<compile_context>
chip_gen: v5e
topology: v5e:2x2
jax: 0.10.0
libtpu: 0.0.40
codegen_flags: <defaults>
</compile_context>

<pallas_src>
import numpy as np
import jax
import jax.numpy as jnp
from jax.experimental import pallas as pl
from jax.experimental.pallas import tpu as pltpu


# ---------------------------------------------------------------------------
# Glue: sinusoid positional table (identical to the PyTorch helper)
# ---------------------------------------------------------------------------
def get_sinusoid_encoding_table(n_position, d_model):
    pos = np.arange(n_position, dtype=np.float64)[:, None]
    hid = np.arange(d_model, dtype=np.float64)[None, :]
    table = pos / np.power(10000.0, 2.0 * np.floor(hid / 2.0) / d_model)
    table[:, 0::2] = np.sin(table[:, 0::2])
    table[:, 1::2] = np.cos(table[:, 1::2])
    return jnp.asarray(table, dtype=jnp.float32)


def _layernorm_feat0(x, gamma, beta, eps=1e-5):
    """LayerNorm over the feature axis = axis 0 of the kernel's (C, M) layout.
    gamma / beta are (C, 1) columns broadcast over the lane (token) axis."""
    mu = jnp.mean(x, axis=0, keepdims=True)
    var = jnp.mean(jnp.square(x - mu), axis=0, keepdims=True)
    return (x - mu) * jax.lax.rsqrt(var + eps) * gamma + beta


def _layernorm_last(x, gamma, beta, eps=1e-5):
    mu = jnp.mean(x, axis=-1, keepdims=True)
    var = jnp.mean(jnp.square(x - mu), axis=-1, keepdims=True)
    return (x - mu) * jax.lax.rsqrt(var + eps) * gamma + beta


# ---------------------------------------------------------------------------
# Pallas kernel (feature-major layout: activations are (C or FC, M),
# M = T * nt with nodes innermost -> lane-dense everywhere when nt % 128 == 0)
# ---------------------------------------------------------------------------
def make_tempformer_kernel(nt, T, C, FC, heads, head_dim):
    scale = float(1.0 / np.sqrt(head_dim))
    M = nt * T                               # tokens per grid step (lane axis)

    def kernel(x_ref, org_ref, wqkv_ref, wo_ref, w1_ref, w2_ref,
               bias_ref, out_ref):
        # Packed f32 bias/scale columns: (FC, 8); rows [:C] hold the C-sized
        # vectors, column 6 holds the (FC,) FFN bias b1.
        bv = bias_ref[...]
        bo = bv[:C, 0:1]
        g3 = bv[:C, 1:2]
        b3 = bv[:C, 2:3]
        b2 = bv[:C, 3:4]
        g4 = bv[:C, 4:5]
        b4 = bv[:C, 5:6]
        b1 = bv[:, 6:7]                                        # (FC, 1)

        # X_tildeT (already query + D_T + D_W_T, transposed in the wrapper):
        # (C, T, nt) -> (C, M).  Free vreg re-indexing when nt % 128 == 0.
        xT = x_ref[0].reshape(C, M)                            # (C, M)  f32
        orgT = org_ref[0].reshape(C, M)                        # (C, M)  f32

        # Fused Q|K|V projection (transposed): (3C, C) @ (C, M) -> (3C, M).
        # One bf16 MXU matmul, f32 accumulation, lane-dense output.
        xqkvT = jnp.dot(wqkv_ref[...], xT.astype(jnp.bfloat16),
                        preferred_element_type=jnp.float32)    # (3C, M)

        # (3C, M) -> (3*heads, d, T, nt): d == 8 aligns with sublanes and nt
        # stays on lanes, so this reshape is pure vreg re-indexing.
        qkv = xqkvT.reshape(3 * heads, head_dim, T, nt)
        qh = qkv[:heads]                                       # (H, d, T, nt)
        kh = qkv[heads:2 * heads]
        vh = qkv[2 * heads:]

        # Temporal attention with nodes on the lane axis.
        # s[h, t2, t1, n] = sum_d q[h, d, t1, n] * k[h, d, t2, n]
        # (t2 leads so the softmax reductions below run over a vreg-batch
        #  axis: pure VPU max/add, no XLU, every vreg 100% lane-dense.)
        s = kh[:, 0][:, :, None, :] * qh[:, 0][:, None, :, :]
        for di in range(1, head_dim):
            s = s + kh[:, di][:, :, None, :] * qh[:, di][:, None, :, :]
        s = s * scale                                          # (H, T, T, nt)

        s = s - jnp.max(s, axis=1, keepdims=True)
        p = jnp.exp(s)
        p = p * pl.reciprocal(jnp.sum(p, axis=1, keepdims=True), approx=True)

        # ctx[h, d, t1, n] = sum_t2 p[h, t2, t1, n] * v[h, d, t2, n]
        ctx = vh[:, :, 0][:, :, None, :] * p[:, 0][:, None, :, :]
        for t2 in range(1, T):
            ctx = ctx + vh[:, :, t2][:, :, None, :] * p[:, t2][:, None, :, :]
        # (H, d, T, nt) -> (C, M): free re-indexing (head-major rows).
        ctxT = ctx.reshape(C, M)

        # fc_out: ONE K=32 bf16 matmul (no per-head slices / accumulation).
        attn_out = jnp.dot(wo_ref[...], ctxT.astype(jnp.bfloat16),
                           preferred_element_type=jnp.float32) + bo   # (C, M)

        # residual + LayerNorm (norm3)
        x_t = _layernorm_feat0(attn_out + orgT, g3, b3)

        # feed_forward_t: Linear -> ReLU -> Linear, residual + LayerNorm (norm4)
        h1 = jnp.maximum(
            jnp.dot(w1_ref[...], x_t.astype(jnp.bfloat16),
                    preferred_element_type=jnp.float32) + b1, 0.0)    # (FC, M)
        ff = jnp.dot(w2_ref[...], h1.astype(jnp.bfloat16),
                     preferred_element_type=jnp.float32) + b2          # (C, M)
        out = _layernorm_feat0(ff + x_t, g4, b4)

        # TODO(synk): nn.Dropout is identity in eval mode; no stochastic dropout.
        # Lane-dense store: (C, M) -> (C, T, nt), nt = 128 lanes.
        out_ref[0] = out.reshape(C, T, nt)

    return kernel


def _pick_node_tile(N, T, B, max_rows=2048):
    """Largest lane-dense node tile: divides N, multiple of 128 (or full N),
    nt*T <= max_rows; keep >= 2 total grid steps for v7x's two TensorCores."""
    lane_ok = [d for d in range(1, N + 1)
               if N % d == 0 and d % 128 == 0 and d * T <= max_rows]
    nt = max(lane_ok) if lane_ok else N
    if B * (N // nt) < 2:
        half = [d for d in lane_ok if N // d >= 2]
        if half:
            nt = max(half)
    return nt


# ---------------------------------------------------------------------------
# Wrapper
# ---------------------------------------------------------------------------
def tempformer_forward(query, w_t, origin_input, params, heads):
    B, N, T, C = query.shape
    head_dim = C // heads
    FC = params["w1"].shape[1]
    nt = _pick_node_tile(N, T, B)

    # Tiny glue in plain JAX: sinusoid table + W_T_embedding, and the
    # positional add, fused by XLA into the (mandatory) layout transpose —
    # no extra HBM traffic vs. doing the add in-kernel.
    d_t = get_sinusoid_encoding_table(T, C)                          # (T, C)
    d_wt = w_t @ params["w_te"] + params["b_te"]                     # (B, C)
    x = query + d_t[None, None, :, :] + d_wt[:, None, None, :]       # (B,N,T,C)

    # Feature-major, nodes-on-lanes layout for the kernel: (B, C, T, N).
    x_cm = jnp.transpose(x, (0, 3, 2, 1))
    org_cm = jnp.transpose(origin_input, (0, 3, 2, 1))

    bf16 = jnp.bfloat16
    # Transposed weights for the feature-major kernel (W^T rows = out features).
    wqkv_t = jnp.concatenate(
        [params["wq"].T, params["wk"].T, params["wv"].T], axis=0).astype(bf16)  # (3C, C)
    wo_t = params["wo"].T.astype(bf16)                               # (C, C)
    w1_t = params["w1"].T.astype(bf16)                               # (FC, C)
    w2_t = params["w2"].T.astype(bf16)                               # (C, FC)

    # Pack the small f32 vectors as columns of one (FC, 8) array.
    bias_pack = jnp.zeros((FC, 8), jnp.float32)
    for col, v in enumerate([params["bo"], params["g3"], params["b3"],
                             params["b2"], params["g4"], params["b4"]]):
        bias_pack = bias_pack.at[:C, col].set(v)
    bias_pack = bias_pack.at[:, 6].set(params["b1"])

    kernel = make_tempformer_kernel(nt, T, C, FC, heads, head_dim)

    def const_spec(shape):
        nd = len(shape)
        return pl.BlockSpec(shape, lambda b, n, _nd=nd: (0,) * _nd)

    grid = (B, N // nt)
    out_cm = pl.pallas_call(
        kernel,
        out_shape=jax.ShapeDtypeStruct((B, C, T, N), jnp.float32),
        grid=grid,
        in_specs=[
            pl.BlockSpec((1, C, T, nt), lambda b, n: (b, 0, 0, n)),   # x (trans.)
            pl.BlockSpec((1, C, T, nt), lambda b, n: (b, 0, 0, n)),   # origin
            const_spec((3 * C, C)),                                   # wqkv^T
            const_spec((C, C)),                                       # wo^T
            const_spec((FC, C)),                                      # w1^T
            const_spec((C, FC)),                                      # w2^T
            const_spec((FC, 8)),                                      # biases
        ],
        out_specs=pl.BlockSpec((1, C, T, nt), lambda b, n: (b, 0, 0, n)),
        compiler_params=pltpu.CompilerParams(
            dimension_semantics=("parallel", "parallel"),
            vmem_limit_bytes=32 * 1024 * 1024),
    )(x_cm, org_cm, wqkv_t, wo_t, w1_t, w2_t, bias_pack)

    # Back to the module's [B, N, T, C] layout.
    return jnp.transpose(out_cm, (0, 3, 2, 1))


# ---------------------------------------------------------------------------
# Pure-JAX reference (mirrors the PyTorch forward; same bf16 matmul casts as
# the kernel so the comparison isolates kernel bugs, not bf16 rounding).
# ---------------------------------------------------------------------------
def _mm(a, b):
    return jnp.einsum("...c,cf->...f",
                      a.astype(jnp.bfloat16), b.astype(jnp.bfloat16),
                      preferred_element_type=jnp.float32)


def tempformer_reference(query, w_t, origin_input, params, heads):
    B, N, T, C = query.shape
    d = C // heads
    hi = jax.lax.Precision.HIGHEST
    d_t = get_sinusoid_encoding_table(T, C)
    d_wt = w_t @ params["w_te"] + params["b_te"]
    x = query + d_t[None, None] + d_wt[:, None, None, :]

    Q = _mm(x, params["wq"]).reshape(B, N, T, heads, d)
    K = _mm(x, params["wk"]).reshape(B, N, T, heads, d)
    V = _mm(x, params["wv"]).reshape(B, N, T, heads, d)
    scores = jnp.einsum("bnthd,bnshd->bnhts", Q, K, precision=hi) / np.sqrt(d)
    attn = jax.nn.softmax(scores, axis=-1)
    ctx = jnp.einsum("bnhts,bnshd->bnthd", attn, V,
                     precision=hi).reshape(B, N, T, C)
    attn_out = _mm(ctx, params["wo"]) + params["bo"]

    x_t = _layernorm_last(attn_out + origin_input, params["g3"], params["b3"])
    h1 = jnp.maximum(_mm(x_t, params["w1"]) + params["b1"], 0.0)
    ff = _mm(h1, params["w2"]) + params["b2"]
    return _layernorm_last(ff + x_t, params["g4"], params["b4"])


def init_params(key, C, heads, expansion):
    FC = expansion * C
    ks = jax.random.split(key, 8)
    s = 0.1
    return dict(
        w_te=jax.random.normal(ks[0], (2, C), jnp.float32) * s,
        b_te=jax.random.normal(ks[1], (C,), jnp.float32) * s,
        wq=jax.random.normal(ks[2], (C, C), jnp.float32) * s,
        wk=jax.random.normal(ks[3], (C, C), jnp.float32) * s,
        wv=jax.random.normal(ks[4], (C, C), jnp.float32) * s,
        wo=jax.random.normal(ks[5], (C, C), jnp.float32) * s,
        bo=jnp.zeros((C,), jnp.float32),
        g3=jnp.ones((C,), jnp.float32), b3=jnp.zeros((C,), jnp.float32),
        w1=jax.random.normal(ks[6], (C, FC), jnp.float32) * s,
        b1=jnp.zeros((FC,), jnp.float32),
        w2=jax.random.normal(ks[7], (FC, C), jnp.float32) * s,
        b2=jnp.zeros((C,), jnp.float32),
        g4=jnp.ones((C,), jnp.float32), b4=jnp.zeros((C,), jnp.float32),
    )


if __name__ == "__main__":
    B, N, T, C = 2, 128, 8, 32          # nt = 128 -> 1024-token slabs, grid (2, 1)
    heads, expansion = 4, 2

    key = jax.random.PRNGKey(0)
    k_q, k_w, k_o, k_p = jax.random.split(key, 4)
    query = jax.random.normal(k_q, (B, N, T, C), jnp.float32)
    w_t = jax.random.normal(k_w, (B, 2), jnp.float32)
    origin_input = jax.random.normal(k_o, (B, N, T, C), jnp.float32)
    params = init_params(k_p, C, heads, expansion)

    out = jax.block_until_ready(
        tempformer_forward(query, w_t, origin_input, params, heads))
    ref = jax.block_until_ready(
        tempformer_reference(query, w_t, origin_input, params, heads))

    # bf16 matmuls + approx softmax reciprocal => ~1e-3 expected deviation.
    np.testing.assert_allclose(np.asarray(out), np.asarray(ref),
                               rtol=1e-2, atol=1e-2)
    print("KERNEL_OK")
</pallas_src>

<mosaic_0001>
module attributes {stable_mosaic.version = 11 : i64} {
  func.func @kernel(%arg0: i32, %arg1: i32, %arg2: memref<1x32x8x128xf32, #tpu.memory_space<vmem>>, %arg3: memref<1x32x8x128xf32, #tpu.memory_space<vmem>>, %arg4: memref<96x32xbf16, #tpu.memory_space<vmem>>, %arg5: memref<32x32xbf16, #tpu.memory_space<vmem>>, %arg6: memref<64x32xbf16, #tpu.memory_space<vmem>>, %arg7: memref<32x64xbf16, #tpu.memory_space<vmem>>, %arg8: memref<64x8xf32, #tpu.memory_space<vmem>>, %arg9: memref<1x32x8x128xf32, #tpu.memory_space<vmem>>) attributes {dimension_semantics = [#tpu.dimension_semantics<parallel>, #tpu.dimension_semantics<parallel>], iteration_bounds = array<i64: 2, 1>, scalar_prefetch = 0 : i64, scratch_operands = 0 : i64, tpu.core_type = #tpu.core_type<tc>, window_params = [{transform_indices = @transform_0, window_bounds = array<i64: 1, 32, 8, 128>}, {transform_indices = @transform_1, window_bounds = array<i64: 1, 32, 8, 128>}, {pipeline_mode = #tpu.pipeline_mode<synchronous>, transform_indices = @transform_2, window_bounds = array<i64: 96, 32>}, {pipeline_mode = #tpu.pipeline_mode<synchronous>, transform_indices = @transform_3, window_bounds = array<i64: 32, 32>}, {pipeline_mode = #tpu.pipeline_mode<synchronous>, transform_indices = @transform_4, window_bounds = array<i64: 64, 32>}, {pipeline_mode = #tpu.pipeline_mode<synchronous>, transform_indices = @transform_5, window_bounds = array<i64: 32, 64>}, {pipeline_mode = #tpu.pipeline_mode<synchronous>, transform_indices = @transform_6, window_bounds = array<i64: 64, 8>}, {transform_indices = @transform_7, window_bounds = array<i64: 1, 32, 8, 128>}]} {
    %c0 = arith.constant 0 : index
    %c0_0 = arith.constant 0 : index
    %0 = vector.load %arg8[%c0, %c0_0] : memref<64x8xf32, #tpu.memory_space<vmem>>, vector<64x8xf32>
    %1 = vector.extract_strided_slice %0 {offsets = [0, 0], sizes = [32, 1], strides = [1, 1]} : vector<64x8xf32> to vector<32x1xf32>
    %2 = vector.extract_strided_slice %0 {offsets = [0, 1], sizes = [32, 1], strides = [1, 1]} : vector<64x8xf32> to vector<32x1xf32>
    %3 = vector.extract_strided_slice %0 {offsets = [0, 2], sizes = [32, 1], strides = [1, 1]} : vector<64x8xf32> to vector<32x1xf32>
    %4 = vector.extract_strided_slice %0 {offsets = [0, 3], sizes = [32, 1], strides = [1, 1]} : vector<64x8xf32> to vector<32x1xf32>
    %5 = vector.extract_strided_slice %0 {offsets = [0, 4], sizes = [32, 1], strides = [1, 1]} : vector<64x8xf32> to vector<32x1xf32>
    %6 = vector.extract_strided_slice %0 {offsets = [0, 5], sizes = [32, 1], strides = [1, 1]} : vector<64x8xf32> to vector<32x1xf32>
    %7 = vector.extract_strided_slice %0 {offsets = [0, 6], sizes = [64, 1], strides = [1, 1]} : vector<64x8xf32> to vector<64x1xf32>
    %c0_1 = arith.constant 0 : index
    %c0_2 = arith.constant 0 : index
    %c0_3 = arith.constant 0 : index
    %c0_4 = arith.constant 0 : index
    %8 = vector.load %arg2[%c0_1, %c0_2, %c0_3, %c0_4] : memref<1x32x8x128xf32, #tpu.memory_space<vmem>>, vector<1x32x8x128xf32>
    %9 = vector.shape_cast %8 : vector<1x32x8x128xf32> to vector<32x8x128xf32>
    %10 = vector.shape_cast %9 : vector<32x8x128xf32> to vector<32x1024xf32>
    %c0_5 = arith.constant 0 : index
    %c0_6 = arith.constant 0 : index
    %c0_7 = arith.constant 0 : index
    %c0_8 = arith.constant 0 : index
    %11 = vector.load %arg3[%c0_5, %c0_6, %c0_7, %c0_8] : memref<1x32x8x128xf32, #tpu.memory_space<vmem>>, vector<1x32x8x128xf32>
    %12 = vector.shape_cast %11 : vector<1x32x8x128xf32> to vector<32x8x128xf32>
    %13 = vector.shape_cast %12 : vector<32x8x128xf32> to vector<32x1024xf32>
    %c0_9 = arith.constant 0 : index
    %c0_10 = arith.constant 0 : index
    %14 = vector.load %arg4[%c0_9, %c0_10] : memref<96x32xbf16, #tpu.memory_space<vmem>>, vector<96x32xbf16>
    %15 = arith.truncf %10 : vector<32x1024xf32> to vector<32x1024xbf16>
    %cst = arith.constant dense<0.000000e+00> : vector<96x1024xf32>
    %16 = tpu.matmul %14, %15, %cst {dimension_numbers = #tpu.dot_dimension_numbers<[1], [0], [0], [1], [0, 0, 1, 1], [], []>} : vector<96x32xbf16>, vector<32x1024xbf16>, vector<96x1024xf32> -> vector<96x1024xf32>
    %17 = vector.shape_cast %16 : vector<96x1024xf32> to vector<12x8x8x128xf32>
    %18 = vector.extract_strided_slice %17 {offsets = [0, 0, 0, 0], sizes = [4, 8, 8, 128], strides = [1, 1, 1, 1]} : vector<12x8x8x128xf32> to vector<4x8x8x128xf32>
    %19 = vector.extract_strided_slice %17 {offsets = [4, 0, 0, 0], sizes = [4, 8, 8, 128], strides = [1, 1, 1, 1]} : vector<12x8x8x128xf32> to vector<4x8x8x128xf32>
    %20 = vector.extract_strided_slice %17 {offsets = [8, 0, 0, 0], sizes = [4, 8, 8, 128], strides = [1, 1, 1, 1]} : vector<12x8x8x128xf32> to vector<4x8x8x128xf32>
    %21 = vector.extract_strided_slice %19 {offsets = [0, 0, 0, 0], sizes = [4, 1, 8, 128], strides = [1, 1, 1, 1]} : vector<4x8x8x128xf32> to vector<4x1x8x128xf32>
    %22 = vector.shape_cast %21 : vector<4x1x8x128xf32> to vector<4x8x128xf32>
    %23 = vector.shape_cast %22 : vector<4x8x128xf32> to vector<4x8x1x128xf32>
    %24 = vector.extract_strided_slice %18 {offsets = [0, 0, 0, 0], sizes = [4, 1, 8, 128], strides = [1, 1, 1, 1]} : vector<4x8x8x128xf32> to vector<4x1x8x128xf32>
    %25 = vector.shape_cast %24 : vector<4x1x8x128xf32> to vector<4x8x128xf32>
    %26 = vector.shape_cast %25 : vector<4x8x128xf32> to vector<4x1x8x128xf32>
    %27 = vector.broadcast %23 : vector<4x8x1x128xf32> to vector<4x8x8x128xf32>
    %28 = vector.broadcast %26 : vector<4x1x8x128xf32> to vector<4x8x8x128xf32>
    %29 = arith.mulf %27, %28 : vector<4x8x8x128xf32>
    %30 = vector.extract_strided_slice %19 {offsets = [0, 1, 0, 0], sizes = [4, 1, 8, 128], strides = [1, 1, 1, 1]} : vector<4x8x8x128xf32> to vector<4x1x8x128xf32>
    %31 = vector.shape_cast %30 : vector<4x1x8x128xf32> to vector<4x8x128xf32>
    %32 = vector.shape_cast %31 : vector<4x8x128xf32> to vector<4x8x1x128xf32>
    %33 = vector.extract_strided_slice %18 {offsets = [0, 1, 0, 0], sizes = [4, 1, 8, 128], strides = [1, 1, 1, 1]} : vector<4x8x8x128xf32> to vector<4x1x8x128xf32>
    %34 = vector.shape_cast %33 : vector<4x1x8x128xf32> to vector<4x8x128xf32>
    %35 = vector.shape_cast %34 : vector<4x8x128xf32> to vector<4x1x8x128xf32>
    %36 = vector.broadcast %32 : vector<4x8x1x128xf32> to vector<4x8x8x128xf32>
    %37 = vector.broadcast %35 : vector<4x1x8x128xf32> to vector<4x8x8x128xf32>
    %38 = arith.mulf %36, %37 : vector<4x8x8x128xf32>
    %39 = arith.addf %29, %38 : vector<4x8x8x128xf32>
    %40 = vector.extract_strided_slice %19 {offsets = [0, 2, 0, 0], sizes = [4, 1, 8, 128], strides = [1, 1, 1, 1]} : vector<4x8x8x128xf32> to vector<4x1x8x128xf32>
    %41 = vector.shape_cast %40 : vector<4x1x8x128xf32> to vector<4x8x128xf32>
    %42 = vector.shape_cast %41 : vector<4x8x128xf32> to vector<4x8x1x128xf32>
    %43 = vector.extract_strided_slice %18 {offsets = [0, 2, 0, 0], sizes = [4, 1, 8, 128], strides = [1, 1, 1, 1]} : vector<4x8x8x128xf32> to vector<4x1x8x128xf32>
    %44 = vector.shape_cast %43 : vector<4x1x8x128xf32> to vector<4x8x128xf32>
    %45 = vector.shape_cast %44 : vector<4x8x128xf32> to vector<4x1x8x128xf32>
    %46 = vector.broadcast %42 : vector<4x8x1x128xf32> to vector<4x8x8x128xf32>
    %47 = vector.broadcast %45 : vector<4x1x8x128xf32> to vector<4x8x8x128xf32>
    %48 = arith.mulf %46, %47 : vector<4x8x8x128xf32>
    %49 = arith.addf %39, %48 : vector<4x8x8x128xf32>
    %50 = vector.extract_strided_slice %19 {offsets = [0, 3, 0, 0], sizes = [4, 1, 8, 128], strides = [1, 1, 1, 1]} : vector<4x8x8x128xf32> to vector<4x1x8x128xf32>
    %51 = vector.shape_cast %50 : vector<4x1x8x128xf32> to vector<4x8x128xf32>
    %52 = vector.shape_cast %51 : vector<4x8x128xf32> to vector<4x8x1x128xf32>
    %53 = vector.extract_strided_slice %18 {offsets = [0, 3, 0, 0], sizes = [4, 1, 8, 128], strides = [1, 1, 1, 1]} : vector<4x8x8x128xf32> to vector<4x1x8x128xf32>
    %54 = vector.shape_cast %53 : vector<4x1x8x128xf32> to vector<4x8x128xf32>
    %55 = vector.shape_cast %54 : vector<4x8x128xf32> to vector<4x1x8x128xf32>
    %56 = vector.broadcast %52 : vector<4x8x1x128xf32> to vector<4x8x8x128xf32>
    %57 = vector.broadcast %55 : vector<4x1x8x128xf32> to vector<4x8x8x128xf32>
    %58 = arith.mulf %56, %57 : vector<4x8x8x128xf32>
    %59 = arith.addf %49, %58 : vector<4x8x8x128xf32>
    %60 = vector.extract_strided_slice %19 {offsets = [0, 4, 0, 0], sizes = [4, 1, 8, 128], strides = [1, 1, 1, 1]} : vector<4x8x8x128xf32> to vector<4x1x8x128xf32>
    %61 = vector.shape_cast %60 : vector<4x1x8x128xf32> to vector<4x8x128xf32>
    %62 = vector.shape_cast %61 : vector<4x8x128xf32> to vector<4x8x1x128xf32>
    %63 = vector.extract_strided_slice %18 {offsets = [0, 4, 0, 0], sizes = [4, 1, 8, 128], strides = [1, 1, 1, 1]} : vector<4x8x8x128xf32> to vector<4x1x8x128xf32>
    %64 = vector.shape_cast %63 : vector<4x1x8x128xf32> to vector<4x8x128xf32>
    %65 = vector.shape_cast %64 : vector<4x8x128xf32> to vector<4x1x8x128xf32>
    %66 = vector.broadcast %62 : vector<4x8x1x128xf32> to vector<4x8x8x128xf32>
    %67 = vector.broadcast %65 : vector<4x1x8x128xf32> to vector<4x8x8x128xf32>
    %68 = arith.mulf %66, %67 : vector<4x8x8x128xf32>
    %69 = arith.addf %59, %68 : vector<4x8x8x128xf32>
    %70 = vector.extract_strided_slice %19 {offsets = [0, 5, 0, 0], sizes = [4, 1, 8, 128], strides = [1, 1, 1, 1]} : vector<4x8x8x128xf32> to vector<4x1x8x128xf32>
    %71 = vector.shape_cast %70 : vector<4x1x8x128xf32> to vector<4x8x128xf32>
    %72 = vector.shape_cast %71 : vector<4x8x128xf32> to vector<4x8x1x128xf32>
    %73 = vector.extract_strided_slice %18 {offsets = [0, 5, 0, 0], sizes = [4, 1, 8, 128], strides = [1, 1, 1, 1]} : vector<4x8x8x128xf32> to vector<4x1x8x128xf32>
    %74 = vector.shape_cast %73 : vector<4x1x8x128xf32> to vector<4x8x128xf32>
    %75 = vector.shape_cast %74 : vector<4x8x128xf32> to vector<4x1x8x128xf32>
    %76 = vector.broadcast %72 : vector<4x8x1x128xf32> to vector<4x8x8x128xf32>
    %77 = vector.broadcast %75 : vector<4x1x8x128xf32> to vector<4x8x8x128xf32>
    %78 = arith.mulf %76, %77 : vector<4x8x8x128xf32>
    %79 = arith.addf %69, %78 : vector<4x8x8x128xf32>
    %80 = vector.extract_strided_slice %19 {offsets = [0, 6, 0, 0], sizes = [4, 1, 8, 128], strides = [1, 1, 1, 1]} : vector<4x8x8x128xf32> to vector<4x1x8x128xf32>
    %81 = vector.shape_cast %80 : vector<4x1x8x128xf32> to vector<4x8x128xf32>
    %82 = vector.shape_cast %81 : vector<4x8x128xf32> to vector<4x8x1x128xf32>
    %83 = vector.extract_strided_slice %18 {offsets = [0, 6, 0, 0], sizes = [4, 1, 8, 128], strides = [1, 1, 1, 1]} : vector<4x8x8x128xf32> to vector<4x1x8x128xf32>
    %84 = vector.shape_cast %83 : vector<4x1x8x128xf32> to vector<4x8x128xf32>
    %85 = vector.shape_cast %84 : vector<4x8x128xf32> to vector<4x1x8x128xf32>
    %86 = vector.broadcast %82 : vector<4x8x1x128xf32> to vector<4x8x8x128xf32>
    %87 = vector.broadcast %85 : vector<4x1x8x128xf32> to vector<4x8x8x128xf32>
    %88 = arith.mulf %86, %87 : vector<4x8x8x128xf32>
    %89 = arith.addf %79, %88 : vector<4x8x8x128xf32>
    %90 = vector.extract_strided_slice %19 {offsets = [0, 7, 0, 0], sizes = [4, 1, 8, 128], strides = [1, 1, 1, 1]} : vector<4x8x8x128xf32> to vector<4x1x8x128xf32>
    %91 = vector.shape_cast %90 : vector<4x1x8x128xf32> to vector<4x8x128xf32>
    %92 = vector.shape_cast %91 : vector<4x8x128xf32> to vector<4x8x1x128xf32>
    %93 = vector.extract_strided_slice %18 {offsets = [0, 7, 0, 0], sizes = [4, 1, 8, 128], strides = [1, 1, 1, 1]} : vector<4x8x8x128xf32> to vector<4x1x8x128xf32>
    %94 = vector.shape_cast %93 : vector<4x1x8x128xf32> to vector<4x8x128xf32>
    %95 = vector.shape_cast %94 : vector<4x8x128xf32> to vector<4x1x8x128xf32>
    %96 = vector.broadcast %92 : vector<4x8x1x128xf32> to vector<4x8x8x128xf32>
    %97 = vector.broadcast %95 : vector<4x1x8x128xf32> to vector<4x8x8x128xf32>
    %98 = arith.mulf %96, %97 : vector<4x8x8x128xf32>
    %99 = arith.addf %89, %98 : vector<4x8x8x128xf32>
    %cst_11 = arith.constant 0.353553385 : f32
    %100 = vector.broadcast %cst_11 : f32 to vector<4x8x8x128xf32>
    %101 = arith.mulf %99, %100 : vector<4x8x8x128xf32>
    %cst_12 = arith.constant dense<0xFF800000> : vector<4x8x128xf32>
    %102 = vector.multi_reduction <maximumf>, %101, %cst_12 [1] : vector<4x8x8x128xf32> to vector<4x8x128xf32>
    %103 = vector.shape_cast %102 : vector<4x8x128xf32> to vector<4x1x8x128xf32>
    %104 = vector.broadcast %103 : vector<4x1x8x128xf32> to vector<4x8x8x128xf32>
    %105 = arith.subf %101, %104 : vector<4x8x8x128xf32>
    %106 = math.exp %105 : vector<4x8x8x128xf32>
    %cst_13 = arith.constant dense<0.000000e+00> : vector<4x8x128xf32>
    %107 = vector.multi_reduction <add>, %106, %cst_13 [1] : vector<4x8x8x128xf32> to vector<4x8x128xf32>
    %108 = vector.shape_cast %107 : vector<4x8x128xf32> to vector<4x1x8x128xf32>
    %109 = tpu.reciprocal %108 {approx = true} : vector<4x1x8x128xf32> -> vector<4x1x8x128xf32>
    %110 = vector.broadcast %109 : vector<4x1x8x128xf32> to vector<4x8x8x128xf32>
    %111 = arith.mulf %106, %110 : vector<4x8x8x128xf32>
    %112 = vector.extract_strided_slice %20 {offsets = [0, 0, 0, 0], sizes = [4, 8, 1, 128], strides = [1, 1, 1, 1]} : vector<4x8x8x128xf32> to vector<4x8x1x128xf32>
    %113 = vector.shape_cast %112 : vector<4x8x1x128xf32> to vector<4x8x128xf32>
    %114 = vector.shape_cast %113 : vector<4x8x128xf32> to vector<4x8x1x128xf32>
    %115 = vector.extract_strided_slice %111 {offsets = [0, 0, 0, 0], sizes = [4, 1, 8, 128], strides = [1, 1, 1, 1]} : vector<4x8x8x128xf32> to vector<4x1x8x128xf32>
    %116 = vector.shape_cast %115 : vector<4x1x8x128xf32> to vector<4x8x128xf32>
    %117 = vector.shape_cast %116 : vector<4x8x128xf32> to vector<4x1x8x128xf32>
    %118 = vector.broadcast %114 : vector<4x8x1x128xf32> to vector<4x8x8x128xf32>
    %119 = vector.broadcast %117 : vector<4x1x8x128xf32> to vector<4x8x8x128xf32>
    %120 = arith.mulf %118, %119 : vector<4x8x8x128xf32>
    %121 = vector.extract_strided_slice %20 {offsets = [0, 0, 1, 0], sizes = [4, 8, 1, 128], strides = [1, 1, 1, 1]} : vector<4x8x8x128xf32> to vector<4x8x1x128xf32>
    %122 = vector.shape_cast %121 : vector<4x8x1x128xf32> to vector<4x8x128xf32>
    %123 = vector.shape_cast %122 : vector<4x8x128xf32> to vector<4x8x1x128xf32>
    %124 = vector.extract_strided_slice %111 {offsets = [0, 1, 0, 0], sizes = [4, 1, 8, 128], strides = [1, 1, 1, 1]} : vector<4x8x8x128xf32> to vector<4x1x8x128xf32>
    %125 = vector.shape_cast %124 : vector<4x1x8x128xf32> to vector<4x8x128xf32>
    %126 = vector.shape_cast %125 : vector<4x8x128xf32> to vector<4x1x8x128xf32>
    %127 = vector.broadcast %123 : vector<4x8x1x128xf32> to vector<4x8x8x128xf32>
    %128 = vector.broadcast %126 : vector<4x1x8x128xf32> to vector<4x8x8x128xf32>
    %129 = arith.mulf %127, %128 : vector<4x8x8x128xf32>
    %130 = arith.addf %120, %129 : vector<4x8x8x128xf32>
    %131 = vector.extract_strided_slice %20 {offsets = [0, 0, 2, 0], sizes = [4, 8, 1, 128], strides = [1, 1, 1, 1]} : vector<4x8x8x128xf32> to vector<4x8x1x128xf32>
    %132 = vector.shape_cast %131 : vector<4x8x1x128xf32> to vector<4x8x128xf32>
    %133 = vector.shape_cast %132 : vector<4x8x128xf32> to vector<4x8x1x128xf32>
    %134 = vector.extract_strided_slice %111 {offsets = [0, 2, 0, 0], sizes = [4, 1, 8, 128], strides = [1, 1, 1, 1]} : vector<4x8x8x128xf32> to vector<4x1x8x128xf32>
    %135 = vector.shape_cast %134 : vector<4x1x8x128xf32> to vector<4x8x128xf32>
    %136 = vector.shape_cast %135 : vector<4x8x128xf32> to vector<4x1x8x128xf32>
    %137 = vector.broadcast %133 : vector<4x8x1x128xf32> to vector<4x8x8x128xf32>
    %138 = vector.broadcast %136 : vector<4x1x8x128xf32> to vector<4x8x8x128xf32>
    %139 = arith.mulf %137, %138 : vector<4x8x8x128xf32>
    %140 = arith.addf %130, %139 : vector<4x8x8x128xf32>
    %141 = vector.extract_strided_slice %20 {offsets = [0, 0, 3, 0], sizes = [4, 8, 1, 128], strides = [1, 1, 1, 1]} : vector<4x8x8x128xf32> to vector<4x8x1x128xf32>
    %142 = vector.shape_cast %141 : vector<4x8x1x128xf32> to vector<4x8x128xf32>
    %143 = vector.shape_cast %142 : vector<4x8x128xf32> to vector<4x8x1x128xf32>
    %144 = vector.extract_strided_slice %111 {offsets = [0, 3, 0, 0], sizes = [4, 1, 8, 128], strides = [1, 1, 1, 1]} : vector<4x8x8x128xf32> to vector<4x1x8x128xf32>
    %145 = vector.shape_cast %144 : vector<4x1x8x128xf32> to vector<4x8x128xf32>
    %146 = vector.shape_cast %145 : vector<4x8x128xf32> to vector<4x1x8x128xf32>
    %147 = vector.broadcast %143 : vector<4x8x1x128xf32> to vector<4x8x8x128xf32>
    %148 = vector.broadcast %146 : vector<4x1x8x128xf32> to vector<4x8x8x128xf32>
    %149 = arith.mulf %147, %148 : vector<4x8x8x128xf32>
    %150 = arith.addf %140, %149 : vector<4x8x8x128xf32>
    %151 = vector.extract_strided_slice %20 {offsets = [0, 0, 4, 0], sizes = [4, 8, 1, 128], strides = [1, 1, 1, 1]} : vector<4x8x8x128xf32> to vector<4x8x1x128xf32>
    %152 = vector.shape_cast %151 : vector<4x8x1x128xf32> to vector<4x8x128xf32>
    %153 = vector.shape_cast %152 : vector<4x8x128xf32> to vector<4x8x1x128xf32>
    %154 = vector.extract_strided_slice %111 {offsets = [0, 4, 0, 0], sizes = [4, 1, 8, 128], strides = [1, 1, 1, 1]} : vector<4x8x8x128xf32> to vector<4x1x8x128xf32>
    %155 = vector.shape_cast %154 : vector<4x1x8x128xf32> to vector<4x8x128xf32>
    %156 = vector.shape_cast %155 : vector<4x8x128xf32> to vector<4x1x8x128xf32>
    %157 = vector.broadcast %153 : vector<4x8x1x128xf32> to vector<4x8x8x128xf32>
    %158 = vector.broadcast %156 : vector<4x1x8x128xf32> to vector<4x8x8x128xf32>
    %159 = arith.mulf %157, %158 : vector<4x8x8x128xf32>
    %160 = arith.addf %150, %159 : vector<4x8x8x128xf32>
    %161 = vector.extract_strided_slice %20 {offsets = [0, 0, 5, 0], sizes = [4, 8, 1, 128], strides = [1, 1, 1, 1]} : vector<4x8x8x128xf32> to vector<4x8x1x128xf32>
    %162 = vector.shape_cast %161 : vector<4x8x1x128xf32> to vector<4x8x128xf32>
    %163 = vector.shape_cast %162 : vector<4x8x128xf32> to vector<4x8x1x128xf32>
    %164 = vector.extract_strided_slice %111 {offsets = [0, 5, 0, 0], sizes = [4, 1, 8, 128], strides = [1, 1, 1, 1]} : vector<4x8x8x128xf32> to vector<4x1x8x128xf32>
    %165 = vector.shape_cast %164 : vector<4x1x8x128xf32> to vector<4x8x128xf32>
    %166 = vector.shape_cast %165 : vector<4x8x128xf32> to vector<4x1x8x128xf32>
    %167 = vector.broadcast %163 : vector<4x8x1x128xf32> to vector<4x8x8x128xf32>
    %168 = vector.broadcast %166 : vector<4x1x8x128xf32> to vector<4x8x8x128xf32>
    %169 = arith.mulf %167, %168 : vector<4x8x8x128xf32>
    %170 = arith.addf %160, %169 : vector<4x8x8x128xf32>
    %171 = vector.extract_strided_slice %20 {offsets = [0, 0, 6, 0], sizes = [4, 8, 1, 128], strides = [1, 1, 1, 1]} : vector<4x8x8x128xf32> to vector<4x8x1x128xf32>
    %172 = vector.shape_cast %171 : vector<4x8x1x128xf32> to vector<4x8x128xf32>
    %173 = vector.shape_cast %172 : vector<4x8x128xf32> to vector<4x8x1x128xf32>
    %174 = vector.extract_strided_slice %111 {offsets = [0, 6, 0, 0], sizes = [4, 1, 8, 128], strides = [1, 1, 1, 1]} : vector<4x8x8x128xf32> to vector<4x1x8x128xf32>
    %175 = vector.shape_cast %174 : vector<4x1x8x128xf32> to vector<4x8x128xf32>
    %176 = vector.shape_cast %175 : vector<4x8x128xf32> to vector<4x1x8x128xf32>
    %177 = vector.broadcast %173 : vector<4x8x1x128xf32> to vector<4x8x8x128xf32>
    %178 = vector.broadcast %176 : vector<4x1x8x128xf32> to vector<4x8x8x128xf32>
    %179 = arith.mulf %177, %178 : vector<4x8x8x128xf32>
    %180 = arith.addf %170, %179 : vector<4x8x8x128xf32>
    %181 = vector.extract_strided_slice %20 {offsets = [0, 0, 7, 0], sizes = [4, 8, 1, 128], strides = [1, 1, 1, 1]} : vector<4x8x8x128xf32> to vector<4x8x1x128xf32>
    %182 = vector.shape_cast %181 : vector<4x8x1x128xf32> to vector<4x8x128xf32>
    %183 = vector.shape_cast %182 : vector<4x8x128xf32> to vector<4x8x1x128xf32>
    %184 = vector.extract_strided_slice %111 {offsets = [0, 7, 0, 0], sizes = [4, 1, 8, 128], strides = [1, 1, 1, 1]} : vector<4x8x8x128xf32> to vector<4x1x8x128xf32>
    %185 = vector.shape_cast %184 : vector<4x1x8x128xf32> to vector<4x8x128xf32>
    %186 = vector.shape_cast %185 : vector<4x8x128xf32> to vector<4x1x8x128xf32>
    %187 = vector.broadcast %183 : vector<4x8x1x128xf32> to vector<4x8x8x128xf32>
    %188 = vector.broadcast %186 : vector<4x1x8x128xf32> to vector<4x8x8x128xf32>
    %189 = arith.mulf %187, %188 : vector<4x8x8x128xf32>
    %190 = arith.addf %180, %189 : vector<4x8x8x128xf32>
    %191 = vector.shape_cast %190 : vector<4x8x8x128xf32> to vector<32x1024xf32>
    %c0_14 = arith.constant 0 : index
    %c0_15 = arith.constant 0 : index
    %192 = vector.load %arg5[%c0_14, %c0_15] : memref<32x32xbf16, #tpu.memory_space<vmem>>, vector<32x32xbf16>
    %193 = arith.truncf %191 : vector<32x1024xf32> to vector<32x1024xbf16>
    %cst_16 = arith.constant dense<0.000000e+00> : vector<32x1024xf32>
    %194 = tpu.matmul %192, %193, %cst_16 {dimension_numbers = #tpu.dot_dimension_numbers<[1], [0], [0], [1], [0, 0, 1, 1], [], []>} : vector<32x32xbf16>, vector<32x1024xbf16>, vector<32x1024xf32> -> vector<32x1024xf32>
    %195 = vector.broadcast %1 : vector<32x1xf32> to vector<32x1024xf32>
    %196 = arith.addf %194, %195 : vector<32x1024xf32>
    %197 = arith.addf %196, %13 : vector<32x1024xf32>
    %cst_17 = arith.constant dense<0.000000e+00> : vector<1024xf32>
    %198 = vector.multi_reduction <add>, %197, %cst_17 [0] : vector<32x1024xf32> to vector<1024xf32>
    %199 = vector.shape_cast %198 : vector<1024xf32> to vector<1x1024xf32>
    %cst_18 = arith.constant 3.200000e+01 : f32
    %200 = vector.broadcast %cst_18 : f32 to vector<1x1024xf32>
    %201 = arith.divf %199, %200 : vector<1x1024xf32>
    %202 = vector.broadcast %201 : vector<1x1024xf32> to vector<32x1024xf32>
    %203 = arith.subf %197, %202 : vector<32x1024xf32>
    %204 = arith.mulf %203, %203 : vector<32x1024xf32>
    %cst_19 = arith.constant dense<0.000000e+00> : vector<1024xf32>
    %205 = vector.multi_reduction <add>, %204, %cst_19 [0] : vector<32x1024xf32> to vector<1024xf32>
    %206 = vector.shape_cast %205 : vector<1024xf32> to vector<1x1024xf32>
    %cst_20 = arith.constant 3.200000e+01 : f32
    %207 = vector.broadcast %cst_20 : f32 to vector<1x1024xf32>
    %208 = arith.divf %206, %207 : vector<1x1024xf32>
    %209 = vector.broadcast %201 : vector<1x1024xf32> to vector<32x1024xf32>
    %210 = arith.subf %197, %209 : vector<32x1024xf32>
    %cst_21 = arith.constant 9.99999974E-6 : f32
    %211 = vector.broadcast %cst_21 : f32 to vector<1x1024xf32>
    %212 = arith.addf %208, %211 : vector<1x1024xf32>
    %213 = math.rsqrt %212 : vector<1x1024xf32>
    %214 = vector.broadcast %213 : vector<1x1024xf32> to vector<32x1024xf32>
    %215 = arith.mulf %210, %214 : vector<32x1024xf32>
    %216 = vector.broadcast %2 : vector<32x1xf32> to vector<32x1024xf32>
    %217 = arith.mulf %215, %216 : vector<32x1024xf32>
    %218 = vector.broadcast %3 : vector<32x1xf32> to vector<32x1024xf32>
    %219 = arith.addf %217, %218 : vector<32x1024xf32>
    %c0_22 = arith.constant 0 : index
    %c0_23 = arith.constant 0 : index
    %220 = vector.load %arg6[%c0_22, %c0_23] : memref<64x32xbf16, #tpu.memory_space<vmem>>, vector<64x32xbf16>
    %221 = arith.truncf %219 : vector<32x1024xf32> to vector<32x1024xbf16>
    %cst_24 = arith.constant dense<0.000000e+00> : vector<64x1024xf32>
    %222 = tpu.matmul %220, %221, %cst_24 {dimension_numbers = #tpu.dot_dimension_numbers<[1], [0], [0], [1], [0, 0, 1, 1], [], []>} : vector<64x32xbf16>, vector<32x1024xbf16>, vector<64x1024xf32> -> vector<64x1024xf32>
    %223 = vector.broadcast %7 : vector<64x1xf32> to vector<64x1024xf32>
    %224 = arith.addf %222, %223 : vector<64x1024xf32>
    %cst_25 = arith.constant 0.000000e+00 : f32
    %225 = vector.broadcast %cst_25 : f32 to vector<64x1024xf32>
    %226 = arith.maximumf %224, %225 : vector<64x1024xf32>
    %c0_26 = arith.constant 0 : index
    %c0_27 = arith.constant 0 : index
    %227 = vector.load %arg7[%c0_26, %c0_27] : memref<32x64xbf16, #tpu.memory_space<vmem>>, vector<32x64xbf16>
    %228 = arith.truncf %226 : vector<64x1024xf32> to vector<64x1024xbf16>
    %cst_28 = arith.constant dense<0.000000e+00> : vector<32x1024xf32>
    %229 = tpu.matmul %227, %228, %cst_28 {dimension_numbers = #tpu.dot_dimension_numbers<[1], [0], [0], [1], [0, 0, 1, 1], [], []>} : vector<32x64xbf16>, vector<64x1024xbf16>, vector<32x1024xf32> -> vector<32x1024xf32>
    %230 = vector.broadcast %4 : vector<32x1xf32> to vector<32x1024xf32>
    %231 = arith.addf %229, %230 : vector<32x1024xf32>
    %232 = arith.addf %231, %219 : vector<32x1024xf32>
    %cst_29 = arith.constant dense<0.000000e+00> : vector<1024xf32>
    %233 = vector.multi_reduction <add>, %232, %cst_29 [0] : vector<32x1024xf32> to vector<1024xf32>
    %234 = vector.shape_cast %233 : vector<1024xf32> to vector<1x1024xf32>
    %cst_30 = arith.constant 3.200000e+01 : f32
    %235 = vector.broadcast %cst_30 : f32 to vector<1x1024xf32>
    %236 = arith.divf %234, %235 : vector<1x1024xf32>
    %237 = vector.broadcast %236 : vector<1x1024xf32> to vector<32x1024xf32>
    %238 = arith.subf %232, %237 : vector<32x1024xf32>
    %239 = arith.mulf %238, %238 : vector<32x1024xf32>
    %cst_31 = arith.constant dense<0.000000e+00> : vector<1024xf32>
    %240 = vector.multi_reduction <add>, %239, %cst_31 [0] : vector<32x1024xf32> to vector<1024xf32>
    %241 = vector.shape_cast %240 : vector<1024xf32> to vector<1x1024xf32>
    %cst_32 = arith.constant 3.200000e+01 : f32
    %242 = vector.broadcast %cst_32 : f32 to vector<1x1024xf32>
    %243 = arith.divf %241, %242 : vector<1x1024xf32>
    %244 = vector.broadcast %236 : vector<1x1024xf32> to vector<32x1024xf32>
    %245 = arith.subf %232, %244 : vector<32x1024xf32>
    %cst_33 = arith.constant 9.99999974E-6 : f32
    %246 = vector.broadcast %cst_33 : f32 to vector<1x1024xf32>
    %247 = arith.addf %243, %246 : vector<1x1024xf32>
    %248 = math.rsqrt %247 : vector<1x1024xf32>
    %249 = vector.broadcast %248 : vector<1x1024xf32> to vector<32x1024xf32>
    %250 = arith.mulf %245, %249 : vector<32x1024xf32>
    %251 = vector.broadcast %5 : vector<32x1xf32> to vector<32x1024xf32>
    %252 = arith.mulf %250, %251 : vector<32x1024xf32>
    %253 = vector.broadcast %6 : vector<32x1xf32> to vector<32x1024xf32>
    %254 = arith.addf %252, %253 : vector<32x1024xf32>
    %255 = vector.shape_cast %254 : vector<32x1024xf32> to vector<32x8x128xf32>
    %c0_34 = arith.constant 0 : index
    %c0_35 = arith.constant 0 : index
    %c0_36 = arith.constant 0 : index
    %c0_37 = arith.constant 0 : index
    %256 = vector.load %arg9[%c0_34, %c0_35, %c0_36, %c0_37] : memref<1x32x8x128xf32, #tpu.memory_space<vmem>>, vector<1x32x8x128xf32>
    %257 = vector.shape_cast %256 : vector<1x32x8x128xf32> to vector<32x8x128xf32>
    %258 = vector.shape_cast %255 : vector<32x8x128xf32> to vector<1x32x8x128xf32>
    tpu.vector_store %arg9[%c0_34, %c0_35, %c0_36, %c0_37], %258 {strides = array<i32>} : memref<1x32x8x128xf32, #tpu.memory_space<vmem>>, vector<1x32x8x128xf32>,
    return
  }
  func.func @transform_0(%arg0: i32, %arg1: i32) -> (i32, i32, i32, i32) {
    %c0_i32 = arith.constant 0 : i32
    %c0_i32_0 = arith.constant 0 : i32
    %c0_i32_1 = arith.constant 0 : i32
    return %arg0, %c0_i32, %c0_i32_0, %arg1 : i32, i32, i32, i32
  }
  func.func @transform_1(%arg0: i32, %arg1: i32) -> (i32, i32, i32, i32) {
    %c0_i32 = arith.constant 0 : i32
    %c0_i32_0 = arith.constant 0 : i32
    %c0_i32_1 = arith.constant 0 : i32
    return %arg0, %c0_i32, %c0_i32_0, %arg1 : i32, i32, i32, i32
  }
  func.func @transform_2(%arg0: i32, %arg1: i32) -> (i32, i32) {
    %c0_i32 = arith.constant 0 : i32
    %c0_i32_0 = arith.constant 0 : i32
    %c0_i32_1 = arith.constant 0 : i32
    return %c0_i32, %c0_i32_0 : i32, i32
  }
  func.func @transform_3(%arg0: i32, %arg1: i32) -> (i32, i32) {
    %c0_i32 = arith.constant 0 : i32
    %c0_i32_0 = arith.constant 0 : i32
    %c0_i32_1 = arith.constant 0 : i32
    return %c0_i32, %c0_i32_0 : i32, i32
  }
  func.func @transform_4(%arg0: i32, %arg1: i32) -> (i32, i32) {
    %c0_i32 = arith.constant 0 : i32
    %c0_i32_0 = arith.constant 0 : i32
    %c0_i32_1 = arith.constant 0 : i32
    return %c0_i32, %c0_i32_0 : i32, i32
  }
  func.func @transform_5(%arg0: i32, %arg1: i32) -> (i32, i32) {
    %c0_i32 = arith.constant 0 : i32
    %c0_i32_0 = arith.constant 0 : i32
    %c0_i32_1 = arith.constant 0 : i32
    return %c0_i32, %c0_i32_0 : i32, i32
  }
  func.func @transform_6(%arg0: i32, %arg1: i32) -> (i32, i32) {
    %c0_i32 = arith.constant 0 : i32
    %c0_i32_0 = arith.constant 0 : i32
    %c0_i32_1 = arith.constant 0 : i32
    return %c0_i32, %c0_i32_0 : i32, i32
  }
  func.func @transform_7(%arg0: i32, %arg1: i32) -> (i32, i32, i32, i32) {
    %c0_i32 = arith.constant 0 : i32
    %c0_i32_0 = arith.constant 0 : i32
    %c0_i32_1 = arith.constant 0 : i32
    return %arg0, %c0_i32, %c0_i32_0, %arg1 : i32, i32, i32, i32
  }
}

</mosaic_0001>

<llo_original>
// kernel: tpu_custom_call.1
$region0: #{tpu_custom_call.1}
  #allocation0 [shape = 'u32[]', space=smem, size = 0x4, offset = 0x4, fixed_abs, tag = 'smem constant byte address 0x4 - core index']
  #allocation1 [shape = 'u32[72,128]{1,0:T(1,128)}', space=vmem, size = 0x9000, scoped, tag = 'internal scratch']
  %s0 = inlined_call_operand.hbm [shape: f32[2,32,8,128], index: 0, kind: input, shape index: {}]
  %s1 = inlined_call_operand.hbm [shape: f32[2,32,8,128], index: 1, kind: input, shape index: {}]
  %s2 = inlined_call_operand.vmem [shape: bf16[96,32], index: 2, kind: input, shape index: {}]
  %s3 = inlined_call_operand.vmem [shape: bf16[32,32], index: 3, kind: input, shape index: {}]
  %s4 = inlined_call_operand.vmem [shape: bf16[64,32], index: 4, kind: input, shape index: {}]
  %s5 = inlined_call_operand.vmem [shape: bf16[32,64], index: 5, kind: input, shape index: {}]
  %s6 = inlined_call_operand.vmem [shape: f32[64,8], index: 6, kind: input, shape index: {}]
  %s7 = inlined_call_operand.hbm [shape: f32[2,32,8,128], index: 7, kind: output, shape index: {}]
  %s8 = sld [smem:[#allocation0]]
  $region69: #{tpu_custom_call.1} parent=0
    _
  %s10 = ssub.s32 1, %s8
  %s11 = scalar_select 0, %s10, %s8
  $region1: #{tpu_custom_call.1} parent=0
    #allocation2 [shape = 'u8[262144]{0}', space=vmem, size = 0x40000, scoped, tag = 'input window, operand 0']
    #allocation3 [shape = 's32[2]{0}', space=sflag, size = 0x8, scoped, tag = 'scoped memory for tpu_custom_call.1']
    #allocation4 [shape = 's32[2]{0}', space=sflag, size = 0x8, scoped, tag = 'scoped memory for tpu_custom_call.1']
    #allocation5 [shape = 'u8[262144]{0}', space=vmem, size = 0x40000, scoped, tag = 'input window, operand 1']
    #allocation6 [shape = 's32[2]{0}', space=sflag, size = 0x8, scoped, tag = 'scoped memory for tpu_custom_call.1']
    #allocation7 [shape = 'u8[262144]{0}', space=vmem, size = 0x40000, scoped, tag = 'output window, operand 0']
    %12 = vsyncpa [#allocation3], 0
    %s13 = scalar_lea.sflag [#allocation3], 1
    %14 = vsyncpa %s13, 0
    %15 = vsyncpa [#allocation6], 0
    %s16 = scalar_lea.sflag [#allocation6], 1
    %17 = vsyncpa %s16, 0
    %18 = vsyncpa [#allocation4], 0
    %s19 = scalar_lea.sflag [#allocation4], 1
    %20 = vsyncpa %s19, 0
    loop: start=0, step=1, limit=4
    $region2: #{tpu_custom_call.1} parent=1 // loop_pre_header
      _
    $region3: #{tpu_custom_call.1} parent=1 // loop_header
      %s22 = sphi 0, %s26
      %p23 = scmp.ge.s32.totalorder %s22, 4
      %s29 = sphi 0, %s41
      %s30 = sphi 0, %s37
      %s31 = sphi 0, %s29
      %s32 = sphi 0, %s30
      %s33 = sphi 0, %s31
      %s34 = sphi 0, %s32
      %s46 = sphi 0, %s48
      %s49 = sphi 0, %s46
      %s50 = sphi 0, %s49
      %s66 = sphi 0, %s50
      %s74 = sphi 0, %s76
      %s77 = sphi 0, %s74
      %s78 = sphi 0, %s77
      %s94 = sphi 0, %s78
      %s98 = sphi 0, %s98
      %s100 = sphi 0, %s98
      %s101 = sphi 0, %s100
      %s115 = sphi 0, %s101
      %s119 = sphi 0, %s119
      %s121 = sphi 0, %s119
      %s122 = sphi 0, %s121
      %s136 = sphi 0, %s122
      %s140 = sphi 0, %s140
      %s142 = sphi 0, %s140
      %s143 = sphi 0, %s142
      %s157 = sphi 0, %s143
      %s161 = sphi 0, %s161
      %s163 = sphi 0, %s161
      %s164 = sphi 0, %s163
      %s178 = sphi 0, %s164
      %s182 = sphi 0, %s182
      %s184 = sphi 0, %s182
      %s185 = sphi 0, %s184
      %s199 = sphi 0, %s185
      %s207 = sphi 0, %s209
      %s210 = sphi 0, %s207
      %s211 = sphi 0, %s210
      %s227 = sphi 0, %s211
    $region4: #{tpu_custom_call.1} parent=1 // loop_header_branch
      %25 = sbr.rel (%p23) target = $region8
    $region5: #{tpu_custom_call.1} parent=1 // loop_body
      %s27 = ssub.s32 %s22, 1
      %s28 = ssub.s32 %s22, 2
      %s35 = sadd.s32 1, %s30
      %p36 = scmp.ge.s32.totalorder %s35, 1
      %s37 = scalar_select %p36, 0, %s35
      %s38 = sadd.s32 1, %s29
      %s39 = scalar_select %p36, %s38, %s29
      %p40 = scmp.ge.s32.totalorder %s39, 2
      %s41 = scalar_select %p40, 0, %s39
      %s42 = ssub.s32 %s29, %s41
      %s43 = ssub.s32 %s30, %s37
      %s44 = sor.u32 %s42, %s43
      %p45 = scmp.eq.s32.totalorder %s44, 0
      %s47 = sadd.s32 %s46, 1
      %s48 = scalar_select %p45, %s46, %s47
      %p51 = pneg %p45
      %p52 = scmp.eq.s32.totalorder %s22, 1
      %p53 = por %p51, %p52
      %p54 = scmp.ne.s32.totalorder %s46, %s49
      %p55 = scmp.eq.s32.totalorder %s22, 0
      %p56 = por %p54, %p55
      %p57 = scmp.ne.s32.totalorder %s46, %s49
      %p58 = scmp.eq.s32.totalorder %s27, 1
      %p59 = por %p57, %p58
      %p60 = scmp.ne.s32.totalorder %s49, %s50
      %p61 = scmp.eq.s32.totalorder %s27, 0
      %p62 = por %p60, %p61
      %p63 = scmp.ne.s32.totalorder %s49, %s50
      %p64 = scmp.eq.s32.totalorder %s28, 1
      %p65 = por %p63, %p64
      %p67 = scmp.ne.s32.totalorder %s50, %s66
      %p68 = scmp.eq.s32.totalorder %s28, 0
      %p69 = por %p67, %p68
      %s70 = ssub.s32 %s29, %s41
      %s71 = ssub.s32 %s30, %s37
      %s72 = sor.u32 %s70, %s71
      %p73 = scmp.eq.s32.totalorder %s72, 0
      %s75 = sadd.s32 %s74, 1
      %s76 = scalar_select %p73, %s74, %s75
      %p79 = pneg %p73
      %p80 = scmp.eq.s32.totalorder %s22, 1
      %p81 = por %p79, %p80
      %p82 = scmp.ne.s32.totalorder %s74, %s77
      %p83 = scmp.eq.s32.totalorder %s22, 0
      %p84 = por %p82, %p83
      %p85 = scmp.ne.s32.totalorder %s74, %s77
      %p86 = scmp.eq.s32.totalorder %s27, 1
      %p87 = por %p85, %p86
      %p88 = scmp.ne.s32.totalorder %s77, %s78
      %p89 = scmp.eq.s32.totalorder %s27, 0
      %p90 = por %p88, %p89
      %p91 = scmp.ne.s32.totalorder %s77, %s78
      %p92 = scmp.eq.s32.totalorder %s28, 1
      %p93 = por %p91, %p92
      %p95 = scmp.ne.s32.totalorder %s78, %s94
      %p96 = scmp.eq.s32.totalorder %s28, 0
      %p97 = por %p95, %p96
      %s99 = sadd.s32 %s98, 1
      %p102 = scmp.eq.s32.totalorder %s22, 1
      %p103 = scmp.ne.s32.totalorder %s98, %s100
      %p104 = scmp.eq.s32.totalorder %s22, 0
      %p105 = por %p103, %p104
      %p106 = scmp.ne.s32.totalorder %s98, %s100
      %p107 = scmp.eq.s32.totalorder %s27, 1
      %p108 = por %p106, %p107
      %p109 = scmp.ne.s32.totalorder %s100, %s101
      %p110 = scmp.eq.s32.totalorder %s27, 0
      %p111 = por %p109, %p110
      %p112 = scmp.ne.s32.totalorder %s100, %s101
      %p113 = scmp.eq.s32.totalorder %s28, 1
      %p114 = por %p112, %p113
      %p116 = scmp.ne.s32.totalorder %s101, %s115
      %p117 = scmp.eq.s32.totalorder %s28, 0
      %p118 = por %p116, %p117
      %s120 = sadd.s32 %s119, 1
      %p123 = scmp.eq.s32.totalorder %s22, 1
      %p124 = scmp.ne.s32.totalorder %s119, %s121
      %p125 = scmp.eq.s32.totalorder %s22, 0
      %p126 = por %p124, %p125
      %p127 = scmp.ne.s32.totalorder %s119, %s121
      %p128 = scmp.eq.s32.totalorder %s27, 1
      %p129 = por %p127, %p128
      %p130 = scmp.ne.s32.totalorder %s121, %s122
      %p131 = scmp.eq.s32.totalorder %s27, 0
      %p132 = por %p130, %p131
      %p133 = scmp.ne.s32.totalorder %s121, %s122
      %p134 = scmp.eq.s32.totalorder %s28, 1
      %p135 = por %p133, %p134
      %p137 = scmp.ne.s32.totalorder %s122, %s136
      %p138 = scmp.eq.s32.totalorder %s28, 0
      %p139 = por %p137, %p138
      %s141 = sadd.s32 %s140, 1
      %p144 = scmp.eq.s32.totalorder %s22, 1
      %p145 = scmp.ne.s32.totalorder %s140, %s142
      %p146 = scmp.eq.s32.totalorder %s22, 0
      %p147 = por %p145, %p146
      %p148 = scmp.ne.s32.totalorder %s140, %s142
      %p149 = scmp.eq.s32.totalorder %s27, 1
      %p150 = por %p148, %p149
      %p151 = scmp.ne.s32.totalorder %s142, %s143
      %p152 = scmp.eq.s32.totalorder %s27, 0
      %p153 = por %p151, %p152
      %p154 = scmp.ne.s32.totalorder %s142, %s143
      %p155 = scmp.eq.s32.totalorder %s28, 1
      %p156 = por %p154, %p155
      %p158 = scmp.ne.s32.totalorder %s143, %s157
      %p159 = scmp.eq.s32.totalorder %s28, 0
      %p160 = por %p158, %p159
      %s162 = sadd.s32 %s161, 1
      %p165 = scmp.eq.s32.totalorder %s22, 1
      %p166 = scmp.ne.s32.totalorder %s161, %s163
      %p167 = scmp.eq.s32.totalorder %s22, 0
      %p168 = por %p166, %p167
      %p169 = scmp.ne.s32.totalorder %s161, %s163
      %p170 = scmp.eq.s32.totalorder %s27, 1
      %p171 = por %p169, %p170
      %p172 = scmp.ne.s32.totalorder %s163, %s164
      %p173 = scmp.eq.s32.totalorder %s27, 0
      %p174 = por %p172, %p173
      %p175 = scmp.ne.s32.totalorder %s163, %s164
      %p176 = scmp.eq.s32.totalorder %s28, 1
      %p177 = por %p175, %p176
      %p179 = scmp.ne.s32.totalorder %s164, %s178
      %p180 = scmp.eq.s32.totalorder %s28, 0
      %p181 = por %p179, %p180
      %s183 = sadd.s32 %s182, 1
      %p186 = scmp.eq.s32.totalorder %s22, 1
      %p187 = scmp.ne.s32.totalorder %s182, %s184
      %p188 = scmp.eq.s32.totalorder %s22, 0
      %p189 = por %p187, %p188
      %p190 = scmp.ne.s32.totalorder %s182, %s184
      %p191 = scmp.eq.s32.totalorder %s27, 1
      %p192 = por %p190, %p191
      %p193 = scmp.ne.s32.totalorder %s184, %s185
      %p194 = scmp.eq.s32.totalorder %s27, 0
      %p195 = por %p193, %p194
      %p196 = scmp.ne.s32.totalorder %s184, %s185
      %p197 = scmp.eq.s32.totalorder %s28, 1
      %p198 = por %p196, %p197
      %p200 = scmp.ne.s32.totalorder %s185, %s199
      %p201 = scmp.eq.s32.totalorder %s28, 0
      %p202 = por %p200, %p201
      %s203 = ssub.s32 %s29, %s41
      %s204 = ssub.s32 %s30, %s37
      %s205 = sor.u32 %s203, %s204
      %p206 = scmp.eq.s32.totalorder %s205, 0
      %s208 = sadd.s32 %s207, 1
      %s209 = scalar_select %p206, %s207, %s208
      %p212 = pneg %p206
      %p213 = scmp.eq.s32.totalorder %s22, 1
      %p214 = por %p212, %p213
      %p215 = scmp.ne.s32.totalorder %s207, %s210
      %p216 = scmp.eq.s32.totalorder %s22, 0
      %p217 = por %p215, %p216
      %p218 = scmp.ne.s32.totalorder %s207, %s210
      %p219 = scmp.eq.s32.totalorder %s27, 1
      %p220 = por %p218, %p219
      %p221 = scmp.ne.s32.totalorder %s210, %s211
      %p222 = scmp.eq.s32.totalorder %s27, 0
      %p223 = por %p221, %p222
      %p224 = scmp.ne.s32.totalorder %s210, %s211
      %p225 = scmp.eq.s32.totalorder %s28, 1
      %p226 = por %p224, %p225
      %p228 = scmp.ne.s32.totalorder %s211, %s227
      %p229 = scmp.eq.s32.totalorder %s28, 0
      %p230 = por %p228, %p229
      %p231 = scmp.le.s32.totalorder 1, %s22
      %p232 = scmp.lt.s32.totalorder %s22, 3
      %p233 = pnand %p231, %p232
      %p234 = pneg %p233
      // Predicated region
      $region9: #{tpu_custom_call.1} parent=5 // pred_check
        _
      $region10: #{tpu_custom_call.1} parent=5 // pred_check_branch
        %236 = sbr.rel (%p233) target = $region12
      $region11: #{tpu_custom_call.1} parent=5 // pred_region
        %s237 = ssub.s32 %s22, 1
        // Predicated region
        $region13: #{tpu_custom_call.1} parent=11 // pred_check
          %p238 = pneg %p111
        $region14: #{tpu_custom_call.1} parent=11 // pred_check_branch
          %240 = sbr.rel (%p238) target = $region16
        $region15: #{tpu_custom_call.1} parent=11 // pred_region
          _
        $region16: #{tpu_custom_call.1} parent=11 // pred_fallthru
          _
        // Predicated region
        $region17: #{tpu_custom_call.1} parent=11 // pred_check
          %p241 = pneg %p132
        $region18: #{tpu_custom_call.1} parent=11 // pred_check_branch
          %243 = sbr.rel (%p241) target = $region20
        $region19: #{tpu_custom_call.1} parent=11 // pred_region
          _
        $region20: #{tpu_custom_call.1} parent=11 // pred_fallthru
          _
        // Predicated region
        $region21: #{tpu_custom_call.1} parent=11 // pred_check
          %p244 = pneg %p153
        $region22: #{tpu_custom_call.1} parent=11 // pred_check_branch
          %246 = sbr.rel (%p244) target = $region24
        $region23: #{tpu_custom_call.1} parent=11 // pred_region
          _
        $region24: #{tpu_custom_call.1} parent=11 // pred_fallthru
          _
        // Predicated region
        $region25: #{tpu_custom_call.1} parent=11 // pred_check
          %p247 = pneg %p174
        $region26: #{tpu_custom_call.1} parent=11 // pred_check_branch
          %249 = sbr.rel (%p247) target = $region28
        $region27: #{tpu_custom_call.1} parent=11 // pred_region
          _
        $region28: #{tpu_custom_call.1} parent=11 // pred_fallthru
          _
        // Predicated region
        $region29: #{tpu_custom_call.1} parent=11 // pred_check
          %p250 = pneg %p195
        $region30: #{tpu_custom_call.1} parent=11 // pred_check_branch
          %252 = sbr.rel (%p250) target = $region32
        $region31: #{tpu_custom_call.1} parent=11 // pred_region
          _
        $region32: #{tpu_custom_call.1} parent=11 // pred_fallthru
          _
      $region12: #{tpu_custom_call.1} parent=5 // pred_fallthru
        _
      %p253 = scmp.lt.s32.totalorder %s22, 2
      // Predicated region
      $region33: #{tpu_custom_call.1} parent=5 // pred_check
        %p254 = pneg %p253
      $region34: #{tpu_custom_call.1} parent=5 // pred_check_branch
        %256 = sbr.rel (%p254) target = $region36
      $region35: #{tpu_custom_call.1} parent=5 // pred_region
        // Predicated region
        $region37: #{tpu_custom_call.1} parent=35 // pred_check
          %p257 = pneg %p56
        $region38: #{tpu_custom_call.1} parent=35 // pred_check_branch
          %259 = sbr.rel (%p257) target = $region40
        $region39: #{tpu_custom_call.1} parent=35 // pred_region
          %s260 = sand.u32 %s46, 1
          %s261 = scalar_lea.sflag [#allocation3], %s260
          %s262 = sand.u32 %s46, 1
          %s263 = smul.addr %s262, 256
          %s264 = scalar_lea.vmem [#allocation2], %s263
          %266 = vsyncadd %s261, 0
          %s267 = smul.addr %s29, 32
          %s268 = sadd.s32 %s30, %s267
          %s269 = smul.addr %s268, 8
          %s270 = scalar_lea.hbm %s0, %s269
          %s271 = sshll.u32 %s270, 4
          %s272 = int_to_ptr.hbm [resolvable:$true] %s271
          %s273 = sshll.u32 %s264, 4
          %s274 = int_to_ptr.vmem [resolvable:$true] %s273
          %279 = dma.hbm_to_vmem [thread:$0]  %s272, 4096, %s274, %s261, 128, 128, 8
        $region40: #{tpu_custom_call.1} parent=35 // pred_fallthru
          _
        // Predicated region
        $region41: #{tpu_custom_call.1} parent=35 // pred_check
          %p280 = pneg %p84
        $region42: #{tpu_custom_call.1} parent=35 // pred_check_branch
          %282 = sbr.rel (%p280) target = $region44
        $region43: #{tpu_custom_call.1} parent=35 // pred_region
          %s283 = sand.u32 %s74, 1
          %s284 = scalar_lea.sflag [#allocation6], %s283
          %s285 = sand.u32 %s74, 1
          %s286 = smul.addr %s285, 256
          %s287 = scalar_lea.vmem [#allocation5], %s286
          %289 = vsyncadd %s284, 0
          %s290 = smul.addr %s29, 32
          %s291 = sadd.s32 %s30, %s290
          %s292 = smul.addr %s291, 8
          %s293 = scalar_lea.hbm %s1, %s292
          %s294 = sshll.u32 %s293, 4
          %s295 = int_to_ptr.hbm [resolvable:$true] %s294
          %s296 = sshll.u32 %s287, 4
          %s297 = int_to_ptr.vmem [resolvable:$true] %s296
          %302 = dma.hbm_to_vmem [thread:$0]  %s295, 4096, %s297, %s284, 128, 128, 8
        $region44: #{tpu_custom_call.1} parent=35 // pred_fallthru
          _
      $region36: #{tpu_custom_call.1} parent=5 // pred_fallthru
        _
      %p303 = scmp.le.s32.totalorder 1, %s22
      %p304 = scmp.lt.s32.totalorder %s22, 3
      %p305 = pnand %p303, %p304
      %p306 = pneg %p305
      // Predicated region
      $region45: #{tpu_custom_call.1} parent=5 // pred_check
        _
      $region46: #{tpu_custom_call.1} parent=5 // pred_check_branch
        %308 = sbr.rel (%p305) target = $region48
      $region47: #{tpu_custom_call.1} parent=5 // pred_region
        %s309 = ssub.s32 %s22, 1
        %s310 = sand.u32 %s49, 1
        %s311 = scalar_lea.sflag [#allocation3], %s310
        %s312 = sand.u32 %s49, 1
        %s313 = smul.addr %s312, 256
        %s314 = scalar_lea.vmem [#allocation2], %s313
        // Predicated region
        $region49: #{tpu_custom_call.1} parent=47 // pred_check
          %p315 = pneg %p62
        $region50: #{tpu_custom_call.1} parent=47 // pred_check_branch
          %317 = sbr.rel (%p315) target = $region52
        $region51: #{tpu_custom_call.1} parent=47 // pred_region
          %319 = dma.done %s311, 4096
        $region52: #{tpu_custom_call.1} parent=47 // pred_fallthru
          _
        %s320 = sand.u32 %s77, 1
        %s321 = scalar_lea.sflag [#allocation6], %s320
        %s322 = sand.u32 %s77, 1
        %s323 = smul.addr %s322, 256
        %s324 = scalar_lea.vmem [#allocation5], %s323
        // Predicated region
        $region53: #{tpu_custom_call.1} parent=47 // pred_check
          %p325 = pneg %p90
        $region54: #{tpu_custom_call.1} parent=47 // pred_check_branch
          %327 = sbr.rel (%p325) target = $region56
        $region55: #{tpu_custom_call.1} parent=47 // pred_region
          %329 = dma.done %s321, 4096
        $region56: #{tpu_custom_call.1} parent=47 // pred_fallthru
          _
        %s330 = sand.u32 %s49, 1
        %s331 = scalar_lea.sflag [#allocation3], %s330
        %s332 = sand.u32 %s49, 1
        %s333 = smul.addr %s332, 256
        %s334 = scalar_lea.vmem [#allocation2], %s333
        %p335 = pneg %p62
        %p336 = pneg %p59
        %s337 = sand.u32 %s77, 1
        %s338 = scalar_lea.sflag [#allocation6], %s337
        %s339 = sand.u32 %s77, 1
        %s340 = smul.addr %s339, 256
        %s341 = scalar_lea.vmem [#allocation5], %s340
        %p342 = pneg %p90
        %p343 = pneg %p87
        %p344 = pneg %p111
        %p345 = pneg %p108
        %p346 = pneg %p132
        %p347 = pneg %p129
        %p348 = pneg %p153
        %p349 = pneg %p150
        %p350 = pneg %p174
        %p351 = pneg %p171
        %p352 = pneg %p195
        %p353 = pneg %p192
        %p354 = pneg %p223
        %p355 = pneg %p220
        %s356 = sand.u32 %s210, 1
        %s357 = scalar_lea.sflag [#allocation4], %s356
        %s358 = sand.u32 %s210, 1
        %s359 = smul.addr %s358, 256
        %s360 = scalar_lea.vmem [#allocation7], %s359
        %v362 = vld [vmem:[%s6] sm:$0xff]
        %v363 = vld [vmem:[%s6 + $0x8] sm:$0xff]
        %v364 = vld [vmem:[%s6 + $0x10] sm:$0xff]
        %v365 = vld [vmem:[%s6 + $0x18] sm:$0xff]
        %v366 = vld [vmem:[%s6 + $0x20] sm:$0xff]
        %v367 = vld [vmem:[%s6 + $0x28] sm:$0xff]
        %v368 = vld [vmem:[%s6 + $0x30] sm:$0xff]
        %v369 = vld [vmem:[%s6 + $0x38] sm:$0xff]
        %v370 = vld [vmem:[%s314] ss:$8 sm:$0xf]
        %v371 = vld [vmem:[%s314] ss:$8 sm:$0xf0]
        %v372 = vor.u32 %v370, %v371
        %s373 = scalar_lea.vmem %s314, 64 [#allocation2]
        %v374 = vld [vmem:[%s373] ss:$8 sm:$0xf]
        %v375 = vld [vmem:[%s373] ss:$8 sm:$0xf0]
        %v376 = vor.u32 %v374, %v375
        %s377 = scalar_lea.vmem %s314, 128 [#allocation2]
        %v378 = vld [vmem:[%s377] ss:$8 sm:$0xf]
        %v379 = vld [vmem:[%s377] ss:$8 sm:$0xf0]
        %v380 = vor.u32 %v378, %v379
        %s381 = scalar_lea.vmem %s314, 192 [#allocation2]
        %v382 = vld [vmem:[%s381] ss:$8 sm:$0xf]
        %v383 = vld [vmem:[%s381] ss:$8 sm:$0xf0]
        %v384 = vor.u32 %v382, %v383
        %s385 = scalar_lea.vmem %s314, 1 [#allocation2]
        %v386 = vld [vmem:[%s385] ss:$8 sm:$0xf]
        %v387 = vld [vmem:[%s385] ss:$8 sm:$0xf0]
        %v388 = vor.u32 %v386, %v387
        %s389 = scalar_lea.vmem %s314, 65 [#allocation2]
        %v390 = vld [vmem:[%s389] ss:$8 sm:$0xf]
        %v391 = vld [vmem:[%s389] ss:$8 sm:$0xf0]
        %v392 = vor.u32 %v390, %v391
        %s393 = scalar_lea.vmem %s314, 129 [#allocation2]
        %v394 = vld [vmem:[%s393] ss:$8 sm:$0xf]
        %v395 = vld [vmem:[%s393] ss:$8 sm:$0xf0]
        %v396 = vor.u32 %v394, %v395
        %s397 = scalar_lea.vmem %s314, 193 [#allocation2]
        %v398 = vld [vmem:[%s397] ss:$8 sm:$0xf]
        %v399 = vld [vmem:[%s397] ss:$8 sm:$0xf0]
        %v400 = vor.u32 %v398, %v399
        %s401 = scalar_lea.vmem %s314, 2 [#allocation2]
        %v402 = vld [vmem:[%s401] ss:$8 sm:$0xf]
        %v403 = vld [vmem:[%s401] ss:$8 sm:$0xf0]
        %v404 = vor.u32 %v402, %v403
        %s405 = scalar_lea.vmem %s314, 66 [#allocation2]
        %v406 = vld [vmem:[%s405] ss:$8 sm:$0xf]
        %v407 = vld [vmem:[%s405] ss:$8 sm:$0xf0]
        %v408 = vor.u32 %v406, %v407
        %s409 = scalar_lea.vmem %s314, 130 [#allocation2]
        %v410 = vld [vmem:[%s409] ss:$8 sm:$0xf]
        %v411 = vld [vmem:[%s409] ss:$8 sm:$0xf0]
        %v412 = vor.u32 %v410, %v411
        %s413 = scalar_lea.vmem %s314, 194 [#allocation2]
        %v414 = vld [vmem:[%s413] ss:$8 sm:$0xf]
        %v415 = vld [vmem:[%s413] ss:$8 sm:$0xf0]
        %v416 = vor.u32 %v414, %v415
        %s417 = scalar_lea.vmem %s314, 3 [#allocation2]
        %v418 = vld [vmem:[%s417] ss:$8 sm:$0xf]
        %v419 = vld [vmem:[%s417] ss:$8 sm:$0xf0]
        %v420 = vor.u32 %v418, %v419
        %s421 = scalar_lea.vmem %s314, 67 [#allocation2]
        %v422 = vld [vmem:[%s421] ss:$8 sm:$0xf]
        %v423 = vld [vmem:[%s421] ss:$8 sm:$0xf0]
        %v424 = vor.u32 %v422, %v423
        %s425 = scalar_lea.vmem %s314, 131 [#allocation2]
        %v426 = vld [vmem:[%s425] ss:$8 sm:$0xf]
        %v427 = vld [vmem:[%s425] ss:$8 sm:$0xf0]
        %v428 = vor.u32 %v426, %v427
        %s429 = scalar_lea.vmem %s314, 195 [#allocation2]
        %v430 = vld [vmem:[%s429] ss:$8 sm:$0xf]
        %v431 = vld [vmem:[%s429] ss:$8 sm:$0xf0]
        %v432 = vor.u32 %v430, %v431
        %s433 = scalar_lea.vmem %s314, 4 [#allocation2]
        %v434 = vld [vmem:[%s433] ss:$8 sm:$0xf]
        %v435 = vld [vmem:[%s433] ss:$8 sm:$0xf0]
        %v436 = vor.u32 %v434, %v435
        %s437 = scalar_lea.vmem %s314, 68 [#allocation2]
        %v438 = vld [vmem:[%s437] ss:$8 sm:$0xf]
        %v439 = vld [vmem:[%s437] ss:$8 sm:$0xf0]
        %v440 = vor.u32 %v438, %v439
        %s441 = scalar_lea.vmem %s314, 132 [#allocation2]
        %v442 = vld [vmem:[%s441] ss:$8 sm:$0xf]
        %v443 = vld [vmem:[%s441] ss:$8 sm:$0xf0]
        %v444 = vor.u32 %v442, %v443
        %s445 = scalar_lea.vmem %s314, 196 [#allocation2]
        %v446 = vld [vmem:[%s445] ss:$8 sm:$0xf]
        %v447 = vld [vmem:[%s445] ss:$8 sm:$0xf0]
        %v448 = vor.u32 %v446, %v447
        %s449 = scalar_lea.vmem %s314, 5 [#allocation2]
        %v450 = vld [vmem:[%s449] ss:$8 sm:$0xf]
        %v451 = vld [vmem:[%s449] ss:$8 sm:$0xf0]
        %v452 = vor.u32 %v450, %v451
        %s453 = scalar_lea.vmem %s314, 69 [#allocation2]
        %v454 = vld [vmem:[%s453] ss:$8 sm:$0xf]
        %v455 = vld [vmem:[%s453] ss:$8 sm:$0xf0]
        %v456 = vor.u32 %v454, %v455
        %s457 = scalar_lea.vmem %s314, 133 [#allocation2]
        %v458 = vld [vmem:[%s457] ss:$8 sm:$0xf]
        %v459 = vld [vmem:[%s457] ss:$8 sm:$0xf0]
        %v460 = vor.u32 %v458, %v459
        %s461 = scalar_lea.vmem %s314, 197 [#allocation2]
        %v462 = vld [vmem:[%s461] ss:$8 sm:$0xf]
        %v463 = vld [vmem:[%s461] ss:$8 sm:$0xf0]
        %v464 = vor.u32 %v462, %v463
        %s465 = scalar_lea.vmem %s314, 6 [#allocation2]
        %v466 = vld [vmem:[%s465] ss:$8 sm:$0xf]
        %v467 = vld [vmem:[%s465] ss:$8 sm:$0xf0]
        %v468 = vor.u32 %v466, %v467
        %s469 = scalar_lea.vmem %s314, 70 [#allocation2]
        %v470 = vld [vmem:[%s469] ss:$8 sm:$0xf]
        %v471 = vld [vmem:[%s469] ss:$8 sm:$0xf0]
        %v472 = vor.u32 %v470, %v471
        %s473 = scalar_lea.vmem %s314, 134 [#allocation2]
        %v474 = vld [vmem:[%s473] ss:$8 sm:$0xf]
        %v475 = vld [vmem:[%s473] ss:$8 sm:$0xf0]
        %v476 = vor.u32 %v474, %v475
        %s477 = scalar_lea.vmem %s314, 198 [#allocation2]
        %v478 = vld [vmem:[%s477] ss:$8 sm:$0xf]
        %v479 = vld [vmem:[%s477] ss:$8 sm:$0xf0]
        %v480 = vor.u32 %v478, %v479
        %s481 = scalar_lea.vmem %s314, 7 [#allocation2]
        %v482 = vld [vmem:[%s481] ss:$8 sm:$0xf]
        %v483 = vld [vmem:[%s481] ss:$8 sm:$0xf0]
        %v484 = vor.u32 %v482, %v483
        %s485 = scalar_lea.vmem %s314, 71 [#allocation2]
        %v486 = vld [vmem:[%s485] ss:$8 sm:$0xf]
        %v487 = vld [vmem:[%s485] ss:$8 sm:$0xf0]
        %v488 = vor.u32 %v486, %v487
        %s489 = scalar_lea.vmem %s314, 135 [#allocation2]
        %v490 = vld [vmem:[%s489] ss:$8 sm:$0xf]
        %v491 = vld [vmem:[%s489] ss:$8 sm:$0xf0]
        %v492 = vor.u32 %v490, %v491
        %s493 = scalar_lea.vmem %s314, 199 [#allocation2]
        %v494 = vld [vmem:[%s493] ss:$8 sm:$0xf]
        %v495 = vld [vmem:[%s493] ss:$8 sm:$0xf0]
        %v496 = vor.u32 %v494, %v495
        %v529 = vld [vmem:[%s324] ss:$8 sm:$0xf]
        %v530 = vld [vmem:[%s324] ss:$8 sm:$0xf0]
        %v531 = vor.u32 %v529, %v530
        %s532 = scalar_lea.vmem %s324, 64 [#allocation5]
        %v533 = vld [vmem:[%s532] ss:$8 sm:$0xf]
        %v534 = vld [vmem:[%s532] ss:$8 sm:$0xf0]
        %v535 = vor.u32 %v533, %v534
        %s536 = scalar_lea.vmem %s324, 128 [#allocation5]
        %v537 = vld [vmem:[%s536] ss:$8 sm:$0xf]
        %v538 = vld [vmem:[%s536] ss:$8 sm:$0xf0]
        %v539 = vor.u32 %v537, %v538
        %s540 = scalar_lea.vmem %s324, 192 [#allocation5]
        %v541 = vld [vmem:[%s540] ss:$8 sm:$0xf]
        %v542 = vld [vmem:[%s540] ss:$8 sm:$0xf0]
        %v543 = vor.u32 %v541, %v542
        %s544 = scalar_lea.vmem %s324, 1 [#allocation5]
        %v545 = vld [vmem:[%s544] ss:$8 sm:$0xf]
        %v546 = vld [vmem:[%s544] ss:$8 sm:$0xf0]
        %v547 = vor.u32 %v545, %v546
        %s548 = scalar_lea.vmem %s324, 65 [#allocation5]
        %v549 = vld [vmem:[%s548] ss:$8 sm:$0xf]
        %v550 = vld [vmem:[%s548] ss:$8 sm:$0xf0]
        %v551 = vor.u32 %v549, %v550
        %s552 = scalar_lea.vmem %s324, 129 [#allocation5]
        %v553 = vld [vmem:[%s552] ss:$8 sm:$0xf]
        %v554 = vld [vmem:[%s552] ss:$8 sm:$0xf0]
        %v555 = vor.u32 %v553, %v554
        %s556 = scalar_lea.vmem %s324, 193 [#allocation5]
        %v557 = vld [vmem:[%s556] ss:$8 sm:$0xf]
        %v558 = vld [vmem:[%s556] ss:$8 sm:$0xf0]
        %v559 = vor.u32 %v557, %v558
        %s560 = scalar_lea.vmem %s324, 2 [#allocation5]
        %v561 = vld [vmem:[%s560] ss:$8 sm:$0xf]
        %v562 = vld [vmem:[%s560] ss:$8 sm:$0xf0]
        %v563 = vor.u32 %v561, %v562
        %s564 = scalar_lea.vmem %s324, 66 [#allocation5]
        %v565 = vld [vmem:[%s564] ss:$8 sm:$0xf]
        %v566 = vld [vmem:[%s564] ss:$8 sm:$0xf0]
        %v567 = vor.u32 %v565, %v566
        %s568 = scalar_lea.vmem %s324, 130 [#allocation5]
        %v569 = vld [vmem:[%s568] ss:$8 sm:$0xf]
        %v570 = vld [vmem:[%s568] ss:$8 sm:$0xf0]
        %v571 = vor.u32 %v569, %v570
        %s572 = scalar_lea.vmem %s324, 194 [#allocation5]
        %v573 = vld [vmem:[%s572] ss:$8 sm:$0xf]
        %v574 = vld [vmem:[%s572] ss:$8 sm:$0xf0]
        %v575 = vor.u32 %v573, %v574
        %s576 = scalar_lea.vmem %s324, 3 [#allocation5]
        %v577 = vld [vmem:[%s576] ss:$8 sm:$0xf]
        %v578 = vld [vmem:[%s576] ss:$8 sm:$0xf0]
        %v579 = vor.u32 %v577, %v578
        %s580 = scalar_lea.vmem %s324, 67 [#allocation5]
        %v581 = vld [vmem:[%s580] ss:$8 sm:$0xf]
        %v582 = vld [vmem:[%s580] ss:$8 sm:$0xf0]
        %v583 = vor.u32 %v581, %v582
        %s584 = scalar_lea.vmem %s324, 131 [#allocation5]
        %v585 = vld [vmem:[%s584] ss:$8 sm:$0xf]
        %v586 = vld [vmem:[%s584] ss:$8 sm:$0xf0]
        %v587 = vor.u32 %v585, %v586
        %s588 = scalar_lea.vmem %s324, 195 [#allocation5]
        %v589 = vld [vmem:[%s588] ss:$8 sm:$0xf]
        %v590 = vld [vmem:[%s588] ss:$8 sm:$0xf0]
        %v591 = vor.u32 %v589, %v590
        %s592 = scalar_lea.vmem %s324, 4 [#allocation5]
        %v593 = vld [vmem:[%s592] ss:$8 sm:$0xf]
        %v594 = vld [vmem:[%s592] ss:$8 sm:$0xf0]
        %v595 = vor.u32 %v593, %v594
        %s596 = scalar_lea.vmem %s324, 68 [#allocation5]
        %v597 = vld [vmem:[%s596] ss:$8 sm:$0xf]
        %v598 = vld [vmem:[%s596] ss:$8 sm:$0xf0]
        %v599 = vor.u32 %v597, %v598
        %s600 = scalar_lea.vmem %s324, 132 [#allocation5]
        %v601 = vld [vmem:[%s600] ss:$8 sm:$0xf]
        %v602 = vld [vmem:[%s600] ss:$8 sm:$0xf0]
        %v603 = vor.u32 %v601, %v602
        %s604 = scalar_lea.vmem %s324, 196 [#allocation5]
        %v605 = vld [vmem:[%s604] ss:$8 sm:$0xf]
        %v606 = vld [vmem:[%s604] ss:$8 sm:$0xf0]
        %v607 = vor.u32 %v605, %v606
        %s608 = scalar_lea.vmem %s324, 5 [#allocation5]
        %v609 = vld [vmem:[%s608] ss:$8 sm:$0xf]
        %v610 = vld [vmem:[%s608] ss:$8 sm:$0xf0]
        %v611 = vor.u32 %v609, %v610
        %s612 = scalar_lea.vmem %s324, 69 [#allocation5]
        %v613 = vld [vmem:[%s612] ss:$8 sm:$0xf]
        %v614 = vld [vmem:[%s612] ss:$8 sm:$0xf0]
        %v615 = vor.u32 %v613, %v614
        %s616 = scalar_lea.vmem %s324, 133 [#allocation5]
        %v617 = vld [vmem:[%s616] ss:$8 sm:$0xf]
        %v618 = vld [vmem:[%s616] ss:$8 sm:$0xf0]
        %v619 = vor.u32 %v617, %v618
        %s620 = scalar_lea.vmem %s324, 197 [#allocation5]
        %v621 = vld [vmem:[%s620] ss:$8 sm:$0xf]
        %v622 = vld [vmem:[%s620] ss:$8 sm:$0xf0]
        %v623 = vor.u32 %v621, %v622
        %s624 = scalar_lea.vmem %s324, 6 [#allocation5]
        %v625 = vld [vmem:[%s624] ss:$8 sm:$0xf]
        %v626 = vld [vmem:[%s624] ss:$8 sm:$0xf0]
        %v627 = vor.u32 %v625, %v626
        %s628 = scalar_lea.vmem %s324, 70 [#allocation5]
        %v629 = vld [vmem:[%s628] ss:$8 sm:$0xf]
        %v630 = vld [vmem:[%s628] ss:$8 sm:$0xf0]
        %v631 = vor.u32 %v629, %v630
        %s632 = scalar_lea.vmem %s324, 134 [#allocation5]
        %v633 = vld [vmem:[%s632] ss:$8 sm:$0xf]
        %v634 = vld [vmem:[%s632] ss:$8 sm:$0xf0]
        %v635 = vor.u32 %v633, %v634
        %s636 = scalar_lea.vmem %s324, 198 [#allocation5]
        %v637 = vld [vmem:[%s636] ss:$8 sm:$0xf]
        %v638 = vld [vmem:[%s636] ss:$8 sm:$0xf0]
        %v639 = vor.u32 %v637, %v638
        %s640 = scalar_lea.vmem %s324, 7 [#allocation5]
        %v641 = vld [vmem:[%s640] ss:$8 sm:$0xf]
        %v642 = vld [vmem:[%s640] ss:$8 sm:$0xf0]
        %v643 = vor.u32 %v641, %v642
        %s644 = scalar_lea.vmem %s324, 71 [#allocation5]
        %v645 = vld [vmem:[%s644] ss:$8 sm:$0xf]
        %v646 = vld [vmem:[%s644] ss:$8 sm:$0xf0]
        %v647 = vor.u32 %v645, %v646
        %s648 = scalar_lea.vmem %s324, 135 [#allocation5]
        %v649 = vld [vmem:[%s648] ss:$8 sm:$0xf]
        %v650 = vld [vmem:[%s648] ss:$8 sm:$0xf0]
        %v651 = vor.u32 %v649, %v650
        %s652 = scalar_lea.vmem %s324, 199 [#allocation5]
        %v653 = vld [vmem:[%s652] ss:$8 sm:$0xf]
        %v654 = vld [vmem:[%s652] ss:$8 sm:$0xf0]
        %v655 = vor.u32 %v653, %v654
        %v688 = vld [vmem:[%s2] sm:$0xf]
        %v689 = vld [vmem:[%s2 + $0x4] sm:$0xf]
        %v690 = vld [vmem:[%s2 + $0x8] sm:$0xf]
        %v691 = vld [vmem:[%s2 + $0xc] sm:$0xf]
        %v692 = vld [vmem:[%s2 + $0x10] sm:$0xf]
        %v693 = vld [vmem:[%s2 + $0x14] sm:$0xf]
        %v694 = vld [vmem:[%s2 + $0x18] sm:$0xf]
        %v695 = vld [vmem:[%s2 + $0x1c] sm:$0xf]
        %v696 = vld [vmem:[%s2 + $0x20] sm:$0xf]
        %v697 = vld [vmem:[%s2 + $0x24] sm:$0xf]
        %v698 = vld [vmem:[%s2 + $0x28] sm:$0xf]
        %v699 = vld [vmem:[%s2 + $0x2c] sm:$0xf]
        %v700 = vpack.c.bf16 %v376, %v372
        %v701 = vpack.c.bf16 %v392, %v388
        %v702 = vpack.c.bf16 %v408, %v404
        %v703 = vpack.c.bf16 %v424, %v420
        %v704 = vpack.c.bf16 %v440, %v436
        %v705 = vpack.c.bf16 %v456, %v452
        %v706 = vpack.c.bf16 %v472, %v468
        %v707 = vpack.c.bf16 %v488, %v484
        %v708 = vpack.c.bf16 %v384, %v380
        %v709 = vpack.c.bf16 %v400, %v396
        %v710 = vpack.c.bf16 %v416, %v412
        %v711 = vpack.c.bf16 %v432, %v428
        %v712 = vpack.c.bf16 %v448, %v444
        %v713 = vpack.c.bf16 %v464, %v460
        %v714 = vpack.c.bf16 %v480, %v476
        %v715 = vpack.c.bf16 %v496, %v492
        %v728 = vunpack.c.l.b16 %v688
        %v729 = vunpack.c.l.b16 %v689
        %v730 = vunpack.c.l.b16 %v690
        %v731 = vunpack.c.l.b16 %v691
        %v732 = vunpack.c.l.b16 %v692
        %v733 = vunpack.c.l.b16 %v693
        %v734 = vunpack.c.l.b16 %v694
        %v735 = vunpack.c.l.b16 %v695
        %v736 = vunpack.c.l.b16 %v696
        %v737 = vunpack.c.l.b16 %v697
        %v738 = vunpack.c.l.b16 %v698
        %v739 = vunpack.c.l.b16 %v699
        %v740 = vpack.c.b16 %v729, %v728
        %v741 = vpack.c.b16 %v731, %v730
        %v742 = vpack.c.b16 %v733, %v732
        %v743 = vpack.c.b16 %v735, %v734
        %v744 = vpack.c.b16 %v737, %v736
        %v745 = vpack.c.b16 %v739, %v738
        %vm746 = vcmask 261120
        %v748 = vsel %vm746, %v740, 0
        %v751 = vsel %vm746, %v741, 0
        %v754 = vsel %vm746, %v742, 0
        %v757 = vsel %vm746, %v743, 0
        %v760 = vsel %vm746, %v744, 0
        %v763 = vsel %vm746, %v745, 0
        %765 = vmatpush.bf16.msra.mxu0 0
        %766 = vmatpush.bf16.msra.mxu0 0
        %767 = vmatpush.bf16.msra.mxu0 0
        %768 = vmatpush.bf16.msra.mxu0 0
        %769 = vmatpush.bf16.msra.mxu0 0
        %770 = vmatpush.bf16.msra.mxu0 0
        %771 = vmatpush.bf16.msra.mxu0 %v708
        %772 = vmatpush.bf16.msra.mxu0 %v700
        %773 = vmatmul.bf16.gmra.mxu0 %v748
        %v774 = vpop.f32.mrf.mxu0
        %v775 = vadd.f32 0.0, %v774
        %v776 = vpop.f32.mrf.mxu0
        %v777 = vadd.f32 0.0, %v776
        %778 = vmatmul.bf16.gmra.mxu0 %v751
        %v779 = vpop.f32.mrf.mxu0
        %v780 = vadd.f32 0.0, %v779
        %v781 = vpop.f32.mrf.mxu0
        %v782 = vadd.f32 0.0, %v781
        %783 = vmatmul.bf16.gmra.mxu0 %v754
        %v784 = vpop.f32.mrf.mxu0
        %v785 = vadd.f32 0.0, %v784
        %v786 = vpop.f32.mrf.mxu0
        %v787 = vadd.f32 0.0, %v786
        %788 = vmatmul.bf16.gmra.mxu0 %v757
        %v789 = vpop.f32.mrf.mxu0
        %v790 = vadd.f32 0.0, %v789
        %v791 = vpop.f32.mrf.mxu0
        %v792 = vadd.f32 0.0, %v791
        %793 = vmatmul.bf16.gmra.mxu0 %v760
        %v794 = vpop.f32.mrf.mxu0
        %v795 = vadd.f32 0.0, %v794
        %v796 = vpop.f32.mrf.mxu0
        %v797 = vadd.f32 0.0, %v796
        %798 = vmatmul.bf16.gmra.mxu0 %v763
        %v799 = vpop.f32.mrf.mxu0
        %v800 = vadd.f32 0.0, %v799
        %v801 = vpop.f32.mrf.mxu0
        %v802 = vadd.f32 0.0, %v801
        %803 = vdwg.mxu0
        %804 = vmatpush.bf16.msra.mxu0 0
        %805 = vmatpush.bf16.msra.mxu0 0
        %806 = vmatpush.bf16.msra.mxu0 0
        %807 = vmatpush.bf16.msra.mxu0 0
        %808 = vmatpush.bf16.msra.mxu0 0
        %809 = vmatpush.bf16.msra.mxu0 0
        %810 = vmatpush.bf16.msra.mxu0 %v709
        %811 = vmatpush.bf16.msra.mxu0 %v701
        %812 = vmatmul.bf16.gmra.mxu0 %v748
        %v813 = vpop.f32.mrf.mxu0
        %v814 = vadd.f32 0.0, %v813
        %v815 = vpop.f32.mrf.mxu0
        %v816 = vadd.f32 0.0, %v815
        %817 = vmatmul.bf16.gmra.mxu0 %v751
        %v818 = vpop.f32.mrf.mxu0
        %v819 = vadd.f32 0.0, %v818
        %v820 = vpop.f32.mrf.mxu0
        %v821 = vadd.f32 0.0, %v820
        %822 = vmatmul.bf16.gmra.mxu0 %v754
        %v823 = vpop.f32.mrf.mxu0
        %v824 = vadd.f32 0.0, %v823
        %v825 = vpop.f32.mrf.mxu0
        %v826 = vadd.f32 0.0, %v825
        %827 = vmatmul.bf16.gmra.mxu0 %v757
        %v828 = vpop.f32.mrf.mxu0
        %v829 = vadd.f32 0.0, %v828
        %v830 = vpop.f32.mrf.mxu0
        %v831 = vadd.f32 0.0, %v830
        %832 = vmatmul.bf16.gmra.mxu0 %v760
        %v833 = vpop.f32.mrf.mxu0
        %v834 = vadd.f32 0.0, %v833
        %v835 = vpop.f32.mrf.mxu0
        %v836 = vadd.f32 0.0, %v835
        %837 = vmatmul.bf16.gmra.mxu0 %v763
        %v838 = vpop.f32.mrf.mxu0
        %v839 = vadd.f32 0.0, %v838
        %v840 = vpop.f32.mrf.mxu0
        %v841 = vadd.f32 0.0, %v840
        %842 = vdwg.mxu0
        %843 = vmatpush.bf16.msra.mxu0 0
        %844 = vmatpush.bf16.msra.mxu0 0
        %845 = vmatpush.bf16.msra.mxu0 0
        %846 = vmatpush.bf16.msra.mxu0 0
        %847 = vmatpush.bf16.msra.mxu0 0
        %848 = vmatpush.bf16.msra.mxu0 0
        %849 = vmatpush.bf16.msra.mxu0 %v710
        %850 = vmatpush.bf16.msra.mxu0 %v702
        %851 = vmatmul.bf16.gmra.mxu0 %v748
        %v852 = vpop.f32.mrf.mxu0
        %v853 = vadd.f32 0.0, %v852
        %v854 = vpop.f32.mrf.mxu0
        %v855 = vadd.f32 0.0, %v854
        %856 = vmatmul.bf16.gmra.mxu0 %v751
        %v857 = vpop.f32.mrf.mxu0
        %v858 = vadd.f32 0.0, %v857
        %v859 = vpop.f32.mrf.mxu0
        %v860 = vadd.f32 0.0, %v859
        %861 = vmatmul.bf16.gmra.mxu0 %v754
        %v862 = vpop.f32.mrf.mxu0
        %v863 = vadd.f32 0.0, %v862
        %v864 = vpop.f32.mrf.mxu0
        %v865 = vadd.f32 0.0, %v864
        %866 = vmatmul.bf16.gmra.mxu0 %v757
        %v867 = vpop.f32.mrf.mxu0
        %v868 = vadd.f32 0.0, %v867
        %v869 = vpop.f32.mrf.mxu0
        %v870 = vadd.f32 0.0, %v869
        %871 = vmatmul.bf16.gmra.mxu0 %v760
        %v872 = vpop.f32.mrf.mxu0
        %v873 = vadd.f32 0.0, %v872
        %v874 = vpop.f32.mrf.mxu0
        %v875 = vadd.f32 0.0, %v874
        %876 = vmatmul.bf16.gmra.mxu0 %v763
        %v877 = vpop.f32.mrf.mxu0
        %v878 = vadd.f32 0.0, %v877
        %v879 = vpop.f32.mrf.mxu0
        %v880 = vadd.f32 0.0, %v879
        %881 = vdwg.mxu0
        %882 = vmatpush.bf16.msra.mxu0 0
        %883 = vmatpush.bf16.msra.mxu0 0
        %884 = vmatpush.bf16.msra.mxu0 0
        %885 = vmatpush.bf16.msra.mxu0 0
        %886 = vmatpush.bf16.msra.mxu0 0
        %887 = vmatpush.bf16.msra.mxu0 0
        %888 = vmatpush.bf16.msra.mxu0 %v711
        %889 = vmatpush.bf16.msra.mxu0 %v703
        %890 = vmatmul.bf16.gmra.mxu0 %v748
        %v891 = vpop.f32.mrf.mxu0
        %v892 = vadd.f32 0.0, %v891
        %v893 = vpop.f32.mrf.mxu0
        %v894 = vadd.f32 0.0, %v893
        %895 = vmatmul.bf16.gmra.mxu0 %v751
        %v896 = vpop.f32.mrf.mxu0
        %v897 = vadd.f32 0.0, %v896
        %v898 = vpop.f32.mrf.mxu0
        %v899 = vadd.f32 0.0, %v898
        %900 = vmatmul.bf16.gmra.mxu0 %v754
        %v901 = vpop.f32.mrf.mxu0
        %v902 = vadd.f32 0.0, %v901
        %v903 = vpop.f32.mrf.mxu0
        %v904 = vadd.f32 0.0, %v903
        %905 = vmatmul.bf16.gmra.mxu0 %v757
        %v906 = vpop.f32.mrf.mxu0
        %v907 = vadd.f32 0.0, %v906
        %v908 = vpop.f32.mrf.mxu0
        %v909 = vadd.f32 0.0, %v908
        %910 = vmatmul.bf16.gmra.mxu0 %v760
        %v911 = vpop.f32.mrf.mxu0
        %v912 = vadd.f32 0.0, %v911
        %v913 = vpop.f32.mrf.mxu0
        %v914 = vadd.f32 0.0, %v913
        %915 = vmatmul.bf16.gmra.mxu0 %v763
        %v916 = vpop.f32.mrf.mxu0
        %v917 = vadd.f32 0.0, %v916
        %v918 = vpop.f32.mrf.mxu0
        %v919 = vadd.f32 0.0, %v918
        %920 = vdwg.mxu0
        %921 = vmatpush.bf16.msra.mxu0 0
        %922 = vmatpush.bf16.msra.mxu0 0
        %923 = vmatpush.bf16.msra.mxu0 0
        %924 = vmatpush.bf16.msra.mxu0 0
        %925 = vmatpush.bf16.msra.mxu0 0
        %926 = vmatpush.bf16.msra.mxu0 0
        %927 = vmatpush.bf16.msra.mxu0 %v712
        %928 = vmatpush.bf16.msra.mxu0 %v704
        %929 = vmatmul.bf16.gmra.mxu0 %v748
        %v930 = vpop.f32.mrf.mxu0
        %v931 = vadd.f32 0.0, %v930
        %v932 = vpop.f32.mrf.mxu0
        %v933 = vadd.f32 0.0, %v932
        %934 = vmatmul.bf16.gmra.mxu0 %v751
        %v935 = vpop.f32.mrf.mxu0
        %v936 = vadd.f32 0.0, %v935
        %v937 = vpop.f32.mrf.mxu0
        %v938 = vadd.f32 0.0, %v937
        %939 = vmatmul.bf16.gmra.mxu0 %v754
        %v940 = vpop.f32.mrf.mxu0
        %v941 = vadd.f32 0.0, %v940
        %v942 = vpop.f32.mrf.mxu0
        %v943 = vadd.f32 0.0, %v942
        %944 = vmatmul.bf16.gmra.mxu0 %v757
        %v945 = vpop.f32.mrf.mxu0
        %v946 = vadd.f32 0.0, %v945
        %v947 = vpop.f32.mrf.mxu0
        %v948 = vadd.f32 0.0, %v947
        %949 = vmatmul.bf16.gmra.mxu0 %v760
        %v950 = vpop.f32.mrf.mxu0
        %v951 = vadd.f32 0.0, %v950
        %v952 = vpop.f32.mrf.mxu0
        %v953 = vadd.f32 0.0, %v952
        %954 = vmatmul.bf16.gmra.mxu0 %v763
        %v955 = vpop.f32.mrf.mxu0
        %v956 = vadd.f32 0.0, %v955
        %v957 = vpop.f32.mrf.mxu0
        %v958 = vadd.f32 0.0, %v957
        %959 = vdwg.mxu0
        %960 = vmatpush.bf16.msra.mxu0 0
        %961 = vmatpush.bf16.msra.mxu0 0
        %962 = vmatpush.bf16.msra.mxu0 0
        %963 = vmatpush.bf16.msra.mxu0 0
        %964 = vmatpush.bf16.msra.mxu0 0
        %965 = vmatpush.bf16.msra.mxu0 0
        %966 = vmatpush.bf16.msra.mxu0 %v713
        %967 = vmatpush.bf16.msra.mxu0 %v705
        %968 = vmatmul.bf16.gmra.mxu0 %v748
        %v969 = vpop.f32.mrf.mxu0
        %v970 = vadd.f32 0.0, %v969
        %v971 = vpop.f32.mrf.mxu0
        %v972 = vadd.f32 0.0, %v971
        %973 = vmatmul.bf16.gmra.mxu0 %v751
        %v974 = vpop.f32.mrf.mxu0
        %v975 = vadd.f32 0.0, %v974
        %v976 = vpop.f32.mrf.mxu0
        %v977 = vadd.f32 0.0, %v976
        %978 = vmatmul.bf16.gmra.mxu0 %v754
        %v979 = vpop.f32.mrf.mxu0
        %v980 = vadd.f32 0.0, %v979
        %v981 = vpop.f32.mrf.mxu0
        %v982 = vadd.f32 0.0, %v981
        %983 = vmatmul.bf16.gmra.mxu0 %v757
        %v984 = vpop.f32.mrf.mxu0
        %v985 = vadd.f32 0.0, %v984
        %v986 = vpop.f32.mrf.mxu0
        %v987 = vadd.f32 0.0, %v986
        %988 = vmatmul.bf16.gmra.mxu0 %v760
        %v989 = vpop.f32.mrf.mxu0
        %v990 = vadd.f32 0.0, %v989
        %v991 = vpop.f32.mrf.mxu0
        %v992 = vadd.f32 0.0, %v991
        %993 = vmatmul.bf16.gmra.mxu0 %v763
        %v994 = vpop.f32.mrf.mxu0
        %v995 = vadd.f32 0.0, %v994
        %v996 = vpop.f32.mrf.mxu0
        %v997 = vadd.f32 0.0, %v996
        %998 = vdwg.mxu0
        %999 = vmatpush.bf16.msra.mxu0 0
        %1000 = vmatpush.bf16.msra.mxu0 0
        %1001 = vmatpush.bf16.msra.mxu0 0
        %1002 = vmatpush.bf16.msra.mxu0 0
        %1003 = vmatpush.bf16.msra.mxu0 0
        %1004 = vmatpush.bf16.msra.mxu0 0
        %1005 = vmatpush.bf16.msra.mxu0 %v714
        %1006 = vmatpush.bf16.msra.mxu0 %v706
        %1007 = vmatmul.bf16.gmra.mxu0 %v748
        %v1008 = vpop.f32.mrf.mxu0
        %v1009 = vadd.f32 0.0, %v1008
        %v1010 = vpop.f32.mrf.mxu0
        %v1011 = vadd.f32 0.0, %v1010
        %1012 = vmatmul.bf16.gmra.mxu0 %v751
        %v1013 = vpop.f32.mrf.mxu0
        %v1014 = vadd.f32 0.0, %v1013
        %v1015 = vpop.f32.mrf.mxu0
        %v1016 = vadd.f32 0.0, %v1015
        %1017 = vmatmul.bf16.gmra.mxu0 %v754
        %v1018 = vpop.f32.mrf.mxu0
        %v1019 = vadd.f32 0.0, %v1018
        %v1020 = vpop.f32.mrf.mxu0
        %v1021 = vadd.f32 0.0, %v1020
        %1022 = vmatmul.bf16.gmra.mxu0 %v757
        %v1023 = vpop.f32.mrf.mxu0
        %v1024 = vadd.f32 0.0, %v1023
        %v1025 = vpop.f32.mrf.mxu0
        %v1026 = vadd.f32 0.0, %v1025
        %1027 = vmatmul.bf16.gmra.mxu0 %v760
        %v1028 = vpop.f32.mrf.mxu0
        %v1029 = vadd.f32 0.0, %v1028
        %v1030 = vpop.f32.mrf.mxu0
        %v1031 = vadd.f32 0.0, %v1030
        %1032 = vmatmul.bf16.gmra.mxu0 %v763
        %v1033 = vpop.f32.mrf.mxu0
        %v1034 = vadd.f32 0.0, %v1033
        %v1035 = vpop.f32.mrf.mxu0
        %v1036 = vadd.f32 0.0, %v1035
        %1037 = vdwg.mxu0
        %1038 = vmatpush.bf16.msra.mxu0 0
        %1039 = vmatpush.bf16.msra.mxu0 0
        %1040 = vmatpush.bf16.msra.mxu0 0
        %1041 = vmatpush.bf16.msra.mxu0 0
        %1042 = vmatpush.bf16.msra.mxu0 0
        %1043 = vmatpush.bf16.msra.mxu0 0
        %1044 = vmatpush.bf16.msra.mxu0 %v715
        %1045 = vmatpush.bf16.msra.mxu0 %v707
        %1046 = vmatmul.bf16.gmra.mxu0 %v748
        %v1047 = vpop.f32.mrf.mxu0
        %v1048 = vadd.f32 0.0, %v1047
        %v1049 = vpop.f32.mrf.mxu0
        %v1050 = vadd.f32 0.0, %v1049
        %1051 = vmatmul.bf16.gmra.mxu0 %v751
        %v1052 = vpop.f32.mrf.mxu0
        %v1053 = vadd.f32 0.0, %v1052
        %v1054 = vpop.f32.mrf.mxu0
        %v1055 = vadd.f32 0.0, %v1054
        %1056 = vmatmul.bf16.gmra.mxu0 %v754
        %v1057 = vpop.f32.mrf.mxu0
        %v1058 = vadd.f32 0.0, %v1057
        %v1059 = vpop.f32.mrf.mxu0
        %v1060 = vadd.f32 0.0, %v1059
        %1061 = vmatmul.bf16.gmra.mxu0 %v757
        %v1062 = vpop.f32.mrf.mxu0
        %v1063 = vadd.f32 0.0, %v1062
        %v1064 = vpop.f32.mrf.mxu0
        %v1065 = vadd.f32 0.0, %v1064
        %1066 = vmatmul.bf16.gmra.mxu0 %v760
        %v1067 = vpop.f32.mrf.mxu0
        %v1068 = vadd.f32 0.0, %v1067
        %v1069 = vpop.f32.mrf.mxu0
        %v1070 = vadd.f32 0.0, %v1069
        %1071 = vmatmul.bf16.gmra.mxu0 %v763
        %v1072 = vpop.f32.mrf.mxu0
        %v1073 = vadd.f32 0.0, %v1072
        %v1074 = vpop.f32.mrf.mxu0
        %v1075 = vadd.f32 0.0, %v1074
        %1076 = vdwg.mxu0
        %v1077 = vrot.slane %v853, 4
        %vm1078 = vcmask 1047556
        %v1079 = vsel %vm1078, %v1077, %v775
        %v1080 = vrot.slane %v775, 4
        %v1081 = vsel %vm1078, %v853, %v1080
        %v1083 = vunpack.c.l.s4 1983009808
        %v1084 = vunpack.c.0.s8 %v1083
        %v1085 = vperm.slane %v1079, %v1084
        %v1087 = vunpack.c.l.s4 1983009808
        %v1088 = vunpack.c.0.s8 %v1087
        %v1089 = vperm.slane %v1081, %v1088
        %v1090 = vrot.slane %v892, 4
        %v1091 = vsel %vm1078, %v1090, %v814
        %v1092 = vrot.slane %v814, 4
        %v1093 = vsel %vm1078, %v892, %v1092
        %v1095 = vunpack.c.l.s4 1983009808
        %v1096 = vunpack.c.0.s8 %v1095
        %v1097 = vperm.slane %v1091, %v1096
        %v1099 = vunpack.c.l.s4 1983009808
        %v1100 = vunpack.c.0.s8 %v1099
        %v1101 = vperm.slane %v1093, %v1100
        %v1102 = vrot.slane %v1009, 4
        %v1103 = vsel %vm1078, %v1102, %v931
        %v1104 = vrot.slane %v931, 4
        %v1105 = vsel %vm1078, %v1009, %v1104
        %v1107 = vunpack.c.l.s4 1983009808
        %v1108 = vunpack.c.0.s8 %v1107
        %v1109 = vperm.slane %v1103, %v1108
        %v1111 = vunpack.c.l.s4 1983009808
        %v1112 = vunpack.c.0.s8 %v1111
        %v1113 = vperm.slane %v1105, %v1112
        %v1114 = vrot.slane %v1048, 4
        %v1115 = vsel %vm1078, %v1114, %v970
        %v1116 = vrot.slane %v970, 4
        %v1117 = vsel %vm1078, %v1048, %v1116
        %v1119 = vunpack.c.l.s4 1983009808
        %v1120 = vunpack.c.0.s8 %v1119
        %v1121 = vperm.slane %v1115, %v1120
        %v1123 = vunpack.c.l.s4 1983009808
        %v1124 = vunpack.c.0.s8 %v1123
        %v1125 = vperm.slane %v1117, %v1124
        %v1126 = vrot.slane %v1097, 4
        %v1127 = vsel %vm1078, %v1126, %v1085
        %v1128 = vrot.slane %v1085, 4
        %v1129 = vsel %vm1078, %v1097, %v1128
        %v1131 = vunpack.c.l.s4 1934713408
        %v1132 = vunpack.c.0.s8 %v1131
        %v1133 = vperm.slane %v1127, %v1132
        %v1135 = vunpack.c.l.s4 1934713408
        %v1136 = vunpack.c.0.s8 %v1135
        %v1137 = vperm.slane %v1129, %v1136
        %v1138 = vrot.slane %v1101, 4
        %v1139 = vsel %vm1078, %v1138, %v1089
        %v1140 = vrot.slane %v1089, 4
        %v1141 = vsel %vm1078, %v1101, %v1140
        %v1143 = vunpack.c.l.s4 1934713408
        %v1144 = vunpack.c.0.s8 %v1143
        %v1145 = vperm.slane %v1139, %v1144
        %v1147 = vunpack.c.l.s4 1934713408
        %v1148 = vunpack.c.0.s8 %v1147
        %v1149 = vperm.slane %v1141, %v1148
        %v1150 = vrot.slane %v1121, 4
        %v1151 = vsel %vm1078, %v1150, %v1109
        %v1152 = vrot.slane %v1109, 4
        %v1153 = vsel %vm1078, %v1121, %v1152
        %v1155 = vunpack.c.l.s4 1934713408
        %v1156 = vunpack.c.0.s8 %v1155
        %v1157 = vperm.slane %v1151, %v1156
        %v1159 = vunpack.c.l.s4 1934713408
        %v1160 = vunpack.c.0.s8 %v1159
        %v1161 = vperm.slane %v1153, %v1160
        %v1162 = vrot.slane %v1125, 4
        %v1163 = vsel %vm1078, %v1162, %v1113
        %v1164 = vrot.slane %v1113, 4
        %v1165 = vsel %vm1078, %v1125, %v1164
        %v1167 = vunpack.c.l.s4 1934713408
        %v1168 = vunpack.c.0.s8 %v1167
        %v1169 = vperm.slane %v1163, %v1168
        %v1171 = vunpack.c.l.s4 1934713408
        %v1172 = vunpack.c.0.s8 %v1171
        %v1173 = vperm.slane %v1165, %v1172
        %v1174 = vrot.slane %v1157, 4
        %v1175 = vsel %vm1078, %v1174, %v1133
        %v1176 = vrot.slane %v1133, 4
        %v1177 = vsel %vm1078, %v1157, %v1176
        %v1178 = vrot.slane %v1161, 4
        %v1179 = vsel %vm1078, %v1178, %v1137
        %v1180 = vrot.slane %v1137, 4
        %v1181 = vsel %vm1078, %v1161, %v1180
        %v1182 = vrot.slane %v1169, 4
        %v1183 = vsel %vm1078, %v1182, %v1145
        %v1184 = vrot.slane %v1145, 4
        %v1185 = vsel %vm1078, %v1169, %v1184
        %v1186 = vrot.slane %v1173, 4
        %v1187 = vsel %vm1078, %v1186, %v1149
        %v1188 = vrot.slane %v1149, 4
        %v1189 = vsel %vm1078, %v1173, %v1188
        %v1190 = vrot.slane %v855, 4
        %v1191 = vsel %vm1078, %v1190, %v777
        %v1192 = vrot.slane %v777, 4
        %v1193 = vsel %vm1078, %v855, %v1192
        %v1195 = vunpack.c.l.s4 1983009808
        %v1196 = vunpack.c.0.s8 %v1195
        %v1197 = vperm.slane %v1191, %v1196
        %v1199 = vunpack.c.l.s4 1983009808
        %v1200 = vunpack.c.0.s8 %v1199
        %v1201 = vperm.slane %v1193, %v1200
        %v1202 = vrot.slane %v894, 4
        %v1203 = vsel %vm1078, %v1202, %v816
        %v1204 = vrot.slane %v816, 4
        %v1205 = vsel %vm1078, %v894, %v1204
        %v1207 = vunpack.c.l.s4 1983009808
        %v1208 = vunpack.c.0.s8 %v1207
        %v1209 = vperm.slane %v1203, %v1208
        %v1211 = vunpack.c.l.s4 1983009808
        %v1212 = vunpack.c.0.s8 %v1211
        %v1213 = vperm.slane %v1205, %v1212
        %v1214 = vrot.slane %v1011, 4
        %v1215 = vsel %vm1078, %v1214, %v933
        %v1216 = vrot.slane %v933, 4
        %v1217 = vsel %vm1078, %v1011, %v1216
        %v1219 = vunpack.c.l.s4 1983009808
        %v1220 = vunpack.c.0.s8 %v1219
        %v1221 = vperm.slane %v1215, %v1220
        %v1223 = vunpack.c.l.s4 1983009808
        %v1224 = vunpack.c.0.s8 %v1223
        %v1225 = vperm.slane %v1217, %v1224
        %v1226 = vrot.slane %v1050, 4
        %v1227 = vsel %vm1078, %v1226, %v972
        %v1228 = vrot.slane %v972, 4
        %v1229 = vsel %vm1078, %v1050, %v1228
        %v1231 = vunpack.c.l.s4 1983009808
        %v1232 = vunpack.c.0.s8 %v1231
        %v1233 = vperm.slane %v1227, %v1232
        %v1235 = vunpack.c.l.s4 1983009808
        %v1236 = vunpack.c.0.s8 %v1235
        %v1237 = vperm.slane %v1229, %v1236
        %v1238 = vrot.slane %v1209, 4
        %v1239 = vsel %vm1078, %v1238, %v1197
        %v1240 = vrot.slane %v1197, 4
        %v1241 = vsel %vm1078, %v1209, %v1240
        %v1243 = vunpack.c.l.s4 1934713408
        %v1244 = vunpack.c.0.s8 %v1243
        %v1245 = vperm.slane %v1239, %v1244
        %v1247 = vunpack.c.l.s4 1934713408
        %v1248 = vunpack.c.0.s8 %v1247
        %v1249 = vperm.slane %v1241, %v1248
        %v1250 = vrot.slane %v1213, 4
        %v1251 = vsel %vm1078, %v1250, %v1201
        %v1252 = vrot.slane %v1201, 4
        %v1253 = vsel %vm1078, %v1213, %v1252
        %v1255 = vunpack.c.l.s4 1934713408
        %v1256 = vunpack.c.0.s8 %v1255
        %v1257 = vperm.slane %v1251, %v1256
        %v1259 = vunpack.c.l.s4 1934713408
        %v1260 = vunpack.c.0.s8 %v1259
        %v1261 = vperm.slane %v1253, %v1260
        %v1262 = vrot.slane %v1233, 4
        %v1263 = vsel %vm1078, %v1262, %v1221
        %v1264 = vrot.slane %v1221, 4
        %v1265 = vsel %vm1078, %v1233, %v1264
        %v1267 = vunpack.c.l.s4 1934713408
        %v1268 = vunpack.c.0.s8 %v1267
        %v1269 = vperm.slane %v1263, %v1268
        %v1271 = vunpack.c.l.s4 1934713408
        %v1272 = vunpack.c.0.s8 %v1271
        %v1273 = vperm.slane %v1265, %v1272
        %v1274 = vrot.slane %v1237, 4
        %v1275 = vsel %vm1078, %v1274, %v1225
        %v1276 = vrot.slane %v1225, 4
        %v1277 = vsel %vm1078, %v1237, %v1276
        %v1279 = vunpack.c.l.s4 1934713408
        %v1280 = vunpack.c.0.s8 %v1279
        %v1281 = vperm.slane %v1275, %v1280
        %v1283 = vunpack.c.l.s4 1934713408
        %v1284 = vunpack.c.0.s8 %v1283
        %v1285 = vperm.slane %v1277, %v1284
        %v1286 = vrot.slane %v1269, 4
        %v1287 = vsel %vm1078, %v1286, %v1245
        %v1288 = vrot.slane %v1245, 4
        %v1289 = vsel %vm1078, %v1269, %v1288
        %v1290 = vrot.slane %v1273, 4
        %v1291 = vsel %vm1078, %v1290, %v1249
        %v1292 = vrot.slane %v1249, 4
        %v1293 = vsel %vm1078, %v1273, %v1292
        %v1294 = vrot.slane %v1281, 4
        %v1295 = vsel %vm1078, %v1294, %v1257
        %v1296 = vrot.slane %v1257, 4
        %v1297 = vsel %vm1078, %v1281, %v1296
        %v1298 = vrot.slane %v1285, 4
        %v1299 = vsel %vm1078, %v1298, %v1261
        %v1300 = vrot.slane %v1261, 4
        %v1301 = vsel %vm1078, %v1285, %v1300
        %v1302 = vrot.slane %v858, 4
        %v1303 = vsel %vm1078, %v1302, %v780
        %v1304 = vrot.slane %v780, 4
        %v1305 = vsel %vm1078, %v858, %v1304
        %v1307 = vunpack.c.l.s4 1983009808
        %v1308 = vunpack.c.0.s8 %v1307
        %v1309 = vperm.slane %v1303, %v1308
        %v1311 = vunpack.c.l.s4 1983009808
        %v1312 = vunpack.c.0.s8 %v1311
        %v1313 = vperm.slane %v1305, %v1312
        %v1314 = vrot.slane %v897, 4
        %v1315 = vsel %vm1078, %v1314, %v819
        %v1316 = vrot.slane %v819, 4
        %v1317 = vsel %vm1078, %v897, %v1316
        %v1319 = vunpack.c.l.s4 1983009808
        %v1320 = vunpack.c.0.s8 %v1319
        %v1321 = vperm.slane %v1315, %v1320
        %v1323 = vunpack.c.l.s4 1983009808
        %v1324 = vunpack.c.0.s8 %v1323
        %v1325 = vperm.slane %v1317, %v1324
        %v1326 = vrot.slane %v1014, 4
        %v1327 = vsel %vm1078, %v1326, %v936
        %v1328 = vrot.slane %v936, 4
        %v1329 = vsel %vm1078, %v1014, %v1328
        %v1331 = vunpack.c.l.s4 1983009808
        %v1332 = vunpack.c.0.s8 %v1331
        %v1333 = vperm.slane %v1327, %v1332
        %v1335 = vunpack.c.l.s4 1983009808
        %v1336 = vunpack.c.0.s8 %v1335
        %v1337 = vperm.slane %v1329, %v1336
        %v1338 = vrot.slane %v1053, 4
        %v1339 = vsel %vm1078, %v1338, %v975
        %v1340 = vrot.slane %v975, 4
        %v1341 = vsel %vm1078, %v1053, %v1340
        %v1343 = vunpack.c.l.s4 1983009808
        %v1344 = vunpack.c.0.s8 %v1343
        %v1345 = vperm.slane %v1339, %v1344
        %v1347 = vunpack.c.l.s4 1983009808
        %v1348 = vunpack.c.0.s8 %v1347
        %v1349 = vperm.slane %v1341, %v1348
        %v1350 = vrot.slane %v1321, 4
        %v1351 = vsel %vm1078, %v1350, %v1309
        %v1352 = vrot.slane %v1309, 4
        %v1353 = vsel %vm1078, %v1321, %v1352
        %v1355 = vunpack.c.l.s4 1934713408
        %v1356 = vunpack.c.0.s8 %v1355
        %v1357 = vperm.slane %v1351, %v1356
        %v1359 = vunpack.c.l.s4 1934713408
        %v1360 = vunpack.c.0.s8 %v1359
        %v1361 = vperm.slane %v1353, %v1360
        %v1362 = vrot.slane %v1325, 4
        %v1363 = vsel %vm1078, %v1362, %v1313
        %v1364 = vrot.slane %v1313, 4
        %v1365 = vsel %vm1078, %v1325, %v1364
        %v1367 = vunpack.c.l.s4 1934713408
        %v1368 = vunpack.c.0.s8 %v1367
        %v1369 = vperm.slane %v1363, %v1368
        %v1371 = vunpack.c.l.s4 1934713408
        %v1372 = vunpack.c.0.s8 %v1371
        %v1373 = vperm.slane %v1365, %v1372
        %v1374 = vrot.slane %v1345, 4
        %v1375 = vsel %vm1078, %v1374, %v1333
        %v1376 = vrot.slane %v1333, 4
        %v1377 = vsel %vm1078, %v1345, %v1376
        %v1379 = vunpack.c.l.s4 1934713408
        %v1380 = vunpack.c.0.s8 %v1379
        %v1381 = vperm.slane %v1375, %v1380
        %v1383 = vunpack.c.l.s4 1934713408
        %v1384 = vunpack.c.0.s8 %v1383
        %v1385 = vperm.slane %v1377, %v1384
        %v1386 = vrot.slane %v1349, 4
        %v1387 = vsel %vm1078, %v1386, %v1337
        %v1388 = vrot.slane %v1337, 4
        %v1389 = vsel %vm1078, %v1349, %v1388
        %v1391 = vunpack.c.l.s4 1934713408
        %v1392 = vunpack.c.0.s8 %v1391
        %v1393 = vperm.slane %v1387, %v1392
        %v1395 = vunpack.c.l.s4 1934713408
        %v1396 = vunpack.c.0.s8 %v1395
        %v1397 = vperm.slane %v1389, %v1396
        %v1398 = vrot.slane %v1381, 4
        %v1399 = vsel %vm1078, %v1398, %v1357
        %v1400 = vrot.slane %v1357, 4
        %v1401 = vsel %vm1078, %v1381, %v1400
        %v1402 = vrot.slane %v1385, 4
        %v1403 = vsel %vm1078, %v1402, %v1361
        %v1404 = vrot.slane %v1361, 4
        %v1405 = vsel %vm1078, %v1385, %v1404
        %v1406 = vrot.slane %v1393, 4
        %v1407 = vsel %vm1078, %v1406, %v1369
        %v1408 = vrot.slane %v1369, 4
        %v1409 = vsel %vm1078, %v1393, %v1408
        %v1410 = vrot.slane %v1397, 4
        %v1411 = vsel %vm1078, %v1410, %v1373
        %v1412 = vrot.slane %v1373, 4
        %v1413 = vsel %vm1078, %v1397, %v1412
        %v1414 = vrot.slane %v860, 4
        %v1415 = vsel %vm1078, %v1414, %v782
        %v1416 = vrot.slane %v782, 4
        %v1417 = vsel %vm1078, %v860, %v1416
        %v1419 = vunpack.c.l.s4 1983009808
        %v1420 = vunpack.c.0.s8 %v1419
        %v1421 = vperm.slane %v1415, %v1420
        %v1423 = vunpack.c.l.s4 1983009808
        %v1424 = vunpack.c.0.s8 %v1423
        %v1425 = vperm.slane %v1417, %v1424
        %v1426 = vrot.slane %v899, 4
        %v1427 = vsel %vm1078, %v1426, %v821
        %v1428 = vrot.slane %v821, 4
        %v1429 = vsel %vm1078, %v899, %v1428
        %v1431 = vunpack.c.l.s4 1983009808
        %v1432 = vunpack.c.0.s8 %v1431
        %v1433 = vperm.slane %v1427, %v1432
        %v1435 = vunpack.c.l.s4 1983009808
        %v1436 = vunpack.c.0.s8 %v1435
        %v1437 = vperm.slane %v1429, %v1436
        %v1438 = vrot.slane %v1016, 4
        %v1439 = vsel %vm1078, %v1438, %v938
        %v1440 = vrot.slane %v938, 4
        %v1441 = vsel %vm1078, %v1016, %v1440
        %v1443 = vunpack.c.l.s4 1983009808
        %v1444 = vunpack.c.0.s8 %v1443
        %v1445 = vperm.slane %v1439, %v1444
        %v1447 = vunpack.c.l.s4 1983009808
        %v1448 = vunpack.c.0.s8 %v1447
        %v1449 = vperm.slane %v1441, %v1448
        %v1450 = vrot.slane %v1055, 4
        %v1451 = vsel %vm1078, %v1450, %v977
        %v1452 = vrot.slane %v977, 4
        %v1453 = vsel %vm1078, %v1055, %v1452
        %v1455 = vunpack.c.l.s4 1983009808
        %v1456 = vunpack.c.0.s8 %v1455
        %v1457 = vperm.slane %v1451, %v1456
        %v1459 = vunpack.c.l.s4 1983009808
        %v1460 = vunpack.c.0.s8 %v1459
        %v1461 = vperm.slane %v1453, %v1460
        %v1462 = vrot.slane %v1433, 4
        %v1463 = vsel %vm1078, %v1462, %v1421
        %v1464 = vrot.slane %v1421, 4
        %v1465 = vsel %vm1078, %v1433, %v1464
        %v1467 = vunpack.c.l.s4 1934713408
        %v1468 = vunpack.c.0.s8 %v1467
        %v1469 = vperm.slane %v1463, %v1468
        %v1471 = vunpack.c.l.s4 1934713408
        %v1472 = vunpack.c.0.s8 %v1471
        %v1473 = vperm.slane %v1465, %v1472
        %v1474 = vrot.slane %v1437, 4
        %v1475 = vsel %vm1078, %v1474, %v1425
        %v1476 = vrot.slane %v1425, 4
        %v1477 = vsel %vm1078, %v1437, %v1476
        %v1479 = vunpack.c.l.s4 1934713408
        %v1480 = vunpack.c.0.s8 %v1479
        %v1481 = vperm.slane %v1475, %v1480
        %v1483 = vunpack.c.l.s4 1934713408
        %v1484 = vunpack.c.0.s8 %v1483
        %v1485 = vperm.slane %v1477, %v1484
        %v1486 = vrot.slane %v1457, 4
        %v1487 = vsel %vm1078, %v1486, %v1445
        %v1488 = vrot.slane %v1445, 4
        %v1489 = vsel %vm1078, %v1457, %v1488
        %v1491 = vunpack.c.l.s4 1934713408
        %v1492 = vunpack.c.0.s8 %v1491
        %v1493 = vperm.slane %v1487, %v1492
        %v1495 = vunpack.c.l.s4 1934713408
        %v1496 = vunpack.c.0.s8 %v1495
        %v1497 = vperm.slane %v1489, %v1496
        %v1498 = vrot.slane %v1461, 4
        %v1499 = vsel %vm1078, %v1498, %v1449
        %v1500 = vrot.slane %v1449, 4
        %v1501 = vsel %vm1078, %v1461, %v1500
        %v1503 = vunpack.c.l.s4 1934713408
        %v1504 = vunpack.c.0.s8 %v1503
        %v1505 = vperm.slane %v1499, %v1504
        %v1507 = vunpack.c.l.s4 1934713408
        %v1508 = vunpack.c.0.s8 %v1507
        %v1509 = vperm.slane %v1501, %v1508
        %v1510 = vrot.slane %v1493, 4
        %v1511 = vsel %vm1078, %v1510, %v1469
        %v1512 = vrot.slane %v1469, 4
        %v1513 = vsel %vm1078, %v1493, %v1512
        %v1514 = vrot.slane %v1497, 4
        %v1515 = vsel %vm1078, %v1514, %v1473
        %v1516 = vrot.slane %v1473, 4
        %v1517 = vsel %vm1078, %v1497, %v1516
        %v1518 = vrot.slane %v1505, 4
        %v1519 = vsel %vm1078, %v1518, %v1481
        %v1520 = vrot.slane %v1481, 4
        %v1521 = vsel %vm1078, %v1505, %v1520
        %v1522 = vrot.slane %v1509, 4
        %v1523 = vsel %vm1078, %v1522, %v1485
        %v1524 = vrot.slane %v1485, 4
        %v1525 = vsel %vm1078, %v1509, %v1524
        %v1526 = vrot.slane %v863, 4
        %v1527 = vsel %vm1078, %v1526, %v785
        %v1528 = vrot.slane %v785, 4
        %v1529 = vsel %vm1078, %v863, %v1528
        %v1531 = vunpack.c.l.s4 1983009808
        %v1532 = vunpack.c.0.s8 %v1531
        %v1533 = vperm.slane %v1527, %v1532
        %v1535 = vunpack.c.l.s4 1983009808
        %v1536 = vunpack.c.0.s8 %v1535
        %v1537 = vperm.slane %v1529, %v1536
        %v1538 = vrot.slane %v902, 4
        %v1539 = vsel %vm1078, %v1538, %v824
        %v1540 = vrot.slane %v824, 4
        %v1541 = vsel %vm1078, %v902, %v1540
        %v1543 = vunpack.c.l.s4 1983009808
        %v1544 = vunpack.c.0.s8 %v1543
        %v1545 = vperm.slane %v1539, %v1544
        %v1547 = vunpack.c.l.s4 1983009808
        %v1548 = vunpack.c.0.s8 %v1547
        %v1549 = vperm.slane %v1541, %v1548
        %v1550 = vrot.slane %v1019, 4
        %v1551 = vsel %vm1078, %v1550, %v941
        %v1552 = vrot.slane %v941, 4
        %v1553 = vsel %vm1078, %v1019, %v1552
        %v1555 = vunpack.c.l.s4 1983009808
        %v1556 = vunpack.c.0.s8 %v1555
        %v1557 = vperm.slane %v1551, %v1556
        %v1559 = vunpack.c.l.s4 1983009808
        %v1560 = vunpack.c.0.s8 %v1559
        %v1561 = vperm.slane %v1553, %v1560
        %v1562 = vrot.slane %v1058, 4
        %v1563 = vsel %vm1078, %v1562, %v980
        %v1564 = vrot.slane %v980, 4
        %v1565 = vsel %vm1078, %v1058, %v1564
        %v1567 = vunpack.c.l.s4 1983009808
        %v1568 = vunpack.c.0.s8 %v1567
        %v1569 = vperm.slane %v1563, %v1568
        %v1571 = vunpack.c.l.s4 1983009808
        %v1572 = vunpack.c.0.s8 %v1571
        %v1573 = vperm.slane %v1565, %v1572
        %v1574 = vrot.slane %v1545, 4
        %v1575 = vsel %vm1078, %v1574, %v1533
        %v1576 = vrot.slane %v1533, 4
        %v1577 = vsel %vm1078, %v1545, %v1576
        %v1579 = vunpack.c.l.s4 1934713408
        %v1580 = vunpack.c.0.s8 %v1579
        %v1581 = vperm.slane %v1575, %v1580
        %v1583 = vunpack.c.l.s4 1934713408
        %v1584 = vunpack.c.0.s8 %v1583
        %v1585 = vperm.slane %v1577, %v1584
        %v1586 = vrot.slane %v1549, 4
        %v1587 = vsel %vm1078, %v1586, %v1537
        %v1588 = vrot.slane %v1537, 4
        %v1589 = vsel %vm1078, %v1549, %v1588
        %v1591 = vunpack.c.l.s4 1934713408
        %v1592 = vunpack.c.0.s8 %v1591
        %v1593 = vperm.slane %v1587, %v1592
        %v1595 = vunpack.c.l.s4 1934713408
        %v1596 = vunpack.c.0.s8 %v1595
        %v1597 = vperm.slane %v1589, %v1596
        %v1598 = vrot.slane %v1569, 4
        %v1599 = vsel %vm1078, %v1598, %v1557
        %v1600 = vrot.slane %v1557, 4
        %v1601 = vsel %vm1078, %v1569, %v1600
        %v1603 = vunpack.c.l.s4 1934713408
        %v1604 = vunpack.c.0.s8 %v1603
        %v1605 = vperm.slane %v1599, %v1604
        %v1607 = vunpack.c.l.s4 1934713408
        %v1608 = vunpack.c.0.s8 %v1607
        %v1609 = vperm.slane %v1601, %v1608
        %v1610 = vrot.slane %v1573, 4
        %v1611 = vsel %vm1078, %v1610, %v1561
        %v1612 = vrot.slane %v1561, 4
        %v1613 = vsel %vm1078, %v1573, %v1612
        %v1615 = vunpack.c.l.s4 1934713408
        %v1616 = vunpack.c.0.s8 %v1615
        %v1617 = vperm.slane %v1611, %v1616
        %v1619 = vunpack.c.l.s4 1934713408
        %v1620 = vunpack.c.0.s8 %v1619
        %v1621 = vperm.slane %v1613, %v1620
        %v1622 = vrot.slane %v1605, 4
        %v1623 = vsel %vm1078, %v1622, %v1581
        %v1624 = vrot.slane %v1581, 4
        %v1625 = vsel %vm1078, %v1605, %v1624
        %v1626 = vrot.slane %v1609, 4
        %v1627 = vsel %vm1078, %v1626, %v1585
        %v1628 = vrot.slane %v1585, 4
        %v1629 = vsel %vm1078, %v1609, %v1628
        %v1630 = vrot.slane %v1617, 4
        %v1631 = vsel %vm1078, %v1630, %v1593
        %v1632 = vrot.slane %v1593, 4
        %v1633 = vsel %vm1078, %v1617, %v1632
        %v1634 = vrot.slane %v1621, 4
        %v1635 = vsel %vm1078, %v1634, %v1597
        %v1636 = vrot.slane %v1597, 4
        %v1637 = vsel %vm1078, %v1621, %v1636
        %v1638 = vrot.slane %v865, 4
        %v1639 = vsel %vm1078, %v1638, %v787
        %v1640 = vrot.slane %v787, 4
        %v1641 = vsel %vm1078, %v865, %v1640
        %v1643 = vunpack.c.l.s4 1983009808
        %v1644 = vunpack.c.0.s8 %v1643
        %v1645 = vperm.slane %v1639, %v1644
        %v1647 = vunpack.c.l.s4 1983009808
        %v1648 = vunpack.c.0.s8 %v1647
        %v1649 = vperm.slane %v1641, %v1648
        %v1650 = vrot.slane %v904, 4
        %v1651 = vsel %vm1078, %v1650, %v826
        %v1652 = vrot.slane %v826, 4
        %v1653 = vsel %vm1078, %v904, %v1652
        %v1655 = vunpack.c.l.s4 1983009808
        %v1656 = vunpack.c.0.s8 %v1655
        %v1657 = vperm.slane %v1651, %v1656
        %v1659 = vunpack.c.l.s4 1983009808
        %v1660 = vunpack.c.0.s8 %v1659
        %v1661 = vperm.slane %v1653, %v1660
        %v1662 = vrot.slane %v1021, 4
        %v1663 = vsel %vm1078, %v1662, %v943
        %v1664 = vrot.slane %v943, 4
        %v1665 = vsel %vm1078, %v1021, %v1664
        %v1667 = vunpack.c.l.s4 1983009808
        %v1668 = vunpack.c.0.s8 %v1667
        %v1669 = vperm.slane %v1663, %v1668
        %v1671 = vunpack.c.l.s4 1983009808
        %v1672 = vunpack.c.0.s8 %v1671
        %v1673 = vperm.slane %v1665, %v1672
        %v1674 = vrot.slane %v1060, 4
        %v1675 = vsel %vm1078, %v1674, %v982
        %v1676 = vrot.slane %v982, 4
        %v1677 = vsel %vm1078, %v1060, %v1676
        %v1679 = vunpack.c.l.s4 1983009808
        %v1680 = vunpack.c.0.s8 %v1679
        %v1681 = vperm.slane %v1675, %v1680
        %v1683 = vunpack.c.l.s4 1983009808
        %v1684 = vunpack.c.0.s8 %v1683
        %v1685 = vperm.slane %v1677, %v1684
        %v1686 = vrot.slane %v1657, 4
        %v1687 = vsel %vm1078, %v1686, %v1645
        %v1688 = vrot.slane %v1645, 4
        %v1689 = vsel %vm1078, %v1657, %v1688
        %v1691 = vunpack.c.l.s4 1934713408
        %v1692 = vunpack.c.0.s8 %v1691
        %v1693 = vperm.slane %v1687, %v1692
        %v1695 = vunpack.c.l.s4 1934713408
        %v1696 = vunpack.c.0.s8 %v1695
        %v1697 = vperm.slane %v1689, %v1696
        %v1698 = vrot.slane %v1661, 4
        %v1699 = vsel %vm1078, %v1698, %v1649
        %v1700 = vrot.slane %v1649, 4
        %v1701 = vsel %vm1078, %v1661, %v1700
        %v1703 = vunpack.c.l.s4 1934713408
        %v1704 = vunpack.c.0.s8 %v1703
        %v1705 = vperm.slane %v1699, %v1704
        %v1707 = vunpack.c.l.s4 1934713408
        %v1708 = vunpack.c.0.s8 %v1707
        %v1709 = vperm.slane %v1701, %v1708
        %v1710 = vrot.slane %v1681, 4
        %v1711 = vsel %vm1078, %v1710, %v1669
        %v1712 = vrot.slane %v1669, 4
        %v1713 = vsel %vm1078, %v1681, %v1712
        %v1715 = vunpack.c.l.s4 1934713408
        %v1716 = vunpack.c.0.s8 %v1715
        %v1717 = vperm.slane %v1711, %v1716
        %v1719 = vunpack.c.l.s4 1934713408
        %v1720 = vunpack.c.0.s8 %v1719
        %v1721 = vperm.slane %v1713, %v1720
        %v1722 = vrot.slane %v1685, 4
        %v1723 = vsel %vm1078, %v1722, %v1673
        %v1724 = vrot.slane %v1673, 4
        %v1725 = vsel %vm1078, %v1685, %v1724
        %v1727 = vunpack.c.l.s4 1934713408
        %v1728 = vunpack.c.0.s8 %v1727
        %v1729 = vperm.slane %v1723, %v1728
        %v1731 = vunpack.c.l.s4 1934713408
        %v1732 = vunpack.c.0.s8 %v1731
        %v1733 = vperm.slane %v1725, %v1732
        %v1734 = vrot.slane %v1717, 4
        %v1735 = vsel %vm1078, %v1734, %v1693
        %v1736 = vrot.slane %v1693, 4
        %v1737 = vsel %vm1078, %v1717, %v1736
        %v1738 = vrot.slane %v1721, 4
        %v1739 = vsel %vm1078, %v1738, %v1697
        %v1740 = vrot.slane %v1697, 4
        %v1741 = vsel %vm1078, %v1721, %v1740
        %v1742 = vrot.slane %v1729, 4
        %v1743 = vsel %vm1078, %v1742, %v1705
        %v1744 = vrot.slane %v1705, 4
        %v1745 = vsel %vm1078, %v1729, %v1744
        %v1746 = vrot.slane %v1733, 4
        %v1747 = vsel %vm1078, %v1746, %v1709
        %v1748 = vrot.slane %v1709, 4
        %v1749 = vsel %vm1078, %v1733, %v1748
        %v1750 = vrot.slane %v868, 4
        %v1751 = vsel %vm1078, %v1750, %v790
        %v1752 = vrot.slane %v790, 4
        %v1753 = vsel %vm1078, %v868, %v1752
        %v1755 = vunpack.c.l.s4 1983009808
        %v1756 = vunpack.c.0.s8 %v1755
        %v1757 = vperm.slane %v1751, %v1756
        %v1759 = vunpack.c.l.s4 1983009808
        %v1760 = vunpack.c.0.s8 %v1759
        %v1761 = vperm.slane %v1753, %v1760
        %v1762 = vrot.slane %v907, 4
        %v1763 = vsel %vm1078, %v1762, %v829
        %v1764 = vrot.slane %v829, 4
        %v1765 = vsel %vm1078, %v907, %v1764
        %v1767 = vunpack.c.l.s4 1983009808
        %v1768 = vunpack.c.0.s8 %v1767
        %v1769 = vperm.slane %v1763, %v1768
        %v1771 = vunpack.c.l.s4 1983009808
        %v1772 = vunpack.c.0.s8 %v1771
        %v1773 = vperm.slane %v1765, %v1772
        %v1774 = vrot.slane %v1024, 4
        %v1775 = vsel %vm1078, %v1774, %v946
        %v1776 = vrot.slane %v946, 4
        %v1777 = vsel %vm1078, %v1024, %v1776
        %v1779 = vunpack.c.l.s4 1983009808
        %v1780 = vunpack.c.0.s8 %v1779
        %v1781 = vperm.slane %v1775, %v1780
        %v1783 = vunpack.c.l.s4 1983009808
        %v1784 = vunpack.c.0.s8 %v1783
        %v1785 = vperm.slane %v1777, %v1784
        %v1786 = vrot.slane %v1063, 4
        %v1787 = vsel %vm1078, %v1786, %v985
        %v1788 = vrot.slane %v985, 4
        %v1789 = vsel %vm1078, %v1063, %v1788
        %v1791 = vunpack.c.l.s4 1983009808
        %v1792 = vunpack.c.0.s8 %v1791
        %v1793 = vperm.slane %v1787, %v1792
        %v1795 = vunpack.c.l.s4 1983009808
        %v1796 = vunpack.c.0.s8 %v1795
        %v1797 = vperm.slane %v1789, %v1796
        %v1798 = vrot.slane %v1769, 4
        %v1799 = vsel %vm1078, %v1798, %v1757
        %v1800 = vrot.slane %v1757, 4
        %v1801 = vsel %vm1078, %v1769, %v1800
        %v1803 = vunpack.c.l.s4 1934713408
        %v1804 = vunpack.c.0.s8 %v1803
        %v1805 = vperm.slane %v1799, %v1804
        %v1807 = vunpack.c.l.s4 1934713408
        %v1808 = vunpack.c.0.s8 %v1807
        %v1809 = vperm.slane %v1801, %v1808
        %v1810 = vrot.slane %v1773, 4
        %v1811 = vsel %vm1078, %v1810, %v1761
        %v1812 = vrot.slane %v1761, 4
        %v1813 = vsel %vm1078, %v1773, %v1812
        %v1815 = vunpack.c.l.s4 1934713408
        %v1816 = vunpack.c.0.s8 %v1815
        %v1817 = vperm.slane %v1811, %v1816
        %v1819 = vunpack.c.l.s4 1934713408
        %v1820 = vunpack.c.0.s8 %v1819
        %v1821 = vperm.slane %v1813, %v1820
        %v1822 = vrot.slane %v1793, 4
        %v1823 = vsel %vm1078, %v1822, %v1781
        %v1824 = vrot.slane %v1781, 4
        %v1825 = vsel %vm1078, %v1793, %v1824
        %v1827 = vunpack.c.l.s4 1934713408
        %v1828 = vunpack.c.0.s8 %v1827
        %v1829 = vperm.slane %v1823, %v1828
        %v1831 = vunpack.c.l.s4 1934713408
        %v1832 = vunpack.c.0.s8 %v1831
        %v1833 = vperm.slane %v1825, %v1832
        %v1834 = vrot.slane %v1797, 4
        %v1835 = vsel %vm1078, %v1834, %v1785
        %v1836 = vrot.slane %v1785, 4
        %v1837 = vsel %vm1078, %v1797, %v1836
        %v1839 = vunpack.c.l.s4 1934713408
        %v1840 = vunpack.c.0.s8 %v1839
        %v1841 = vperm.slane %v1835, %v1840
        %v1843 = vunpack.c.l.s4 1934713408
        %v1844 = vunpack.c.0.s8 %v1843
        %v1845 = vperm.slane %v1837, %v1844
        %v1846 = vrot.slane %v1829, 4
        %v1847 = vsel %vm1078, %v1846, %v1805
        %v1848 = vrot.slane %v1805, 4
        %v1849 = vsel %vm1078, %v1829, %v1848
        %v1850 = vrot.slane %v1833, 4
        %v1851 = vsel %vm1078, %v1850, %v1809
        %v1852 = vrot.slane %v1809, 4
        %v1853 = vsel %vm1078, %v1833, %v1852
        %v1854 = vrot.slane %v1841, 4
        %v1855 = vsel %vm1078, %v1854, %v1817
        %v1856 = vrot.slane %v1817, 4
        %v1857 = vsel %vm1078, %v1841, %v1856
        %v1858 = vrot.slane %v1845, 4
        %v1859 = vsel %vm1078, %v1858, %v1821
        %v1860 = vrot.slane %v1821, 4
        %v1861 = vsel %vm1078, %v1845, %v1860
        %v1862 = vrot.slane %v870, 4
        %v1863 = vsel %vm1078, %v1862, %v792
        %v1864 = vrot.slane %v792, 4
        %v1865 = vsel %vm1078, %v870, %v1864
        %v1867 = vunpack.c.l.s4 1983009808
        %v1868 = vunpack.c.0.s8 %v1867
        %v1869 = vperm.slane %v1863, %v1868
        %v1871 = vunpack.c.l.s4 1983009808
        %v1872 = vunpack.c.0.s8 %v1871
        %v1873 = vperm.slane %v1865, %v1872
        %v1874 = vrot.slane %v909, 4
        %v1875 = vsel %vm1078, %v1874, %v831
        %v1876 = vrot.slane %v831, 4
        %v1877 = vsel %vm1078, %v909, %v1876
        %v1879 = vunpack.c.l.s4 1983009808
        %v1880 = vunpack.c.0.s8 %v1879
        %v1881 = vperm.slane %v1875, %v1880
        %v1883 = vunpack.c.l.s4 1983009808
        %v1884 = vunpack.c.0.s8 %v1883
        %v1885 = vperm.slane %v1877, %v1884
        %v1886 = vrot.slane %v1026, 4
        %v1887 = vsel %vm1078, %v1886, %v948
        %v1888 = vrot.slane %v948, 4
        %v1889 = vsel %vm1078, %v1026, %v1888
        %v1891 = vunpack.c.l.s4 1983009808
        %v1892 = vunpack.c.0.s8 %v1891
        %v1893 = vperm.slane %v1887, %v1892
        %v1895 = vunpack.c.l.s4 1983009808
        %v1896 = vunpack.c.0.s8 %v1895
        %v1897 = vperm.slane %v1889, %v1896
        %v1898 = vrot.slane %v1065, 4
        %v1899 = vsel %vm1078, %v1898, %v987
        %v1900 = vrot.slane %v987, 4
        %v1901 = vsel %vm1078, %v1065, %v1900
        %v1903 = vunpack.c.l.s4 1983009808
        %v1904 = vunpack.c.0.s8 %v1903
        %v1905 = vperm.slane %v1899, %v1904
        %v1907 = vunpack.c.l.s4 1983009808
        %v1908 = vunpack.c.0.s8 %v1907
        %v1909 = vperm.slane %v1901, %v1908
        %v1910 = vrot.slane %v1881, 4
        %v1911 = vsel %vm1078, %v1910, %v1869
        %v1912 = vrot.slane %v1869, 4
        %v1913 = vsel %vm1078, %v1881, %v1912
        %v1915 = vunpack.c.l.s4 1934713408
        %v1916 = vunpack.c.0.s8 %v1915
        %v1917 = vperm.slane %v1911, %v1916
        %v1919 = vunpack.c.l.s4 1934713408
        %v1920 = vunpack.c.0.s8 %v1919
        %v1921 = vperm.slane %v1913, %v1920
        %v1922 = vrot.slane %v1885, 4
        %v1923 = vsel %vm1078, %v1922, %v1873
        %v1924 = vrot.slane %v1873, 4
        %v1925 = vsel %vm1078, %v1885, %v1924
        %v1927 = vunpack.c.l.s4 1934713408
        %v1928 = vunpack.c.0.s8 %v1927
        %v1929 = vperm.slane %v1923, %v1928
        %v1931 = vunpack.c.l.s4 1934713408
        %v1932 = vunpack.c.0.s8 %v1931
        %v1933 = vperm.slane %v1925, %v1932
        %v1934 = vrot.slane %v1905, 4
        %v1935 = vsel %vm1078, %v1934, %v1893
        %v1936 = vrot.slane %v1893, 4
        %v1937 = vsel %vm1078, %v1905, %v1936
        %v1939 = vunpack.c.l.s4 1934713408
        %v1940 = vunpack.c.0.s8 %v1939
        %v1941 = vperm.slane %v1935, %v1940
        %v1943 = vunpack.c.l.s4 1934713408
        %v1944 = vunpack.c.0.s8 %v1943
        %v1945 = vperm.slane %v1937, %v1944
        %v1946 = vrot.slane %v1909, 4
        %v1947 = vsel %vm1078, %v1946, %v1897
        %v1948 = vrot.slane %v1897, 4
        %v1949 = vsel %vm1078, %v1909, %v1948
        %v1951 = vunpack.c.l.s4 1934713408
        %v1952 = vunpack.c.0.s8 %v1951
        %v1953 = vperm.slane %v1947, %v1952
        %v1955 = vunpack.c.l.s4 1934713408
        %v1956 = vunpack.c.0.s8 %v1955
        %v1957 = vperm.slane %v1949, %v1956
        %v1958 = vrot.slane %v1941, 4
        %v1959 = vsel %vm1078, %v1958, %v1917
        %v1960 = vrot.slane %v1917, 4
        %v1961 = vsel %vm1078, %v1941, %v1960
        %v1962 = vrot.slane %v1945, 4
        %v1963 = vsel %vm1078, %v1962, %v1921
        %v1964 = vrot.slane %v1921, 4
        %v1965 = vsel %vm1078, %v1945, %v1964
        %v1966 = vrot.slane %v1953, 4
        %v1967 = vsel %vm1078, %v1966, %v1929
        %v1968 = vrot.slane %v1929, 4
        %v1969 = vsel %vm1078, %v1953, %v1968
        %v1970 = vrot.slane %v1957, 4
        %v1971 = vsel %vm1078, %v1970, %v1933
        %v1972 = vrot.slane %v1933, 4
        %v1973 = vsel %vm1078, %v1957, %v1972
        %v1974 = vrot.slane %v873, 4
        %v1975 = vsel %vm1078, %v1974, %v795
        %v1976 = vrot.slane %v795, 4
        %v1977 = vsel %vm1078, %v873, %v1976
        %v1979 = vunpack.c.l.s4 1983009808
        %v1980 = vunpack.c.0.s8 %v1979
        %v1981 = vperm.slane %v1975, %v1980
        %v1983 = vunpack.c.l.s4 1983009808
        %v1984 = vunpack.c.0.s8 %v1983
        %v1985 = vperm.slane %v1977, %v1984
        %v1986 = vrot.slane %v912, 4
        %v1987 = vsel %vm1078, %v1986, %v834
        %v1988 = vrot.slane %v834, 4
        %v1989 = vsel %vm1078, %v912, %v1988
        %v1991 = vunpack.c.l.s4 1983009808
        %v1992 = vunpack.c.0.s8 %v1991
        %v1993 = vperm.slane %v1987, %v1992
        %v1995 = vunpack.c.l.s4 1983009808
        %v1996 = vunpack.c.0.s8 %v1995
        %v1997 = vperm.slane %v1989, %v1996
        %v1998 = vrot.slane %v1029, 4
        %v1999 = vsel %vm1078, %v1998, %v951
        %v2000 = vrot.slane %v951, 4
        %v2001 = vsel %vm1078, %v1029, %v2000
        %v2003 = vunpack.c.l.s4 1983009808
        %v2004 = vunpack.c.0.s8 %v2003
        %v2005 = vperm.slane %v1999, %v2004
        %v2007 = vunpack.c.l.s4 1983009808
        %v2008 = vunpack.c.0.s8 %v2007
        %v2009 = vperm.slane %v2001, %v2008
        %v2010 = vrot.slane %v1068, 4
        %v2011 = vsel %vm1078, %v2010, %v990
        %v2012 = vrot.slane %v990, 4
        %v2013 = vsel %vm1078, %v1068, %v2012
        %v2015 = vunpack.c.l.s4 1983009808
        %v2016 = vunpack.c.0.s8 %v2015
        %v2017 = vperm.slane %v2011, %v2016
        %v2019 = vunpack.c.l.s4 1983009808
        %v2020 = vunpack.c.0.s8 %v2019
        %v2021 = vperm.slane %v2013, %v2020
        %v2022 = vrot.slane %v1993, 4
        %v2023 = vsel %vm1078, %v2022, %v1981
        %v2024 = vrot.slane %v1981, 4
        %v2025 = vsel %vm1078, %v1993, %v2024
        %v2027 = vunpack.c.l.s4 1934713408
        %v2028 = vunpack.c.0.s8 %v2027
        %v2029 = vperm.slane %v2023, %v2028
        %v2031 = vunpack.c.l.s4 1934713408
        %v2032 = vunpack.c.0.s8 %v2031
        %v2033 = vperm.slane %v2025, %v2032
        %v2034 = vrot.slane %v1997, 4
        %v2035 = vsel %vm1078, %v2034, %v1985
        %v2036 = vrot.slane %v1985, 4
        %v2037 = vsel %vm1078, %v1997, %v2036
        %v2039 = vunpack.c.l.s4 1934713408
        %v2040 = vunpack.c.0.s8 %v2039
        %v2041 = vperm.slane %v2035, %v2040
        %v2043 = vunpack.c.l.s4 1934713408
        %v2044 = vunpack.c.0.s8 %v2043
        %v2045 = vperm.slane %v2037, %v2044
        %v2046 = vrot.slane %v2017, 4
        %v2047 = vsel %vm1078, %v2046, %v2005
        %v2048 = vrot.slane %v2005, 4
        %v2049 = vsel %vm1078, %v2017, %v2048
        %v2051 = vunpack.c.l.s4 1934713408
        %v2052 = vunpack.c.0.s8 %v2051
        %v2053 = vperm.slane %v2047, %v2052
        %v2055 = vunpack.c.l.s4 1934713408
        %v2056 = vunpack.c.0.s8 %v2055
        %v2057 = vperm.slane %v2049, %v2056
        %v2058 = vrot.slane %v2021, 4
        %v2059 = vsel %vm1078, %v2058, %v2009
        %v2060 = vrot.slane %v2009, 4
        %v2061 = vsel %vm1078, %v2021, %v2060
        %v2063 = vunpack.c.l.s4 1934713408
        %v2064 = vunpack.c.0.s8 %v2063
        %v2065 = vperm.slane %v2059, %v2064
        %v2067 = vunpack.c.l.s4 1934713408
        %v2068 = vunpack.c.0.s8 %v2067
        %v2069 = vperm.slane %v2061, %v2068
        %v2070 = vrot.slane %v2053, 4
        %v2071 = vsel %vm1078, %v2070, %v2029
        %v2072 = vrot.slane %v2029, 4
        %v2073 = vsel %vm1078, %v2053, %v2072
        %v2074 = vrot.slane %v2057, 4
        %v2075 = vsel %vm1078, %v2074, %v2033
        %v2076 = vrot.slane %v2033, 4
        %v2077 = vsel %vm1078, %v2057, %v2076
        %v2078 = vrot.slane %v2065, 4
        %v2079 = vsel %vm1078, %v2078, %v2041
        %v2080 = vrot.slane %v2041, 4
        %v2081 = vsel %vm1078, %v2065, %v2080
        %v2082 = vrot.slane %v2069, 4
        %v2083 = vsel %vm1078, %v2082, %v2045
        %v2084 = vrot.slane %v2045, 4
        %v2085 = vsel %vm1078, %v2069, %v2084
        %v2086 = vrot.slane %v875, 4
        %v2087 = vsel %vm1078, %v2086, %v797
        %v2088 = vrot.slane %v797, 4
        %v2089 = vsel %vm1078, %v875, %v2088
        %v2091 = vunpack.c.l.s4 1983009808
        %v2092 = vunpack.c.0.s8 %v2091
        %v2093 = vperm.slane %v2087, %v2092
        %v2095 = vunpack.c.l.s4 1983009808
        %v2096 = vunpack.c.0.s8 %v2095
        %v2097 = vperm.slane %v2089, %v2096
        %v2098 = vrot.slane %v914, 4
        %v2099 = vsel %vm1078, %v2098, %v836
        %v2100 = vrot.slane %v836, 4
        %v2101 = vsel %vm1078, %v914, %v2100
        %v2103 = vunpack.c.l.s4 1983009808
        %v2104 = vunpack.c.0.s8 %v2103
        %v2105 = vperm.slane %v2099, %v2104
        %v2107 = vunpack.c.l.s4 1983009808
        %v2108 = vunpack.c.0.s8 %v2107
        %v2109 = vperm.slane %v2101, %v2108
        %v2110 = vrot.slane %v1031, 4
        %v2111 = vsel %vm1078, %v2110, %v953
        %v2112 = vrot.slane %v953, 4
        %v2113 = vsel %vm1078, %v1031, %v2112
        %v2115 = vunpack.c.l.s4 1983009808
        %v2116 = vunpack.c.0.s8 %v2115
        %v2117 = vperm.slane %v2111, %v2116
        %v2119 = vunpack.c.l.s4 1983009808
        %v2120 = vunpack.c.0.s8 %v2119
        %v2121 = vperm.slane %v2113, %v2120
        %v2122 = vrot.slane %v1070, 4
        %v2123 = vsel %vm1078, %v2122, %v992
        %v2124 = vrot.slane %v992, 4
        %v2125 = vsel %vm1078, %v1070, %v2124
        %v2127 = vunpack.c.l.s4 1983009808
        %v2128 = vunpack.c.0.s8 %v2127
        %v2129 = vperm.slane %v2123, %v2128
        %v2131 = vunpack.c.l.s4 1983009808
        %v2132 = vunpack.c.0.s8 %v2131
        %v2133 = vperm.slane %v2125, %v2132
        %v2134 = vrot.slane %v2105, 4
        %v2135 = vsel %vm1078, %v2134, %v2093
        %v2136 = vrot.slane %v2093, 4
        %v2137 = vsel %vm1078, %v2105, %v2136
        %v2139 = vunpack.c.l.s4 1934713408
        %v2140 = vunpack.c.0.s8 %v2139
        %v2141 = vperm.slane %v2135, %v2140
        %v2143 = vunpack.c.l.s4 1934713408
        %v2144 = vunpack.c.0.s8 %v2143
        %v2145 = vperm.slane %v2137, %v2144
        %v2146 = vrot.slane %v2109, 4
        %v2147 = vsel %vm1078, %v2146, %v2097
        %v2148 = vrot.slane %v2097, 4
        %v2149 = vsel %vm1078, %v2109, %v2148
        %v2151 = vunpack.c.l.s4 1934713408
        %v2152 = vunpack.c.0.s8 %v2151
        %v2153 = vperm.slane %v2147, %v2152
        %v2155 = vunpack.c.l.s4 1934713408
        %v2156 = vunpack.c.0.s8 %v2155
        %v2157 = vperm.slane %v2149, %v2156
        %v2158 = vrot.slane %v2129, 4
        %v2159 = vsel %vm1078, %v2158, %v2117
        %v2160 = vrot.slane %v2117, 4
        %v2161 = vsel %vm1078, %v2129, %v2160
        %v2163 = vunpack.c.l.s4 1934713408
        %v2164 = vunpack.c.0.s8 %v2163
        %v2165 = vperm.slane %v2159, %v2164
        %v2167 = vunpack.c.l.s4 1934713408
        %v2168 = vunpack.c.0.s8 %v2167
        %v2169 = vperm.slane %v2161, %v2168
        %v2170 = vrot.slane %v2133, 4
        %v2171 = vsel %vm1078, %v2170, %v2121
        %v2172 = vrot.slane %v2121, 4
        %v2173 = vsel %vm1078, %v2133, %v2172
        %v2175 = vunpack.c.l.s4 1934713408
        %v2176 = vunpack.c.0.s8 %v2175
        %v2177 = vperm.slane %v2171, %v2176
        %v2179 = vunpack.c.l.s4 1934713408
        %v2180 = vunpack.c.0.s8 %v2179
        %v2181 = vperm.slane %v2173, %v2180
        %v2182 = vrot.slane %v2165, 4
        %v2183 = vsel %vm1078, %v2182, %v2141
        %v2184 = vrot.slane %v2141, 4
        %v2185 = vsel %vm1078, %v2165, %v2184
        %v2186 = vrot.slane %v2169, 4
        %v2187 = vsel %vm1078, %v2186, %v2145
        %v2188 = vrot.slane %v2145, 4
        %v2189 = vsel %vm1078, %v2169, %v2188
        %v2190 = vrot.slane %v2177, 4
        %v2191 = vsel %vm1078, %v2190, %v2153
        %v2192 = vrot.slane %v2153, 4
        %v2193 = vsel %vm1078, %v2177, %v2192
        %v2194 = vrot.slane %v2181, 4
        %v2195 = vsel %vm1078, %v2194, %v2157
        %v2196 = vrot.slane %v2157, 4
        %v2197 = vsel %vm1078, %v2181, %v2196
        %v2198 = vrot.slane %v878, 4
        %v2199 = vsel %vm1078, %v2198, %v800
        %v2200 = vrot.slane %v800, 4
        %v2201 = vsel %vm1078, %v878, %v2200
        %v2203 = vunpack.c.l.s4 1983009808
        %v2204 = vunpack.c.0.s8 %v2203
        %v2205 = vperm.slane %v2199, %v2204
        %v2207 = vunpack.c.l.s4 1983009808
        %v2208 = vunpack.c.0.s8 %v2207
        %v2209 = vperm.slane %v2201, %v2208
        %v2210 = vrot.slane %v917, 4
        %v2211 = vsel %vm1078, %v2210, %v839
        %v2212 = vrot.slane %v839, 4
        %v2213 = vsel %vm1078, %v917, %v2212
        %v2215 = vunpack.c.l.s4 1983009808
        %v2216 = vunpack.c.0.s8 %v2215
        %v2217 = vperm.slane %v2211, %v2216
        %v2219 = vunpack.c.l.s4 1983009808
        %v2220 = vunpack.c.0.s8 %v2219
        %v2221 = vperm.slane %v2213, %v2220
        %v2222 = vrot.slane %v1034, 4
        %v2223 = vsel %vm1078, %v2222, %v956
        %v2224 = vrot.slane %v956, 4
        %v2225 = vsel %vm1078, %v1034, %v2224
        %v2227 = vunpack.c.l.s4 1983009808
        %v2228 = vunpack.c.0.s8 %v2227
        %v2229 = vperm.slane %v2223, %v2228
        %v2231 = vunpack.c.l.s4 1983009808
        %v2232 = vunpack.c.0.s8 %v2231
        %v2233 = vperm.slane %v2225, %v2232
        %v2234 = vrot.slane %v1073, 4
        %v2235 = vsel %vm1078, %v2234, %v995
        %v2236 = vrot.slane %v995, 4
        %v2237 = vsel %vm1078, %v1073, %v2236
        %v2239 = vunpack.c.l.s4 1983009808
        %v2240 = vunpack.c.0.s8 %v2239
        %v2241 = vperm.slane %v2235, %v2240
        %v2243 = vunpack.c.l.s4 1983009808
        %v2244 = vunpack.c.0.s8 %v2243
        %v2245 = vperm.slane %v2237, %v2244
        %v2246 = vrot.slane %v2217, 4
        %v2247 = vsel %vm1078, %v2246, %v2205
        %v2248 = vrot.slane %v2205, 4
        %v2249 = vsel %vm1078, %v2217, %v2248
        %v2251 = vunpack.c.l.s4 1934713408
        %v2252 = vunpack.c.0.s8 %v2251
        %v2253 = vperm.slane %v2247, %v2252
        %v2255 = vunpack.c.l.s4 1934713408
        %v2256 = vunpack.c.0.s8 %v2255
        %v2257 = vperm.slane %v2249, %v2256
        %v2258 = vrot.slane %v2221, 4
        %v2259 = vsel %vm1078, %v2258, %v2209
        %v2260 = vrot.slane %v2209, 4
        %v2261 = vsel %vm1078, %v2221, %v2260
        %v2263 = vunpack.c.l.s4 1934713408
        %v2264 = vunpack.c.0.s8 %v2263
        %v2265 = vperm.slane %v2259, %v2264
        %v2267 = vunpack.c.l.s4 1934713408
        %v2268 = vunpack.c.0.s8 %v2267
        %v2269 = vperm.slane %v2261, %v2268
        %v2270 = vrot.slane %v2241, 4
        %v2271 = vsel %vm1078, %v2270, %v2229
        %v2272 = vrot.slane %v2229, 4
        %v2273 = vsel %vm1078, %v2241, %v2272
        %v2275 = vunpack.c.l.s4 1934713408
        %v2276 = vunpack.c.0.s8 %v2275
        %v2277 = vperm.slane %v2271, %v2276
        %v2279 = vunpack.c.l.s4 1934713408
        %v2280 = vunpack.c.0.s8 %v2279
        %v2281 = vperm.slane %v2273, %v2280
        %v2282 = vrot.slane %v2245, 4
        %v2283 = vsel %vm1078, %v2282, %v2233
        %v2284 = vrot.slane %v2233, 4
        %v2285 = vsel %vm1078, %v2245, %v2284
        %v2287 = vunpack.c.l.s4 1934713408
        %v2288 = vunpack.c.0.s8 %v2287
        %v2289 = vperm.slane %v2283, %v2288
        %v2291 = vunpack.c.l.s4 1934713408
        %v2292 = vunpack.c.0.s8 %v2291
        %v2293 = vperm.slane %v2285, %v2292
        %v2294 = vrot.slane %v2277, 4
        %v2295 = vsel %vm1078, %v2294, %v2253
        %v2296 = vrot.slane %v2253, 4
        %v2297 = vsel %vm1078, %v2277, %v2296
        %v2298 = vrot.slane %v2281, 4
        %v2299 = vsel %vm1078, %v2298, %v2257
        %v2300 = vrot.slane %v2257, 4
        %v2301 = vsel %vm1078, %v2281, %v2300
        %v2302 = vrot.slane %v2289, 4
        %v2303 = vsel %vm1078, %v2302, %v2265
        %v2304 = vrot.slane %v2265, 4
        %v2305 = vsel %vm1078, %v2289, %v2304
        %v2306 = vrot.slane %v2293, 4
        %v2307 = vsel %vm1078, %v2306, %v2269
        %v2308 = vrot.slane %v2269, 4
        %v2309 = vsel %vm1078, %v2293, %v2308
        %v2310 = vrot.slane %v880, 4
        %v2311 = vsel %vm1078, %v2310, %v802
        %v2312 = vrot.slane %v802, 4
        %v2313 = vsel %vm1078, %v880, %v2312
        %v2315 = vunpack.c.l.s4 1983009808
        %v2316 = vunpack.c.0.s8 %v2315
        %v2317 = vperm.slane %v2311, %v2316
        %v2319 = vunpack.c.l.s4 1983009808
        %v2320 = vunpack.c.0.s8 %v2319
        %v2321 = vperm.slane %v2313, %v2320
        %v2322 = vrot.slane %v919, 4
        %v2323 = vsel %vm1078, %v2322, %v841
        %v2324 = vrot.slane %v841, 4
        %v2325 = vsel %vm1078, %v919, %v2324
        %v2327 = vunpack.c.l.s4 1983009808
        %v2328 = vunpack.c.0.s8 %v2327
        %v2329 = vperm.slane %v2323, %v2328
        %v2331 = vunpack.c.l.s4 1983009808
        %v2332 = vunpack.c.0.s8 %v2331
        %v2333 = vperm.slane %v2325, %v2332
        %v2334 = vrot.slane %v1036, 4
        %v2335 = vsel %vm1078, %v2334, %v958
        %v2336 = vrot.slane %v958, 4
        %v2337 = vsel %vm1078, %v1036, %v2336
        %v2339 = vunpack.c.l.s4 1983009808
        %v2340 = vunpack.c.0.s8 %v2339
        %v2341 = vperm.slane %v2335, %v2340
        %v2343 = vunpack.c.l.s4 1983009808
        %v2344 = vunpack.c.0.s8 %v2343
        %v2345 = vperm.slane %v2337, %v2344
        %v2346 = vrot.slane %v1075, 4
        %v2347 = vsel %vm1078, %v2346, %v997
        %v2348 = vrot.slane %v997, 4
        %v2349 = vsel %vm1078, %v1075, %v2348
        %v2351 = vunpack.c.l.s4 1983009808
        %v2352 = vunpack.c.0.s8 %v2351
        %v2353 = vperm.slane %v2347, %v2352
        %v2355 = vunpack.c.l.s4 1983009808
        %v2356 = vunpack.c.0.s8 %v2355
        %v2357 = vperm.slane %v2349, %v2356
        %v2358 = vrot.slane %v2329, 4
        %v2359 = vsel %vm1078, %v2358, %v2317
        %v2360 = vrot.slane %v2317, 4
        %v2361 = vsel %vm1078, %v2329, %v2360
        %v2363 = vunpack.c.l.s4 1934713408
        %v2364 = vunpack.c.0.s8 %v2363
        %v2365 = vperm.slane %v2359, %v2364
        %v2367 = vunpack.c.l.s4 1934713408
        %v2368 = vunpack.c.0.s8 %v2367
        %v2369 = vperm.slane %v2361, %v2368
        %v2370 = vrot.slane %v2333, 4
        %v2371 = vsel %vm1078, %v2370, %v2321
        %v2372 = vrot.slane %v2321, 4
        %v2373 = vsel %vm1078, %v2333, %v2372
        %v2375 = vunpack.c.l.s4 1934713408
        %v2376 = vunpack.c.0.s8 %v2375
        %v2377 = vperm.slane %v2371, %v2376
        %v2379 = vunpack.c.l.s4 1934713408
        %v2380 = vunpack.c.0.s8 %v2379
        %v2381 = vperm.slane %v2373, %v2380
        %v2382 = vrot.slane %v2353, 4
        %v2383 = vsel %vm1078, %v2382, %v2341
        %v2384 = vrot.slane %v2341, 4
        %v2385 = vsel %vm1078, %v2353, %v2384
        %v2387 = vunpack.c.l.s4 1934713408
        %v2388 = vunpack.c.0.s8 %v2387
        %v2389 = vperm.slane %v2383, %v2388
        %v2391 = vunpack.c.l.s4 1934713408
        %v2392 = vunpack.c.0.s8 %v2391
        %v2393 = vperm.slane %v2385, %v2392
        %v2394 = vrot.slane %v2357, 4
        %v2395 = vsel %vm1078, %v2394, %v2345
        %v2396 = vrot.slane %v2345, 4
        %v2397 = vsel %vm1078, %v2357, %v2396
        %v2399 = vunpack.c.l.s4 1934713408
        %v2400 = vunpack.c.0.s8 %v2399
        %v2401 = vperm.slane %v2395, %v2400
        %v2403 = vunpack.c.l.s4 1934713408
        %v2404 = vunpack.c.0.s8 %v2403
        %v2405 = vperm.slane %v2397, %v2404
        %v2406 = vrot.slane %v2389, 4
        %v2407 = vsel %vm1078, %v2406, %v2365
        %v2408 = vrot.slane %v2365, 4
        %v2409 = vsel %vm1078, %v2389, %v2408
        %v2410 = vrot.slane %v2393, 4
        %v2411 = vsel %vm1078, %v2410, %v2369
        %v2412 = vrot.slane %v2369, 4
        %v2413 = vsel %vm1078, %v2393, %v2412
        %v2414 = vrot.slane %v2401, 4
        %v2415 = vsel %vm1078, %v2414, %v2377
        %v2416 = vrot.slane %v2377, 4
        %v2417 = vsel %vm1078, %v2401, %v2416
        %v2418 = vrot.slane %v2405, 4
        %v2419 = vsel %vm1078, %v2418, %v2381
        %v2420 = vrot.slane %v2381, 4
        %v2421 = vsel %vm1078, %v2405, %v2420
        %v2426 = vrot.slane %v1623, 1
        %v2427 = vrot.slane %v1623, 2
        %v2428 = vrot.slane %v1623, 3
        %v2429 = vrot.slane %v1623, 4
        %v2430 = vrot.slane %v1623, 5
        %v2431 = vrot.slane %v1623, 6
        %v2432 = vrot.slane %v1623, 7
        %v2433 = vrot.slane %v1735, 1
        %v2434 = vrot.slane %v1735, 2
        %v2435 = vrot.slane %v1735, 3
        %v2436 = vrot.slane %v1735, 4
        %v2437 = vrot.slane %v1735, 5
        %v2438 = vrot.slane %v1735, 6
        %v2439 = vrot.slane %v1735, 7
        %v2440 = vrot.slane %v1847, 1
        %v2441 = vrot.slane %v1847, 2
        %v2442 = vrot.slane %v1847, 3
        %v2443 = vrot.slane %v1847, 4
        %v2444 = vrot.slane %v1847, 5
        %v2445 = vrot.slane %v1847, 6
        %v2446 = vrot.slane %v1847, 7
        %v2447 = vrot.slane %v1959, 1
        %v2448 = vrot.slane %v1959, 2
        %v2449 = vrot.slane %v1959, 3
        %v2450 = vrot.slane %v1959, 4
        %v2451 = vrot.slane %v1959, 5
        %v2452 = vrot.slane %v1959, 6
        %v2453 = vrot.slane %v1959, 7
        %v2454 = vperm.slane %v1623, 0
        %v2455 = vperm.slane %v2426, 0
        %v2456 = vperm.slane %v2427, 0
        %v2457 = vperm.slane %v2428, 0
        %v2458 = vperm.slane %v2429, 0
        %v2459 = vperm.slane %v2430, 0
        %v2460 = vperm.slane %v2431, 0
        %v2461 = vperm.slane %v2432, 0
        %v2462 = vperm.slane %v1735, 0
        %v2463 = vperm.slane %v2433, 0
        %v2464 = vperm.slane %v2434, 0
        %v2465 = vperm.slane %v2435, 0
        %v2466 = vperm.slane %v2436, 0
        %v2467 = vperm.slane %v2437, 0
        %v2468 = vperm.slane %v2438, 0
        %v2469 = vperm.slane %v2439, 0
        %v2470 = vperm.slane %v1847, 0
        %v2471 = vperm.slane %v2440, 0
        %v2472 = vperm.slane %v2441, 0
        %v2473 = vperm.slane %v2442, 0
        %v2474 = vperm.slane %v2443, 0
        %v2475 = vperm.slane %v2444, 0
        %v2476 = vperm.slane %v2445, 0
        %v2477 = vperm.slane %v2446, 0
        %v2478 = vperm.slane %v1959, 0
        %v2479 = vperm.slane %v2447, 0
        %v2480 = vperm.slane %v2448, 0
        %v2481 = vperm.slane %v2449, 0
        %v2482 = vperm.slane %v2450, 0
        %v2483 = vperm.slane %v2451, 0
        %v2484 = vperm.slane %v2452, 0
        %v2485 = vperm.slane %v2453, 0
        %v2518 = vmul.f32 %v2454, %v1175
        %v2519 = vmul.f32 %v2455, %v1175
        %v2520 = vmul.f32 %v2456, %v1175
        %v2521 = vmul.f32 %v2457, %v1175
        %v2522 = vmul.f32 %v2458, %v1175
        %v2523 = vmul.f32 %v2459, %v1175
        %v2524 = vmul.f32 %v2460, %v1175
        %v2525 = vmul.f32 %v2461, %v1175
        %v2526 = vmul.f32 %v2462, %v1287
        %v2527 = vmul.f32 %v2463, %v1287
        %v2528 = vmul.f32 %v2464, %v1287
        %v2529 = vmul.f32 %v2465, %v1287
        %v2530 = vmul.f32 %v2466, %v1287
        %v2531 = vmul.f32 %v2467, %v1287
        %v2532 = vmul.f32 %v2468, %v1287
        %v2533 = vmul.f32 %v2469, %v1287
        %v2534 = vmul.f32 %v2470, %v1399
        %v2535 = vmul.f32 %v2471, %v1399
        %v2536 = vmul.f32 %v2472, %v1399
        %v2537 = vmul.f32 %v2473, %v1399
        %v2538 = vmul.f32 %v2474, %v1399
        %v2539 = vmul.f32 %v2475, %v1399
        %v2540 = vmul.f32 %v2476, %v1399
        %v2541 = vmul.f32 %v2477, %v1399
        %v2542 = vmul.f32 %v2478, %v1511
        %v2543 = vmul.f32 %v2479, %v1511
        %v2544 = vmul.f32 %v2480, %v1511
        %v2545 = vmul.f32 %v2481, %v1511
        %v2546 = vmul.f32 %v2482, %v1511
        %v2547 = vmul.f32 %v2483, %v1511
        %v2548 = vmul.f32 %v2484, %v1511
        %v2549 = vmul.f32 %v2485, %v1511
        %v2554 = vrot.slane %v1625, 1
        %v2555 = vrot.slane %v1625, 2
        %v2556 = vrot.slane %v1625, 3
        %v2557 = vrot.slane %v1625, 4
        %v2558 = vrot.slane %v1625, 5
        %v2559 = vrot.slane %v1625, 6
        %v2560 = vrot.slane %v1625, 7
        %v2561 = vrot.slane %v1737, 1
        %v2562 = vrot.slane %v1737, 2
        %v2563 = vrot.slane %v1737, 3
        %v2564 = vrot.slane %v1737, 4
        %v2565 = vrot.slane %v1737, 5
        %v2566 = vrot.slane %v1737, 6
        %v2567 = vrot.slane %v1737, 7
        %v2568 = vrot.slane %v1849, 1
        %v2569 = vrot.slane %v1849, 2
        %v2570 = vrot.slane %v1849, 3
        %v2571 = vrot.slane %v1849, 4
        %v2572 = vrot.slane %v1849, 5
        %v2573 = vrot.slane %v1849, 6
        %v2574 = vrot.slane %v1849, 7
        %v2575 = vrot.slane %v1961, 1
        %v2576 = vrot.slane %v1961, 2
        %v2577 = vrot.slane %v1961, 3
        %v2578 = vrot.slane %v1961, 4
        %v2579 = vrot.slane %v1961, 5
        %v2580 = vrot.slane %v1961, 6
        %v2581 = vrot.slane %v1961, 7
        %v2582 = vperm.slane %v1625, 0
        %v2583 = vperm.slane %v2554, 0
        %v2584 = vperm.slane %v2555, 0
        %v2585 = vperm.slane %v2556, 0
        %v2586 = vperm.slane %v2557, 0
        %v2587 = vperm.slane %v2558, 0
        %v2588 = vperm.slane %v2559, 0
        %v2589 = vperm.slane %v2560, 0
        %v2590 = vperm.slane %v1737, 0
        %v2591 = vperm.slane %v2561, 0
        %v2592 = vperm.slane %v2562, 0
        %v2593 = vperm.slane %v2563, 0
        %v2594 = vperm.slane %v2564, 0
        %v2595 = vperm.slane %v2565, 0
        %v2596 = vperm.slane %v2566, 0
        %v2597 = vperm.slane %v2567, 0
        %v2598 = vperm.slane %v1849, 0
        %v2599 = vperm.slane %v2568, 0
        %v2600 = vperm.slane %v2569, 0
        %v2601 = vperm.slane %v2570, 0
        %v2602 = vperm.slane %v2571, 0
        %v2603 = vperm.slane %v2572, 0
        %v2604 = vperm.slane %v2573, 0
        %v2605 = vperm.slane %v2574, 0
        %v2606 = vperm.slane %v1961, 0
        %v2607 = vperm.slane %v2575, 0
        %v2608 = vperm.slane %v2576, 0
        %v2609 = vperm.slane %v2577, 0
        %v2610 = vperm.slane %v2578, 0
        %v2611 = vperm.slane %v2579, 0
        %v2612 = vperm.slane %v2580, 0
        %v2613 = vperm.slane %v2581, 0
        %v2646 = vmul.f32 %v2582, %v1177
        %v2647 = vmul.f32 %v2583, %v1177
        %v2648 = vmul.f32 %v2584, %v1177
        %v2649 = vmul.f32 %v2585, %v1177
        %v2650 = vmul.f32 %v2586, %v1177
        %v2651 = vmul.f32 %v2587, %v1177
        %v2652 = vmul.f32 %v2588, %v1177
        %v2653 = vmul.f32 %v2589, %v1177
        %v2654 = vmul.f32 %v2590, %v1289
        %v2655 = vmul.f32 %v2591, %v1289
        %v2656 = vmul.f32 %v2592, %v1289
        %v2657 = vmul.f32 %v2593, %v1289
        %v2658 = vmul.f32 %v2594, %v1289
        %v2659 = vmul.f32 %v2595, %v1289
        %v2660 = vmul.f32 %v2596, %v1289
        %v2661 = vmul.f32 %v2597, %v1289
        %v2662 = vmul.f32 %v2598, %v1401
        %v2663 = vmul.f32 %v2599, %v1401
        %v2664 = vmul.f32 %v2600, %v1401
        %v2665 = vmul.f32 %v2601, %v1401
        %v2666 = vmul.f32 %v2602, %v1401
        %v2667 = vmul.f32 %v2603, %v1401
        %v2668 = vmul.f32 %v2604, %v1401
        %v2669 = vmul.f32 %v2605, %v1401
        %v2670 = vmul.f32 %v2606, %v1513
        %v2671 = vmul.f32 %v2607, %v1513
        %v2672 = vmul.f32 %v2608, %v1513
        %v2673 = vmul.f32 %v2609, %v1513
        %v2674 = vmul.f32 %v2610, %v1513
        %v2675 = vmul.f32 %v2611, %v1513
        %v2676 = vmul.f32 %v2612, %v1513
        %v2677 = vmul.f32 %v2613, %v1513
        %v2678 = vadd.f32 %v2518, %v2646
        %v2679 = vadd.f32 %v2519, %v2647
        %v2680 = vadd.f32 %v2520, %v2648
        %v2681 = vadd.f32 %v2521, %v2649
        %v2682 = vadd.f32 %v2522, %v2650
        %v2683 = vadd.f32 %v2523, %v2651
        %v2684 = vadd.f32 %v2524, %v2652
        %v2685 = vadd.f32 %v2525, %v2653
        %v2686 = vadd.f32 %v2526, %v2654
        %v2687 = vadd.f32 %v2527, %v2655
        %v2688 = vadd.f32 %v2528, %v2656
        %v2689 = vadd.f32 %v2529, %v2657
        %v2690 = vadd.f32 %v2530, %v2658
        %v2691 = vadd.f32 %v2531, %v2659
        %v2692 = vadd.f32 %v2532, %v2660
        %v2693 = vadd.f32 %v2533, %v2661
        %v2694 = vadd.f32 %v2534, %v2662
        %v2695 = vadd.f32 %v2535, %v2663
        %v2696 = vadd.f32 %v2536, %v2664
        %v2697 = vadd.f32 %v2537, %v2665
        %v2698 = vadd.f32 %v2538, %v2666
        %v2699 = vadd.f32 %v2539, %v2667
        %v2700 = vadd.f32 %v2540, %v2668
        %v2701 = vadd.f32 %v2541, %v2669
        %v2702 = vadd.f32 %v2542, %v2670
        %v2703 = vadd.f32 %v2543, %v2671
        %v2704 = vadd.f32 %v2544, %v2672
        %v2705 = vadd.f32 %v2545, %v2673
        %v2706 = vadd.f32 %v2546, %v2674
        %v2707 = vadd.f32 %v2547, %v2675
        %v2708 = vadd.f32 %v2548, %v2676
        %v2709 = vadd.f32 %v2549, %v2677
        %v2714 = vrot.slane %v1627, 1
        %v2715 = vrot.slane %v1627, 2
        %v2716 = vrot.slane %v1627, 3
        %v2717 = vrot.slane %v1627, 4
        %v2718 = vrot.slane %v1627, 5
        %v2719 = vrot.slane %v1627, 6
        %v2720 = vrot.slane %v1627, 7
        %v2721 = vrot.slane %v1739, 1
        %v2722 = vrot.slane %v1739, 2
        %v2723 = vrot.slane %v1739, 3
        %v2724 = vrot.slane %v1739, 4
        %v2725 = vrot.slane %v1739, 5
        %v2726 = vrot.slane %v1739, 6
        %v2727 = vrot.slane %v1739, 7
        %v2728 = vrot.slane %v1851, 1
        %v2729 = vrot.slane %v1851, 2
        %v2730 = vrot.slane %v1851, 3
        %v2731 = vrot.slane %v1851, 4
        %v2732 = vrot.slane %v1851, 5
        %v2733 = vrot.slane %v1851, 6
        %v2734 = vrot.slane %v1851, 7
        %v2735 = vrot.slane %v1963, 1
        %v2736 = vrot.slane %v1963, 2
        %v2737 = vrot.slane %v1963, 3
        %v2738 = vrot.slane %v1963, 4
        %v2739 = vrot.slane %v1963, 5
        %v2740 = vrot.slane %v1963, 6
        %v2741 = vrot.slane %v1963, 7
        %v2742 = vperm.slane %v1627, 0
        %v2743 = vperm.slane %v2714, 0
        %v2744 = vperm.slane %v2715, 0
        %v2745 = vperm.slane %v2716, 0
        %v2746 = vperm.slane %v2717, 0
        %v2747 = vperm.slane %v2718, 0
        %v2748 = vperm.slane %v2719, 0
        %v2749 = vperm.slane %v2720, 0
        %v2750 = vperm.slane %v1739, 0
        %v2751 = vperm.slane %v2721, 0
        %v2752 = vperm.slane %v2722, 0
        %v2753 = vperm.slane %v2723, 0
        %v2754 = vperm.slane %v2724, 0
        %v2755 = vperm.slane %v2725, 0
        %v2756 = vperm.slane %v2726, 0
        %v2757 = vperm.slane %v2727, 0
        %v2758 = vperm.slane %v1851, 0
        %v2759 = vperm.slane %v2728, 0
        %v2760 = vperm.slane %v2729, 0
        %v2761 = vperm.slane %v2730, 0
        %v2762 = vperm.slane %v2731, 0
        %v2763 = vperm.slane %v2732, 0
        %v2764 = vperm.slane %v2733, 0
        %v2765 = vperm.slane %v2734, 0
        %v2766 = vperm.slane %v1963, 0
        %v2767 = vperm.slane %v2735, 0
        %v2768 = vperm.slane %v2736, 0
        %v2769 = vperm.slane %v2737, 0
        %v2770 = vperm.slane %v2738, 0
        %v2771 = vperm.slane %v2739, 0
        %v2772 = vperm.slane %v2740, 0
        %v2773 = vperm.slane %v2741, 0
        %v2806 = vmul.f32 %v2742, %v1179
        %v2807 = vmul.f32 %v2743, %v1179
        %v2808 = vmul.f32 %v2744, %v1179
        %v2809 = vmul.f32 %v2745, %v1179
        %v2810 = vmul.f32 %v2746, %v1179
        %v2811 = vmul.f32 %v2747, %v1179
        %v2812 = vmul.f32 %v2748, %v1179
        %v2813 = vmul.f32 %v2749, %v1179
        %v2814 = vmul.f32 %v2750, %v1291
        %v2815 = vmul.f32 %v2751, %v1291
        %v2816 = vmul.f32 %v2752, %v1291
        %v2817 = vmul.f32 %v2753, %v1291
        %v2818 = vmul.f32 %v2754, %v1291
        %v2819 = vmul.f32 %v2755, %v1291
        %v2820 = vmul.f32 %v2756, %v1291
        %v2821 = vmul.f32 %v2757, %v1291
        %v2822 = vmul.f32 %v2758, %v1403
        %v2823 = vmul.f32 %v2759, %v1403
        %v2824 = vmul.f32 %v2760, %v1403
        %v2825 = vmul.f32 %v2761, %v1403
        %v2826 = vmul.f32 %v2762, %v1403
        %v2827 = vmul.f32 %v2763, %v1403
        %v2828 = vmul.f32 %v2764, %v1403
        %v2829 = vmul.f32 %v2765, %v1403
        %v2830 = vmul.f32 %v2766, %v1515
        %v2831 = vmul.f32 %v2767, %v1515
        %v2832 = vmul.f32 %v2768, %v1515
        %v2833 = vmul.f32 %v2769, %v1515
        %v2834 = vmul.f32 %v2770, %v1515
        %v2835 = vmul.f32 %v2771, %v1515
        %v2836 = vmul.f32 %v2772, %v1515
        %v2837 = vmul.f32 %v2773, %v1515
        %v2838 = vadd.f32 %v2678, %v2806
        %v2839 = vadd.f32 %v2679, %v2807
        %v2840 = vadd.f32 %v2680, %v2808
        %v2841 = vadd.f32 %v2681, %v2809
        %v2842 = vadd.f32 %v2682, %v2810
        %v2843 = vadd.f32 %v2683, %v2811
        %v2844 = vadd.f32 %v2684, %v2812
        %v2845 = vadd.f32 %v2685, %v2813
        %v2846 = vadd.f32 %v2686, %v2814
        %v2847 = vadd.f32 %v2687, %v2815
        %v2848 = vadd.f32 %v2688, %v2816
        %v2849 = vadd.f32 %v2689, %v2817
        %v2850 = vadd.f32 %v2690, %v2818
        %v2851 = vadd.f32 %v2691, %v2819
        %v2852 = vadd.f32 %v2692, %v2820
        %v2853 = vadd.f32 %v2693, %v2821
        %v2854 = vadd.f32 %v2694, %v2822
        %v2855 = vadd.f32 %v2695, %v2823
        %v2856 = vadd.f32 %v2696, %v2824
        %v2857 = vadd.f32 %v2697, %v2825
        %v2858 = vadd.f32 %v2698, %v2826
        %v2859 = vadd.f32 %v2699, %v2827
        %v2860 = vadd.f32 %v2700, %v2828
        %v2861 = vadd.f32 %v2701, %v2829
        %v2862 = vadd.f32 %v2702, %v2830
        %v2863 = vadd.f32 %v2703, %v2831
        %v2864 = vadd.f32 %v2704, %v2832
        %v2865 = vadd.f32 %v2705, %v2833
        %v2866 = vadd.f32 %v2706, %v2834
        %v2867 = vadd.f32 %v2707, %v2835
        %v2868 = vadd.f32 %v2708, %v2836
        %v2869 = vadd.f32 %v2709, %v2837
        %v2874 = vrot.slane %v1629, 1
        %v2875 = vrot.slane %v1629, 2
        %v2876 = vrot.slane %v1629, 3
        %v2877 = vrot.slane %v1629, 4
        %v2878 = vrot.slane %v1629, 5
        %v2879 = vrot.slane %v1629, 6
        %v2880 = vrot.slane %v1629, 7
        %v2881 = vrot.slane %v1741, 1
        %v2882 = vrot.slane %v1741, 2
        %v2883 = vrot.slane %v1741, 3
        %v2884 = vrot.slane %v1741, 4
        %v2885 = vrot.slane %v1741, 5
        %v2886 = vrot.slane %v1741, 6
        %v2887 = vrot.slane %v1741, 7
        %v2888 = vrot.slane %v1853, 1
        %v2889 = vrot.slane %v1853, 2
        %v2890 = vrot.slane %v1853, 3
        %v2891 = vrot.slane %v1853, 4
        %v2892 = vrot.slane %v1853, 5
        %v2893 = vrot.slane %v1853, 6
        %v2894 = vrot.slane %v1853, 7
        %v2895 = vrot.slane %v1965, 1
        %v2896 = vrot.slane %v1965, 2
        %v2897 = vrot.slane %v1965, 3
        %v2898 = vrot.slane %v1965, 4
        %v2899 = vrot.slane %v1965, 5
        %v2900 = vrot.slane %v1965, 6
        %v2901 = vrot.slane %v1965, 7
        %v2902 = vperm.slane %v1629, 0
        %v2903 = vperm.slane %v2874, 0
        %v2904 = vperm.slane %v2875, 0
        %v2905 = vperm.slane %v2876, 0
        %v2906 = vperm.slane %v2877, 0
        %v2907 = vperm.slane %v2878, 0
        %v2908 = vperm.slane %v2879, 0
        %v2909 = vperm.slane %v2880, 0
        %v2910 = vperm.slane %v1741, 0
        %v2911 = vperm.slane %v2881, 0
        %v2912 = vperm.slane %v2882, 0
        %v2913 = vperm.slane %v2883, 0
        %v2914 = vperm.slane %v2884, 0
        %v2915 = vperm.slane %v2885, 0
        %v2916 = vperm.slane %v2886, 0
        %v2917 = vperm.slane %v2887, 0
        %v2918 = vperm.slane %v1853, 0
        %v2919 = vperm.slane %v2888, 0
        %v2920 = vperm.slane %v2889, 0
        %v2921 = vperm.slane %v2890, 0
        %v2922 = vperm.slane %v2891, 0
        %v2923 = vperm.slane %v2892, 0
        %v2924 = vperm.slane %v2893, 0
        %v2925 = vperm.slane %v2894, 0
        %v2926 = vperm.slane %v1965, 0
        %v2927 = vperm.slane %v2895, 0
        %v2928 = vperm.slane %v2896, 0
        %v2929 = vperm.slane %v2897, 0
        %v2930 = vperm.slane %v2898, 0
        %v2931 = vperm.slane %v2899, 0
        %v2932 = vperm.slane %v2900, 0
        %v2933 = vperm.slane %v2901, 0
        %v2966 = vmul.f32 %v2902, %v1181
        %v2967 = vmul.f32 %v2903, %v1181
        %v2968 = vmul.f32 %v2904, %v1181
        %v2969 = vmul.f32 %v2905, %v1181
        %v2970 = vmul.f32 %v2906, %v1181
        %v2971 = vmul.f32 %v2907, %v1181
        %v2972 = vmul.f32 %v2908, %v1181
        %v2973 = vmul.f32 %v2909, %v1181
        %v2974 = vmul.f32 %v2910, %v1293
        %v2975 = vmul.f32 %v2911, %v1293
        %v2976 = vmul.f32 %v2912, %v1293
        %v2977 = vmul.f32 %v2913, %v1293
        %v2978 = vmul.f32 %v2914, %v1293
        %v2979 = vmul.f32 %v2915, %v1293
        %v2980 = vmul.f32 %v2916, %v1293
        %v2981 = vmul.f32 %v2917, %v1293
        %v2982 = vmul.f32 %v2918, %v1405
        %v2983 = vmul.f32 %v2919, %v1405
        %v2984 = vmul.f32 %v2920, %v1405
        %v2985 = vmul.f32 %v2921, %v1405
        %v2986 = vmul.f32 %v2922, %v1405
        %v2987 = vmul.f32 %v2923, %v1405
        %v2988 = vmul.f32 %v2924, %v1405
        %v2989 = vmul.f32 %v2925, %v1405
        %v2990 = vmul.f32 %v2926, %v1517
        %v2991 = vmul.f32 %v2927, %v1517
        %v2992 = vmul.f32 %v2928, %v1517
        %v2993 = vmul.f32 %v2929, %v1517
        %v2994 = vmul.f32 %v2930, %v1517
        %v2995 = vmul.f32 %v2931, %v1517
        %v2996 = vmul.f32 %v2932, %v1517
        %v2997 = vmul.f32 %v2933, %v1517
        %v2998 = vadd.f32 %v2838, %v2966
        %v2999 = vadd.f32 %v2839, %v2967
        %v3000 = vadd.f32 %v2840, %v2968
        %v3001 = vadd.f32 %v2841, %v2969
        %v3002 = vadd.f32 %v2842, %v2970
        %v3003 = vadd.f32 %v2843, %v2971
        %v3004 = vadd.f32 %v2844, %v2972
        %v3005 = vadd.f32 %v2845, %v2973
        %v3006 = vadd.f32 %v2846, %v2974
        %v3007 = vadd.f32 %v2847, %v2975
        %v3008 = vadd.f32 %v2848, %v2976
        %v3009 = vadd.f32 %v2849, %v2977
        %v3010 = vadd.f32 %v2850, %v2978
        %v3011 = vadd.f32 %v2851, %v2979
        %v3012 = vadd.f32 %v2852, %v2980
        %v3013 = vadd.f32 %v2853, %v2981
        %v3014 = vadd.f32 %v2854, %v2982
        %v3015 = vadd.f32 %v2855, %v2983
        %v3016 = vadd.f32 %v2856, %v2984
        %v3017 = vadd.f32 %v2857, %v2985
        %v3018 = vadd.f32 %v2858, %v2986
        %v3019 = vadd.f32 %v2859, %v2987
        %v3020 = vadd.f32 %v2860, %v2988
        %v3021 = vadd.f32 %v2861, %v2989
        %v3022 = vadd.f32 %v2862, %v2990
        %v3023 = vadd.f32 %v2863, %v2991
        %v3024 = vadd.f32 %v2864, %v2992
        %v3025 = vadd.f32 %v2865, %v2993
        %v3026 = vadd.f32 %v2866, %v2994
        %v3027 = vadd.f32 %v2867, %v2995
        %v3028 = vadd.f32 %v2868, %v2996
        %v3029 = vadd.f32 %v2869, %v2997
        %v3034 = vrot.slane %v1631, 1
        %v3035 = vrot.slane %v1631, 2
        %v3036 = vrot.slane %v1631, 3
        %v3037 = vrot.slane %v1631, 4
        %v3038 = vrot.slane %v1631, 5
        %v3039 = vrot.slane %v1631, 6
        %v3040 = vrot.slane %v1631, 7
        %v3041 = vrot.slane %v1743, 1
        %v3042 = vrot.slane %v1743, 2
        %v3043 = vrot.slane %v1743, 3
        %v3044 = vrot.slane %v1743, 4
        %v3045 = vrot.slane %v1743, 5
        %v3046 = vrot.slane %v1743, 6
        %v3047 = vrot.slane %v1743, 7
        %v3048 = vrot.slane %v1855, 1
        %v3049 = vrot.slane %v1855, 2
        %v3050 = vrot.slane %v1855, 3
        %v3051 = vrot.slane %v1855, 4
        %v3052 = vrot.slane %v1855, 5
        %v3053 = vrot.slane %v1855, 6
        %v3054 = vrot.slane %v1855, 7
        %v3055 = vrot.slane %v1967, 1
        %v3056 = vrot.slane %v1967, 2
        %v3057 = vrot.slane %v1967, 3
        %v3058 = vrot.slane %v1967, 4
        %v3059 = vrot.slane %v1967, 5
        %v3060 = vrot.slane %v1967, 6
        %v3061 = vrot.slane %v1967, 7
        %v3062 = vperm.slane %v1631, 0
        %v3063 = vperm.slane %v3034, 0
        %v3064 = vperm.slane %v3035, 0
        %v3065 = vperm.slane %v3036, 0
        %v3066 = vperm.slane %v3037, 0
        %v3067 = vperm.slane %v3038, 0
        %v3068 = vperm.slane %v3039, 0
        %v3069 = vperm.slane %v3040, 0
        %v3070 = vperm.slane %v1743, 0
        %v3071 = vperm.slane %v3041, 0
        %v3072 = vperm.slane %v3042, 0
        %v3073 = vperm.slane %v3043, 0
        %v3074 = vperm.slane %v3044, 0
        %v3075 = vperm.slane %v3045, 0
        %v3076 = vperm.slane %v3046, 0
        %v3077 = vperm.slane %v3047, 0
        %v3078 = vperm.slane %v1855, 0
        %v3079 = vperm.slane %v3048, 0
        %v3080 = vperm.slane %v3049, 0
        %v3081 = vperm.slane %v3050, 0
        %v3082 = vperm.slane %v3051, 0
        %v3083 = vperm.slane %v3052, 0
        %v3084 = vperm.slane %v3053, 0
        %v3085 = vperm.slane %v3054, 0
        %v3086 = vperm.slane %v1967, 0
        %v3087 = vperm.slane %v3055, 0
        %v3088 = vperm.slane %v3056, 0
        %v3089 = vperm.slane %v3057, 0
        %v3090 = vperm.slane %v3058, 0
        %v3091 = vperm.slane %v3059, 0
        %v3092 = vperm.slane %v3060, 0
        %v3093 = vperm.slane %v3061, 0
        %v3126 = vmul.f32 %v3062, %v1183
        %v3127 = vmul.f32 %v3063, %v1183
        %v3128 = vmul.f32 %v3064, %v1183
        %v3129 = vmul.f32 %v3065, %v1183
        %v3130 = vmul.f32 %v3066, %v1183
        %v3131 = vmul.f32 %v3067, %v1183
        %v3132 = vmul.f32 %v3068, %v1183
        %v3133 = vmul.f32 %v3069, %v1183
        %v3134 = vmul.f32 %v3070, %v1295
        %v3135 = vmul.f32 %v3071, %v1295
        %v3136 = vmul.f32 %v3072, %v1295
        %v3137 = vmul.f32 %v3073, %v1295
        %v3138 = vmul.f32 %v3074, %v1295
        %v3139 = vmul.f32 %v3075, %v1295
        %v3140 = vmul.f32 %v3076, %v1295
        %v3141 = vmul.f32 %v3077, %v1295
        %v3142 = vmul.f32 %v3078, %v1407
        %v3143 = vmul.f32 %v3079, %v1407
        %v3144 = vmul.f32 %v3080, %v1407
        %v3145 = vmul.f32 %v3081, %v1407
        %v3146 = vmul.f32 %v3082, %v1407
        %v3147 = vmul.f32 %v3083, %v1407
        %v3148 = vmul.f32 %v3084, %v1407
        %v3149 = vmul.f32 %v3085, %v1407
        %v3150 = vmul.f32 %v3086, %v1519
        %v3151 = vmul.f32 %v3087, %v1519
        %v3152 = vmul.f32 %v3088, %v1519
        %v3153 = vmul.f32 %v3089, %v1519
        %v3154 = vmul.f32 %v3090, %v1519
        %v3155 = vmul.f32 %v3091, %v1519
        %v3156 = vmul.f32 %v3092, %v1519
        %v3157 = vmul.f32 %v3093, %v1519
        %v3158 = vadd.f32 %v2998, %v3126
        %v3159 = vadd.f32 %v2999, %v3127
        %v3160 = vadd.f32 %v3000, %v3128
        %v3161 = vadd.f32 %v3001, %v3129
        %v3162 = vadd.f32 %v3002, %v3130
        %v3163 = vadd.f32 %v3003, %v3131
        %v3164 = vadd.f32 %v3004, %v3132
        %v3165 = vadd.f32 %v3005, %v3133
        %v3166 = vadd.f32 %v3006, %v3134
        %v3167 = vadd.f32 %v3007, %v3135
        %v3168 = vadd.f32 %v3008, %v3136
        %v3169 = vadd.f32 %v3009, %v3137
        %v3170 = vadd.f32 %v3010, %v3138
        %v3171 = vadd.f32 %v3011, %v3139
        %v3172 = vadd.f32 %v3012, %v3140
        %v3173 = vadd.f32 %v3013, %v3141
        %v3174 = vadd.f32 %v3014, %v3142
        %v3175 = vadd.f32 %v3015, %v3143
        %v3176 = vadd.f32 %v3016, %v3144
        %v3177 = vadd.f32 %v3017, %v3145
        %v3178 = vadd.f32 %v3018, %v3146
        %v3179 = vadd.f32 %v3019, %v3147
        %v3180 = vadd.f32 %v3020, %v3148
        %v3181 = vadd.f32 %v3021, %v3149
        %v3182 = vadd.f32 %v3022, %v3150
        %v3183 = vadd.f32 %v3023, %v3151
        %v3184 = vadd.f32 %v3024, %v3152
        %v3185 = vadd.f32 %v3025, %v3153
        %v3186 = vadd.f32 %v3026, %v3154
        %v3187 = vadd.f32 %v3027, %v3155
        %v3188 = vadd.f32 %v3028, %v3156
        %v3189 = vadd.f32 %v3029, %v3157
        %v3194 = vrot.slane %v1633, 1
        %v3195 = vrot.slane %v1633, 2
        %v3196 = vrot.slane %v1633, 3
        %v3197 = vrot.slane %v1633, 4
        %v3198 = vrot.slane %v1633, 5
        %v3199 = vrot.slane %v1633, 6
        %v3200 = vrot.slane %v1633, 7
        %v3201 = vrot.slane %v1745, 1
        %v3202 = vrot.slane %v1745, 2
        %v3203 = vrot.slane %v1745, 3
        %v3204 = vrot.slane %v1745, 4
        %v3205 = vrot.slane %v1745, 5
        %v3206 = vrot.slane %v1745, 6
        %v3207 = vrot.slane %v1745, 7
        %v3208 = vrot.slane %v1857, 1
        %v3209 = vrot.slane %v1857, 2
        %v3210 = vrot.slane %v1857, 3
        %v3211 = vrot.slane %v1857, 4
        %v3212 = vrot.slane %v1857, 5
        %v3213 = vrot.slane %v1857, 6
        %v3214 = vrot.slane %v1857, 7
        %v3215 = vrot.slane %v1969, 1
        %v3216 = vrot.slane %v1969, 2
        %v3217 = vrot.slane %v1969, 3
        %v3218 = vrot.slane %v1969, 4
        %v3219 = vrot.slane %v1969, 5
        %v3220 = vrot.slane %v1969, 6
        %v3221 = vrot.slane %v1969, 7
        %v3222 = vperm.slane %v1633, 0
        %v3223 = vperm.slane %v3194, 0
        %v3224 = vperm.slane %v3195, 0
        %v3225 = vperm.slane %v3196, 0
        %v3226 = vperm.slane %v3197, 0
        %v3227 = vperm.slane %v3198, 0
        %v3228 = vperm.slane %v3199, 0
        %v3229 = vperm.slane %v3200, 0
        %v3230 = vperm.slane %v1745, 0
        %v3231 = vperm.slane %v3201, 0
        %v3232 = vperm.slane %v3202, 0
        %v3233 = vperm.slane %v3203, 0
        %v3234 = vperm.slane %v3204, 0
        %v3235 = vperm.slane %v3205, 0
        %v3236 = vperm.slane %v3206, 0
        %v3237 = vperm.slane %v3207, 0
        %v3238 = vperm.slane %v1857, 0
        %v3239 = vperm.slane %v3208, 0
        %v3240 = vperm.slane %v3209, 0
        %v3241 = vperm.slane %v3210, 0
        %v3242 = vperm.slane %v3211, 0
        %v3243 = vperm.slane %v3212, 0
        %v3244 = vperm.slane %v3213, 0
        %v3245 = vperm.slane %v3214, 0
        %v3246 = vperm.slane %v1969, 0
        %v3247 = vperm.slane %v3215, 0
        %v3248 = vperm.slane %v3216, 0
        %v3249 = vperm.slane %v3217, 0
        %v3250 = vperm.slane %v3218, 0
        %v3251 = vperm.slane %v3219, 0
        %v3252 = vperm.slane %v3220, 0
        %v3253 = vperm.slane %v3221, 0
        %v3286 = vmul.f32 %v3222, %v1185
        %v3287 = vmul.f32 %v3223, %v1185
        %v3288 = vmul.f32 %v3224, %v1185
        %v3289 = vmul.f32 %v3225, %v1185
        %v3290 = vmul.f32 %v3226, %v1185
        %v3291 = vmul.f32 %v3227, %v1185
        %v3292 = vmul.f32 %v3228, %v1185
        %v3293 = vmul.f32 %v3229, %v1185
        %v3294 = vmul.f32 %v3230, %v1297
        %v3295 = vmul.f32 %v3231, %v1297
        %v3296 = vmul.f32 %v3232, %v1297
        %v3297 = vmul.f32 %v3233, %v1297
        %v3298 = vmul.f32 %v3234, %v1297
        %v3299 = vmul.f32 %v3235, %v1297
        %v3300 = vmul.f32 %v3236, %v1297
        %v3301 = vmul.f32 %v3237, %v1297
        %v3302 = vmul.f32 %v3238, %v1409
        %v3303 = vmul.f32 %v3239, %v1409
        %v3304 = vmul.f32 %v3240, %v1409
        %v3305 = vmul.f32 %v3241, %v1409
        %v3306 = vmul.f32 %v3242, %v1409
        %v3307 = vmul.f32 %v3243, %v1409
        %v3308 = vmul.f32 %v3244, %v1409
        %v3309 = vmul.f32 %v3245, %v1409
        %v3310 = vmul.f32 %v3246, %v1521
        %v3311 = vmul.f32 %v3247, %v1521
        %v3312 = vmul.f32 %v3248, %v1521
        %v3313 = vmul.f32 %v3249, %v1521
        %v3314 = vmul.f32 %v3250, %v1521
        %v3315 = vmul.f32 %v3251, %v1521
        %v3316 = vmul.f32 %v3252, %v1521
        %v3317 = vmul.f32 %v3253, %v1521
        %v3318 = vadd.f32 %v3158, %v3286
        %v3319 = vadd.f32 %v3159, %v3287
        %v3320 = vadd.f32 %v3160, %v3288
        %v3321 = vadd.f32 %v3161, %v3289
        %v3322 = vadd.f32 %v3162, %v3290
        %v3323 = vadd.f32 %v3163, %v3291
        %v3324 = vadd.f32 %v3164, %v3292
        %v3325 = vadd.f32 %v3165, %v3293
        %v3326 = vadd.f32 %v3166, %v3294
        %v3327 = vadd.f32 %v3167, %v3295
        %v3328 = vadd.f32 %v3168, %v3296
        %v3329 = vadd.f32 %v3169, %v3297
        %v3330 = vadd.f32 %v3170, %v3298
        %v3331 = vadd.f32 %v3171, %v3299
        %v3332 = vadd.f32 %v3172, %v3300
        %v3333 = vadd.f32 %v3173, %v3301
        %v3334 = vadd.f32 %v3174, %v3302
        %v3335 = vadd.f32 %v3175, %v3303
        %v3336 = vadd.f32 %v3176, %v3304
        %v3337 = vadd.f32 %v3177, %v3305
        %v3338 = vadd.f32 %v3178, %v3306
        %v3339 = vadd.f32 %v3179, %v3307
        %v3340 = vadd.f32 %v3180, %v3308
        %v3341 = vadd.f32 %v3181, %v3309
        %v3342 = vadd.f32 %v3182, %v3310
        %v3343 = vadd.f32 %v3183, %v3311
        %v3344 = vadd.f32 %v3184, %v3312
        %v3345 = vadd.f32 %v3185, %v3313
        %v3346 = vadd.f32 %v3186, %v3314
        %v3347 = vadd.f32 %v3187, %v3315
        %v3348 = vadd.f32 %v3188, %v3316
        %v3349 = vadd.f32 %v3189, %v3317
        %v3354 = vrot.slane %v1635, 1
        %v3355 = vrot.slane %v1635, 2
        %v3356 = vrot.slane %v1635, 3
        %v3357 = vrot.slane %v1635, 4
        %v3358 = vrot.slane %v1635, 5
        %v3359 = vrot.slane %v1635, 6
        %v3360 = vrot.slane %v1635, 7
        %v3361 = vrot.slane %v1747, 1
        %v3362 = vrot.slane %v1747, 2
        %v3363 = vrot.slane %v1747, 3
        %v3364 = vrot.slane %v1747, 4
        %v3365 = vrot.slane %v1747, 5
        %v3366 = vrot.slane %v1747, 6
        %v3367 = vrot.slane %v1747, 7
        %v3368 = vrot.slane %v1859, 1
        %v3369 = vrot.slane %v1859, 2
        %v3370 = vrot.slane %v1859, 3
        %v3371 = vrot.slane %v1859, 4
        %v3372 = vrot.slane %v1859, 5
        %v3373 = vrot.slane %v1859, 6
        %v3374 = vrot.slane %v1859, 7
        %v3375 = vrot.slane %v1971, 1
        %v3376 = vrot.slane %v1971, 2
        %v3377 = vrot.slane %v1971, 3
        %v3378 = vrot.slane %v1971, 4
        %v3379 = vrot.slane %v1971, 5
        %v3380 = vrot.slane %v1971, 6
        %v3381 = vrot.slane %v1971, 7
        %v3382 = vperm.slane %v1635, 0
        %v3383 = vperm.slane %v3354, 0
        %v3384 = vperm.slane %v3355, 0
        %v3385 = vperm.slane %v3356, 0
        %v3386 = vperm.slane %v3357, 0
        %v3387 = vperm.slane %v3358, 0
        %v3388 = vperm.slane %v3359, 0
        %v3389 = vperm.slane %v3360, 0
        %v3390 = vperm.slane %v1747, 0
        %v3391 = vperm.slane %v3361, 0
        %v3392 = vperm.slane %v3362, 0
        %v3393 = vperm.slane %v3363, 0
        %v3394 = vperm.slane %v3364, 0
        %v3395 = vperm.slane %v3365, 0
        %v3396 = vperm.slane %v3366, 0
        %v3397 = vperm.slane %v3367, 0
        %v3398 = vperm.slane %v1859, 0
        %v3399 = vperm.slane %v3368, 0
        %v3400 = vperm.slane %v3369, 0
        %v3401 = vperm.slane %v3370, 0
        %v3402 = vperm.slane %v3371, 0
        %v3403 = vperm.slane %v3372, 0
        %v3404 = vperm.slane %v3373, 0
        %v3405 = vperm.slane %v3374, 0
        %v3406 = vperm.slane %v1971, 0
        %v3407 = vperm.slane %v3375, 0
        %v3408 = vperm.slane %v3376, 0
        %v3409 = vperm.slane %v3377, 0
        %v3410 = vperm.slane %v3378, 0
        %v3411 = vperm.slane %v3379, 0
        %v3412 = vperm.slane %v3380, 0
        %v3413 = vperm.slane %v3381, 0
        %v3446 = vmul.f32 %v3382, %v1187
        %v3447 = vmul.f32 %v3383, %v1187
        %v3448 = vmul.f32 %v3384, %v1187
        %v3449 = vmul.f32 %v3385, %v1187
        %v3450 = vmul.f32 %v3386, %v1187
        %v3451 = vmul.f32 %v3387, %v1187
        %v3452 = vmul.f32 %v3388, %v1187
        %v3453 = vmul.f32 %v3389, %v1187
        %v3454 = vmul.f32 %v3390, %v1299
        %v3455 = vmul.f32 %v3391, %v1299
        %v3456 = vmul.f32 %v3392, %v1299
        %v3457 = vmul.f32 %v3393, %v1299
        %v3458 = vmul.f32 %v3394, %v1299
        %v3459 = vmul.f32 %v3395, %v1299
        %v3460 = vmul.f32 %v3396, %v1299
        %v3461 = vmul.f32 %v3397, %v1299
        %v3462 = vmul.f32 %v3398, %v1411
        %v3463 = vmul.f32 %v3399, %v1411
        %v3464 = vmul.f32 %v3400, %v1411
        %v3465 = vmul.f32 %v3401, %v1411
        %v3466 = vmul.f32 %v3402, %v1411
        %v3467 = vmul.f32 %v3403, %v1411
        %v3468 = vmul.f32 %v3404, %v1411
        %v3469 = vmul.f32 %v3405, %v1411
        %v3470 = vmul.f32 %v3406, %v1523
        %v3471 = vmul.f32 %v3407, %v1523
        %v3472 = vmul.f32 %v3408, %v1523
        %v3473 = vmul.f32 %v3409, %v1523
        %v3474 = vmul.f32 %v3410, %v1523
        %v3475 = vmul.f32 %v3411, %v1523
        %v3476 = vmul.f32 %v3412, %v1523
        %v3477 = vmul.f32 %v3413, %v1523
        %v3478 = vadd.f32 %v3318, %v3446
        %v3479 = vadd.f32 %v3319, %v3447
        %v3480 = vadd.f32 %v3320, %v3448
        %v3481 = vadd.f32 %v3321, %v3449
        %v3482 = vadd.f32 %v3322, %v3450
        %v3483 = vadd.f32 %v3323, %v3451
        %v3484 = vadd.f32 %v3324, %v3452
        %v3485 = vadd.f32 %v3325, %v3453
        %v3486 = vadd.f32 %v3326, %v3454
        %v3487 = vadd.f32 %v3327, %v3455
        %v3488 = vadd.f32 %v3328, %v3456
        %v3489 = vadd.f32 %v3329, %v3457
        %v3490 = vadd.f32 %v3330, %v3458
        %v3491 = vadd.f32 %v3331, %v3459
        %v3492 = vadd.f32 %v3332, %v3460
        %v3493 = vadd.f32 %v3333, %v3461
        %v3494 = vadd.f32 %v3334, %v3462
        %v3495 = vadd.f32 %v3335, %v3463
        %v3496 = vadd.f32 %v3336, %v3464
        %v3497 = vadd.f32 %v3337, %v3465
        %v3498 = vadd.f32 %v3338, %v3466
        %v3499 = vadd.f32 %v3339, %v3467
        %v3500 = vadd.f32 %v3340, %v3468
        %v3501 = vadd.f32 %v3341, %v3469
        %v3502 = vadd.f32 %v3342, %v3470
        %v3503 = vadd.f32 %v3343, %v3471
        %v3504 = vadd.f32 %v3344, %v3472
        %v3505 = vadd.f32 %v3345, %v3473
        %v3506 = vadd.f32 %v3346, %v3474
        %v3507 = vadd.f32 %v3347, %v3475
        %v3508 = vadd.f32 %v3348, %v3476
        %v3509 = vadd.f32 %v3349, %v3477
        %v3514 = vrot.slane %v1637, 1
        %v3515 = vrot.slane %v1637, 2
        %v3516 = vrot.slane %v1637, 3
        %v3517 = vrot.slane %v1637, 4
        %v3518 = vrot.slane %v1637, 5
        %v3519 = vrot.slane %v1637, 6
        %v3520 = vrot.slane %v1637, 7
        %v3521 = vrot.slane %v1749, 1
        %v3522 = vrot.slane %v1749, 2
        %v3523 = vrot.slane %v1749, 3
        %v3524 = vrot.slane %v1749, 4
        %v3525 = vrot.slane %v1749, 5
        %v3526 = vrot.slane %v1749, 6
        %v3527 = vrot.slane %v1749, 7
        %v3528 = vrot.slane %v1861, 1
        %v3529 = vrot.slane %v1861, 2
        %v3530 = vrot.slane %v1861, 3
        %v3531 = vrot.slane %v1861, 4
        %v3532 = vrot.slane %v1861, 5
        %v3533 = vrot.slane %v1861, 6
        %v3534 = vrot.slane %v1861, 7
        %v3535 = vrot.slane %v1973, 1
        %v3536 = vrot.slane %v1973, 2
        %v3537 = vrot.slane %v1973, 3
        %v3538 = vrot.slane %v1973, 4
        %v3539 = vrot.slane %v1973, 5
        %v3540 = vrot.slane %v1973, 6
        %v3541 = vrot.slane %v1973, 7
        %v3542 = vperm.slane %v1637, 0
        %v3543 = vperm.slane %v3514, 0
        %v3544 = vperm.slane %v3515, 0
        %v3545 = vperm.slane %v3516, 0
        %v3546 = vperm.slane %v3517, 0
        %v3547 = vperm.slane %v3518, 0
        %v3548 = vperm.slane %v3519, 0
        %v3549 = vperm.slane %v3520, 0
        %v3550 = vperm.slane %v1749, 0
        %v3551 = vperm.slane %v3521, 0
        %v3552 = vperm.slane %v3522, 0
        %v3553 = vperm.slane %v3523, 0
        %v3554 = vperm.slane %v3524, 0
        %v3555 = vperm.slane %v3525, 0
        %v3556 = vperm.slane %v3526, 0
        %v3557 = vperm.slane %v3527, 0
        %v3558 = vperm.slane %v1861, 0
        %v3559 = vperm.slane %v3528, 0
        %v3560 = vperm.slane %v3529, 0
        %v3561 = vperm.slane %v3530, 0
        %v3562 = vperm.slane %v3531, 0
        %v3563 = vperm.slane %v3532, 0
        %v3564 = vperm.slane %v3533, 0
        %v3565 = vperm.slane %v3534, 0
        %v3566 = vperm.slane %v1973, 0
        %v3567 = vperm.slane %v3535, 0
        %v3568 = vperm.slane %v3536, 0
        %v3569 = vperm.slane %v3537, 0
        %v3570 = vperm.slane %v3538, 0
        %v3571 = vperm.slane %v3539, 0
        %v3572 = vperm.slane %v3540, 0
        %v3573 = vperm.slane %v3541, 0
        %v3606 = vmul.f32 %v3542, %v1189
        %v3607 = vmul.f32 %v3543, %v1189
        %v3608 = vmul.f32 %v3544, %v1189
        %v3609 = vmul.f32 %v3545, %v1189
        %v3610 = vmul.f32 %v3546, %v1189
        %v3611 = vmul.f32 %v3547, %v1189
        %v3612 = vmul.f32 %v3548, %v1189
        %v3613 = vmul.f32 %v3549, %v1189
        %v3614 = vmul.f32 %v3550, %v1301
        %v3615 = vmul.f32 %v3551, %v1301
        %v3616 = vmul.f32 %v3552, %v1301
        %v3617 = vmul.f32 %v3553, %v1301
        %v3618 = vmul.f32 %v3554, %v1301
        %v3619 = vmul.f32 %v3555, %v1301
        %v3620 = vmul.f32 %v3556, %v1301
        %v3621 = vmul.f32 %v3557, %v1301
        %v3622 = vmul.f32 %v3558, %v1413
        %v3623 = vmul.f32 %v3559, %v1413
        %v3624 = vmul.f32 %v3560, %v1413
        %v3625 = vmul.f32 %v3561, %v1413
        %v3626 = vmul.f32 %v3562, %v1413
        %v3627 = vmul.f32 %v3563, %v1413
        %v3628 = vmul.f32 %v3564, %v1413
        %v3629 = vmul.f32 %v3565, %v1413
        %v3630 = vmul.f32 %v3566, %v1525
        %v3631 = vmul.f32 %v3567, %v1525
        %v3632 = vmul.f32 %v3568, %v1525
        %v3633 = vmul.f32 %v3569, %v1525
        %v3634 = vmul.f32 %v3570, %v1525
        %v3635 = vmul.f32 %v3571, %v1525
        %v3636 = vmul.f32 %v3572, %v1525
        %v3637 = vmul.f32 %v3573, %v1525
        %v3638 = vadd.f32 %v3478, %v3606
        %v3639 = vadd.f32 %v3479, %v3607
        %v3640 = vadd.f32 %v3480, %v3608
        %v3641 = vadd.f32 %v3481, %v3609
        %v3642 = vadd.f32 %v3482, %v3610
        %v3643 = vadd.f32 %v3483, %v3611
        %v3644 = vadd.f32 %v3484, %v3612
        %v3645 = vadd.f32 %v3485, %v3613
        %v3646 = vadd.f32 %v3486, %v3614
        %v3647 = vadd.f32 %v3487, %v3615
        %v3648 = vadd.f32 %v3488, %v3616
        %v3649 = vadd.f32 %v3489, %v3617
        %v3650 = vadd.f32 %v3490, %v3618
        %v3651 = vadd.f32 %v3491, %v3619
        %v3652 = vadd.f32 %v3492, %v3620
        %v3653 = vadd.f32 %v3493, %v3621
        %v3654 = vadd.f32 %v3494, %v3622
        %v3655 = vadd.f32 %v3495, %v3623
        %v3656 = vadd.f32 %v3496, %v3624
        %v3657 = vadd.f32 %v3497, %v3625
        %v3658 = vadd.f32 %v3498, %v3626
        %v3659 = vadd.f32 %v3499, %v3627
        %v3660 = vadd.f32 %v3500, %v3628
        %v3661 = vadd.f32 %v3501, %v3629
        %v3662 = vadd.f32 %v3502, %v3630
        %v3663 = vadd.f32 %v3503, %v3631
        %v3664 = vadd.f32 %v3504, %v3632
        %v3665 = vadd.f32 %v3505, %v3633
        %v3666 = vadd.f32 %v3506, %v3634
        %v3667 = vadd.f32 %v3507, %v3635
        %v3668 = vadd.f32 %v3508, %v3636
        %v3669 = vadd.f32 %v3509, %v3637
        %v3670 = vmul.f32 %v3638, 0.35355338
        %v3671 = vmul.f32 %v3639, 0.35355338
        %v3672 = vmul.f32 %v3640, 0.35355338
        %v3673 = vmul.f32 %v3641, 0.35355338
        %v3674 = vmul.f32 %v3642, 0.35355338
        %v3675 = vmul.f32 %v3643, 0.35355338
        %v3676 = vmul.f32 %v3644, 0.35355338
        %v3677 = vmul.f32 %v3645, 0.35355338
        %v3678 = vmul.f32 %v3646, 0.35355338
        %v3679 = vmul.f32 %v3647, 0.35355338
        %v3680 = vmul.f32 %v3648, 0.35355338
        %v3681 = vmul.f32 %v3649, 0.35355338
        %v3682 = vmul.f32 %v3650, 0.35355338
        %v3683 = vmul.f32 %v3651, 0.35355338
        %v3684 = vmul.f32 %v3652, 0.35355338
        %v3685 = vmul.f32 %v3653, 0.35355338
        %v3686 = vmul.f32 %v3654, 0.35355338
        %v3687 = vmul.f32 %v3655, 0.35355338
        %v3688 = vmul.f32 %v3656, 0.35355338
        %v3689 = vmul.f32 %v3657, 0.35355338
        %v3690 = vmul.f32 %v3658, 0.35355338
        %v3691 = vmul.f32 %v3659, 0.35355338
        %v3692 = vmul.f32 %v3660, 0.35355338
        %v3693 = vmul.f32 %v3661, 0.35355338
        %v3694 = vmul.f32 %v3662, 0.35355338
        %v3695 = vmul.f32 %v3663, 0.35355338
        %v3696 = vmul.f32 %v3664, 0.35355338
        %v3697 = vmul.f32 %v3665, 0.35355338
        %v3698 = vmul.f32 %v3666, 0.35355338
        %v3699 = vmul.f32 %v3667, 0.35355338
        %v3700 = vmul.f32 %v3668, 0.35355338
        %v3701 = vmul.f32 %v3669, 0.35355338
        %v3702 = vmax.f32 %v3670, %v3671
        %v3703 = vmax.f32 %v3702, %v3672
        %v3704 = vmax.f32 %v3703, %v3673
        %v3705 = vmax.f32 %v3704, %v3674
        %v3706 = vmax.f32 %v3705, %v3675
        %v3707 = vmax.f32 %v3706, %v3676
        %v3708 = vmax.f32 %v3707, %v3677
        %v3709 = vmax.f32 %v3678, %v3679
        %v3710 = vmax.f32 %v3709, %v3680
        %v3711 = vmax.f32 %v3710, %v3681
        %v3712 = vmax.f32 %v3711, %v3682
        %v3713 = vmax.f32 %v3712, %v3683
        %v3714 = vmax.f32 %v3713, %v3684
        %v3715 = vmax.f32 %v3714, %v3685
        %v3716 = vmax.f32 %v3686, %v3687
        %v3717 = vmax.f32 %v3716, %v3688
        %v3718 = vmax.f32 %v3717, %v3689
        %v3719 = vmax.f32 %v3718, %v3690
        %v3720 = vmax.f32 %v3719, %v3691
        %v3721 = vmax.f32 %v3720, %v3692
        %v3722 = vmax.f32 %v3721, %v3693
        %v3723 = vmax.f32 %v3694, %v3695
        %v3724 = vmax.f32 %v3723, %v3696
        %v3725 = vmax.f32 %v3724, %v3697
        %v3726 = vmax.f32 %v3725, %v3698
        %v3727 = vmax.f32 %v3726, %v3699
        %v3728 = vmax.f32 %v3727, %v3700
        %v3729 = vmax.f32 %v3728, %v3701
        %v3730 = vsub.f32 %v3670, %v3708
        %v3731 = vsub.f32 %v3671, %v3708
        %v3732 = vsub.f32 %v3672, %v3708
        %v3733 = vsub.f32 %v3673, %v3708
        %v3734 = vsub.f32 %v3674, %v3708
        %v3735 = vsub.f32 %v3675, %v3708
        %v3736 = vsub.f32 %v3676, %v3708
        %v3737 = vsub.f32 %v3677, %v3708
        %v3738 = vsub.f32 %v3678, %v3715
        %v3739 = vsub.f32 %v3679, %v3715
        %v3740 = vsub.f32 %v3680, %v3715
        %v3741 = vsub.f32 %v3681, %v3715
        %v3742 = vsub.f32 %v3682, %v3715
        %v3743 = vsub.f32 %v3683, %v3715
        %v3744 = vsub.f32 %v3684, %v3715
        %v3745 = vsub.f32 %v3685, %v3715
        %v3746 = vsub.f32 %v3686, %v3722
        %v3747 = vsub.f32 %v3687, %v3722
        %v3748 = vsub.f32 %v3688, %v3722
        %v3749 = vsub.f32 %v3689, %v3722
        %v3750 = vsub.f32 %v3690, %v3722
        %v3751 = vsub.f32 %v3691, %v3722
        %v3752 = vsub.f32 %v3692, %v3722
        %v3753 = vsub.f32 %v3693, %v3722
        %v3754 = vsub.f32 %v3694, %v3729
        %v3755 = vsub.f32 %v3695, %v3729
        %v3756 = vsub.f32 %v3696, %v3729
        %v3757 = vsub.f32 %v3697, %v3729
        %v3758 = vsub.f32 %v3698, %v3729
        %v3759 = vsub.f32 %v3699, %v3729
        %v3760 = vsub.f32 %v3700, %v3729
        %v3761 = vsub.f32 %v3701, %v3729
        %v3762 = vmul.f32 %v3730, 1.442695
        %v3763 = vpow.pop %v3762
        %v3764 = vmul.f32 %v3731, 1.442695
        %v3765 = vpow.pop %v3764
        %v3766 = vmul.f32 %v3732, 1.442695
        %v3767 = vpow.pop %v3766
        %v3768 = vmul.f32 %v3733, 1.442695
        %v3769 = vpow.pop %v3768
        %v3770 = vmul.f32 %v3734, 1.442695
        %v3771 = vpow.pop %v3770
        %v3772 = vmul.f32 %v3735, 1.442695
        %v3773 = vpow.pop %v3772
        %v3774 = vmul.f32 %v3736, 1.442695
        %v3775 = vpow.pop %v3774
        %v3776 = vmul.f32 %v3737, 1.442695
        %v3777 = vpow.pop %v3776
        %v3778 = vmul.f32 %v3738, 1.442695
        %v3779 = vpow.pop %v3778
        %v3780 = vmul.f32 %v3739, 1.442695
        %v3781 = vpow.pop %v3780
        %v3782 = vmul.f32 %v3740, 1.442695
        %v3783 = vpow.pop %v3782
        %v3784 = vmul.f32 %v3741, 1.442695
        %v3785 = vpow.pop %v3784
        %v3786 = vmul.f32 %v3742, 1.442695
        %v3787 = vpow.pop %v3786
        %v3788 = vmul.f32 %v3743, 1.442695
        %v3789 = vpow.pop %v3788
        %v3790 = vmul.f32 %v3744, 1.442695
        %v3791 = vpow.pop %v3790
        %v3792 = vmul.f32 %v3745, 1.442695
        %v3793 = vpow.pop %v3792
        %v3794 = vmul.f32 %v3746, 1.442695
        %v3795 = vpow.pop %v3794
        %v3796 = vmul.f32 %v3747, 1.442695
        %v3797 = vpow.pop %v3796
        %v3798 = vmul.f32 %v3748, 1.442695
        %v3799 = vpow.pop %v3798
        %v3800 = vmul.f32 %v3749, 1.442695
        %v3801 = vpow.pop %v3800
        %v3802 = vmul.f32 %v3750, 1.442695
        %v3803 = vpow.pop %v3802
        %v3804 = vmul.f32 %v3751, 1.442695
        %v3805 = vpow.pop %v3804
        %v3806 = vmul.f32 %v3752, 1.442695
        %v3807 = vpow.pop %v3806
        %v3808 = vmul.f32 %v3753, 1.442695
        %v3809 = vpow.pop %v3808
        %v3810 = vmul.f32 %v3754, 1.442695
        %v3811 = vpow.pop %v3810
        %v3812 = vmul.f32 %v3755, 1.442695
        %v3813 = vpow.pop %v3812
        %v3814 = vmul.f32 %v3756, 1.442695
        %v3815 = vpow.pop %v3814
        %v3816 = vmul.f32 %v3757, 1.442695
        %v3817 = vpow.pop %v3816
        %v3818 = vmul.f32 %v3758, 1.442695
        %v3819 = vpow.pop %v3818
        %v3820 = vmul.f32 %v3759, 1.442695
        %v3821 = vpow.pop %v3820
        %v3822 = vmul.f32 %v3760, 1.442695
        %v3823 = vpow.pop %v3822
        %v3824 = vmul.f32 %v3761, 1.442695
        %v3825 = vpow.pop %v3824
        %v3826 = vadd.f32 %v3763, %v3765
        %v3827 = vadd.f32 %v3826, %v3767
        %v3828 = vadd.f32 %v3827, %v3769
        %v3829 = vadd.f32 %v3828, %v3771
        %v3830 = vadd.f32 %v3829, %v3773
        %v3831 = vadd.f32 %v3830, %v3775
        %v3832 = vadd.f32 %v3831, %v3777
        %v3833 = vadd.f32 %v3779, %v3781
        %v3834 = vadd.f32 %v3833, %v3783
        %v3835 = vadd.f32 %v3834, %v3785
        %v3836 = vadd.f32 %v3835, %v3787
        %v3837 = vadd.f32 %v3836, %v3789
        %v3838 = vadd.f32 %v3837, %v3791
        %v3839 = vadd.f32 %v3838, %v3793
        %v3840 = vadd.f32 %v3795, %v3797
        %v3841 = vadd.f32 %v3840, %v3799
        %v3842 = vadd.f32 %v3841, %v3801
        %v3843 = vadd.f32 %v3842, %v3803
        %v3844 = vadd.f32 %v3843, %v3805
        %v3845 = vadd.f32 %v3844, %v3807
        %v3846 = vadd.f32 %v3845, %v3809
        %v3847 = vadd.f32 %v3811, %v3813
        %v3848 = vadd.f32 %v3847, %v3815
        %v3849 = vadd.f32 %v3848, %v3817
        %v3850 = vadd.f32 %v3849, %v3819
        %v3851 = vadd.f32 %v3850, %v3821
        %v3852 = vadd.f32 %v3851, %v3823
        %v3853 = vadd.f32 %v3852, %v3825
        %v3854 = vrcp.pop %v3832
        %v3855 = vrcp.pop %v3839
        %v3856 = vrcp.pop %v3846
        %v3857 = vrcp.pop %v3853
        %v3858 = vmul.f32 %v3763, %v3854
        %v3859 = vmul.f32 %v3765, %v3854
        %v3860 = vmul.f32 %v3767, %v3854
        %v3861 = vmul.f32 %v3769, %v3854
        %v3862 = vmul.f32 %v3771, %v3854
        %v3863 = vmul.f32 %v3773, %v3854
        %v3864 = vmul.f32 %v3775, %v3854
        %v3865 = vmul.f32 %v3777, %v3854
        %v3866 = vmul.f32 %v3779, %v3855
        %v3867 = vmul.f32 %v3781, %v3855
        %v3868 = vmul.f32 %v3783, %v3855
        %v3869 = vmul.f32 %v3785, %v3855
        %v3870 = vmul.f32 %v3787, %v3855
        %v3871 = vmul.f32 %v3789, %v3855
        %v3872 = vmul.f32 %v3791, %v3855
        %v3873 = vmul.f32 %v3793, %v3855
        %v3874 = vmul.f32 %v3795, %v3856
        %v3875 = vmul.f32 %v3797, %v3856
        %v3876 = vmul.f32 %v3799, %v3856
        %v3877 = vmul.f32 %v3801, %v3856
        %v3878 = vmul.f32 %v3803, %v3856
        %v3879 = vmul.f32 %v3805, %v3856
        %v3880 = vmul.f32 %v3807, %v3856
        %v3881 = vmul.f32 %v3809, %v3856
        %v3882 = vmul.f32 %v3811, %v3857
        %v3883 = vmul.f32 %v3813, %v3857
        %v3884 = vmul.f32 %v3815, %v3857
        %v3885 = vmul.f32 %v3817, %v3857
        %v3886 = vmul.f32 %v3819, %v3857
        %v3887 = vmul.f32 %v3821, %v3857
        %v3888 = vmul.f32 %v3823, %v3857
        %v3889 = vmul.f32 %v3825, %v3857
        %v3890 = vperm.slane %v2071, 0
        %v3891 = vperm.slane %v2073, 0
        %v3892 = vperm.slane %v2075, 0
        %v3893 = vperm.slane %v2077, 0
        %v3894 = vperm.slane %v2079, 0
        %v3895 = vperm.slane %v2081, 0
        %v3896 = vperm.slane %v2083, 0
        %v3897 = vperm.slane %v2085, 0
        %v3898 = vperm.slane %v2183, 0
        %v3899 = vperm.slane %v2185, 0
        %v3900 = vperm.slane %v2187, 0
        %v3901 = vperm.slane %v2189, 0
        %v3902 = vperm.slane %v2191, 0
        %v3903 = vperm.slane %v2193, 0
        %v3904 = vperm.slane %v2195, 0
        %v3905 = vperm.slane %v2197, 0
        %v3906 = vperm.slane %v2295, 0
        %v3907 = vperm.slane %v2297, 0
        %v3908 = vperm.slane %v2299, 0
        %v3909 = vperm.slane %v2301, 0
        %v3910 = vperm.slane %v2303, 0
        %v3911 = vperm.slane %v2305, 0
        %v3912 = vperm.slane %v2307, 0
        %v3913 = vperm.slane %v2309, 0
        %v3914 = vperm.slane %v2407, 0
        %v3915 = vperm.slane %v2409, 0
        %v3916 = vperm.slane %v2411, 0
        %v3917 = vperm.slane %v2413, 0
        %v3918 = vperm.slane %v2415, 0
        %v3919 = vperm.slane %v2417, 0
        %v3920 = vperm.slane %v2419, 0
        %v3921 = vperm.slane %v2421, 0
        %v3922 = vmul.f32 %v3890, %v3858
        %v3923 = vmul.f32 %v3891, %v3858
        %v3924 = vmul.f32 %v3892, %v3858
        %v3925 = vmul.f32 %v3893, %v3858
        %v3926 = vmul.f32 %v3894, %v3858
        %v3927 = vmul.f32 %v3895, %v3858
        %v3928 = vmul.f32 %v3896, %v3858
        %v3929 = vmul.f32 %v3897, %v3858
        %v3930 = vmul.f32 %v3898, %v3866
        %v3931 = vmul.f32 %v3899, %v3866
        %v3932 = vmul.f32 %v3900, %v3866
        %v3933 = vmul.f32 %v3901, %v3866
        %v3934 = vmul.f32 %v3902, %v3866
        %v3935 = vmul.f32 %v3903, %v3866
        %v3936 = vmul.f32 %v3904, %v3866
        %v3937 = vmul.f32 %v3905, %v3866
        %v3938 = vmul.f32 %v3906, %v3874
        %v3939 = vmul.f32 %v3907, %v3874
        %v3940 = vmul.f32 %v3908, %v3874
        %v3941 = vmul.f32 %v3909, %v3874
        %v3942 = vmul.f32 %v3910, %v3874
        %v3943 = vmul.f32 %v3911, %v3874
        %v3944 = vmul.f32 %v3912, %v3874
        %v3945 = vmul.f32 %v3913, %v3874
        %v3946 = vmul.f32 %v3914, %v3882
        %v3947 = vmul.f32 %v3915, %v3882
        %v3948 = vmul.f32 %v3916, %v3882
        %v3949 = vmul.f32 %v3917, %v3882
        %v3950 = vmul.f32 %v3918, %v3882
        %v3951 = vmul.f32 %v3919, %v3882
        %v3952 = vmul.f32 %v3920, %v3882
        %v3953 = vmul.f32 %v3921, %v3882
        %v3954 = vperm.slane %v2071, 1
        %v3955 = vperm.slane %v2073, 1
        %v3956 = vperm.slane %v2075, 1
        %v3957 = vperm.slane %v2077, 1
        %v3958 = vperm.slane %v2079, 1
        %v3959 = vperm.slane %v2081, 1
        %v3960 = vperm.slane %v2083, 1
        %v3961 = vperm.slane %v2085, 1
        %v3962 = vperm.slane %v2183, 1
        %v3963 = vperm.slane %v2185, 1
        %v3964 = vperm.slane %v2187, 1
        %v3965 = vperm.slane %v2189, 1
        %v3966 = vperm.slane %v2191, 1
        %v3967 = vperm.slane %v2193, 1
        %v3968 = vperm.slane %v2195, 1
        %v3969 = vperm.slane %v2197, 1
        %v3970 = vperm.slane %v2295, 1
        %v3971 = vperm.slane %v2297, 1
        %v3972 = vperm.slane %v2299, 1
        %v3973 = vperm.slane %v2301, 1
        %v3974 = vperm.slane %v2303, 1
        %v3975 = vperm.slane %v2305, 1
        %v3976 = vperm.slane %v2307, 1
        %v3977 = vperm.slane %v2309, 1
        %v3978 = vperm.slane %v2407, 1
        %v3979 = vperm.slane %v2409, 1
        %v3980 = vperm.slane %v2411, 1
        %v3981 = vperm.slane %v2413, 1
        %v3982 = vperm.slane %v2415, 1
        %v3983 = vperm.slane %v2417, 1
        %v3984 = vperm.slane %v2419, 1
        %v3985 = vperm.slane %v2421, 1
        %v3986 = vmul.f32 %v3954, %v3859
        %v3987 = vmul.f32 %v3955, %v3859
        %v3988 = vmul.f32 %v3956, %v3859
        %v3989 = vmul.f32 %v3957, %v3859
        %v3990 = vmul.f32 %v3958, %v3859
        %v3991 = vmul.f32 %v3959, %v3859
        %v3992 = vmul.f32 %v3960, %v3859
        %v3993 = vmul.f32 %v3961, %v3859
        %v3994 = vmul.f32 %v3962, %v3867
        %v3995 = vmul.f32 %v3963, %v3867
        %v3996 = vmul.f32 %v3964, %v3867
        %v3997 = vmul.f32 %v3965, %v3867
        %v3998 = vmul.f32 %v3966, %v3867
        %v3999 = vmul.f32 %v3967, %v3867
        %v4000 = vmul.f32 %v3968, %v3867
        %v4001 = vmul.f32 %v3969, %v3867
        %v4002 = vmul.f32 %v3970, %v3875
        %v4003 = vmul.f32 %v3971, %v3875
        %v4004 = vmul.f32 %v3972, %v3875
        %v4005 = vmul.f32 %v3973, %v3875
        %v4006 = vmul.f32 %v3974, %v3875
        %v4007 = vmul.f32 %v3975, %v3875
        %v4008 = vmul.f32 %v3976, %v3875
        %v4009 = vmul.f32 %v3977, %v3875
        %v4010 = vmul.f32 %v3978, %v3883
        %v4011 = vmul.f32 %v3979, %v3883
        %v4012 = vmul.f32 %v3980, %v3883
        %v4013 = vmul.f32 %v3981, %v3883
        %v4014 = vmul.f32 %v3982, %v3883
        %v4015 = vmul.f32 %v3983, %v3883
        %v4016 = vmul.f32 %v3984, %v3883
        %v4017 = vmul.f32 %v3985, %v3883
        %v4018 = vadd.f32 %v3922, %v3986
        %v4019 = vadd.f32 %v3923, %v3987
        %v4020 = vadd.f32 %v3924, %v3988
        %v4021 = vadd.f32 %v3925, %v3989
        %v4022 = vadd.f32 %v3926, %v3990
        %v4023 = vadd.f32 %v3927, %v3991
        %v4024 = vadd.f32 %v3928, %v3992
        %v4025 = vadd.f32 %v3929, %v3993
        %v4026 = vadd.f32 %v3930, %v3994
        %v4027 = vadd.f32 %v3931, %v3995
        %v4028 = vadd.f32 %v3932, %v3996
        %v4029 = vadd.f32 %v3933, %v3997
        %v4030 = vadd.f32 %v3934, %v3998
        %v4031 = vadd.f32 %v3935, %v3999
        %v4032 = vadd.f32 %v3936, %v4000
        %v4033 = vadd.f32 %v3937, %v4001
        %v4034 = vadd.f32 %v3938, %v4002
        %v4035 = vadd.f32 %v3939, %v4003
        %v4036 = vadd.f32 %v3940, %v4004
        %v4037 = vadd.f32 %v3941, %v4005
        %v4038 = vadd.f32 %v3942, %v4006
        %v4039 = vadd.f32 %v3943, %v4007
        %v4040 = vadd.f32 %v3944, %v4008
        %v4041 = vadd.f32 %v3945, %v4009
        %v4042 = vadd.f32 %v3946, %v4010
        %v4043 = vadd.f32 %v3947, %v4011
        %v4044 = vadd.f32 %v3948, %v4012
        %v4045 = vadd.f32 %v3949, %v4013
        %v4046 = vadd.f32 %v3950, %v4014
        %v4047 = vadd.f32 %v3951, %v4015
        %v4048 = vadd.f32 %v3952, %v4016
        %v4049 = vadd.f32 %v3953, %v4017
        %v4050 = vperm.slane %v2071, 2
        %v4051 = vperm.slane %v2073, 2
        %v4052 = vperm.slane %v2075, 2
        %v4053 = vperm.slane %v2077, 2
        %v4054 = vperm.slane %v2079, 2
        %v4055 = vperm.slane %v2081, 2
        %v4056 = vperm.slane %v2083, 2
        %v4057 = vperm.slane %v2085, 2
        %v4058 = vperm.slane %v2183, 2
        %v4059 = vperm.slane %v2185, 2
        %v4060 = vperm.slane %v2187, 2
        %v4061 = vperm.slane %v2189, 2
        %v4062 = vperm.slane %v2191, 2
        %v4063 = vperm.slane %v2193, 2
        %v4064 = vperm.slane %v2195, 2
        %v4065 = vperm.slane %v2197, 2
        %v4066 = vperm.slane %v2295, 2
        %v4067 = vperm.slane %v2297, 2
        %v4068 = vperm.slane %v2299, 2
        %v4069 = vperm.slane %v2301, 2
        %v4070 = vperm.slane %v2303, 2
        %v4071 = vperm.slane %v2305, 2
        %v4072 = vperm.slane %v2307, 2
        %v4073 = vperm.slane %v2309, 2
        %v4074 = vperm.slane %v2407, 2
        %v4075 = vperm.slane %v2409, 2
        %v4076 = vperm.slane %v2411, 2
        %v4077 = vperm.slane %v2413, 2
        %v4078 = vperm.slane %v2415, 2
        %v4079 = vperm.slane %v2417, 2
        %v4080 = vperm.slane %v2419, 2
        %v4081 = vperm.slane %v2421, 2
        %v4082 = vmul.f32 %v4050, %v3860
        %v4083 = vmul.f32 %v4051, %v3860
        %v4084 = vmul.f32 %v4052, %v3860
        %v4085 = vmul.f32 %v4053, %v3860
        %v4086 = vmul.f32 %v4054, %v3860
        %v4087 = vmul.f32 %v4055, %v3860
        %v4088 = vmul.f32 %v4056, %v3860
        %v4089 = vmul.f32 %v4057, %v3860
        %v4090 = vmul.f32 %v4058, %v3868
        %v4091 = vmul.f32 %v4059, %v3868
        %v4092 = vmul.f32 %v4060, %v3868
        %v4093 = vmul.f32 %v4061, %v3868
        %v4094 = vmul.f32 %v4062, %v3868
        %v4095 = vmul.f32 %v4063, %v3868
        %v4096 = vmul.f32 %v4064, %v3868
        %v4097 = vmul.f32 %v4065, %v3868
        %v4098 = vmul.f32 %v4066, %v3876
        %v4099 = vmul.f32 %v4067, %v3876
        %v4100 = vmul.f32 %v4068, %v3876
        %v4101 = vmul.f32 %v4069, %v3876
        %v4102 = vmul.f32 %v4070, %v3876
        %v4103 = vmul.f32 %v4071, %v3876
        %v4104 = vmul.f32 %v4072, %v3876
        %v4105 = vmul.f32 %v4073, %v3876
        %v4106 = vmul.f32 %v4074, %v3884
        %v4107 = vmul.f32 %v4075, %v3884
        %v4108 = vmul.f32 %v4076, %v3884
        %v4109 = vmul.f32 %v4077, %v3884
        %v4110 = vmul.f32 %v4078, %v3884
        %v4111 = vmul.f32 %v4079, %v3884
        %v4112 = vmul.f32 %v4080, %v3884
        %v4113 = vmul.f32 %v4081, %v3884
        %v4114 = vadd.f32 %v4018, %v4082
        %v4115 = vadd.f32 %v4019, %v4083
        %v4116 = vadd.f32 %v4020, %v4084
        %v4117 = vadd.f32 %v4021, %v4085
        %v4118 = vadd.f32 %v4022, %v4086
        %v4119 = vadd.f32 %v4023, %v4087
        %v4120 = vadd.f32 %v4024, %v4088
        %v4121 = vadd.f32 %v4025, %v4089
        %v4122 = vadd.f32 %v4026, %v4090
        %v4123 = vadd.f32 %v4027, %v4091
        %v4124 = vadd.f32 %v4028, %v4092
        %v4125 = vadd.f32 %v4029, %v4093
        %v4126 = vadd.f32 %v4030, %v4094
        %v4127 = vadd.f32 %v4031, %v4095
        %v4128 = vadd.f32 %v4032, %v4096
        %v4129 = vadd.f32 %v4033, %v4097
        %v4130 = vadd.f32 %v4034, %v4098
        %v4131 = vadd.f32 %v4035, %v4099
        %v4132 = vadd.f32 %v4036, %v4100
        %v4133 = vadd.f32 %v4037, %v4101
        %v4134 = vadd.f32 %v4038, %v4102
        %v4135 = vadd.f32 %v4039, %v4103
        %v4136 = vadd.f32 %v4040, %v4104
        %v4137 = vadd.f32 %v4041, %v4105
        %v4138 = vadd.f32 %v4042, %v4106
        %v4139 = vadd.f32 %v4043, %v4107
        %v4140 = vadd.f32 %v4044, %v4108
        %v4141 = vadd.f32 %v4045, %v4109
        %v4142 = vadd.f32 %v4046, %v4110
        %v4143 = vadd.f32 %v4047, %v4111
        %v4144 = vadd.f32 %v4048, %v4112
        %v4145 = vadd.f32 %v4049, %v4113
        %v4146 = vperm.slane %v2071, 3
        %v4147 = vperm.slane %v2073, 3
        %v4148 = vperm.slane %v2075, 3
        %v4149 = vperm.slane %v2077, 3
        %v4150 = vperm.slane %v2079, 3
        %v4151 = vperm.slane %v2081, 3
        %v4152 = vperm.slane %v2083, 3
        %v4153 = vperm.slane %v2085, 3
        %v4154 = vperm.slane %v2183, 3
        %v4155 = vperm.slane %v2185, 3
        %v4156 = vperm.slane %v2187, 3
        %v4157 = vperm.slane %v2189, 3
        %v4158 = vperm.slane %v2191, 3
        %v4159 = vperm.slane %v2193, 3
        %v4160 = vperm.slane %v2195, 3
        %v4161 = vperm.slane %v2197, 3
        %v4162 = vperm.slane %v2295, 3
        %v4163 = vperm.slane %v2297, 3
        %v4164 = vperm.slane %v2299, 3
        %v4165 = vperm.slane %v2301, 3
        %v4166 = vperm.slane %v2303, 3
        %v4167 = vperm.slane %v2305, 3
        %v4168 = vperm.slane %v2307, 3
        %v4169 = vperm.slane %v2309, 3
        %v4170 = vperm.slane %v2407, 3
        %v4171 = vperm.slane %v2409, 3
        %v4172 = vperm.slane %v2411, 3
        %v4173 = vperm.slane %v2413, 3
        %v4174 = vperm.slane %v2415, 3
        %v4175 = vperm.slane %v2417, 3
        %v4176 = vperm.slane %v2419, 3
        %v4177 = vperm.slane %v2421, 3
        %v4178 = vmul.f32 %v4146, %v3861
        %v4179 = vmul.f32 %v4147, %v3861
        %v4180 = vmul.f32 %v4148, %v3861
        %v4181 = vmul.f32 %v4149, %v3861
        %v4182 = vmul.f32 %v4150, %v3861
        %v4183 = vmul.f32 %v4151, %v3861
        %v4184 = vmul.f32 %v4152, %v3861
        %v4185 = vmul.f32 %v4153, %v3861
        %v4186 = vmul.f32 %v4154, %v3869
        %v4187 = vmul.f32 %v4155, %v3869
        %v4188 = vmul.f32 %v4156, %v3869
        %v4189 = vmul.f32 %v4157, %v3869
        %v4190 = vmul.f32 %v4158, %v3869
        %v4191 = vmul.f32 %v4159, %v3869
        %v4192 = vmul.f32 %v4160, %v3869
        %v4193 = vmul.f32 %v4161, %v3869
        %v4194 = vmul.f32 %v4162, %v3877
        %v4195 = vmul.f32 %v4163, %v3877
        %v4196 = vmul.f32 %v4164, %v3877
        %v4197 = vmul.f32 %v4165, %v3877
        %v4198 = vmul.f32 %v4166, %v3877
        %v4199 = vmul.f32 %v4167, %v3877
        %v4200 = vmul.f32 %v4168, %v3877
        %v4201 = vmul.f32 %v4169, %v3877
        %v4202 = vmul.f32 %v4170, %v3885
        %v4203 = vmul.f32 %v4171, %v3885
        %v4204 = vmul.f32 %v4172, %v3885
        %v4205 = vmul.f32 %v4173, %v3885
        %v4206 = vmul.f32 %v4174, %v3885
        %v4207 = vmul.f32 %v4175, %v3885
        %v4208 = vmul.f32 %v4176, %v3885
        %v4209 = vmul.f32 %v4177, %v3885
        %v4210 = vadd.f32 %v4114, %v4178
        %v4211 = vadd.f32 %v4115, %v4179
        %v4212 = vadd.f32 %v4116, %v4180
        %v4213 = vadd.f32 %v4117, %v4181
        %v4214 = vadd.f32 %v4118, %v4182
        %v4215 = vadd.f32 %v4119, %v4183
        %v4216 = vadd.f32 %v4120, %v4184
        %v4217 = vadd.f32 %v4121, %v4185
        %v4218 = vadd.f32 %v4122, %v4186
        %v4219 = vadd.f32 %v4123, %v4187
        %v4220 = vadd.f32 %v4124, %v4188
        %v4221 = vadd.f32 %v4125, %v4189
        %v4222 = vadd.f32 %v4126, %v4190
        %v4223 = vadd.f32 %v4127, %v4191
        %v4224 = vadd.f32 %v4128, %v4192
        %v4225 = vadd.f32 %v4129, %v4193
        %v4226 = vadd.f32 %v4130, %v4194
        %v4227 = vadd.f32 %v4131, %v4195
        %v4228 = vadd.f32 %v4132, %v4196
        %v4229 = vadd.f32 %v4133, %v4197
        %v4230 = vadd.f32 %v4134, %v4198
        %v4231 = vadd.f32 %v4135, %v4199
        %v4232 = vadd.f32 %v4136, %v4200
        %v4233 = vadd.f32 %v4137, %v4201
        %v4234 = vadd.f32 %v4138, %v4202
        %v4235 = vadd.f32 %v4139, %v4203
        %v4236 = vadd.f32 %v4140, %v4204
        %v4237 = vadd.f32 %v4141, %v4205
        %v4238 = vadd.f32 %v4142, %v4206
        %v4239 = vadd.f32 %v4143, %v4207
        %v4240 = vadd.f32 %v4144, %v4208
        %v4241 = vadd.f32 %v4145, %v4209
        %v4242 = vperm.slane %v2071, 4
        %v4243 = vperm.slane %v2073, 4
        %v4244 = vperm.slane %v2075, 4
        %v4245 = vperm.slane %v2077, 4
        %v4246 = vperm.slane %v2079, 4
        %v4247 = vperm.slane %v2081, 4
        %v4248 = vperm.slane %v2083, 4
        %v4249 = vperm.slane %v2085, 4
        %v4250 = vperm.slane %v2183, 4
        %v4251 = vperm.slane %v2185, 4
        %v4252 = vperm.slane %v2187, 4
        %v4253 = vperm.slane %v2189, 4
        %v4254 = vperm.slane %v2191, 4
        %v4255 = vperm.slane %v2193, 4
        %v4256 = vperm.slane %v2195, 4
        %v4257 = vperm.slane %v2197, 4
        %v4258 = vperm.slane %v2295, 4
        %v4259 = vperm.slane %v2297, 4
        %v4260 = vperm.slane %v2299, 4
        %v4261 = vperm.slane %v2301, 4
        %v4262 = vperm.slane %v2303, 4
        %v4263 = vperm.slane %v2305, 4
        %v4264 = vperm.slane %v2307, 4
        %v4265 = vperm.slane %v2309, 4
        %v4266 = vperm.slane %v2407, 4
        %v4267 = vperm.slane %v2409, 4
        %v4268 = vperm.slane %v2411, 4
        %v4269 = vperm.slane %v2413, 4
        %v4270 = vperm.slane %v2415, 4
        %v4271 = vperm.slane %v2417, 4
        %v4272 = vperm.slane %v2419, 4
        %v4273 = vperm.slane %v2421, 4
        %v4274 = vmul.f32 %v4242, %v3862
        %v4275 = vmul.f32 %v4243, %v3862
        %v4276 = vmul.f32 %v4244, %v3862
        %v4277 = vmul.f32 %v4245, %v3862
        %v4278 = vmul.f32 %v4246, %v3862
        %v4279 = vmul.f32 %v4247, %v3862
        %v4280 = vmul.f32 %v4248, %v3862
        %v4281 = vmul.f32 %v4249, %v3862
        %v4282 = vmul.f32 %v4250, %v3870
        %v4283 = vmul.f32 %v4251, %v3870
        %v4284 = vmul.f32 %v4252, %v3870
        %v4285 = vmul.f32 %v4253, %v3870
        %v4286 = vmul.f32 %v4254, %v3870
        %v4287 = vmul.f32 %v4255, %v3870
        %v4288 = vmul.f32 %v4256, %v3870
        %v4289 = vmul.f32 %v4257, %v3870
        %v4290 = vmul.f32 %v4258, %v3878
        %v4291 = vmul.f32 %v4259, %v3878
        %v4292 = vmul.f32 %v4260, %v3878
        %v4293 = vmul.f32 %v4261, %v3878
        %v4294 = vmul.f32 %v4262, %v3878
        %v4295 = vmul.f32 %v4263, %v3878
        %v4296 = vmul.f32 %v4264, %v3878
        %v4297 = vmul.f32 %v4265, %v3878
        %v4298 = vmul.f32 %v4266, %v3886
        %v4299 = vmul.f32 %v4267, %v3886
        %v4300 = vmul.f32 %v4268, %v3886
        %v4301 = vmul.f32 %v4269, %v3886
        %v4302 = vmul.f32 %v4270, %v3886
        %v4303 = vmul.f32 %v4271, %v3886
        %v4304 = vmul.f32 %v4272, %v3886
        %v4305 = vmul.f32 %v4273, %v3886
        %v4306 = vadd.f32 %v4210, %v4274
        %v4307 = vadd.f32 %v4211, %v4275
        %v4308 = vadd.f32 %v4212, %v4276
        %v4309 = vadd.f32 %v4213, %v4277
        %v4310 = vadd.f32 %v4214, %v4278
        %v4311 = vadd.f32 %v4215, %v4279
        %v4312 = vadd.f32 %v4216, %v4280
        %v4313 = vadd.f32 %v4217, %v4281
        %v4314 = vadd.f32 %v4218, %v4282
        %v4315 = vadd.f32 %v4219, %v4283
        %v4316 = vadd.f32 %v4220, %v4284
        %v4317 = vadd.f32 %v4221, %v4285
        %v4318 = vadd.f32 %v4222, %v4286
        %v4319 = vadd.f32 %v4223, %v4287
        %v4320 = vadd.f32 %v4224, %v4288
        %v4321 = vadd.f32 %v4225, %v4289
        %v4322 = vadd.f32 %v4226, %v4290
        %v4323 = vadd.f32 %v4227, %v4291
        %v4324 = vadd.f32 %v4228, %v4292
        %v4325 = vadd.f32 %v4229, %v4293
        %v4326 = vadd.f32 %v4230, %v4294
        %v4327 = vadd.f32 %v4231, %v4295
        %v4328 = vadd.f32 %v4232, %v4296
        %v4329 = vadd.f32 %v4233, %v4297
        %v4330 = vadd.f32 %v4234, %v4298
        %v4331 = vadd.f32 %v4235, %v4299
        %v4332 = vadd.f32 %v4236, %v4300
        %v4333 = vadd.f32 %v4237, %v4301
        %v4334 = vadd.f32 %v4238, %v4302
        %v4335 = vadd.f32 %v4239, %v4303
        %v4336 = vadd.f32 %v4240, %v4304
        %v4337 = vadd.f32 %v4241, %v4305
        %v4338 = vperm.slane %v2071, 5
        %v4339 = vperm.slane %v2073, 5
        %v4340 = vperm.slane %v2075, 5
        %v4341 = vperm.slane %v2077, 5
        %v4342 = vperm.slane %v2079, 5
        %v4343 = vperm.slane %v2081, 5
        %v4344 = vperm.slane %v2083, 5
        %v4345 = vperm.slane %v2085, 5
        %v4346 = vperm.slane %v2183, 5
        %v4347 = vperm.slane %v2185, 5
        %v4348 = vperm.slane %v2187, 5
        %v4349 = vperm.slane %v2189, 5
        %v4350 = vperm.slane %v2191, 5
        %v4351 = vperm.slane %v2193, 5
        %v4352 = vperm.slane %v2195, 5
        %v4353 = vperm.slane %v2197, 5
        %v4354 = vperm.slane %v2295, 5
        %v4355 = vperm.slane %v2297, 5
        %v4356 = vperm.slane %v2299, 5
        %v4357 = vperm.slane %v2301, 5
        %v4358 = vperm.slane %v2303, 5
        %v4359 = vperm.slane %v2305, 5
        %v4360 = vperm.slane %v2307, 5
        %v4361 = vperm.slane %v2309, 5
        %v4362 = vperm.slane %v2407, 5
        %v4363 = vperm.slane %v2409, 5
        %v4364 = vperm.slane %v2411, 5
        %v4365 = vperm.slane %v2413, 5
        %v4366 = vperm.slane %v2415, 5
        %v4367 = vperm.slane %v2417, 5
        %v4368 = vperm.slane %v2419, 5
        %v4369 = vperm.slane %v2421, 5
        %v4370 = vmul.f32 %v4338, %v3863
        %v4371 = vmul.f32 %v4339, %v3863
        %v4372 = vmul.f32 %v4340, %v3863
        %v4373 = vmul.f32 %v4341, %v3863
        %v4374 = vmul.f32 %v4342, %v3863
        %v4375 = vmul.f32 %v4343, %v3863
        %v4376 = vmul.f32 %v4344, %v3863
        %v4377 = vmul.f32 %v4345, %v3863
        %v4378 = vmul.f32 %v4346, %v3871
        %v4379 = vmul.f32 %v4347, %v3871
        %v4380 = vmul.f32 %v4348, %v3871
        %v4381 = vmul.f32 %v4349, %v3871
        %v4382 = vmul.f32 %v4350, %v3871
        %v4383 = vmul.f32 %v4351, %v3871
        %v4384 = vmul.f32 %v4352, %v3871
        %v4385 = vmul.f32 %v4353, %v3871
        %v4386 = vmul.f32 %v4354, %v3879
        %v4387 = vmul.f32 %v4355, %v3879
        %v4388 = vmul.f32 %v4356, %v3879
        %v4389 = vmul.f32 %v4357, %v3879
        %v4390 = vmul.f32 %v4358, %v3879
        %v4391 = vmul.f32 %v4359, %v3879
        %v4392 = vmul.f32 %v4360, %v3879
        %v4393 = vmul.f32 %v4361, %v3879
        %v4394 = vmul.f32 %v4362, %v3887
        %v4395 = vmul.f32 %v4363, %v3887
        %v4396 = vmul.f32 %v4364, %v3887
        %v4397 = vmul.f32 %v4365, %v3887
        %v4398 = vmul.f32 %v4366, %v3887
        %v4399 = vmul.f32 %v4367, %v3887
        %v4400 = vmul.f32 %v4368, %v3887
        %v4401 = vmul.f32 %v4369, %v3887
        %v4402 = vadd.f32 %v4306, %v4370
        %v4403 = vadd.f32 %v4307, %v4371
        %v4404 = vadd.f32 %v4308, %v4372
        %v4405 = vadd.f32 %v4309, %v4373
        %v4406 = vadd.f32 %v4310, %v4374
        %v4407 = vadd.f32 %v4311, %v4375
        %v4408 = vadd.f32 %v4312, %v4376
        %v4409 = vadd.f32 %v4313, %v4377
        %v4410 = vadd.f32 %v4314, %v4378
        %v4411 = vadd.f32 %v4315, %v4379
        %v4412 = vadd.f32 %v4316, %v4380
        %v4413 = vadd.f32 %v4317, %v4381
        %v4414 = vadd.f32 %v4318, %v4382
        %v4415 = vadd.f32 %v4319, %v4383
        %v4416 = vadd.f32 %v4320, %v4384
        %v4417 = vadd.f32 %v4321, %v4385
        %v4418 = vadd.f32 %v4322, %v4386
        %v4419 = vadd.f32 %v4323, %v4387
        %v4420 = vadd.f32 %v4324, %v4388
        %v4421 = vadd.f32 %v4325, %v4389
        %v4422 = vadd.f32 %v4326, %v4390
        %v4423 = vadd.f32 %v4327, %v4391
        %v4424 = vadd.f32 %v4328, %v4392
        %v4425 = vadd.f32 %v4329, %v4393
        %v4426 = vadd.f32 %v4330, %v4394
        %v4427 = vadd.f32 %v4331, %v4395
        %v4428 = vadd.f32 %v4332, %v4396
        %v4429 = vadd.f32 %v4333, %v4397
        %v4430 = vadd.f32 %v4334, %v4398
        %v4431 = vadd.f32 %v4335, %v4399
        %v4432 = vadd.f32 %v4336, %v4400
        %v4433 = vadd.f32 %v4337, %v4401
        %v4434 = vperm.slane %v2071, 6
        %v4435 = vperm.slane %v2073, 6
        %v4436 = vperm.slane %v2075, 6
        %v4437 = vperm.slane %v2077, 6
        %v4438 = vperm.slane %v2079, 6
        %v4439 = vperm.slane %v2081, 6
        %v4440 = vperm.slane %v2083, 6
        %v4441 = vperm.slane %v2085, 6
        %v4442 = vperm.slane %v2183, 6
        %v4443 = vperm.slane %v2185, 6
        %v4444 = vperm.slane %v2187, 6
        %v4445 = vperm.slane %v2189, 6
        %v4446 = vperm.slane %v2191, 6
        %v4447 = vperm.slane %v2193, 6
        %v4448 = vperm.slane %v2195, 6
        %v4449 = vperm.slane %v2197, 6
        %v4450 = vperm.slane %v2295, 6
        %v4451 = vperm.slane %v2297, 6
        %v4452 = vperm.slane %v2299, 6
        %v4453 = vperm.slane %v2301, 6
        %v4454 = vperm.slane %v2303, 6
        %v4455 = vperm.slane %v2305, 6
        %v4456 = vperm.slane %v2307, 6
        %v4457 = vperm.slane %v2309, 6
        %v4458 = vperm.slane %v2407, 6
        %v4459 = vperm.slane %v2409, 6
        %v4460 = vperm.slane %v2411, 6
        %v4461 = vperm.slane %v2413, 6
        %v4462 = vperm.slane %v2415, 6
        %v4463 = vperm.slane %v2417, 6
        %v4464 = vperm.slane %v2419, 6
        %v4465 = vperm.slane %v2421, 6
        %v4466 = vmul.f32 %v4434, %v3864
        %v4467 = vmul.f32 %v4435, %v3864
        %v4468 = vmul.f32 %v4436, %v3864
        %v4469 = vmul.f32 %v4437, %v3864
        %v4470 = vmul.f32 %v4438, %v3864
        %v4471 = vmul.f32 %v4439, %v3864
        %v4472 = vmul.f32 %v4440, %v3864
        %v4473 = vmul.f32 %v4441, %v3864
        %v4474 = vmul.f32 %v4442, %v3872
        %v4475 = vmul.f32 %v4443, %v3872
        %v4476 = vmul.f32 %v4444, %v3872
        %v4477 = vmul.f32 %v4445, %v3872
        %v4478 = vmul.f32 %v4446, %v3872
        %v4479 = vmul.f32 %v4447, %v3872
        %v4480 = vmul.f32 %v4448, %v3872
        %v4481 = vmul.f32 %v4449, %v3872
        %v4482 = vmul.f32 %v4450, %v3880
        %v4483 = vmul.f32 %v4451, %v3880
        %v4484 = vmul.f32 %v4452, %v3880
        %v4485 = vmul.f32 %v4453, %v3880
        %v4486 = vmul.f32 %v4454, %v3880
        %v4487 = vmul.f32 %v4455, %v3880
        %v4488 = vmul.f32 %v4456, %v3880
        %v4489 = vmul.f32 %v4457, %v3880
        %v4490 = vmul.f32 %v4458, %v3888
        %v4491 = vmul.f32 %v4459, %v3888
        %v4492 = vmul.f32 %v4460, %v3888
        %v4493 = vmul.f32 %v4461, %v3888
        %v4494 = vmul.f32 %v4462, %v3888
        %v4495 = vmul.f32 %v4463, %v3888
        %v4496 = vmul.f32 %v4464, %v3888
        %v4497 = vmul.f32 %v4465, %v3888
        %v4498 = vadd.f32 %v4402, %v4466
        %v4499 = vadd.f32 %v4403, %v4467
        %v4500 = vadd.f32 %v4404, %v4468
        %v4501 = vadd.f32 %v4405, %v4469
        %v4502 = vadd.f32 %v4406, %v4470
        %v4503 = vadd.f32 %v4407, %v4471
        %v4504 = vadd.f32 %v4408, %v4472
        %v4505 = vadd.f32 %v4409, %v4473
        %v4506 = vadd.f32 %v4410, %v4474
        %v4507 = vadd.f32 %v4411, %v4475
        %v4508 = vadd.f32 %v4412, %v4476
        %v4509 = vadd.f32 %v4413, %v4477
        %v4510 = vadd.f32 %v4414, %v4478
        %v4511 = vadd.f32 %v4415, %v4479
        %v4512 = vadd.f32 %v4416, %v4480
        %v4513 = vadd.f32 %v4417, %v4481
        %v4514 = vadd.f32 %v4418, %v4482
        %v4515 = vadd.f32 %v4419, %v4483
        %v4516 = vadd.f32 %v4420, %v4484
        %v4517 = vadd.f32 %v4421, %v4485
        %v4518 = vadd.f32 %v4422, %v4486
        %v4519 = vadd.f32 %v4423, %v4487
        %v4520 = vadd.f32 %v4424, %v4488
        %v4521 = vadd.f32 %v4425, %v4489
        %v4522 = vadd.f32 %v4426, %v4490
        %v4523 = vadd.f32 %v4427, %v4491
        %v4524 = vadd.f32 %v4428, %v4492
        %v4525 = vadd.f32 %v4429, %v4493
        %v4526 = vadd.f32 %v4430, %v4494
        %v4527 = vadd.f32 %v4431, %v4495
        %v4528 = vadd.f32 %v4432, %v4496
        %v4529 = vadd.f32 %v4433, %v4497
        %v4530 = vperm.slane %v2071, 7
        %v4531 = vperm.slane %v2073, 7
        %v4532 = vperm.slane %v2075, 7
        %v4533 = vperm.slane %v2077, 7
        %v4534 = vperm.slane %v2079, 7
        %v4535 = vperm.slane %v2081, 7
        %v4536 = vperm.slane %v2083, 7
        %v4537 = vperm.slane %v2085, 7
        %v4538 = vperm.slane %v2183, 7
        %v4539 = vperm.slane %v2185, 7
        %v4540 = vperm.slane %v2187, 7
        %v4541 = vperm.slane %v2189, 7
        %v4542 = vperm.slane %v2191, 7
        %v4543 = vperm.slane %v2193, 7
        %v4544 = vperm.slane %v2195, 7
        %v4545 = vperm.slane %v2197, 7
        %v4546 = vperm.slane %v2295, 7
        %v4547 = vperm.slane %v2297, 7
        %v4548 = vperm.slane %v2299, 7
        %v4549 = vperm.slane %v2301, 7
        %v4550 = vperm.slane %v2303, 7
        %v4551 = vperm.slane %v2305, 7
        %v4552 = vperm.slane %v2307, 7
        %v4553 = vperm.slane %v2309, 7
        %v4554 = vperm.slane %v2407, 7
        %v4555 = vperm.slane %v2409, 7
        %v4556 = vperm.slane %v2411, 7
        %v4557 = vperm.slane %v2413, 7
        %v4558 = vperm.slane %v2415, 7
        %v4559 = vperm.slane %v2417, 7
        %v4560 = vperm.slane %v2419, 7
        %v4561 = vperm.slane %v2421, 7
        %v4562 = vmul.f32 %v4530, %v3865
        %v4563 = vmul.f32 %v4531, %v3865
        %v4564 = vmul.f32 %v4532, %v3865
        %v4565 = vmul.f32 %v4533, %v3865
        %v4566 = vmul.f32 %v4534, %v3865
        %v4567 = vmul.f32 %v4535, %v3865
        %v4568 = vmul.f32 %v4536, %v3865
        %v4569 = vmul.f32 %v4537, %v3865
        %v4570 = vmul.f32 %v4538, %v3873
        %v4571 = vmul.f32 %v4539, %v3873
        %v4572 = vmul.f32 %v4540, %v3873
        %v4573 = vmul.f32 %v4541, %v3873
        %v4574 = vmul.f32 %v4542, %v3873
        %v4575 = vmul.f32 %v4543, %v3873
        %v4576 = vmul.f32 %v4544, %v3873
        %v4577 = vmul.f32 %v4545, %v3873
        %v4578 = vmul.f32 %v4546, %v3881
        %v4579 = vmul.f32 %v4547, %v3881
        %v4580 = vmul.f32 %v4548, %v3881
        %v4581 = vmul.f32 %v4549, %v3881
        %v4582 = vmul.f32 %v4550, %v3881
        %v4583 = vmul.f32 %v4551, %v3881
        %v4584 = vmul.f32 %v4552, %v3881
        %v4585 = vmul.f32 %v4553, %v3881
        %v4586 = vmul.f32 %v4554, %v3889
        %v4587 = vmul.f32 %v4555, %v3889
        %v4588 = vmul.f32 %v4556, %v3889
        %v4589 = vmul.f32 %v4557, %v3889
        %v4590 = vmul.f32 %v4558, %v3889
        %v4591 = vmul.f32 %v4559, %v3889
        %v4592 = vmul.f32 %v4560, %v3889
        %v4593 = vmul.f32 %v4561, %v3889
        %v4594 = vadd.f32 %v4498, %v4562
        %v4595 = vadd.f32 %v4499, %v4563
        %v4596 = vadd.f32 %v4500, %v4564
        %v4597 = vadd.f32 %v4501, %v4565
        %v4598 = vadd.f32 %v4502, %v4566
        %v4599 = vadd.f32 %v4503, %v4567
        %v4600 = vadd.f32 %v4504, %v4568
        %v4601 = vadd.f32 %v4505, %v4569
        %v4602 = vadd.f32 %v4506, %v4570
        %v4603 = vadd.f32 %v4507, %v4571
        %v4604 = vadd.f32 %v4508, %v4572
        %v4605 = vadd.f32 %v4509, %v4573
        %v4606 = vadd.f32 %v4510, %v4574
        %v4607 = vadd.f32 %v4511, %v4575
        %v4608 = vadd.f32 %v4512, %v4576
        %v4609 = vadd.f32 %v4513, %v4577
        %v4610 = vadd.f32 %v4514, %v4578
        %v4611 = vadd.f32 %v4515, %v4579
        %v4612 = vadd.f32 %v4516, %v4580
        %v4613 = vadd.f32 %v4517, %v4581
        %v4614 = vadd.f32 %v4518, %v4582
        %v4615 = vadd.f32 %v4519, %v4583
        %v4616 = vadd.f32 %v4520, %v4584
        %v4617 = vadd.f32 %v4521, %v4585
        %v4618 = vadd.f32 %v4522, %v4586
        %v4619 = vadd.f32 %v4523, %v4587
        %v4620 = vadd.f32 %v4524, %v4588
        %v4621 = vadd.f32 %v4525, %v4589
        %v4622 = vadd.f32 %v4526, %v4590
        %v4623 = vadd.f32 %v4527, %v4591
        %v4624 = vadd.f32 %v4528, %v4592
        %v4625 = vadd.f32 %v4529, %v4593
        %v4626 = vrot.slane %v4596, 4
        %v4627 = vsel %vm1078, %v4626, %v4594
        %v4628 = vrot.slane %v4594, 4
        %v4629 = vsel %vm1078, %v4596, %v4628
        %v4631 = vunpack.c.l.s4 1983009808
        %v4632 = vunpack.c.0.s8 %v4631
        %v4633 = vperm.slane %v4627, %v4632
        %v4635 = vunpack.c.l.s4 1983009808
        %v4636 = vunpack.c.0.s8 %v4635
        %v4637 = vperm.slane %v4629, %v4636
        %v4638 = vrot.slane %v4597, 4
        %v4639 = vsel %vm1078, %v4638, %v4595
        %v4640 = vrot.slane %v4595, 4
        %v4641 = vsel %vm1078, %v4597, %v4640
        %v4643 = vunpack.c.l.s4 1983009808
        %v4644 = vunpack.c.0.s8 %v4643
        %v4645 = vperm.slane %v4639, %v4644
        %v4647 = vunpack.c.l.s4 1983009808
        %v4648 = vunpack.c.0.s8 %v4647
        %v4649 = vperm.slane %v4641, %v4648
        %v4650 = vrot.slane %v4600, 4
        %v4651 = vsel %vm1078, %v4650, %v4598
        %v4652 = vrot.slane %v4598, 4
        %v4653 = vsel %vm1078, %v4600, %v4652
        %v4655 = vunpack.c.l.s4 1983009808
        %v4656 = vunpack.c.0.s8 %v4655
        %v4657 = vperm.slane %v4651, %v4656
        %v4659 = vunpack.c.l.s4 1983009808
        %v4660 = vunpack.c.0.s8 %v4659
        %v4661 = vperm.slane %v4653, %v4660
        %v4662 = vrot.slane %v4601, 4
        %v4663 = vsel %vm1078, %v4662, %v4599
        %v4664 = vrot.slane %v4599, 4
        %v4665 = vsel %vm1078, %v4601, %v4664
        %v4667 = vunpack.c.l.s4 1983009808
        %v4668 = vunpack.c.0.s8 %v4667
        %v4669 = vperm.slane %v4663, %v4668
        %v4671 = vunpack.c.l.s4 1983009808
        %v4672 = vunpack.c.0.s8 %v4671
        %v4673 = vperm.slane %v4665, %v4672
        %v4674 = vrot.slane %v4645, 4
        %v4675 = vsel %vm1078, %v4674, %v4633
        %v4676 = vrot.slane %v4633, 4
        %v4677 = vsel %vm1078, %v4645, %v4676
        %v4679 = vunpack.c.l.s4 1934713408
        %v4680 = vunpack.c.0.s8 %v4679
        %v4681 = vperm.slane %v4675, %v4680
        %v4683 = vunpack.c.l.s4 1934713408
        %v4684 = vunpack.c.0.s8 %v4683
        %v4685 = vperm.slane %v4677, %v4684
        %v4686 = vrot.slane %v4649, 4
        %v4687 = vsel %vm1078, %v4686, %v4637
        %v4688 = vrot.slane %v4637, 4
        %v4689 = vsel %vm1078, %v4649, %v4688
        %v4691 = vunpack.c.l.s4 1934713408
        %v4692 = vunpack.c.0.s8 %v4691
        %v4693 = vperm.slane %v4687, %v4692
        %v4695 = vunpack.c.l.s4 1934713408
        %v4696 = vunpack.c.0.s8 %v4695
        %v4697 = vperm.slane %v4689, %v4696
        %v4698 = vrot.slane %v4669, 4
        %v4699 = vsel %vm1078, %v4698, %v4657
        %v4700 = vrot.slane %v4657, 4
        %v4701 = vsel %vm1078, %v4669, %v4700
        %v4703 = vunpack.c.l.s4 1934713408
        %v4704 = vunpack.c.0.s8 %v4703
        %v4705 = vperm.slane %v4699, %v4704
        %v4707 = vunpack.c.l.s4 1934713408
        %v4708 = vunpack.c.0.s8 %v4707
        %v4709 = vperm.slane %v4701, %v4708
        %v4710 = vrot.slane %v4673, 4
        %v4711 = vsel %vm1078, %v4710, %v4661
        %v4712 = vrot.slane %v4661, 4
        %v4713 = vsel %vm1078, %v4673, %v4712
        %v4715 = vunpack.c.l.s4 1934713408
        %v4716 = vunpack.c.0.s8 %v4715
        %v4717 = vperm.slane %v4711, %v4716
        %v4719 = vunpack.c.l.s4 1934713408
        %v4720 = vunpack.c.0.s8 %v4719
        %v4721 = vperm.slane %v4713, %v4720
        %v4722 = vrot.slane %v4705, 4
        %v4723 = vsel %vm1078, %v4722, %v4681
        %v4724 = vrot.slane %v4681, 4
        %v4725 = vsel %vm1078, %v4705, %v4724
        %v4726 = vrot.slane %v4709, 4
        %v4727 = vsel %vm1078, %v4726, %v4685
        %v4728 = vrot.slane %v4685, 4
        %v4729 = vsel %vm1078, %v4709, %v4728
        %v4730 = vrot.slane %v4717, 4
        %v4731 = vsel %vm1078, %v4730, %v4693
        %v4732 = vrot.slane %v4693, 4
        %v4733 = vsel %vm1078, %v4717, %v4732
        %v4734 = vrot.slane %v4721, 4
        %v4735 = vsel %vm1078, %v4734, %v4697
        %v4736 = vrot.slane %v4697, 4
        %v4737 = vsel %vm1078, %v4721, %v4736
        %v4738 = vrot.slane %v4604, 4
        %v4739 = vsel %vm1078, %v4738, %v4602
        %v4740 = vrot.slane %v4602, 4
        %v4741 = vsel %vm1078, %v4604, %v4740
        %v4743 = vunpack.c.l.s4 1983009808
        %v4744 = vunpack.c.0.s8 %v4743
        %v4745 = vperm.slane %v4739, %v4744
        %v4747 = vunpack.c.l.s4 1983009808
        %v4748 = vunpack.c.0.s8 %v4747
        %v4749 = vperm.slane %v4741, %v4748
        %v4750 = vrot.slane %v4605, 4
        %v4751 = vsel %vm1078, %v4750, %v4603
        %v4752 = vrot.slane %v4603, 4
        %v4753 = vsel %vm1078, %v4605, %v4752
        %v4755 = vunpack.c.l.s4 1983009808
        %v4756 = vunpack.c.0.s8 %v4755
        %v4757 = vperm.slane %v4751, %v4756
        %v4759 = vunpack.c.l.s4 1983009808
        %v4760 = vunpack.c.0.s8 %v4759
        %v4761 = vperm.slane %v4753, %v4760
        %v4762 = vrot.slane %v4608, 4
        %v4763 = vsel %vm1078, %v4762, %v4606
        %v4764 = vrot.slane %v4606, 4
        %v4765 = vsel %vm1078, %v4608, %v4764
        %v4767 = vunpack.c.l.s4 1983009808
        %v4768 = vunpack.c.0.s8 %v4767
        %v4769 = vperm.slane %v4763, %v4768
        %v4771 = vunpack.c.l.s4 1983009808
        %v4772 = vunpack.c.0.s8 %v4771
        %v4773 = vperm.slane %v4765, %v4772
        %v4774 = vrot.slane %v4609, 4
        %v4775 = vsel %vm1078, %v4774, %v4607
        %v4776 = vrot.slane %v4607, 4
        %v4777 = vsel %vm1078, %v4609, %v4776
        %v4779 = vunpack.c.l.s4 1983009808
        %v4780 = vunpack.c.0.s8 %v4779
        %v4781 = vperm.slane %v4775, %v4780
        %v4783 = vunpack.c.l.s4 1983009808
        %v4784 = vunpack.c.0.s8 %v4783
        %v4785 = vperm.slane %v4777, %v4784
        %v4786 = vrot.slane %v4757, 4
        %v4787 = vsel %vm1078, %v4786, %v4745
        %v4788 = vrot.slane %v4745, 4
        %v4789 = vsel %vm1078, %v4757, %v4788
        %v4791 = vunpack.c.l.s4 1934713408
        %v4792 = vunpack.c.0.s8 %v4791
        %v4793 = vperm.slane %v4787, %v4792
        %v4795 = vunpack.c.l.s4 1934713408
        %v4796 = vunpack.c.0.s8 %v4795
        %v4797 = vperm.slane %v4789, %v4796
        %v4798 = vrot.slane %v4761, 4
        %v4799 = vsel %vm1078, %v4798, %v4749
        %v4800 = vrot.slane %v4749, 4
        %v4801 = vsel %vm1078, %v4761, %v4800
        %v4803 = vunpack.c.l.s4 1934713408
        %v4804 = vunpack.c.0.s8 %v4803
        %v4805 = vperm.slane %v4799, %v4804
        %v4807 = vunpack.c.l.s4 1934713408
        %v4808 = vunpack.c.0.s8 %v4807
        %v4809 = vperm.slane %v4801, %v4808
        %v4810 = vrot.slane %v4781, 4
        %v4811 = vsel %vm1078, %v4810, %v4769
        %v4812 = vrot.slane %v4769, 4
        %v4813 = vsel %vm1078, %v4781, %v4812
        %v4815 = vunpack.c.l.s4 1934713408
        %v4816 = vunpack.c.0.s8 %v4815
        %v4817 = vperm.slane %v4811, %v4816
        %v4819 = vunpack.c.l.s4 1934713408
        %v4820 = vunpack.c.0.s8 %v4819
        %v4821 = vperm.slane %v4813, %v4820
        %v4822 = vrot.slane %v4785, 4
        %v4823 = vsel %vm1078, %v4822, %v4773
        %v4824 = vrot.slane %v4773, 4
        %v4825 = vsel %vm1078, %v4785, %v4824
        %v4827 = vunpack.c.l.s4 1934713408
        %v4828 = vunpack.c.0.s8 %v4827
        %v4829 = vperm.slane %v4823, %v4828
        %v4831 = vunpack.c.l.s4 1934713408
        %v4832 = vunpack.c.0.s8 %v4831
        %v4833 = vperm.slane %v4825, %v4832
        %v4834 = vrot.slane %v4817, 4
        %v4835 = vsel %vm1078, %v4834, %v4793
        %v4836 = vrot.slane %v4793, 4
        %v4837 = vsel %vm1078, %v4817, %v4836
        %v4838 = vrot.slane %v4821, 4
        %v4839 = vsel %vm1078, %v4838, %v4797
        %v4840 = vrot.slane %v4797, 4
        %v4841 = vsel %vm1078, %v4821, %v4840
        %v4842 = vrot.slane %v4829, 4
        %v4843 = vsel %vm1078, %v4842, %v4805
        %v4844 = vrot.slane %v4805, 4
        %v4845 = vsel %vm1078, %v4829, %v4844
        %v4846 = vrot.slane %v4833, 4
        %v4847 = vsel %vm1078, %v4846, %v4809
        %v4848 = vrot.slane %v4809, 4
        %v4849 = vsel %vm1078, %v4833, %v4848
        %v4850 = vrot.slane %v4612, 4
        %v4851 = vsel %vm1078, %v4850, %v4610
        %v4852 = vrot.slane %v4610, 4
        %v4853 = vsel %vm1078, %v4612, %v4852
        %v4855 = vunpack.c.l.s4 1983009808
        %v4856 = vunpack.c.0.s8 %v4855
        %v4857 = vperm.slane %v4851, %v4856
        %v4859 = vunpack.c.l.s4 1983009808
        %v4860 = vunpack.c.0.s8 %v4859
        %v4861 = vperm.slane %v4853, %v4860
        %v4862 = vrot.slane %v4613, 4
        %v4863 = vsel %vm1078, %v4862, %v4611
        %v4864 = vrot.slane %v4611, 4
        %v4865 = vsel %vm1078, %v4613, %v4864
        %v4867 = vunpack.c.l.s4 1983009808
        %v4868 = vunpack.c.0.s8 %v4867
        %v4869 = vperm.slane %v4863, %v4868
        %v4871 = vunpack.c.l.s4 1983009808
        %v4872 = vunpack.c.0.s8 %v4871
        %v4873 = vperm.slane %v4865, %v4872
        %v4874 = vrot.slane %v4616, 4
        %v4875 = vsel %vm1078, %v4874, %v4614
        %v4876 = vrot.slane %v4614, 4
        %v4877 = vsel %vm1078, %v4616, %v4876
        %v4879 = vunpack.c.l.s4 1983009808
        %v4880 = vunpack.c.0.s8 %v4879
        %v4881 = vperm.slane %v4875, %v4880
        %v4883 = vunpack.c.l.s4 1983009808
        %v4884 = vunpack.c.0.s8 %v4883
        %v4885 = vperm.slane %v4877, %v4884
        %v4886 = vrot.slane %v4617, 4
        %v4887 = vsel %vm1078, %v4886, %v4615
        %v4888 = vrot.slane %v4615, 4
        %v4889 = vsel %vm1078, %v4617, %v4888
        %v4891 = vunpack.c.l.s4 1983009808
        %v4892 = vunpack.c.0.s8 %v4891
        %v4893 = vperm.slane %v4887, %v4892
        %v4895 = vunpack.c.l.s4 1983009808
        %v4896 = vunpack.c.0.s8 %v4895
        %v4897 = vperm.slane %v4889, %v4896
        %v4898 = vrot.slane %v4869, 4
        %v4899 = vsel %vm1078, %v4898, %v4857
        %v4900 = vrot.slane %v4857, 4
        %v4901 = vsel %vm1078, %v4869, %v4900
        %v4903 = vunpack.c.l.s4 1934713408
        %v4904 = vunpack.c.0.s8 %v4903
        %v4905 = vperm.slane %v4899, %v4904
        %v4907 = vunpack.c.l.s4 1934713408
        %v4908 = vunpack.c.0.s8 %v4907
        %v4909 = vperm.slane %v4901, %v4908
        %v4910 = vrot.slane %v4873, 4
        %v4911 = vsel %vm1078, %v4910, %v4861
        %v4912 = vrot.slane %v4861, 4
        %v4913 = vsel %vm1078, %v4873, %v4912
        %v4915 = vunpack.c.l.s4 1934713408
        %v4916 = vunpack.c.0.s8 %v4915
        %v4917 = vperm.slane %v4911, %v4916
        %v4919 = vunpack.c.l.s4 1934713408
        %v4920 = vunpack.c.0.s8 %v4919
        %v4921 = vperm.slane %v4913, %v4920
        %v4922 = vrot.slane %v4893, 4
        %v4923 = vsel %vm1078, %v4922, %v4881
        %v4924 = vrot.slane %v4881, 4
        %v4925 = vsel %vm1078, %v4893, %v4924
        %v4927 = vunpack.c.l.s4 1934713408
        %v4928 = vunpack.c.0.s8 %v4927
        %v4929 = vperm.slane %v4923, %v4928
        %v4931 = vunpack.c.l.s4 1934713408
        %v4932 = vunpack.c.0.s8 %v4931
        %v4933 = vperm.slane %v4925, %v4932
        %v4934 = vrot.slane %v4897, 4
        %v4935 = vsel %vm1078, %v4934, %v4885
        %v4936 = vrot.slane %v4885, 4
        %v4937 = vsel %vm1078, %v4897, %v4936
        %v4939 = vunpack.c.l.s4 1934713408
        %v4940 = vunpack.c.0.s8 %v4939
        %v4941 = vperm.slane %v4935, %v4940
        %v4943 = vunpack.c.l.s4 1934713408
        %v4944 = vunpack.c.0.s8 %v4943
        %v4945 = vperm.slane %v4937, %v4944
        %v4946 = vrot.slane %v4929, 4
        %v4947 = vsel %vm1078, %v4946, %v4905
        %v4948 = vrot.slane %v4905, 4
        %v4949 = vsel %vm1078, %v4929, %v4948
        %v4950 = vrot.slane %v4933, 4
        %v4951 = vsel %vm1078, %v4950, %v4909
        %v4952 = vrot.slane %v4909, 4
        %v4953 = vsel %vm1078, %v4933, %v4952
        %v4954 = vrot.slane %v4941, 4
        %v4955 = vsel %vm1078, %v4954, %v4917
        %v4956 = vrot.slane %v4917, 4
        %v4957 = vsel %vm1078, %v4941, %v4956
        %v4958 = vrot.slane %v4945, 4
        %v4959 = vsel %vm1078, %v4958, %v4921
        %v4960 = vrot.slane %v4921, 4
        %v4961 = vsel %vm1078, %v4945, %v4960
        %v4962 = vrot.slane %v4620, 4
        %v4963 = vsel %vm1078, %v4962, %v4618
        %v4964 = vrot.slane %v4618, 4
        %v4965 = vsel %vm1078, %v4620, %v4964
        %v4967 = vunpack.c.l.s4 1983009808
        %v4968 = vunpack.c.0.s8 %v4967
        %v4969 = vperm.slane %v4963, %v4968
        %v4971 = vunpack.c.l.s4 1983009808
        %v4972 = vunpack.c.0.s8 %v4971
        %v4973 = vperm.slane %v4965, %v4972
        %v4974 = vrot.slane %v4621, 4
        %v4975 = vsel %vm1078, %v4974, %v4619
        %v4976 = vrot.slane %v4619, 4
        %v4977 = vsel %vm1078, %v4621, %v4976
        %v4979 = vunpack.c.l.s4 1983009808
        %v4980 = vunpack.c.0.s8 %v4979
        %v4981 = vperm.slane %v4975, %v4980
        %v4983 = vunpack.c.l.s4 1983009808
        %v4984 = vunpack.c.0.s8 %v4983
        %v4985 = vperm.slane %v4977, %v4984
        %v4986 = vrot.slane %v4624, 4
        %v4987 = vsel %vm1078, %v4986, %v4622
        %v4988 = vrot.slane %v4622, 4
        %v4989 = vsel %vm1078, %v4624, %v4988
        %v4991 = vunpack.c.l.s4 1983009808
        %v4992 = vunpack.c.0.s8 %v4991
        %v4993 = vperm.slane %v4987, %v4992
        %v4995 = vunpack.c.l.s4 1983009808
        %v4996 = vunpack.c.0.s8 %v4995
        %v4997 = vperm.slane %v4989, %v4996
        %v4998 = vrot.slane %v4625, 4
        %v4999 = vsel %vm1078, %v4998, %v4623
        %v5000 = vrot.slane %v4623, 4
        %v5001 = vsel %vm1078, %v4625, %v5000
        %v5003 = vunpack.c.l.s4 1983009808
        %v5004 = vunpack.c.0.s8 %v5003
        %v5005 = vperm.slane %v4999, %v5004
        %v5007 = vunpack.c.l.s4 1983009808
        %v5008 = vunpack.c.0.s8 %v5007
        %v5009 = vperm.slane %v5001, %v5008
        %v5010 = vrot.slane %v4981, 4
        %v5011 = vsel %vm1078, %v5010, %v4969
        %v5012 = vrot.slane %v4969, 4
        %v5013 = vsel %vm1078, %v4981, %v5012
        %v5015 = vunpack.c.l.s4 1934713408
        %v5016 = vunpack.c.0.s8 %v5015
        %v5017 = vperm.slane %v5011, %v5016
        %v5019 = vunpack.c.l.s4 1934713408
        %v5020 = vunpack.c.0.s8 %v5019
        %v5021 = vperm.slane %v5013, %v5020
        %v5022 = vrot.slane %v4985, 4
        %v5023 = vsel %vm1078, %v5022, %v4973
        %v5024 = vrot.slane %v4973, 4
        %v5025 = vsel %vm1078, %v4985, %v5024
        %v5027 = vunpack.c.l.s4 1934713408
        %v5028 = vunpack.c.0.s8 %v5027
        %v5029 = vperm.slane %v5023, %v5028
        %v5031 = vunpack.c.l.s4 1934713408
        %v5032 = vunpack.c.0.s8 %v5031
        %v5033 = vperm.slane %v5025, %v5032
        %v5034 = vrot.slane %v5005, 4
        %v5035 = vsel %vm1078, %v5034, %v4993
        %v5036 = vrot.slane %v4993, 4
        %v5037 = vsel %vm1078, %v5005, %v5036
        %v5039 = vunpack.c.l.s4 1934713408
        %v5040 = vunpack.c.0.s8 %v5039
        %v5041 = vperm.slane %v5035, %v5040
        %v5043 = vunpack.c.l.s4 1934713408
        %v5044 = vunpack.c.0.s8 %v5043
        %v5045 = vperm.slane %v5037, %v5044
        %v5046 = vrot.slane %v5009, 4
        %v5047 = vsel %vm1078, %v5046, %v4997
        %v5048 = vrot.slane %v4997, 4
        %v5049 = vsel %vm1078, %v5009, %v5048
        %v5051 = vunpack.c.l.s4 1934713408
        %v5052 = vunpack.c.0.s8 %v5051
        %v5053 = vperm.slane %v5047, %v5052
        %v5055 = vunpack.c.l.s4 1934713408
        %v5056 = vunpack.c.0.s8 %v5055
        %v5057 = vperm.slane %v5049, %v5056
        %v5058 = vrot.slane %v5041, 4
        %v5059 = vsel %vm1078, %v5058, %v5017
        %v5060 = vrot.slane %v5017, 4
        %v5061 = vsel %vm1078, %v5041, %v5060
        %v5062 = vrot.slane %v5045, 4
        %v5063 = vsel %vm1078, %v5062, %v5021
        %v5064 = vrot.slane %v5021, 4
        %v5065 = vsel %vm1078, %v5045, %v5064
        %v5066 = vrot.slane %v5053, 4
        %v5067 = vsel %vm1078, %v5066, %v5029
        %v5068 = vrot.slane %v5029, 4
        %v5069 = vsel %vm1078, %v5053, %v5068
        %v5070 = vrot.slane %v5057, 4
        %v5071 = vsel %vm1078, %v5070, %v5033
        %v5072 = vrot.slane %v5033, 4
        %v5073 = vsel %vm1078, %v5057, %v5072
        %v5074 = vld [vmem:[%s3] sm:$0xf]
        %v5075 = vld [vmem:[%s3 + $0x4] sm:$0xf]
        %v5076 = vld [vmem:[%s3 + $0x8] sm:$0xf]
        %v5077 = vld [vmem:[%s3 + $0xc] sm:$0xf]
        %v5078 = vpack.c.bf16 %v4835, %v4723
        %v5079 = vpack.c.bf16 %v4837, %v4725
        %v5080 = vpack.c.bf16 %v4839, %v4727
        %v5081 = vpack.c.bf16 %v4841, %v4729
        %v5082 = vpack.c.bf16 %v4843, %v4731
        %v5083 = vpack.c.bf16 %v4845, %v4733
        %v5084 = vpack.c.bf16 %v4847, %v4735
        %v5085 = vpack.c.bf16 %v4849, %v4737
        %v5086 = vpack.c.bf16 %v5059, %v4947
        %v5087 = vpack.c.bf16 %v5061, %v4949
        %v5088 = vpack.c.bf16 %v5063, %v4951
        %v5089 = vpack.c.bf16 %v5065, %v4953
        %v5090 = vpack.c.bf16 %v5067, %v4955
        %v5091 = vpack.c.bf16 %v5069, %v4957
        %v5092 = vpack.c.bf16 %v5071, %v4959
        %v5093 = vpack.c.bf16 %v5073, %v4961
        %5095 = vset.pattern.permute.xlu0 0
        %5096 = vperm.xlu0 %5095, %v362
        %v5097 = vpop.permute.xlu0 %5096
        %5100 = vset.pattern.permute.xlu0 0
        %5101 = vperm.xlu0 %5100, %v363
        %v5102 = vpop.permute.xlu0 %5101
        %5105 = vset.pattern.permute.xlu0 0
        %5106 = vperm.xlu0 %5105, %v364
        %v5107 = vpop.permute.xlu0 %5106
        %5110 = vset.pattern.permute.xlu0 0
        %5111 = vperm.xlu0 %5110, %v365
        %v5112 = vpop.permute.xlu0 %5111
        %v5118 = vunpack.c.l.b16 %v5074
        %v5119 = vunpack.c.l.b16 %v5075
        %v5120 = vunpack.c.l.b16 %v5076
        %v5121 = vunpack.c.l.b16 %v5077
        %v5122 = vpack.c.b16 %v5119, %v5118
        %v5123 = vpack.c.b16 %v5121, %v5120
        %v5125 = vsel %vm746, %v5122, 0
        %v5128 = vsel %vm746, %v5123, 0
        %5130 = vmatpush.bf16.msra.mxu0 0
        %5131 = vmatpush.bf16.msra.mxu0 0
        %5132 = vmatpush.bf16.msra.mxu0 0
        %5133 = vmatpush.bf16.msra.mxu0 0
        %5134 = vmatpush.bf16.msra.mxu0 0
        %5135 = vmatpush.bf16.msra.mxu0 0
        %5136 = vmatpush.bf16.msra.mxu0 %v5086
        %5137 = vmatpush.bf16.msra.mxu0 %v5078
        %5138 = vmatmul.bf16.gmra.mxu0 %v5125
        %v5139 = vpop.f32.mrf.mxu0
        %v5140 = vadd.f32 %v5097, %v5139
        %v5141 = vpop.f32.mrf.mxu0
        %v5142 = vadd.f32 %v5102, %v5141
        %5143 = vmatmul.bf16.gmra.mxu0 %v5128
        %v5144 = vpop.f32.mrf.mxu0
        %v5145 = vadd.f32 %v5107, %v5144
        %v5146 = vpop.f32.mrf.mxu0
        %v5147 = vadd.f32 %v5112, %v5146
        %5148 = vdwg.mxu0
        %5149 = vmatpush.bf16.msra.mxu0 0
        %5150 = vmatpush.bf16.msra.mxu0 0
        %5151 = vmatpush.bf16.msra.mxu0 0
        %5152 = vmatpush.bf16.msra.mxu0 0
        %5153 = vmatpush.bf16.msra.mxu0 0
        %5154 = vmatpush.bf16.msra.mxu0 0
        %5155 = vmatpush.bf16.msra.mxu0 %v5087
        %5156 = vmatpush.bf16.msra.mxu0 %v5079
        %5157 = vmatmul.bf16.gmra.mxu0 %v5125
        %v5158 = vpop.f32.mrf.mxu0
        %v5159 = vadd.f32 %v5097, %v5158
        %v5160 = vpop.f32.mrf.mxu0
        %v5161 = vadd.f32 %v5102, %v5160
        %5162 = vmatmul.bf16.gmra.mxu0 %v5128
        %v5163 = vpop.f32.mrf.mxu0
        %v5164 = vadd.f32 %v5107, %v5163
        %v5165 = vpop.f32.mrf.mxu0
        %v5166 = vadd.f32 %v5112, %v5165
        %5167 = vdwg.mxu0
        %5168 = vmatpush.bf16.msra.mxu0 0
        %5169 = vmatpush.bf16.msra.mxu0 0
        %5170 = vmatpush.bf16.msra.mxu0 0
        %5171 = vmatpush.bf16.msra.mxu0 0
        %5172 = vmatpush.bf16.msra.mxu0 0
        %5173 = vmatpush.bf16.msra.mxu0 0
        %5174 = vmatpush.bf16.msra.mxu0 %v5088
        %5175 = vmatpush.bf16.msra.mxu0 %v5080
        %5176 = vmatmul.bf16.gmra.mxu0 %v5125
        %v5177 = vpop.f32.mrf.mxu0
        %v5178 = vadd.f32 %v5097, %v5177
        %v5179 = vpop.f32.mrf.mxu0
        %v5180 = vadd.f32 %v5102, %v5179
        %5181 = vmatmul.bf16.gmra.mxu0 %v5128
        %v5182 = vpop.f32.mrf.mxu0
        %v5183 = vadd.f32 %v5107, %v5182
        %v5184 = vpop.f32.mrf.mxu0
        %v5185 = vadd.f32 %v5112, %v5184
        %5186 = vdwg.mxu0
        %5187 = vmatpush.bf16.msra.mxu0 0
        %5188 = vmatpush.bf16.msra.mxu0 0
        %5189 = vmatpush.bf16.msra.mxu0 0
        %5190 = vmatpush.bf16.msra.mxu0 0
        %5191 = vmatpush.bf16.msra.mxu0 0
        %5192 = vmatpush.bf16.msra.mxu0 0
        %5193 = vmatpush.bf16.msra.mxu0 %v5089
        %5194 = vmatpush.bf16.msra.mxu0 %v5081
        %5195 = vmatmul.bf16.gmra.mxu0 %v5125
        %v5196 = vpop.f32.mrf.mxu0
        %v5197 = vadd.f32 %v5097, %v5196
        %v5198 = vpop.f32.mrf.mxu0
        %v5199 = vadd.f32 %v5102, %v5198
        %5200 = vmatmul.bf16.gmra.mxu0 %v5128
        %v5201 = vpop.f32.mrf.mxu0
        %v5202 = vadd.f32 %v5107, %v5201
        %v5203 = vpop.f32.mrf.mxu0
        %v5204 = vadd.f32 %v5112, %v5203
        %5205 = vdwg.mxu0
        %5206 = vmatpush.bf16.msra.mxu0 0
        %5207 = vmatpush.bf16.msra.mxu0 0
        %5208 = vmatpush.bf16.msra.mxu0 0
        %5209 = vmatpush.bf16.msra.mxu0 0
        %5210 = vmatpush.bf16.msra.mxu0 0
        %5211 = vmatpush.bf16.msra.mxu0 0
        %5212 = vmatpush.bf16.msra.mxu0 %v5090
        %5213 = vmatpush.bf16.msra.mxu0 %v5082
        %5214 = vmatmul.bf16.gmra.mxu0 %v5125
        %v5215 = vpop.f32.mrf.mxu0
        %v5216 = vadd.f32 %v5097, %v5215
        %v5217 = vpop.f32.mrf.mxu0
        %v5218 = vadd.f32 %v5102, %v5217
        %5219 = vmatmul.bf16.gmra.mxu0 %v5128
        %v5220 = vpop.f32.mrf.mxu0
        %v5221 = vadd.f32 %v5107, %v5220
        %v5222 = vpop.f32.mrf.mxu0
        %v5223 = vadd.f32 %v5112, %v5222
        %5224 = vdwg.mxu0
        %5225 = vmatpush.bf16.msra.mxu0 0
        %5226 = vmatpush.bf16.msra.mxu0 0
        %5227 = vmatpush.bf16.msra.mxu0 0
        %5228 = vmatpush.bf16.msra.mxu0 0
        %5229 = vmatpush.bf16.msra.mxu0 0
        %5230 = vmatpush.bf16.msra.mxu0 0
        %5231 = vmatpush.bf16.msra.mxu0 %v5091
        %5232 = vmatpush.bf16.msra.mxu0 %v5083
        %5233 = vmatmul.bf16.gmra.mxu0 %v5125
        %v5234 = vpop.f32.mrf.mxu0
        %v5235 = vadd.f32 %v5097, %v5234
        %v5236 = vpop.f32.mrf.mxu0
        %v5237 = vadd.f32 %v5102, %v5236
        %5238 = vmatmul.bf16.gmra.mxu0 %v5128
        %v5239 = vpop.f32.mrf.mxu0
        %v5240 = vadd.f32 %v5107, %v5239
        %v5241 = vpop.f32.mrf.mxu0
        %v5242 = vadd.f32 %v5112, %v5241
        %5243 = vdwg.mxu0
        %5244 = vmatpush.bf16.msra.mxu0 0
        %5245 = vmatpush.bf16.msra.mxu0 0
        %5246 = vmatpush.bf16.msra.mxu0 0
        %5247 = vmatpush.bf16.msra.mxu0 0
        %5248 = vmatpush.bf16.msra.mxu0 0
        %5249 = vmatpush.bf16.msra.mxu0 0
        %5250 = vmatpush.bf16.msra.mxu0 %v5092
        %5251 = vmatpush.bf16.msra.mxu0 %v5084
        %5252 = vmatmul.bf16.gmra.mxu0 %v5125
        %v5253 = vpop.f32.mrf.mxu0
        %v5254 = vadd.f32 %v5097, %v5253
        %v5255 = vpop.f32.mrf.mxu0
        %v5256 = vadd.f32 %v5102, %v5255
        %5257 = vmatmul.bf16.gmra.mxu0 %v5128
        %v5258 = vpop.f32.mrf.mxu0
        %v5259 = vadd.f32 %v5107, %v5258
        %v5260 = vpop.f32.mrf.mxu0
        %v5261 = vadd.f32 %v5112, %v5260
        %5262 = vdwg.mxu0
        %5263 = vmatpush.bf16.msra.mxu0 0
        %5264 = vmatpush.bf16.msra.mxu0 0
        %5265 = vmatpush.bf16.msra.mxu0 0
        %5266 = vmatpush.bf16.msra.mxu0 0
        %5267 = vmatpush.bf16.msra.mxu0 0
        %5268 = vmatpush.bf16.msra.mxu0 0
        %5269 = vmatpush.bf16.msra.mxu0 %v5093
        %5270 = vmatpush.bf16.msra.mxu0 %v5085
        %5271 = vmatmul.bf16.gmra.mxu0 %v5125
        %v5272 = vpop.f32.mrf.mxu0
        %v5273 = vadd.f32 %v5097, %v5272
        %v5274 = vpop.f32.mrf.mxu0
        %v5275 = vadd.f32 %v5102, %v5274
        %5276 = vmatmul.bf16.gmra.mxu0 %v5128
        %v5277 = vpop.f32.mrf.mxu0
        %v5278 = vadd.f32 %v5107, %v5277
        %v5279 = vpop.f32.mrf.mxu0
        %v5280 = vadd.f32 %v5112, %v5279
        %5281 = vdwg.mxu0
        %v5282 = vadd.f32 %v5140, %v531
        %v5283 = vadd.f32 %v5159, %v547
        %v5284 = vadd.f32 %v5178, %v563
        %v5285 = vadd.f32 %v5197, %v579
        %v5286 = vadd.f32 %v5216, %v595
        %v5287 = vadd.f32 %v5235, %v611
        %v5288 = vadd.f32 %v5254, %v627
        %v5289 = vadd.f32 %v5273, %v643
        %v5290 = vadd.f32 %v5142, %v535
        %v5291 = vadd.f32 %v5161, %v551
        %v5292 = vadd.f32 %v5180, %v567
        %v5293 = vadd.f32 %v5199, %v583
        %v5294 = vadd.f32 %v5218, %v599
        %v5295 = vadd.f32 %v5237, %v615
        %v5296 = vadd.f32 %v5256, %v631
        %v5297 = vadd.f32 %v5275, %v647
        %v5298 = vadd.f32 %v5145, %v539
        %v5299 = vadd.f32 %v5164, %v555
        %v5300 = vadd.f32 %v5183, %v571
        %v5301 = vadd.f32 %v5202, %v587
        %v5302 = vadd.f32 %v5221, %v603
        %v5303 = vadd.f32 %v5240, %v619
        %v5304 = vadd.f32 %v5259, %v635
        %v5305 = vadd.f32 %v5278, %v651
        %v5306 = vadd.f32 %v5147, %v543
        %v5307 = vadd.f32 %v5166, %v559
        %v5308 = vadd.f32 %v5185, %v575
        %v5309 = vadd.f32 %v5204, %v591
        %v5310 = vadd.f32 %v5223, %v607
        %v5311 = vadd.f32 %v5242, %v623
        %v5312 = vadd.f32 %v5261, %v639
        %v5313 = vadd.f32 %v5280, %v655
        %v5314 = vadd.f32 %v5282, %v5290
        %v5315 = vadd.f32 %v5314, %v5298
        %v5316 = vadd.f32 %v5315, %v5306
        %v5317 = vrot.slane %v5316, 4
        %v5318 = vadd.f32 %v5316, %v5317
        %v5319 = vrot.slane %v5318, 2
        %v5320 = vadd.f32 %v5318, %v5319
        %v5321 = vrot.slane %v5320, 1
        %v5322 = vadd.f32 %v5320, %v5321
        %v5323 = vadd.f32 %v5283, %v5291
        %v5324 = vadd.f32 %v5323, %v5299
        %v5325 = vadd.f32 %v5324, %v5307
        %v5326 = vrot.slane %v5325, 4
        %v5327 = vadd.f32 %v5325, %v5326
        %v5328 = vrot.slane %v5327, 2
        %v5329 = vadd.f32 %v5327, %v5328
        %v5330 = vrot.slane %v5329, 1
        %v5331 = vadd.f32 %v5329, %v5330
        %v5332 = vadd.f32 %v5284, %v5292
        %v5333 = vadd.f32 %v5332, %v5300
        %v5334 = vadd.f32 %v5333, %v5308
        %v5335 = vrot.slane %v5334, 4
        %v5336 = vadd.f32 %v5334, %v5335
        %v5337 = vrot.slane %v5336, 2
        %v5338 = vadd.f32 %v5336, %v5337
        %v5339 = vrot.slane %v5338, 1
        %v5340 = vadd.f32 %v5338, %v5339
        %v5341 = vadd.f32 %v5285, %v5293
        %v5342 = vadd.f32 %v5341, %v5301
        %v5343 = vadd.f32 %v5342, %v5309
        %v5344 = vrot.slane %v5343, 4
        %v5345 = vadd.f32 %v5343, %v5344
        %v5346 = vrot.slane %v5345, 2
        %v5347 = vadd.f32 %v5345, %v5346
        %v5348 = vrot.slane %v5347, 1
        %v5349 = vadd.f32 %v5347, %v5348
        %v5350 = vadd.f32 %v5286, %v5294
        %v5351 = vadd.f32 %v5350, %v5302
        %v5352 = vadd.f32 %v5351, %v5310
        %v5353 = vrot.slane %v5352, 4
        %v5354 = vadd.f32 %v5352, %v5353
        %v5355 = vrot.slane %v5354, 2
        %v5356 = vadd.f32 %v5354, %v5355
        %v5357 = vrot.slane %v5356, 1
        %v5358 = vadd.f32 %v5356, %v5357
        %v5359 = vadd.f32 %v5287, %v5295
        %v5360 = vadd.f32 %v5359, %v5303
        %v5361 = vadd.f32 %v5360, %v5311
        %v5362 = vrot.slane %v5361, 4
        %v5363 = vadd.f32 %v5361, %v5362
        %v5364 = vrot.slane %v5363, 2
        %v5365 = vadd.f32 %v5363, %v5364
        %v5366 = vrot.slane %v5365, 1
        %v5367 = vadd.f32 %v5365, %v5366
        %v5368 = vadd.f32 %v5288, %v5296
        %v5369 = vadd.f32 %v5368, %v5304
        %v5370 = vadd.f32 %v5369, %v5312
        %v5371 = vrot.slane %v5370, 4
        %v5372 = vadd.f32 %v5370, %v5371
        %v5373 = vrot.slane %v5372, 2
        %v5374 = vadd.f32 %v5372, %v5373
        %v5375 = vrot.slane %v5374, 1
        %v5376 = vadd.f32 %v5374, %v5375
        %v5377 = vadd.f32 %v5289, %v5297
        %v5378 = vadd.f32 %v5377, %v5305
        %v5379 = vadd.f32 %v5378, %v5313
        %v5380 = vrot.slane %v5379, 4
        %v5381 = vadd.f32 %v5379, %v5380
        %v5382 = vrot.slane %v5381, 2
        %v5383 = vadd.f32 %v5381, %v5382
        %v5384 = vrot.slane %v5383, 1
        %v5385 = vadd.f32 %v5383, %v5384
        %v5386 = vrcp.pop 32.0
        %v5387 = vmul.f32 32.0, %v5386
        %v5388 = vsub.f32 1.0, %v5387
        %v5389 = vmul.f32 %v5386, %v5388
        %v5390 = vadd.f32 %v5386, %v5389
        %vm5391 = vweird.f32 %v5386
        %v5392 = vsel %vm5391, %v5386, %v5390
        %v5393 = vmul.f32 %v5322, %v5392
        %v5394 = vmul.f32 %v5331, %v5392
        %v5395 = vmul.f32 %v5340, %v5392
        %v5396 = vmul.f32 %v5349, %v5392
        %v5397 = vmul.f32 %v5358, %v5392
        %v5398 = vmul.f32 %v5367, %v5392
        %v5399 = vmul.f32 %v5376, %v5392
        %v5400 = vmul.f32 %v5385, %v5392
        %v5401 = vsub.f32 %v5282, %v5393
        %v5402 = vsub.f32 %v5283, %v5394
        %v5403 = vsub.f32 %v5284, %v5395
        %v5404 = vsub.f32 %v5285, %v5396
        %v5405 = vsub.f32 %v5286, %v5397
        %v5406 = vsub.f32 %v5287, %v5398
        %v5407 = vsub.f32 %v5288, %v5399
        %v5408 = vsub.f32 %v5289, %v5400
        %v5409 = vsub.f32 %v5290, %v5393
        %v5410 = vsub.f32 %v5291, %v5394
        %v5411 = vsub.f32 %v5292, %v5395
        %v5412 = vsub.f32 %v5293, %v5396
        %v5413 = vsub.f32 %v5294, %v5397
        %v5414 = vsub.f32 %v5295, %v5398
        %v5415 = vsub.f32 %v5296, %v5399
        %v5416 = vsub.f32 %v5297, %v5400
        %v5417 = vsub.f32 %v5298, %v5393
        %v5418 = vsub.f32 %v5299, %v5394
        %v5419 = vsub.f32 %v5300, %v5395
        %v5420 = vsub.f32 %v5301, %v5396
        %v5421 = vsub.f32 %v5302, %v5397
        %v5422 = vsub.f32 %v5303, %v5398
        %v5423 = vsub.f32 %v5304, %v5399
        %v5424 = vsub.f32 %v5305, %v5400
        %v5425 = vsub.f32 %v5306, %v5393
        %v5426 = vsub.f32 %v5307, %v5394
        %v5427 = vsub.f32 %v5308, %v5395
        %v5428 = vsub.f32 %v5309, %v5396
        %v5429 = vsub.f32 %v5310, %v5397
        %v5430 = vsub.f32 %v5311, %v5398
        %v5431 = vsub.f32 %v5312, %v5399
        %v5432 = vsub.f32 %v5313, %v5400
        %v5433 = vmul.f32 %v5401, %v5401
        %v5434 = vmul.f32 %v5402, %v5402
        %v5435 = vmul.f32 %v5403, %v5403
        %v5436 = vmul.f32 %v5404, %v5404
        %v5437 = vmul.f32 %v5405, %v5405
        %v5438 = vmul.f32 %v5406, %v5406
        %v5439 = vmul.f32 %v5407, %v5407
        %v5440 = vmul.f32 %v5408, %v5408
        %v5441 = vmul.f32 %v5409, %v5409
        %v5442 = vmul.f32 %v5410, %v5410
        %v5443 = vmul.f32 %v5411, %v5411
        %v5444 = vmul.f32 %v5412, %v5412
        %v5445 = vmul.f32 %v5413, %v5413
        %v5446 = vmul.f32 %v5414, %v5414
        %v5447 = vmul.f32 %v5415, %v5415
        %v5448 = vmul.f32 %v5416, %v5416
        %v5449 = vmul.f32 %v5417, %v5417
        %v5450 = vmul.f32 %v5418, %v5418
        %v5451 = vmul.f32 %v5419, %v5419
        %v5452 = vmul.f32 %v5420, %v5420
        %v5453 = vmul.f32 %v5421, %v5421
        %v5454 = vmul.f32 %v5422, %v5422
        %v5455 = vmul.f32 %v5423, %v5423
        %v5456 = vmul.f32 %v5424, %v5424
        %v5457 = vmul.f32 %v5425, %v5425
        %v5458 = vmul.f32 %v5426, %v5426
        %v5459 = vmul.f32 %v5427, %v5427
        %v5460 = vmul.f32 %v5428, %v5428
        %v5461 = vmul.f32 %v5429, %v5429
        %v5462 = vmul.f32 %v5430, %v5430
        %v5463 = vmul.f32 %v5431, %v5431
        %v5464 = vmul.f32 %v5432, %v5432
        %v5465 = vadd.f32 %v5433, %v5441
        %v5466 = vadd.f32 %v5465, %v5449
        %v5467 = vadd.f32 %v5466, %v5457
        %v5468 = vrot.slane %v5467, 4
        %v5469 = vadd.f32 %v5467, %v5468
        %v5470 = vrot.slane %v5469, 2
        %v5471 = vadd.f32 %v5469, %v5470
        %v5472 = vrot.slane %v5471, 1
        %v5473 = vadd.f32 %v5471, %v5472
        %v5474 = vadd.f32 %v5434, %v5442
        %v5475 = vadd.f32 %v5474, %v5450
        %v5476 = vadd.f32 %v5475, %v5458
        %v5477 = vrot.slane %v5476, 4
        %v5478 = vadd.f32 %v5476, %v5477
        %v5479 = vrot.slane %v5478, 2
        %v5480 = vadd.f32 %v5478, %v5479
        %v5481 = vrot.slane %v5480, 1
        %v5482 = vadd.f32 %v5480, %v5481
        %v5483 = vadd.f32 %v5435, %v5443
        %v5484 = vadd.f32 %v5483, %v5451
        %v5485 = vadd.f32 %v5484, %v5459
        %v5486 = vrot.slane %v5485, 4
        %v5487 = vadd.f32 %v5485, %v5486
        %v5488 = vrot.slane %v5487, 2
        %v5489 = vadd.f32 %v5487, %v5488
        %v5490 = vrot.slane %v5489, 1
        %v5491 = vadd.f32 %v5489, %v5490
        %v5492 = vadd.f32 %v5436, %v5444
        %v5493 = vadd.f32 %v5492, %v5452
        %v5494 = vadd.f32 %v5493, %v5460
        %v5495 = vrot.slane %v5494, 4
        %v5496 = vadd.f32 %v5494, %v5495
        %v5497 = vrot.slane %v5496, 2
        %v5498 = vadd.f32 %v5496, %v5497
        %v5499 = vrot.slane %v5498, 1
        %v5500 = vadd.f32 %v5498, %v5499
        %v5501 = vadd.f32 %v5437, %v5445
        %v5502 = vadd.f32 %v5501, %v5453
        %v5503 = vadd.f32 %v5502, %v5461
        %v5504 = vrot.slane %v5503, 4
        %v5505 = vadd.f32 %v5503, %v5504
        %v5506 = vrot.slane %v5505, 2
        %v5507 = vadd.f32 %v5505, %v5506
        %v5508 = vrot.slane %v5507, 1
        %v5509 = vadd.f32 %v5507, %v5508
        %v5510 = vadd.f32 %v5438, %v5446
        %v5511 = vadd.f32 %v5510, %v5454
        %v5512 = vadd.f32 %v5511, %v5462
        %v5513 = vrot.slane %v5512, 4
        %v5514 = vadd.f32 %v5512, %v5513
        %v5515 = vrot.slane %v5514, 2
        %v5516 = vadd.f32 %v5514, %v5515
        %v5517 = vrot.slane %v5516, 1
        %v5518 = vadd.f32 %v5516, %v5517
        %v5519 = vadd.f32 %v5439, %v5447
        %v5520 = vadd.f32 %v5519, %v5455
        %v5521 = vadd.f32 %v5520, %v5463
        %v5522 = vrot.slane %v5521, 4
        %v5523 = vadd.f32 %v5521, %v5522
        %v5524 = vrot.slane %v5523, 2
        %v5525 = vadd.f32 %v5523, %v5524
        %v5526 = vrot.slane %v5525, 1
        %v5527 = vadd.f32 %v5525, %v5526
        %v5528 = vadd.f32 %v5440, %v5448
        %v5529 = vadd.f32 %v5528, %v5456
        %v5530 = vadd.f32 %v5529, %v5464
        %v5531 = vrot.slane %v5530, 4
        %v5532 = vadd.f32 %v5530, %v5531
        %v5533 = vrot.slane %v5532, 2
        %v5534 = vadd.f32 %v5532, %v5533
        %v5535 = vrot.slane %v5534, 1
        %v5536 = vadd.f32 %v5534, %v5535
        %v5537 = vmul.f32 %v5473, %v5392
        %v5538 = vmul.f32 %v5482, %v5392
        %v5539 = vmul.f32 %v5491, %v5392
        %v5540 = vmul.f32 %v5500, %v5392
        %v5541 = vmul.f32 %v5509, %v5392
        %v5542 = vmul.f32 %v5518, %v5392
        %v5543 = vmul.f32 %v5527, %v5392
        %v5544 = vmul.f32 %v5536, %v5392
        %v5545 = vadd.f32 %v5537, 1e-05
        %v5546 = vadd.f32 %v5538, 1e-05
        %v5547 = vadd.f32 %v5539, 1e-05
        %v5548 = vadd.f32 %v5540, 1e-05
        %v5549 = vadd.f32 %v5541, 1e-05
        %v5550 = vadd.f32 %v5542, 1e-05
        %v5551 = vadd.f32 %v5543, 1e-05
        %v5552 = vadd.f32 %v5544, 1e-05
        %v5553 = vrsqrt.pop %v5545
        %v5554 = vmul.f32 %v5553, %v5545
        %v5555 = vmul.f32 %v5554, %v5553
        %v5556 = vmul.f32 0.5, %v5555
        %v5557 = vsub.f32 1.5, %v5556
        %v5558 = vmul.f32 %v5553, %v5557
        %vm5559 = vweird.f32 %v5545
        %vm5560 = vweird.f32 %v5553
        %vm5561 = vmor %vm5559, %vm5560
        %v5562 = vsel %vm5561, %v5553, %v5558
        %v5563 = vrsqrt.pop %v5546
        %v5564 = vmul.f32 %v5563, %v5546
        %v5565 = vmul.f32 %v5564, %v5563
        %v5566 = vmul.f32 0.5, %v5565
        %v5567 = vsub.f32 1.5, %v5566
        %v5568 = vmul.f32 %v5563, %v5567
        %vm5569 = vweird.f32 %v5546
        %vm5570 = vweird.f32 %v5563
        %vm5571 = vmor %vm5569, %vm5570
        %v5572 = vsel %vm5571, %v5563, %v5568
        %v5573 = vrsqrt.pop %v5547
        %v5574 = vmul.f32 %v5573, %v5547
        %v5575 = vmul.f32 %v5574, %v5573
        %v5576 = vmul.f32 0.5, %v5575
        %v5577 = vsub.f32 1.5, %v5576
        %v5578 = vmul.f32 %v5573, %v5577
        %vm5579 = vweird.f32 %v5547
        %vm5580 = vweird.f32 %v5573
        %vm5581 = vmor %vm5579, %vm5580
        %v5582 = vsel %vm5581, %v5573, %v5578
        %v5583 = vrsqrt.pop %v5548
        %v5584 = vmul.f32 %v5583, %v5548
        %v5585 = vmul.f32 %v5584, %v5583
        %v5586 = vmul.f32 0.5, %v5585
        %v5587 = vsub.f32 1.5, %v5586
        %v5588 = vmul.f32 %v5583, %v5587
        %vm5589 = vweird.f32 %v5548
        %vm5590 = vweird.f32 %v5583
        %vm5591 = vmor %vm5589, %vm5590
        %v5592 = vsel %vm5591, %v5583, %v5588
        %v5593 = vrsqrt.pop %v5549
        %v5594 = vmul.f32 %v5593, %v5549
        %v5595 = vmul.f32 %v5594, %v5593
        %v5596 = vmul.f32 0.5, %v5595
        %v5597 = vsub.f32 1.5, %v5596
        %v5598 = vmul.f32 %v5593, %v5597
        %vm5599 = vweird.f32 %v5549
        %vm5600 = vweird.f32 %v5593
        %vm5601 = vmor %vm5599, %vm5600
        %v5602 = vsel %vm5601, %v5593, %v5598
        %v5603 = vrsqrt.pop %v5550
        %v5604 = vmul.f32 %v5603, %v5550
        %v5605 = vmul.f32 %v5604, %v5603
        %v5606 = vmul.f32 0.5, %v5605
        %v5607 = vsub.f32 1.5, %v5606
        %v5608 = vmul.f32 %v5603, %v5607
        %vm5609 = vweird.f32 %v5550
        %vm5610 = vweird.f32 %v5603
        %vm5611 = vmor %vm5609, %vm5610
        %v5612 = vsel %vm5611, %v5603, %v5608
        %v5613 = vrsqrt.pop %v5551
        %v5614 = vmul.f32 %v5613, %v5551
        %v5615 = vmul.f32 %v5614, %v5613
        %v5616 = vmul.f32 0.5, %v5615
        %v5617 = vsub.f32 1.5, %v5616
        %v5618 = vmul.f32 %v5613, %v5617
        %vm5619 = vweird.f32 %v5551
        %vm5620 = vweird.f32 %v5613
        %vm5621 = vmor %vm5619, %vm5620
        %v5622 = vsel %vm5621, %v5613, %v5618
        %v5623 = vrsqrt.pop %v5552
        %v5624 = vmul.f32 %v5623, %v5552
        %v5625 = vmul.f32 %v5624, %v5623
        %v5626 = vmul.f32 0.5, %v5625
        %v5627 = vsub.f32 1.5, %v5626
        %v5628 = vmul.f32 %v5623, %v5627
        %vm5629 = vweird.f32 %v5552
        %vm5630 = vweird.f32 %v5623
        %vm5631 = vmor %vm5629, %vm5630
        %v5632 = vsel %vm5631, %v5623, %v5628
        %v5633 = vmul.f32 %v5401, %v5562
        %v5634 = vmul.f32 %v5402, %v5572
        %v5635 = vmul.f32 %v5403, %v5582
        %v5636 = vmul.f32 %v5404, %v5592
        %v5637 = vmul.f32 %v5405, %v5602
        %v5638 = vmul.f32 %v5406, %v5612
        %v5639 = vmul.f32 %v5407, %v5622
        %v5640 = vmul.f32 %v5408, %v5632
        %v5641 = vmul.f32 %v5409, %v5562
        %v5642 = vmul.f32 %v5410, %v5572
        %v5643 = vmul.f32 %v5411, %v5582
        %v5644 = vmul.f32 %v5412, %v5592
        %v5645 = vmul.f32 %v5413, %v5602
        %v5646 = vmul.f32 %v5414, %v5612
        %v5647 = vmul.f32 %v5415, %v5622
        %v5648 = vmul.f32 %v5416, %v5632
        %v5649 = vmul.f32 %v5417, %v5562
        %v5650 = vmul.f32 %v5418, %v5572
        %v5651 = vmul.f32 %v5419, %v5582
        %v5652 = vmul.f32 %v5420, %v5592
        %v5653 = vmul.f32 %v5421, %v5602
        %v5654 = vmul.f32 %v5422, %v5612
        %v5655 = vmul.f32 %v5423, %v5622
        %v5656 = vmul.f32 %v5424, %v5632
        %v5657 = vmul.f32 %v5425, %v5562
        %v5658 = vmul.f32 %v5426, %v5572
        %v5659 = vmul.f32 %v5427, %v5582
        %v5660 = vmul.f32 %v5428, %v5592
        %v5661 = vmul.f32 %v5429, %v5602
        %v5662 = vmul.f32 %v5430, %v5612
        %v5663 = vmul.f32 %v5431, %v5622
        %v5664 = vmul.f32 %v5432, %v5632
        %5665 = vset.pattern.permute.xlu0 1
        %5666 = vperm.xlu0 %5665, %v362
        %v5667 = vpop.permute.xlu0 %5666
        %5669 = vset.pattern.permute.xlu0 1
        %5670 = vperm.xlu0 %5669, %v363
        %v5671 = vpop.permute.xlu0 %5670
        %5673 = vset.pattern.permute.xlu0 1
        %5674 = vperm.xlu0 %5673, %v364
        %v5675 = vpop.permute.xlu0 %5674
        %5677 = vset.pattern.permute.xlu0 1
        %5678 = vperm.xlu0 %5677, %v365
        %v5679 = vpop.permute.xlu0 %5678
        %v5681 = vmul.f32 %v5633, %v5667
        %v5682 = vmul.f32 %v5634, %v5667
        %v5683 = vmul.f32 %v5635, %v5667
        %v5684 = vmul.f32 %v5636, %v5667
        %v5685 = vmul.f32 %v5637, %v5667
        %v5686 = vmul.f32 %v5638, %v5667
        %v5687 = vmul.f32 %v5639, %v5667
        %v5688 = vmul.f32 %v5640, %v5667
        %v5689 = vmul.f32 %v5641, %v5671
        %v5690 = vmul.f32 %v5642, %v5671
        %v5691 = vmul.f32 %v5643, %v5671
        %v5692 = vmul.f32 %v5644, %v5671
        %v5693 = vmul.f32 %v5645, %v5671
        %v5694 = vmul.f32 %v5646, %v5671
        %v5695 = vmul.f32 %v5647, %v5671
        %v5696 = vmul.f32 %v5648, %v5671
        %v5697 = vmul.f32 %v5649, %v5675
        %v5698 = vmul.f32 %v5650, %v5675
        %v5699 = vmul.f32 %v5651, %v5675
        %v5700 = vmul.f32 %v5652, %v5675
        %v5701 = vmul.f32 %v5653, %v5675
        %v5702 = vmul.f32 %v5654, %v5675
        %v5703 = vmul.f32 %v5655, %v5675
        %v5704 = vmul.f32 %v5656, %v5675
        %v5705 = vmul.f32 %v5657, %v5679
        %v5706 = vmul.f32 %v5658, %v5679
        %v5707 = vmul.f32 %v5659, %v5679
        %v5708 = vmul.f32 %v5660, %v5679
        %v5709 = vmul.f32 %v5661, %v5679
        %v5710 = vmul.f32 %v5662, %v5679
        %v5711 = vmul.f32 %v5663, %v5679
        %v5712 = vmul.f32 %v5664, %v5679
        %5713 = vset.pattern.permute.xlu0 2
        %5714 = vperm.xlu0 %5713, %v362
        %v5715 = vpop.permute.xlu0 %5714
        %5717 = vset.pattern.permute.xlu0 2
        %5718 = vperm.xlu0 %5717, %v363
        %v5719 = vpop.permute.xlu0 %5718
        %5721 = vset.pattern.permute.xlu0 2
        %5722 = vperm.xlu0 %5721, %v364
        %v5723 = vpop.permute.xlu0 %5722
        %5725 = vset.pattern.permute.xlu0 2
        %5726 = vperm.xlu0 %5725, %v365
        %v5727 = vpop.permute.xlu0 %5726
        %v5729 = vadd.f32 %v5681, %v5715
        %v5730 = vadd.f32 %v5682, %v5715
        %v5731 = vadd.f32 %v5683, %v5715
        %v5732 = vadd.f32 %v5684, %v5715
        %v5733 = vadd.f32 %v5685, %v5715
        %v5734 = vadd.f32 %v5686, %v5715
        %v5735 = vadd.f32 %v5687, %v5715
        %v5736 = vadd.f32 %v5688, %v5715
        %v5737 = vadd.f32 %v5689, %v5719
        %v5738 = vadd.f32 %v5690, %v5719
        %v5739 = vadd.f32 %v5691, %v5719
        %v5740 = vadd.f32 %v5692, %v5719
        %v5741 = vadd.f32 %v5693, %v5719
        %v5742 = vadd.f32 %v5694, %v5719
        %v5743 = vadd.f32 %v5695, %v5719
        %v5744 = vadd.f32 %v5696, %v5719
        %v5745 = vadd.f32 %v5697, %v5723
        %v5746 = vadd.f32 %v5698, %v5723
        %v5747 = vadd.f32 %v5699, %v5723
        %v5748 = vadd.f32 %v5700, %v5723
        %v5749 = vadd.f32 %v5701, %v5723
        %v5750 = vadd.f32 %v5702, %v5723
        %v5751 = vadd.f32 %v5703, %v5723
        %v5752 = vadd.f32 %v5704, %v5723
        %v5753 = vadd.f32 %v5705, %v5727
        %v5754 = vadd.f32 %v5706, %v5727
        %v5755 = vadd.f32 %v5707, %v5727
        %v5756 = vadd.f32 %v5708, %v5727
        %v5757 = vadd.f32 %v5709, %v5727
        %v5758 = vadd.f32 %v5710, %v5727
        %v5759 = vadd.f32 %v5711, %v5727
        %v5760 = vadd.f32 %v5712, %v5727
        %v5761 = vld [vmem:[%s4] sm:$0xf]
        %v5762 = vld [vmem:[%s4 + $0x4] sm:$0xf]
        %v5763 = vld [vmem:[%s4 + $0x8] sm:$0xf]
        %v5764 = vld [vmem:[%s4 + $0xc] sm:$0xf]
        %v5765 = vld [vmem:[%s4 + $0x10] sm:$0xf]
        %v5766 = vld [vmem:[%s4 + $0x14] sm:$0xf]
        %v5767 = vld [vmem:[%s4 + $0x18] sm:$0xf]
        %v5768 = vld [vmem:[%s4 + $0x1c] sm:$0xf]
        %v5769 = vpack.c.bf16 %v5737, %v5729
        %v5770 = vpack.c.bf16 %v5738, %v5730
        %v5771 = vpack.c.bf16 %v5739, %v5731
        %v5772 = vpack.c.bf16 %v5740, %v5732
        %v5773 = vpack.c.bf16 %v5741, %v5733
        %v5774 = vpack.c.bf16 %v5742, %v5734
        %v5775 = vpack.c.bf16 %v5743, %v5735
        %v5776 = vpack.c.bf16 %v5744, %v5736
        %v5777 = vpack.c.bf16 %v5753, %v5745
        %v5778 = vpack.c.bf16 %v5754, %v5746
        %v5779 = vpack.c.bf16 %v5755, %v5747
        %v5780 = vpack.c.bf16 %v5756, %v5748
        %v5781 = vpack.c.bf16 %v5757, %v5749
        %v5782 = vpack.c.bf16 %v5758, %v5750
        %v5783 = vpack.c.bf16 %v5759, %v5751
        %v5784 = vpack.c.bf16 %v5760, %v5752
        %5785 = vset.pattern.permute.xlu0 6
        %5786 = vperm.xlu0 %5785, %v362
        %v5787 = vpop.permute.xlu0 %5786
        %5789 = vset.pattern.permute.xlu0 6
        %5790 = vperm.xlu0 %5789, %v363
        %v5791 = vpop.permute.xlu0 %5790
        %5793 = vset.pattern.permute.xlu0 6
        %5794 = vperm.xlu0 %5793, %v364
        %v5795 = vpop.permute.xlu0 %5794
        %5797 = vset.pattern.permute.xlu0 6
        %5798 = vperm.xlu0 %5797, %v365
        %v5799 = vpop.permute.xlu0 %5798
        %5802 = vset.pattern.permute.xlu0 6
        %5803 = vperm.xlu0 %5802, %v366
        %v5804 = vpop.permute.xlu0 %5803
        %5807 = vset.pattern.permute.xlu0 6
        %5808 = vperm.xlu0 %5807, %v367
        %v5809 = vpop.permute.xlu0 %5808
        %5812 = vset.pattern.permute.xlu0 6
        %5813 = vperm.xlu0 %5812, %v368
        %v5814 = vpop.permute.xlu0 %5813
        %5817 = vset.pattern.permute.xlu0 6
        %5818 = vperm.xlu0 %5817, %v369
        %v5819 = vpop.permute.xlu0 %5818
        %v5829 = vunpack.c.l.b16 %v5761
        %v5830 = vunpack.c.l.b16 %v5762
        %v5831 = vunpack.c.l.b16 %v5763
        %v5832 = vunpack.c.l.b16 %v5764
        %v5833 = vunpack.c.l.b16 %v5765
        %v5834 = vunpack.c.l.b16 %v5766
        %v5835 = vunpack.c.l.b16 %v5767
        %v5836 = vunpack.c.l.b16 %v5768
        %v5837 = vpack.c.b16 %v5830, %v5829
        %v5838 = vpack.c.b16 %v5832, %v5831
        %v5839 = vpack.c.b16 %v5834, %v5833
        %v5840 = vpack.c.b16 %v5836, %v5835
        %v5842 = vsel %vm746, %v5837, 0
        %v5845 = vsel %vm746, %v5838, 0
        %v5848 = vsel %vm746, %v5839, 0
        %v5851 = vsel %vm746, %v5840, 0
        %5853 = vmatpush.bf16.msra.mxu0 0
        %5854 = vmatpush.bf16.msra.mxu0 0
        %5855 = vmatpush.bf16.msra.mxu0 0
        %5856 = vmatpush.bf16.msra.mxu0 0
        %5857 = vmatpush.bf16.msra.mxu0 0
        %5858 = vmatpush.bf16.msra.mxu0 0
        %5859 = vmatpush.bf16.msra.mxu0 %v5777
        %5860 = vmatpush.bf16.msra.mxu0 %v5769
        %5861 = vmatmul.bf16.gmra.mxu0 %v5842
        %v5862 = vpop.f32.mrf.mxu0
        %v5863 = vadd.f32 %v5787, %v5862
        %v5864 = vpop.f32.mrf.mxu0
        %v5865 = vadd.f32 %v5791, %v5864
        %5866 = vmatmul.bf16.gmra.mxu0 %v5845
        %v5867 = vpop.f32.mrf.mxu0
        %v5868 = vadd.f32 %v5795, %v5867
        %v5869 = vpop.f32.mrf.mxu0
        %v5870 = vadd.f32 %v5799, %v5869
        %5871 = vmatmul.bf16.gmra.mxu0 %v5848
        %v5872 = vpop.f32.mrf.mxu0
        %v5873 = vadd.f32 %v5804, %v5872
        %v5874 = vpop.f32.mrf.mxu0
        %v5875 = vadd.f32 %v5809, %v5874
        %5876 = vmatmul.bf16.gmra.mxu0 %v5851
        %v5877 = vpop.f32.mrf.mxu0
        %v5878 = vadd.f32 %v5814, %v5877
        %v5879 = vpop.f32.mrf.mxu0
        %v5880 = vadd.f32 %v5819, %v5879
        %5881 = vdwg.mxu0
        %5882 = vmatpush.bf16.msra.mxu0 0
        %5883 = vmatpush.bf16.msra.mxu0 0
        %5884 = vmatpush.bf16.msra.mxu0 0
        %5885 = vmatpush.bf16.msra.mxu0 0
        %5886 = vmatpush.bf16.msra.mxu0 0
        %5887 = vmatpush.bf16.msra.mxu0 0
        %5888 = vmatpush.bf16.msra.mxu0 %v5778
        %5889 = vmatpush.bf16.msra.mxu0 %v5770
        %5890 = vmatmul.bf16.gmra.mxu0 %v5842
        %v5891 = vpop.f32.mrf.mxu0
        %v5892 = vadd.f32 %v5787, %v5891
        %v5893 = vpop.f32.mrf.mxu0
        %v5894 = vadd.f32 %v5791, %v5893
        %5895 = vmatmul.bf16.gmra.mxu0 %v5845
        %v5896 = vpop.f32.mrf.mxu0
        %v5897 = vadd.f32 %v5795, %v5896
        %v5898 = vpop.f32.mrf.mxu0
        %v5899 = vadd.f32 %v5799, %v5898
        %5900 = vmatmul.bf16.gmra.mxu0 %v5848
        %v5901 = vpop.f32.mrf.mxu0
        %v5902 = vadd.f32 %v5804, %v5901
        %v5903 = vpop.f32.mrf.mxu0
        %v5904 = vadd.f32 %v5809, %v5903
        %5905 = vmatmul.bf16.gmra.mxu0 %v5851
        %v5906 = vpop.f32.mrf.mxu0
        %v5907 = vadd.f32 %v5814, %v5906
        %v5908 = vpop.f32.mrf.mxu0
        %v5909 = vadd.f32 %v5819, %v5908
        %5910 = vdwg.mxu0
        %5911 = vmatpush.bf16.msra.mxu0 0
        %5912 = vmatpush.bf16.msra.mxu0 0
        %5913 = vmatpush.bf16.msra.mxu0 0
        %5914 = vmatpush.bf16.msra.mxu0 0
        %5915 = vmatpush.bf16.msra.mxu0 0
        %5916 = vmatpush.bf16.msra.mxu0 0
        %5917 = vmatpush.bf16.msra.mxu0 %v5779
        %5918 = vmatpush.bf16.msra.mxu0 %v5771
        %5919 = vmatmul.bf16.gmra.mxu0 %v5842
        %v5920 = vpop.f32.mrf.mxu0
        %v5921 = vadd.f32 %v5787, %v5920
        %v5922 = vpop.f32.mrf.mxu0
        %v5923 = vadd.f32 %v5791, %v5922
        %5924 = vmatmul.bf16.gmra.mxu0 %v5845
        %v5925 = vpop.f32.mrf.mxu0
        %v5926 = vadd.f32 %v5795, %v5925
        %v5927 = vpop.f32.mrf.mxu0
        %v5928 = vadd.f32 %v5799, %v5927
        %5929 = vmatmul.bf16.gmra.mxu0 %v5848
        %v5930 = vpop.f32.mrf.mxu0
        %v5931 = vadd.f32 %v5804, %v5930
        %v5932 = vpop.f32.mrf.mxu0
        %v5933 = vadd.f32 %v5809, %v5932
        %5934 = vmatmul.bf16.gmra.mxu0 %v5851
        %v5935 = vpop.f32.mrf.mxu0
        %v5936 = vadd.f32 %v5814, %v5935
        %v5937 = vpop.f32.mrf.mxu0
        %v5938 = vadd.f32 %v5819, %v5937
        %5939 = vdwg.mxu0
        %5940 = vmatpush.bf16.msra.mxu0 0
        %5941 = vmatpush.bf16.msra.mxu0 0
        %5942 = vmatpush.bf16.msra.mxu0 0
        %5943 = vmatpush.bf16.msra.mxu0 0
        %5944 = vmatpush.bf16.msra.mxu0 0
        %5945 = vmatpush.bf16.msra.mxu0 0
        %5946 = vmatpush.bf16.msra.mxu0 %v5780
        %5947 = vmatpush.bf16.msra.mxu0 %v5772
        %5948 = vmatmul.bf16.gmra.mxu0 %v5842
        %v5949 = vpop.f32.mrf.mxu0
        %v5950 = vadd.f32 %v5787, %v5949
        %v5951 = vpop.f32.mrf.mxu0
        %v5952 = vadd.f32 %v5791, %v5951
        %5953 = vmatmul.bf16.gmra.mxu0 %v5845
        %v5954 = vpop.f32.mrf.mxu0
        %v5955 = vadd.f32 %v5795, %v5954
        %v5956 = vpop.f32.mrf.mxu0
        %v5957 = vadd.f32 %v5799, %v5956
        %5958 = vmatmul.bf16.gmra.mxu0 %v5848
        %v5959 = vpop.f32.mrf.mxu0
        %v5960 = vadd.f32 %v5804, %v5959
        %v5961 = vpop.f32.mrf.mxu0
        %v5962 = vadd.f32 %v5809, %v5961
        %5963 = vmatmul.bf16.gmra.mxu0 %v5851
        %v5964 = vpop.f32.mrf.mxu0
        %v5965 = vadd.f32 %v5814, %v5964
        %v5966 = vpop.f32.mrf.mxu0
        %v5967 = vadd.f32 %v5819, %v5966
        %5968 = vdwg.mxu0
        %5969 = vmatpush.bf16.msra.mxu0 0
        %5970 = vmatpush.bf16.msra.mxu0 0
        %5971 = vmatpush.bf16.msra.mxu0 0
        %5972 = vmatpush.bf16.msra.mxu0 0
        %5973 = vmatpush.bf16.msra.mxu0 0
        %5974 = vmatpush.bf16.msra.mxu0 0
        %5975 = vmatpush.bf16.msra.mxu0 %v5781
        %5976 = vmatpush.bf16.msra.mxu0 %v5773
        %5977 = vmatmul.bf16.gmra.mxu0 %v5842
        %v5978 = vpop.f32.mrf.mxu0
        %v5979 = vadd.f32 %v5787, %v5978
        %v5980 = vpop.f32.mrf.mxu0
        %v5981 = vadd.f32 %v5791, %v5980
        %5982 = vmatmul.bf16.gmra.mxu0 %v5845
        %v5983 = vpop.f32.mrf.mxu0
        %v5984 = vadd.f32 %v5795, %v5983
        %v5985 = vpop.f32.mrf.mxu0
        %v5986 = vadd.f32 %v5799, %v5985
        %5987 = vmatmul.bf16.gmra.mxu0 %v5848
        %v5988 = vpop.f32.mrf.mxu0
        %v5989 = vadd.f32 %v5804, %v5988
        %v5990 = vpop.f32.mrf.mxu0
        %v5991 = vadd.f32 %v5809, %v5990
        %5992 = vmatmul.bf16.gmra.mxu0 %v5851
        %v5993 = vpop.f32.mrf.mxu0
        %v5994 = vadd.f32 %v5814, %v5993
        %v5995 = vpop.f32.mrf.mxu0
        %v5996 = vadd.f32 %v5819, %v5995
        %5997 = vdwg.mxu0
        %5998 = vmatpush.bf16.msra.mxu0 0
        %5999 = vmatpush.bf16.msra.mxu0 0
        %6000 = vmatpush.bf16.msra.mxu0 0
        %6001 = vmatpush.bf16.msra.mxu0 0
        %6002 = vmatpush.bf16.msra.mxu0 0
        %6003 = vmatpush.bf16.msra.mxu0 0
        %6004 = vmatpush.bf16.msra.mxu0 %v5782
        %6005 = vmatpush.bf16.msra.mxu0 %v5774
        %6006 = vmatmul.bf16.gmra.mxu0 %v5842
        %v6007 = vpop.f32.mrf.mxu0
        %v6008 = vadd.f32 %v5787, %v6007
        %v6009 = vpop.f32.mrf.mxu0
        %v6010 = vadd.f32 %v5791, %v6009
        %6011 = vmatmul.bf16.gmra.mxu0 %v5845
        %v6012 = vpop.f32.mrf.mxu0
        %v6013 = vadd.f32 %v5795, %v6012
        %v6014 = vpop.f32.mrf.mxu0
        %v6015 = vadd.f32 %v5799, %v6014
        %6016 = vmatmul.bf16.gmra.mxu0 %v5848
        %v6017 = vpop.f32.mrf.mxu0
        %v6018 = vadd.f32 %v5804, %v6017
        %v6019 = vpop.f32.mrf.mxu0
        %v6020 = vadd.f32 %v5809, %v6019
        %6021 = vmatmul.bf16.gmra.mxu0 %v5851
        %v6022 = vpop.f32.mrf.mxu0
        %v6023 = vadd.f32 %v5814, %v6022
        %v6024 = vpop.f32.mrf.mxu0
        %v6025 = vadd.f32 %v5819, %v6024
        %6026 = vdwg.mxu0
        %6027 = vmatpush.bf16.msra.mxu0 0
        %6028 = vmatpush.bf16.msra.mxu0 0
        %6029 = vmatpush.bf16.msra.mxu0 0
        %6030 = vmatpush.bf16.msra.mxu0 0
        %6031 = vmatpush.bf16.msra.mxu0 0
        %6032 = vmatpush.bf16.msra.mxu0 0
        %6033 = vmatpush.bf16.msra.mxu0 %v5783
        %6034 = vmatpush.bf16.msra.mxu0 %v5775
        %6035 = vmatmul.bf16.gmra.mxu0 %v5842
        %v6036 = vpop.f32.mrf.mxu0
        %v6037 = vadd.f32 %v5787, %v6036
        %v6038 = vpop.f32.mrf.mxu0
        %v6039 = vadd.f32 %v5791, %v6038
        %6040 = vmatmul.bf16.gmra.mxu0 %v5845
        %v6041 = vpop.f32.mrf.mxu0
        %v6042 = vadd.f32 %v5795, %v6041
        %v6043 = vpop.f32.mrf.mxu0
        %v6044 = vadd.f32 %v5799, %v6043
        %6045 = vmatmul.bf16.gmra.mxu0 %v5848
        %v6046 = vpop.f32.mrf.mxu0
        %v6047 = vadd.f32 %v5804, %v6046
        %v6048 = vpop.f32.mrf.mxu0
        %v6049 = vadd.f32 %v5809, %v6048
        %6050 = vmatmul.bf16.gmra.mxu0 %v5851
        %v6051 = vpop.f32.mrf.mxu0
        %v6052 = vadd.f32 %v5814, %v6051
        %v6053 = vpop.f32.mrf.mxu0
        %v6054 = vadd.f32 %v5819, %v6053
        %6055 = vdwg.mxu0
        %6056 = vmatpush.bf16.msra.mxu0 0
        %6057 = vmatpush.bf16.msra.mxu0 0
        %6058 = vmatpush.bf16.msra.mxu0 0
        %6059 = vmatpush.bf16.msra.mxu0 0
        %6060 = vmatpush.bf16.msra.mxu0 0
        %6061 = vmatpush.bf16.msra.mxu0 0
        %6062 = vmatpush.bf16.msra.mxu0 %v5784
        %6063 = vmatpush.bf16.msra.mxu0 %v5776
        %6064 = vmatmul.bf16.gmra.mxu0 %v5842
        %v6065 = vpop.f32.mrf.mxu0
        %v6066 = vadd.f32 %v5787, %v6065
        %v6067 = vpop.f32.mrf.mxu0
        %v6068 = vadd.f32 %v5791, %v6067
        %6069 = vmatmul.bf16.gmra.mxu0 %v5845
        %v6070 = vpop.f32.mrf.mxu0
        %v6071 = vadd.f32 %v5795, %v6070
        %v6072 = vpop.f32.mrf.mxu0
        %v6073 = vadd.f32 %v5799, %v6072
        %6074 = vmatmul.bf16.gmra.mxu0 %v5848
        %v6075 = vpop.f32.mrf.mxu0
        %v6076 = vadd.f32 %v5804, %v6075
        %v6077 = vpop.f32.mrf.mxu0
        %v6078 = vadd.f32 %v5809, %v6077
        %6079 = vmatmul.bf16.gmra.mxu0 %v5851
        %v6080 = vpop.f32.mrf.mxu0
        %v6081 = vadd.f32 %v5814, %v6080
        %v6082 = vpop.f32.mrf.mxu0
        %v6083 = vadd.f32 %v5819, %v6082
        %6084 = vdwg.mxu0
        %v6085 = vmax.f32 %v5863, 0.0
        %v6086 = vmax.f32 %v5892, 0.0
        %v6087 = vmax.f32 %v5921, 0.0
        %v6088 = vmax.f32 %v5950, 0.0
        %v6089 = vmax.f32 %v5979, 0.0
        %v6090 = vmax.f32 %v6008, 0.0
        %v6091 = vmax.f32 %v6037, 0.0
        %v6092 = vmax.f32 %v6066, 0.0
        %v6093 = vmax.f32 %v5865, 0.0
        %v6094 = vmax.f32 %v5894, 0.0
        %v6095 = vmax.f32 %v5923, 0.0
        %v6096 = vmax.f32 %v5952, 0.0
        %v6097 = vmax.f32 %v5981, 0.0
        %v6098 = vmax.f32 %v6010, 0.0
        %v6099 = vmax.f32 %v6039, 0.0
        %v6100 = vmax.f32 %v6068, 0.0
        %v6101 = vmax.f32 %v5868, 0.0
        %v6102 = vmax.f32 %v5897, 0.0
        %v6103 = vmax.f32 %v5926, 0.0
        %v6104 = vmax.f32 %v5955, 0.0
        %v6105 = vmax.f32 %v5984, 0.0
        %v6106 = vmax.f32 %v6013, 0.0
        %v6107 = vmax.f32 %v6042, 0.0
        %v6108 = vmax.f32 %v6071, 0.0
        %v6109 = vmax.f32 %v5870, 0.0
        %v6110 = vmax.f32 %v5899, 0.0
        %v6111 = vmax.f32 %v5928, 0.0
        %v6112 = vmax.f32 %v5957, 0.0
        %v6113 = vmax.f32 %v5986, 0.0
        %v6114 = vmax.f32 %v6015, 0.0
        %v6115 = vmax.f32 %v6044, 0.0
        %v6116 = vmax.f32 %v6073, 0.0
        %v6117 = vmax.f32 %v5873, 0.0
        %v6118 = vmax.f32 %v5902, 0.0
        %v6119 = vmax.f32 %v5931, 0.0
        %v6120 = vmax.f32 %v5960, 0.0
        %v6121 = vmax.f32 %v5989, 0.0
        %v6122 = vmax.f32 %v6018, 0.0
        %v6123 = vmax.f32 %v6047, 0.0
        %v6124 = vmax.f32 %v6076, 0.0
        %v6125 = vmax.f32 %v5875, 0.0
        %v6126 = vmax.f32 %v5904, 0.0
        %v6127 = vmax.f32 %v5933, 0.0
        %v6128 = vmax.f32 %v5962, 0.0
        %v6129 = vmax.f32 %v5991, 0.0
        %v6130 = vmax.f32 %v6020, 0.0
        %v6131 = vmax.f32 %v6049, 0.0
        %v6132 = vmax.f32 %v6078, 0.0
        %v6133 = vmax.f32 %v5878, 0.0
        %v6134 = vmax.f32 %v5907, 0.0
        %v6135 = vmax.f32 %v5936, 0.0
        %v6136 = vmax.f32 %v5965, 0.0
        %v6137 = vmax.f32 %v5994, 0.0
        %v6138 = vmax.f32 %v6023, 0.0
        %v6139 = vmax.f32 %v6052, 0.0
        %v6140 = vmax.f32 %v6081, 0.0
        %v6141 = vmax.f32 %v5880, 0.0
        %v6142 = vmax.f32 %v5909, 0.0
        %v6143 = vmax.f32 %v5938, 0.0
        %v6144 = vmax.f32 %v5967, 0.0
        %v6145 = vmax.f32 %v5996, 0.0
        %v6146 = vmax.f32 %v6025, 0.0
        %v6147 = vmax.f32 %v6054, 0.0
        %v6148 = vmax.f32 %v6083, 0.0
        %v6149 = vld [vmem:[%s5] sm:$0xf]
        %v6150 = vld [vmem:[%s5 + $0x4] sm:$0xf]
        %v6151 = vld [vmem:[%s5 + $0x8] sm:$0xf]
        %v6152 = vld [vmem:[%s5 + $0xc] sm:$0xf]
        %v6153 = vpack.c.bf16 %v6093, %v6085
        %v6154 = vpack.c.bf16 %v6094, %v6086
        %v6155 = vpack.c.bf16 %v6095, %v6087
        %v6156 = vpack.c.bf16 %v6096, %v6088
        %v6157 = vpack.c.bf16 %v6097, %v6089
        %v6158 = vpack.c.bf16 %v6098, %v6090
        %v6159 = vpack.c.bf16 %v6099, %v6091
        %v6160 = vpack.c.bf16 %v6100, %v6092
        %v6161 = vpack.c.bf16 %v6109, %v6101
        %v6162 = vpack.c.bf16 %v6110, %v6102
        %v6163 = vpack.c.bf16 %v6111, %v6103
        %v6164 = vpack.c.bf16 %v6112, %v6104
        %v6165 = vpack.c.bf16 %v6113, %v6105
        %v6166 = vpack.c.bf16 %v6114, %v6106
        %v6167 = vpack.c.bf16 %v6115, %v6107
        %v6168 = vpack.c.bf16 %v6116, %v6108
        %v6169 = vpack.c.bf16 %v6125, %v6117
        %v6170 = vpack.c.bf16 %v6126, %v6118
        %v6171 = vpack.c.bf16 %v6127, %v6119
        %v6172 = vpack.c.bf16 %v6128, %v6120
        %v6173 = vpack.c.bf16 %v6129, %v6121
        %v6174 = vpack.c.bf16 %v6130, %v6122
        %v6175 = vpack.c.bf16 %v6131, %v6123
        %v6176 = vpack.c.bf16 %v6132, %v6124
        %v6177 = vpack.c.bf16 %v6141, %v6133
        %v6178 = vpack.c.bf16 %v6142, %v6134
        %v6179 = vpack.c.bf16 %v6143, %v6135
        %v6180 = vpack.c.bf16 %v6144, %v6136
        %v6181 = vpack.c.bf16 %v6145, %v6137
        %v6182 = vpack.c.bf16 %v6146, %v6138
        %v6183 = vpack.c.bf16 %v6147, %v6139
        %v6184 = vpack.c.bf16 %v6148, %v6140
        %6185 = vset.pattern.permute.xlu0 3
        %6186 = vperm.xlu0 %6185, %v362
        %v6187 = vpop.permute.xlu0 %6186
        %6189 = vset.pattern.permute.xlu0 3
        %6190 = vperm.xlu0 %6189, %v363
        %v6191 = vpop.permute.xlu0 %6190
        %6193 = vset.pattern.permute.xlu0 3
        %6194 = vperm.xlu0 %6193, %v364
        %v6195 = vpop.permute.xlu0 %6194
        %6197 = vset.pattern.permute.xlu0 3
        %6198 = vperm.xlu0 %6197, %v365
        %v6199 = vpop.permute.xlu0 %6198
        %v6205 = vunpack.c.l.b16 %v6149
        %v6206 = vunpack.c.l.b16 %v6150
        %v6207 = vunpack.c.l.b16 %v6151
        %v6208 = vunpack.c.l.b16 %v6152
        %v6209 = vpack.c.b16 %v6206, %v6205
        %v6210 = vpack.c.b16 %v6208, %v6207
        %vm6211 = vcmask 523264
        %v6213 = vsel %vm6211, %v6209, 0
        %v6216 = vsel %vm6211, %v6210, 0
        %6218 = vmatpush.bf16.msra.mxu0 0
        %6219 = vmatpush.bf16.msra.mxu0 0
        %6220 = vmatpush.bf16.msra.mxu0 0
        %6221 = vmatpush.bf16.msra.mxu0 0
        %6222 = vmatpush.bf16.msra.mxu0 %v6177
        %6223 = vmatpush.bf16.msra.mxu0 %v6169
        %6224 = vmatpush.bf16.msra.mxu0 %v6161
        %6225 = vmatpush.bf16.msra.mxu0 %v6153
        %6226 = vmatmul.bf16.gmra.mxu0 %v6213
        %v6227 = vpop.f32.mrf.mxu0
        %v6228 = vadd.f32 %v6187, %v6227
        %v6229 = vpop.f32.mrf.mxu0
        %v6230 = vadd.f32 %v6191, %v6229
        %6231 = vmatmul.bf16.gmra.mxu0 %v6216
        %v6232 = vpop.f32.mrf.mxu0
        %v6233 = vadd.f32 %v6195, %v6232
        %v6234 = vpop.f32.mrf.mxu0
        %v6235 = vadd.f32 %v6199, %v6234
        %6236 = vdwg.mxu0
        %6237 = vmatpush.bf16.msra.mxu0 0
        %6238 = vmatpush.bf16.msra.mxu0 0
        %6239 = vmatpush.bf16.msra.mxu0 0
        %6240 = vmatpush.bf16.msra.mxu0 0
        %6241 = vmatpush.bf16.msra.mxu0 %v6178
        %6242 = vmatpush.bf16.msra.mxu0 %v6170
        %6243 = vmatpush.bf16.msra.mxu0 %v6162
        %6244 = vmatpush.bf16.msra.mxu0 %v6154
        %6245 = vmatmul.bf16.gmra.mxu0 %v6213
        %v6246 = vpop.f32.mrf.mxu0
        %v6247 = vadd.f32 %v6187, %v6246
        %v6248 = vpop.f32.mrf.mxu0
        %v6249 = vadd.f32 %v6191, %v6248
        %6250 = vmatmul.bf16.gmra.mxu0 %v6216
        %v6251 = vpop.f32.mrf.mxu0
        %v6252 = vadd.f32 %v6195, %v6251
        %v6253 = vpop.f32.mrf.mxu0
        %v6254 = vadd.f32 %v6199, %v6253
        %6255 = vdwg.mxu0
        %6256 = vmatpush.bf16.msra.mxu0 0
        %6257 = vmatpush.bf16.msra.mxu0 0
        %6258 = vmatpush.bf16.msra.mxu0 0
        %6259 = vmatpush.bf16.msra.mxu0 0
        %6260 = vmatpush.bf16.msra.mxu0 %v6179
        %6261 = vmatpush.bf16.msra.mxu0 %v6171
        %6262 = vmatpush.bf16.msra.mxu0 %v6163
        %6263 = vmatpush.bf16.msra.mxu0 %v6155
        %6264 = vmatmul.bf16.gmra.mxu0 %v6213
        %v6265 = vpop.f32.mrf.mxu0
        %v6266 = vadd.f32 %v6187, %v6265
        %v6267 = vpop.f32.mrf.mxu0
        %v6268 = vadd.f32 %v6191, %v6267
        %6269 = vmatmul.bf16.gmra.mxu0 %v6216
        %v6270 = vpop.f32.mrf.mxu0
        %v6271 = vadd.f32 %v6195, %v6270
        %v6272 = vpop.f32.mrf.mxu0
        %v6273 = vadd.f32 %v6199, %v6272
        %6274 = vdwg.mxu0
        %6275 = vmatpush.bf16.msra.mxu0 0
        %6276 = vmatpush.bf16.msra.mxu0 0
        %6277 = vmatpush.bf16.msra.mxu0 0
        %6278 = vmatpush.bf16.msra.mxu0 0
        %6279 = vmatpush.bf16.msra.mxu0 %v6180
        %6280 = vmatpush.bf16.msra.mxu0 %v6172
        %6281 = vmatpush.bf16.msra.mxu0 %v6164
        %6282 = vmatpush.bf16.msra.mxu0 %v6156
        %6283 = vmatmul.bf16.gmra.mxu0 %v6213
        %v6284 = vpop.f32.mrf.mxu0
        %v6285 = vadd.f32 %v6187, %v6284
        %v6286 = vpop.f32.mrf.mxu0
        %v6287 = vadd.f32 %v6191, %v6286
        %6288 = vmatmul.bf16.gmra.mxu0 %v6216
        %v6289 = vpop.f32.mrf.mxu0
        %v6290 = vadd.f32 %v6195, %v6289
        %v6291 = vpop.f32.mrf.mxu0
        %v6292 = vadd.f32 %v6199, %v6291
        %6293 = vdwg.mxu0
        %6294 = vmatpush.bf16.msra.mxu0 0
        %6295 = vmatpush.bf16.msra.mxu0 0
        %6296 = vmatpush.bf16.msra.mxu0 0
        %6297 = vmatpush.bf16.msra.mxu0 0
        %6298 = vmatpush.bf16.msra.mxu0 %v6181
        %6299 = vmatpush.bf16.msra.mxu0 %v6173
        %6300 = vmatpush.bf16.msra.mxu0 %v6165
        %6301 = vmatpush.bf16.msra.mxu0 %v6157
        %6302 = vmatmul.bf16.gmra.mxu0 %v6213
        %v6303 = vpop.f32.mrf.mxu0
        %v6304 = vadd.f32 %v6187, %v6303
        %v6305 = vpop.f32.mrf.mxu0
        %v6306 = vadd.f32 %v6191, %v6305
        %6307 = vmatmul.bf16.gmra.mxu0 %v6216
        %v6308 = vpop.f32.mrf.mxu0
        %v6309 = vadd.f32 %v6195, %v6308
        %v6310 = vpop.f32.mrf.mxu0
        %v6311 = vadd.f32 %v6199, %v6310
        %6312 = vdwg.mxu0
        %6313 = vmatpush.bf16.msra.mxu0 0
        %6314 = vmatpush.bf16.msra.mxu0 0
        %6315 = vmatpush.bf16.msra.mxu0 0
        %6316 = vmatpush.bf16.msra.mxu0 0
        %6317 = vmatpush.bf16.msra.mxu0 %v6182
        %6318 = vmatpush.bf16.msra.mxu0 %v6174
        %6319 = vmatpush.bf16.msra.mxu0 %v6166
        %6320 = vmatpush.bf16.msra.mxu0 %v6158
        %6321 = vmatmul.bf16.gmra.mxu0 %v6213
        %v6322 = vpop.f32.mrf.mxu0
        %v6323 = vadd.f32 %v6187, %v6322
        %v6324 = vpop.f32.mrf.mxu0
        %v6325 = vadd.f32 %v6191, %v6324
        %6326 = vmatmul.bf16.gmra.mxu0 %v6216
        %v6327 = vpop.f32.mrf.mxu0
        %v6328 = vadd.f32 %v6195, %v6327
        %v6329 = vpop.f32.mrf.mxu0
        %v6330 = vadd.f32 %v6199, %v6329
        %6331 = vdwg.mxu0
        %6332 = vmatpush.bf16.msra.mxu0 0
        %6333 = vmatpush.bf16.msra.mxu0 0
        %6334 = vmatpush.bf16.msra.mxu0 0
        %6335 = vmatpush.bf16.msra.mxu0 0
        %6336 = vmatpush.bf16.msra.mxu0 %v6183
        %6337 = vmatpush.bf16.msra.mxu0 %v6175
        %6338 = vmatpush.bf16.msra.mxu0 %v6167
        %6339 = vmatpush.bf16.msra.mxu0 %v6159
        %6340 = vmatmul.bf16.gmra.mxu0 %v6213
        %v6341 = vpop.f32.mrf.mxu0
        %v6342 = vadd.f32 %v6187, %v6341
        %v6343 = vpop.f32.mrf.mxu0
        %v6344 = vadd.f32 %v6191, %v6343
        %6345 = vmatmul.bf16.gmra.mxu0 %v6216
        %v6346 = vpop.f32.mrf.mxu0
        %v6347 = vadd.f32 %v6195, %v6346
        %v6348 = vpop.f32.mrf.mxu0
        %v6349 = vadd.f32 %v6199, %v6348
        %6350 = vdwg.mxu0
        %6351 = vmatpush.bf16.msra.mxu0 0
        %6352 = vmatpush.bf16.msra.mxu0 0
        %6353 = vmatpush.bf16.msra.mxu0 0
        %6354 = vmatpush.bf16.msra.mxu0 0
        %6355 = vmatpush.bf16.msra.mxu0 %v6184
        %6356 = vmatpush.bf16.msra.mxu0 %v6176
        %6357 = vmatpush.bf16.msra.mxu0 %v6168
        %6358 = vmatpush.bf16.msra.mxu0 %v6160
        %6359 = vmatmul.bf16.gmra.mxu0 %v6213
        %v6360 = vpop.f32.mrf.mxu0
        %v6361 = vadd.f32 %v6187, %v6360
        %v6362 = vpop.f32.mrf.mxu0
        %v6363 = vadd.f32 %v6191, %v6362
        %6364 = vmatmul.bf16.gmra.mxu0 %v6216
        %v6365 = vpop.f32.mrf.mxu0
        %v6366 = vadd.f32 %v6195, %v6365
        %v6367 = vpop.f32.mrf.mxu0
        %v6368 = vadd.f32 %v6199, %v6367
        %6369 = vdwg.mxu0
        %v6370 = vadd.f32 %v6228, %v5729
        %v6371 = vadd.f32 %v6247, %v5730
        %v6372 = vadd.f32 %v6266, %v5731
        %v6373 = vadd.f32 %v6285, %v5732
        %v6374 = vadd.f32 %v6304, %v5733
        %v6375 = vadd.f32 %v6323, %v5734
        %v6376 = vadd.f32 %v6342, %v5735
        %v6377 = vadd.f32 %v6361, %v5736
        %v6378 = vadd.f32 %v6230, %v5737
        %v6379 = vadd.f32 %v6249, %v5738
        %v6380 = vadd.f32 %v6268, %v5739
        %v6381 = vadd.f32 %v6287, %v5740
        %v6382 = vadd.f32 %v6306, %v5741
        %v6383 = vadd.f32 %v6325, %v5742
        %v6384 = vadd.f32 %v6344, %v5743
        %v6385 = vadd.f32 %v6363, %v5744
        %v6386 = vadd.f32 %v6233, %v5745
        %v6387 = vadd.f32 %v6252, %v5746
        %v6388 = vadd.f32 %v6271, %v5747
        %v6389 = vadd.f32 %v6290, %v5748
        %v6390 = vadd.f32 %v6309, %v5749
        %v6391 = vadd.f32 %v6328, %v5750
        %v6392 = vadd.f32 %v6347, %v5751
        %v6393 = vadd.f32 %v6366, %v5752
        %v6394 = vadd.f32 %v6235, %v5753
        %v6395 = vadd.f32 %v6254, %v5754
        %v6396 = vadd.f32 %v6273, %v5755
        %v6397 = vadd.f32 %v6292, %v5756
        %v6398 = vadd.f32 %v6311, %v5757
        %v6399 = vadd.f32 %v6330, %v5758
        %v6400 = vadd.f32 %v6349, %v5759
        %v6401 = vadd.f32 %v6368, %v5760
        %v6402 = vadd.f32 %v6370, %v6378
        %v6403 = vadd.f32 %v6402, %v6386
        %v6404 = vadd.f32 %v6403, %v6394
        %v6405 = vrot.slane %v6404, 4
        %v6406 = vadd.f32 %v6404, %v6405
        %v6407 = vrot.slane %v6406, 2
        %v6408 = vadd.f32 %v6406, %v6407
        %v6409 = vrot.slane %v6408, 1
        %v6410 = vadd.f32 %v6408, %v6409
        %v6411 = vadd.f32 %v6371, %v6379
        %v6412 = vadd.f32 %v6411, %v6387
        %v6413 = vadd.f32 %v6412, %v6395
        %v6414 = vrot.slane %v6413, 4
        %v6415 = vadd.f32 %v6413, %v6414
        %v6416 = vrot.slane %v6415, 2
        %v6417 = vadd.f32 %v6415, %v6416
        %v6418 = vrot.slane %v6417, 1
        %v6419 = vadd.f32 %v6417, %v6418
        %v6420 = vadd.f32 %v6372, %v6380
        %v6421 = vadd.f32 %v6420, %v6388
        %v6422 = vadd.f32 %v6421, %v6396
        %v6423 = vrot.slane %v6422, 4
        %v6424 = vadd.f32 %v6422, %v6423
        %v6425 = vrot.slane %v6424, 2
        %v6426 = vadd.f32 %v6424, %v6425
        %v6427 = vrot.slane %v6426, 1
        %v6428 = vadd.f32 %v6426, %v6427
        %v6429 = vadd.f32 %v6373, %v6381
        %v6430 = vadd.f32 %v6429, %v6389
        %v6431 = vadd.f32 %v6430, %v6397
        %v6432 = vrot.slane %v6431, 4
        %v6433 = vadd.f32 %v6431, %v6432
        %v6434 = vrot.slane %v6433, 2
        %v6435 = vadd.f32 %v6433, %v6434
        %v6436 = vrot.slane %v6435, 1
        %v6437 = vadd.f32 %v6435, %v6436
        %v6438 = vadd.f32 %v6374, %v6382
        %v6439 = vadd.f32 %v6438, %v6390
        %v6440 = vadd.f32 %v6439, %v6398
        %v6441 = vrot.slane %v6440, 4
        %v6442 = vadd.f32 %v6440, %v6441
        %v6443 = vrot.slane %v6442, 2
        %v6444 = vadd.f32 %v6442, %v6443
        %v6445 = vrot.slane %v6444, 1
        %v6446 = vadd.f32 %v6444, %v6445
        %v6447 = vadd.f32 %v6375, %v6383
        %v6448 = vadd.f32 %v6447, %v6391
        %v6449 = vadd.f32 %v6448, %v6399
        %v6450 = vrot.slane %v6449, 4
        %v6451 = vadd.f32 %v6449, %v6450
        %v6452 = vrot.slane %v6451, 2
        %v6453 = vadd.f32 %v6451, %v6452
        %v6454 = vrot.slane %v6453, 1
        %v6455 = vadd.f32 %v6453, %v6454
        %v6456 = vadd.f32 %v6376, %v6384
        %v6457 = vadd.f32 %v6456, %v6392
        %v6458 = vadd.f32 %v6457, %v6400
        %v6459 = vrot.slane %v6458, 4
        %v6460 = vadd.f32 %v6458, %v6459
        %v6461 = vrot.slane %v6460, 2
        %v6462 = vadd.f32 %v6460, %v6461
        %v6463 = vrot.slane %v6462, 1
        %v6464 = vadd.f32 %v6462, %v6463
        %v6465 = vadd.f32 %v6377, %v6385
        %v6466 = vadd.f32 %v6465, %v6393
        %v6467 = vadd.f32 %v6466, %v6401
        %v6468 = vrot.slane %v6467, 4
        %v6469 = vadd.f32 %v6467, %v6468
        %v6470 = vrot.slane %v6469, 2
        %v6471 = vadd.f32 %v6469, %v6470
        %v6472 = vrot.slane %v6471, 1
        %v6473 = vadd.f32 %v6471, %v6472
        %v6474 = vmul.f32 %v6410, %v5392
        %v6475 = vmul.f32 %v6419, %v5392
        %v6476 = vmul.f32 %v6428, %v5392
        %v6477 = vmul.f32 %v6437, %v5392
        %v6478 = vmul.f32 %v6446, %v5392
        %v6479 = vmul.f32 %v6455, %v5392
        %v6480 = vmul.f32 %v6464, %v5392
        %v6481 = vmul.f32 %v6473, %v5392
        %v6482 = vsub.f32 %v6370, %v6474
        %v6483 = vsub.f32 %v6371, %v6475
        %v6484 = vsub.f32 %v6372, %v6476
        %v6485 = vsub.f32 %v6373, %v6477
        %v6486 = vsub.f32 %v6374, %v6478
        %v6487 = vsub.f32 %v6375, %v6479
        %v6488 = vsub.f32 %v6376, %v6480
        %v6489 = vsub.f32 %v6377, %v6481
        %v6490 = vsub.f32 %v6378, %v6474
        %v6491 = vsub.f32 %v6379, %v6475
        %v6492 = vsub.f32 %v6380, %v6476
        %v6493 = vsub.f32 %v6381, %v6477
        %v6494 = vsub.f32 %v6382, %v6478
        %v6495 = vsub.f32 %v6383, %v6479
        %v6496 = vsub.f32 %v6384, %v6480
        %v6497 = vsub.f32 %v6385, %v6481
        %v6498 = vsub.f32 %v6386, %v6474
        %v6499 = vsub.f32 %v6387, %v6475
        %v6500 = vsub.f32 %v6388, %v6476
        %v6501 = vsub.f32 %v6389, %v6477
        %v6502 = vsub.f32 %v6390, %v6478
        %v6503 = vsub.f32 %v6391, %v6479
        %v6504 = vsub.f32 %v6392, %v6480
        %v6505 = vsub.f32 %v6393, %v6481
        %v6506 = vsub.f32 %v6394, %v6474
        %v6507 = vsub.f32 %v6395, %v6475
        %v6508 = vsub.f32 %v6396, %v6476
        %v6509 = vsub.f32 %v6397, %v6477
        %v6510 = vsub.f32 %v6398, %v6478
        %v6511 = vsub.f32 %v6399, %v6479
        %v6512 = vsub.f32 %v6400, %v6480
        %v6513 = vsub.f32 %v6401, %v6481
        %v6514 = vmul.f32 %v6482, %v6482
        %v6515 = vmul.f32 %v6483, %v6483
        %v6516 = vmul.f32 %v6484, %v6484
        %v6517 = vmul.f32 %v6485, %v6485
        %v6518 = vmul.f32 %v6486, %v6486
        %v6519 = vmul.f32 %v6487, %v6487
        %v6520 = vmul.f32 %v6488, %v6488
        %v6521 = vmul.f32 %v6489, %v6489
        %v6522 = vmul.f32 %v6490, %v6490
        %v6523 = vmul.f32 %v6491, %v6491
        %v6524 = vmul.f32 %v6492, %v6492
        %v6525 = vmul.f32 %v6493, %v6493
        %v6526 = vmul.f32 %v6494, %v6494
        %v6527 = vmul.f32 %v6495, %v6495
        %v6528 = vmul.f32 %v6496, %v6496
        %v6529 = vmul.f32 %v6497, %v6497
        %v6530 = vmul.f32 %v6498, %v6498
        %v6531 = vmul.f32 %v6499, %v6499
        %v6532 = vmul.f32 %v6500, %v6500
        %v6533 = vmul.f32 %v6501, %v6501
        %v6534 = vmul.f32 %v6502, %v6502
        %v6535 = vmul.f32 %v6503, %v6503
        %v6536 = vmul.f32 %v6504, %v6504
        %v6537 = vmul.f32 %v6505, %v6505
        %v6538 = vmul.f32 %v6506, %v6506
        %v6539 = vmul.f32 %v6507, %v6507
        %v6540 = vmul.f32 %v6508, %v6508
        %v6541 = vmul.f32 %v6509, %v6509
        %v6542 = vmul.f32 %v6510, %v6510
        %v6543 = vmul.f32 %v6511, %v6511
        %v6544 = vmul.f32 %v6512, %v6512
        %v6545 = vmul.f32 %v6513, %v6513
        %v6546 = vadd.f32 %v6514, %v6522
        %v6547 = vadd.f32 %v6546, %v6530
        %v6548 = vadd.f32 %v6547, %v6538
        %v6549 = vrot.slane %v6548, 4
        %v6550 = vadd.f32 %v6548, %v6549
        %v6551 = vrot.slane %v6550, 2
        %v6552 = vadd.f32 %v6550, %v6551
        %v6553 = vrot.slane %v6552, 1
        %v6554 = vadd.f32 %v6552, %v6553
        %v6555 = vadd.f32 %v6515, %v6523
        %v6556 = vadd.f32 %v6555, %v6531
        %v6557 = vadd.f32 %v6556, %v6539
        %v6558 = vrot.slane %v6557, 4
        %v6559 = vadd.f32 %v6557, %v6558
        %v6560 = vrot.slane %v6559, 2
        %v6561 = vadd.f32 %v6559, %v6560
        %v6562 = vrot.slane %v6561, 1
        %v6563 = vadd.f32 %v6561, %v6562
        %v6564 = vadd.f32 %v6516, %v6524
        %v6565 = vadd.f32 %v6564, %v6532
        %v6566 = vadd.f32 %v6565, %v6540
        %v6567 = vrot.slane %v6566, 4
        %v6568 = vadd.f32 %v6566, %v6567
        %v6569 = vrot.slane %v6568, 2
        %v6570 = vadd.f32 %v6568, %v6569
        %v6571 = vrot.slane %v6570, 1
        %v6572 = vadd.f32 %v6570, %v6571
        %v6573 = vadd.f32 %v6517, %v6525
        %v6574 = vadd.f32 %v6573, %v6533
        %v6575 = vadd.f32 %v6574, %v6541
        %v6576 = vrot.slane %v6575, 4
        %v6577 = vadd.f32 %v6575, %v6576
        %v6578 = vrot.slane %v6577, 2
        %v6579 = vadd.f32 %v6577, %v6578
        %v6580 = vrot.slane %v6579, 1
        %v6581 = vadd.f32 %v6579, %v6580
        %v6582 = vadd.f32 %v6518, %v6526
        %v6583 = vadd.f32 %v6582, %v6534
        %v6584 = vadd.f32 %v6583, %v6542
        %v6585 = vrot.slane %v6584, 4
        %v6586 = vadd.f32 %v6584, %v6585
        %v6587 = vrot.slane %v6586, 2
        %v6588 = vadd.f32 %v6586, %v6587
        %v6589 = vrot.slane %v6588, 1
        %v6590 = vadd.f32 %v6588, %v6589
        %v6591 = vadd.f32 %v6519, %v6527
        %v6592 = vadd.f32 %v6591, %v6535
        %v6593 = vadd.f32 %v6592, %v6543
        %v6594 = vrot.slane %v6593, 4
        %v6595 = vadd.f32 %v6593, %v6594
        %v6596 = vrot.slane %v6595, 2
        %v6597 = vadd.f32 %v6595, %v6596
        %v6598 = vrot.slane %v6597, 1
        %v6599 = vadd.f32 %v6597, %v6598
        %v6600 = vadd.f32 %v6520, %v6528
        %v6601 = vadd.f32 %v6600, %v6536
        %v6602 = vadd.f32 %v6601, %v6544
        %v6603 = vrot.slane %v6602, 4
        %v6604 = vadd.f32 %v6602, %v6603
        %v6605 = vrot.slane %v6604, 2
        %v6606 = vadd.f32 %v6604, %v6605
        %v6607 = vrot.slane %v6606, 1
        %v6608 = vadd.f32 %v6606, %v6607
        %v6609 = vadd.f32 %v6521, %v6529
        %v6610 = vadd.f32 %v6609, %v6537
        %v6611 = vadd.f32 %v6610, %v6545
        %v6612 = vrot.slane %v6611, 4
        %v6613 = vadd.f32 %v6611, %v6612
        %v6614 = vrot.slane %v6613, 2
        %v6615 = vadd.f32 %v6613, %v6614
        %v6616 = vrot.slane %v6615, 1
        %v6617 = vadd.f32 %v6615, %v6616
        %v6618 = vmul.f32 %v6554, %v5392
        %v6619 = vmul.f32 %v6563, %v5392
        %v6620 = vmul.f32 %v6572, %v5392
        %v6621 = vmul.f32 %v6581, %v5392
        %v6622 = vmul.f32 %v6590, %v5392
        %v6623 = vmul.f32 %v6599, %v5392
        %v6624 = vmul.f32 %v6608, %v5392
        %v6625 = vmul.f32 %v6617, %v5392
        %v6626 = vadd.f32 %v6618, 1e-05
        %v6627 = vadd.f32 %v6619, 1e-05
        %v6628 = vadd.f32 %v6620, 1e-05
        %v6629 = vadd.f32 %v6621, 1e-05
        %v6630 = vadd.f32 %v6622, 1e-05
        %v6631 = vadd.f32 %v6623, 1e-05
        %v6632 = vadd.f32 %v6624, 1e-05
        %v6633 = vadd.f32 %v6625, 1e-05
        %v6634 = vrsqrt.pop %v6626
        %v6635 = vmul.f32 %v6634, %v6626
        %v6636 = vmul.f32 %v6635, %v6634
        %v6637 = vmul.f32 0.5, %v6636
        %v6638 = vsub.f32 1.5, %v6637
        %v6639 = vmul.f32 %v6634, %v6638
        %vm6640 = vweird.f32 %v6626
        %vm6641 = vweird.f32 %v6634
        %vm6642 = vmor %vm6640, %vm6641
        %v6643 = vsel %vm6642, %v6634, %v6639
        %v6644 = vrsqrt.pop %v6627
        %v6645 = vmul.f32 %v6644, %v6627
        %v6646 = vmul.f32 %v6645, %v6644
        %v6647 = vmul.f32 0.5, %v6646
        %v6648 = vsub.f32 1.5, %v6647
        %v6649 = vmul.f32 %v6644, %v6648
        %vm6650 = vweird.f32 %v6627
        %vm6651 = vweird.f32 %v6644
        %vm6652 = vmor %vm6650, %vm6651
        %v6653 = vsel %vm6652, %v6644, %v6649
        %v6654 = vrsqrt.pop %v6628
        %v6655 = vmul.f32 %v6654, %v6628
        %v6656 = vmul.f32 %v6655, %v6654
        %v6657 = vmul.f32 0.5, %v6656
        %v6658 = vsub.f32 1.5, %v6657
        %v6659 = vmul.f32 %v6654, %v6658
        %vm6660 = vweird.f32 %v6628
        %vm6661 = vweird.f32 %v6654
        %vm6662 = vmor %vm6660, %vm6661
        %v6663 = vsel %vm6662, %v6654, %v6659
        %v6664 = vrsqrt.pop %v6629
        %v6665 = vmul.f32 %v6664, %v6629
        %v6666 = vmul.f32 %v6665, %v6664
        %v6667 = vmul.f32 0.5, %v6666
        %v6668 = vsub.f32 1.5, %v6667
        %v6669 = vmul.f32 %v6664, %v6668
        %vm6670 = vweird.f32 %v6629
        %vm6671 = vweird.f32 %v6664
        %vm6672 = vmor %vm6670, %vm6671
        %v6673 = vsel %vm6672, %v6664, %v6669
        %v6674 = vrsqrt.pop %v6630
        %v6675 = vmul.f32 %v6674, %v6630
        %v6676 = vmul.f32 %v6675, %v6674
        %v6677 = vmul.f32 0.5, %v6676
        %v6678 = vsub.f32 1.5, %v6677
        %v6679 = vmul.f32 %v6674, %v6678
        %vm6680 = vweird.f32 %v6630
        %vm6681 = vweird.f32 %v6674
        %vm6682 = vmor %vm6680, %vm6681
        %v6683 = vsel %vm6682, %v6674, %v6679
        %v6684 = vrsqrt.pop %v6631
        %v6685 = vmul.f32 %v6684, %v6631
        %v6686 = vmul.f32 %v6685, %v6684
        %v6687 = vmul.f32 0.5, %v6686
        %v6688 = vsub.f32 1.5, %v6687
        %v6689 = vmul.f32 %v6684, %v6688
        %vm6690 = vweird.f32 %v6631
        %vm6691 = vweird.f32 %v6684
        %vm6692 = vmor %vm6690, %vm6691
        %v6693 = vsel %vm6692, %v6684, %v6689
        %v6694 = vrsqrt.pop %v6632
        %v6695 = vmul.f32 %v6694, %v6632
        %v6696 = vmul.f32 %v6695, %v6694
        %v6697 = vmul.f32 0.5, %v6696
        %v6698 = vsub.f32 1.5, %v6697
        %v6699 = vmul.f32 %v6694, %v6698
        %vm6700 = vweird.f32 %v6632
        %vm6701 = vweird.f32 %v6694
        %vm6702 = vmor %vm6700, %vm6701
        %v6703 = vsel %vm6702, %v6694, %v6699
        %v6704 = vrsqrt.pop %v6633
        %v6705 = vmul.f32 %v6704, %v6633
        %v6706 = vmul.f32 %v6705, %v6704
        %v6707 = vmul.f32 0.5, %v6706
        %v6708 = vsub.f32 1.5, %v6707
        %v6709 = vmul.f32 %v6704, %v6708
        %vm6710 = vweird.f32 %v6633
        %vm6711 = vweird.f32 %v6704
        %vm6712 = vmor %vm6710, %vm6711
        %v6713 = vsel %vm6712, %v6704, %v6709
        %v6714 = vmul.f32 %v6482, %v6643
        %v6715 = vmul.f32 %v6483, %v6653
        %v6716 = vmul.f32 %v6484, %v6663
        %v6717 = vmul.f32 %v6485, %v6673
        %v6718 = vmul.f32 %v6486, %v6683
        %v6719 = vmul.f32 %v6487, %v6693
        %v6720 = vmul.f32 %v6488, %v6703
        %v6721 = vmul.f32 %v6489, %v6713
        %v6722 = vmul.f32 %v6490, %v6643
        %v6723 = vmul.f32 %v6491, %v6653
        %v6724 = vmul.f32 %v6492, %v6663
        %v6725 = vmul.f32 %v6493, %v6673
        %v6726 = vmul.f32 %v6494, %v6683
        %v6727 = vmul.f32 %v6495, %v6693
        %v6728 = vmul.f32 %v6496, %v6703
        %v6729 = vmul.f32 %v6497, %v6713
        %v6730 = vmul.f32 %v6498, %v6643
        %v6731 = vmul.f32 %v6499, %v6653
        %v6732 = vmul.f32 %v6500, %v6663
        %v6733 = vmul.f32 %v6501, %v6673
        %v6734 = vmul.f32 %v6502, %v6683
        %v6735 = vmul.f32 %v6503, %v6693
        %v6736 = vmul.f32 %v6504, %v6703
        %v6737 = vmul.f32 %v6505, %v6713
        %v6738 = vmul.f32 %v6506, %v6643
        %v6739 = vmul.f32 %v6507, %v6653
        %v6740 = vmul.f32 %v6508, %v6663
        %v6741 = vmul.f32 %v6509, %v6673
        %v6742 = vmul.f32 %v6510, %v6683
        %v6743 = vmul.f32 %v6511, %v6693
        %v6744 = vmul.f32 %v6512, %v6703
        %v6745 = vmul.f32 %v6513, %v6713
        %6746 = vset.pattern.permute.xlu0 4
        %6747 = vperm.xlu0 %6746, %v362
        %v6748 = vpop.permute.xlu0 %6747
        %6750 = vset.pattern.permute.xlu0 4
        %6751 = vperm.xlu0 %6750, %v363
        %v6752 = vpop.permute.xlu0 %6751
        %6754 = vset.pattern.permute.xlu0 4
        %6755 = vperm.xlu0 %6754, %v364
        %v6756 = vpop.permute.xlu0 %6755
        %6758 = vset.pattern.permute.xlu0 4
        %6759 = vperm.xlu0 %6758, %v365
        %v6760 = vpop.permute.xlu0 %6759
        %v6762 = vmul.f32 %v6714, %v6748
        %v6763 = vmul.f32 %v6715, %v6748
        %v6764 = vmul.f32 %v6716, %v6748
        %v6765 = vmul.f32 %v6717, %v6748
        %v6766 = vmul.f32 %v6718, %v6748
        %v6767 = vmul.f32 %v6719, %v6748
        %v6768 = vmul.f32 %v6720, %v6748
        %v6769 = vmul.f32 %v6721, %v6748
        %v6770 = vmul.f32 %v6722, %v6752
        %v6771 = vmul.f32 %v6723, %v6752
        %v6772 = vmul.f32 %v6724, %v6752
        %v6773 = vmul.f32 %v6725, %v6752
        %v6774 = vmul.f32 %v6726, %v6752
        %v6775 = vmul.f32 %v6727, %v6752
        %v6776 = vmul.f32 %v6728, %v6752
        %v6777 = vmul.f32 %v6729, %v6752
        %v6778 = vmul.f32 %v6730, %v6756
        %v6779 = vmul.f32 %v6731, %v6756
        %v6780 = vmul.f32 %v6732, %v6756
        %v6781 = vmul.f32 %v6733, %v6756
        %v6782 = vmul.f32 %v6734, %v6756
        %v6783 = vmul.f32 %v6735, %v6756
        %v6784 = vmul.f32 %v6736, %v6756
        %v6785 = vmul.f32 %v6737, %v6756
        %v6786 = vmul.f32 %v6738, %v6760
        %v6787 = vmul.f32 %v6739, %v6760
        %v6788 = vmul.f32 %v6740, %v6760
        %v6789 = vmul.f32 %v6741, %v6760
        %v6790 = vmul.f32 %v6742, %v6760
        %v6791 = vmul.f32 %v6743, %v6760
        %v6792 = vmul.f32 %v6744, %v6760
        %v6793 = vmul.f32 %v6745, %v6760
        %6794 = vset.pattern.permute.xlu0 5
        %6795 = vperm.xlu0 %6794, %v362
        %v6796 = vpop.permute.xlu0 %6795
        %6798 = vset.pattern.permute.xlu0 5
        %6799 = vperm.xlu0 %6798, %v363
        %v6800 = vpop.permute.xlu0 %6799
        %6802 = vset.pattern.permute.xlu0 5
        %6803 = vperm.xlu0 %6802, %v364
        %v6804 = vpop.permute.xlu0 %6803
        %6806 = vset.pattern.permute.xlu0 5
        %6807 = vperm.xlu0 %6806, %v365
        %v6808 = vpop.permute.xlu0 %6807
        %v6810 = vadd.f32 %v6762, %v6796
        %v6811 = vadd.f32 %v6763, %v6796
        %v6812 = vadd.f32 %v6764, %v6796
        %v6813 = vadd.f32 %v6765, %v6796
        %v6814 = vadd.f32 %v6766, %v6796
        %v6815 = vadd.f32 %v6767, %v6796
        %v6816 = vadd.f32 %v6768, %v6796
        %v6817 = vadd.f32 %v6769, %v6796
        %v6818 = vadd.f32 %v6770, %v6800
        %v6819 = vadd.f32 %v6771, %v6800
        %v6820 = vadd.f32 %v6772, %v6800
        %v6821 = vadd.f32 %v6773, %v6800
        %v6822 = vadd.f32 %v6774, %v6800
        %v6823 = vadd.f32 %v6775, %v6800
        %v6824 = vadd.f32 %v6776, %v6800
        %v6825 = vadd.f32 %v6777, %v6800
        %v6826 = vadd.f32 %v6778, %v6804
        %v6827 = vadd.f32 %v6779, %v6804
        %v6828 = vadd.f32 %v6780, %v6804
        %v6829 = vadd.f32 %v6781, %v6804
        %v6830 = vadd.f32 %v6782, %v6804
        %v6831 = vadd.f32 %v6783, %v6804
        %v6832 = vadd.f32 %v6784, %v6804
        %v6833 = vadd.f32 %v6785, %v6804
        %v6834 = vadd.f32 %v6786, %v6808
        %v6835 = vadd.f32 %v6787, %v6808
        %v6836 = vadd.f32 %v6788, %v6808
        %v6837 = vadd.f32 %v6789, %v6808
        %v6838 = vadd.f32 %v6790, %v6808
        %v6839 = vadd.f32 %v6791, %v6808
        %v6840 = vadd.f32 %v6792, %v6808
        %v6841 = vadd.f32 %v6793, %v6808
        %6846 = vst [vmem:[%s360] ss:$8 sm:$0xf] %v6810
        %6847 = vst [vmem:[%s360] ss:$8 sm:$0xf0] %v6810
        %s6848 = scalar_lea.vmem %s360, 64 [#allocation7]
        %6849 = vst [vmem:[%s6848] ss:$8 sm:$0xf] %v6818
        %6850 = vst [vmem:[%s6848] ss:$8 sm:$0xf0] %v6818
        %s6851 = scalar_lea.vmem %s360, 128 [#allocation7]
        %6852 = vst [vmem:[%s6851] ss:$8 sm:$0xf] %v6826
        %6853 = vst [vmem:[%s6851] ss:$8 sm:$0xf0] %v6826
        %s6854 = scalar_lea.vmem %s360, 192 [#allocation7]
        %6855 = vst [vmem:[%s6854] ss:$8 sm:$0xf] %v6834
        %6856 = vst [vmem:[%s6854] ss:$8 sm:$0xf0] %v6834
        %s6861 = scalar_lea.vmem %s360, 1 [#allocation7]
        %6862 = vst [vmem:[%s6861] ss:$8 sm:$0xf] %v6811
        %6863 = vst [vmem:[%s6861] ss:$8 sm:$0xf0] %v6811
        %s6864 = scalar_lea.vmem %s360, 65 [#allocation7]
        %6865 = vst [vmem:[%s6864] ss:$8 sm:$0xf] %v6819
        %6866 = vst [vmem:[%s6864] ss:$8 sm:$0xf0] %v6819
        %s6867 = scalar_lea.vmem %s360, 129 [#allocation7]
        %6868 = vst [vmem:[%s6867] ss:$8 sm:$0xf] %v6827
        %6869 = vst [vmem:[%s6867] ss:$8 sm:$0xf0] %v6827
        %s6870 = scalar_lea.vmem %s360, 193 [#allocation7]
        %6871 = vst [vmem:[%s6870] ss:$8 sm:$0xf] %v6835
        %6872 = vst [vmem:[%s6870] ss:$8 sm:$0xf0] %v6835
        %s6877 = scalar_lea.vmem %s360, 2 [#allocation7]
        %6878 = vst [vmem:[%s6877] ss:$8 sm:$0xf] %v6812
        %6879 = vst [vmem:[%s6877] ss:$8 sm:$0xf0] %v6812
        %s6880 = scalar_lea.vmem %s360, 66 [#allocation7]
        %6881 = vst [vmem:[%s6880] ss:$8 sm:$0xf] %v6820
        %6882 = vst [vmem:[%s6880] ss:$8 sm:$0xf0] %v6820
        %s6883 = scalar_lea.vmem %s360, 130 [#allocation7]
        %6884 = vst [vmem:[%s6883] ss:$8 sm:$0xf] %v6828
        %6885 = vst [vmem:[%s6883] ss:$8 sm:$0xf0] %v6828
        %s6886 = scalar_lea.vmem %s360, 194 [#allocation7]
        %6887 = vst [vmem:[%s6886] ss:$8 sm:$0xf] %v6836
        %6888 = vst [vmem:[%s6886] ss:$8 sm:$0xf0] %v6836
        %s6893 = scalar_lea.vmem %s360, 3 [#allocation7]
        %6894 = vst [vmem:[%s6893] ss:$8 sm:$0xf] %v6813
        %6895 = vst [vmem:[%s6893] ss:$8 sm:$0xf0] %v6813
        %s6896 = scalar_lea.vmem %s360, 67 [#allocation7]
        %6897 = vst [vmem:[%s6896] ss:$8 sm:$0xf] %v6821
        %6898 = vst [vmem:[%s6896] ss:$8 sm:$0xf0] %v6821
        %s6899 = scalar_lea.vmem %s360, 131 [#allocation7]
        %6900 = vst [vmem:[%s6899] ss:$8 sm:$0xf] %v6829
        %6901 = vst [vmem:[%s6899] ss:$8 sm:$0xf0] %v6829
        %s6902 = scalar_lea.vmem %s360, 195 [#allocation7]
        %6903 = vst [vmem:[%s6902] ss:$8 sm:$0xf] %v6837
        %6904 = vst [vmem:[%s6902] ss:$8 sm:$0xf0] %v6837
        %s6909 = scalar_lea.vmem %s360, 4 [#allocation7]
        %6910 = vst [vmem:[%s6909] ss:$8 sm:$0xf] %v6814
        %6911 = vst [vmem:[%s6909] ss:$8 sm:$0xf0] %v6814
        %s6912 = scalar_lea.vmem %s360, 68 [#allocation7]
        %6913 = vst [vmem:[%s6912] ss:$8 sm:$0xf] %v6822
        %6914 = vst [vmem:[%s6912] ss:$8 sm:$0xf0] %v6822
        %s6915 = scalar_lea.vmem %s360, 132 [#allocation7]
        %6916 = vst [vmem:[%s6915] ss:$8 sm:$0xf] %v6830
        %6917 = vst [vmem:[%s6915] ss:$8 sm:$0xf0] %v6830
        %s6918 = scalar_lea.vmem %s360, 196 [#allocation7]
        %6919 = vst [vmem:[%s6918] ss:$8 sm:$0xf] %v6838
        %6920 = vst [vmem:[%s6918] ss:$8 sm:$0xf0] %v6838
        %s6925 = scalar_lea.vmem %s360, 5 [#allocation7]
        %6926 = vst [vmem:[%s6925] ss:$8 sm:$0xf] %v6815
        %6927 = vst [vmem:[%s6925] ss:$8 sm:$0xf0] %v6815
        %s6928 = scalar_lea.vmem %s360, 69 [#allocation7]
        %6929 = vst [vmem:[%s6928] ss:$8 sm:$0xf] %v6823
        %6930 = vst [vmem:[%s6928] ss:$8 sm:$0xf0] %v6823
        %s6931 = scalar_lea.vmem %s360, 133 [#allocation7]
        %6932 = vst [vmem:[%s6931] ss:$8 sm:$0xf] %v6831
        %6933 = vst [vmem:[%s6931] ss:$8 sm:$0xf0] %v6831
        %s6934 = scalar_lea.vmem %s360, 197 [#allocation7]
        %6935 = vst [vmem:[%s6934] ss:$8 sm:$0xf] %v6839
        %6936 = vst [vmem:[%s6934] ss:$8 sm:$0xf0] %v6839
        %s6941 = scalar_lea.vmem %s360, 6 [#allocation7]
        %6942 = vst [vmem:[%s6941] ss:$8 sm:$0xf] %v6816
        %6943 = vst [vmem:[%s6941] ss:$8 sm:$0xf0] %v6816
        %s6944 = scalar_lea.vmem %s360, 70 [#allocation7]
        %6945 = vst [vmem:[%s6944] ss:$8 sm:$0xf] %v6824
        %6946 = vst [vmem:[%s6944] ss:$8 sm:$0xf0] %v6824
        %s6947 = scalar_lea.vmem %s360, 134 [#allocation7]
        %6948 = vst [vmem:[%s6947] ss:$8 sm:$0xf] %v6832
        %6949 = vst [vmem:[%s6947] ss:$8 sm:$0xf0] %v6832
        %s6950 = scalar_lea.vmem %s360, 198 [#allocation7]
        %6951 = vst [vmem:[%s6950] ss:$8 sm:$0xf] %v6840
        %6952 = vst [vmem:[%s6950] ss:$8 sm:$0xf0] %v6840
        %s6957 = scalar_lea.vmem %s360, 7 [#allocation7]
        %6958 = vst [vmem:[%s6957] ss:$8 sm:$0xf] %v6817
        %6959 = vst [vmem:[%s6957] ss:$8 sm:$0xf0] %v6817
        %s6960 = scalar_lea.vmem %s360, 71 [#allocation7]
        %6961 = vst [vmem:[%s6960] ss:$8 sm:$0xf] %v6825
        %6962 = vst [vmem:[%s6960] ss:$8 sm:$0xf0] %v6825
        %s6963 = scalar_lea.vmem %s360, 135 [#allocation7]
        %6964 = vst [vmem:[%s6963] ss:$8 sm:$0xf] %v6833
        %6965 = vst [vmem:[%s6963] ss:$8 sm:$0xf0] %v6833
        %s6966 = scalar_lea.vmem %s360, 199 [#allocation7]
        %6967 = vst [vmem:[%s6966] ss:$8 sm:$0xf] %v6841
        %6968 = vst [vmem:[%s6966] ss:$8 sm:$0xf0] %v6841
        %s6969 = sand.u32 %s210, 1
        %s6970 = scalar_lea.sflag [#allocation4], %s6969
        %s6971 = sand.u32 %s210, 1
        %s6972 = smul.addr %s6971, 256
        %s6973 = scalar_lea.vmem [#allocation7], %s6972
        // Predicated region
        $region57: #{tpu_custom_call.1} parent=47 // pred_check
          %p6974 = pneg %p220
        $region58: #{tpu_custom_call.1} parent=47 // pred_check_branch
          %6976 = sbr.rel (%p6974) target = $region60
        $region59: #{tpu_custom_call.1} parent=47 // pred_region
          %6978 = vsyncadd %s6970, 0
          %s6979 = smul.addr %s31, 32
          %s6980 = sadd.s32 %s32, %s6979
          %s6981 = smul.addr %s6980, 8
          %s6982 = scalar_lea.hbm %s7, %s6981
          %s6983 = sshll.u32 %s6973, 4
          %s6984 = int_to_ptr.vmem [resolvable:$true] %s6983
          %s6985 = sshll.u32 %s6982, 4
          %s6986 = int_to_ptr.hbm [resolvable:$true] %s6985
          %6991 = dma.vmem_to_hbm [thread:$0]  %s6984, 4096, %s6986, %s6970, 128, 128, 8
        $region60: #{tpu_custom_call.1} parent=47 // pred_fallthru
          _
      $region48: #{tpu_custom_call.1} parent=5 // pred_fallthru
        _
      %p6992 = scmp.le.s32.totalorder 2, %s22
      // Predicated region
      $region61: #{tpu_custom_call.1} parent=5 // pred_check
        %p6993 = pneg %p6992
      $region62: #{tpu_custom_call.1} parent=5 // pred_check_branch
        %6995 = sbr.rel (%p6993) target = $region64
      $region63: #{tpu_custom_call.1} parent=5 // pred_region
        %s6996 = ssub.s32 %s22, 2
        // Predicated region
        $region65: #{tpu_custom_call.1} parent=63 // pred_check
          %p6997 = pneg %p226
        $region66: #{tpu_custom_call.1} parent=63 // pred_check_branch
          %6999 = sbr.rel (%p6997) target = $region68
        $region67: #{tpu_custom_call.1} parent=63 // pred_region
          %s7000 = sand.u32 %s211, 1
          %s7001 = scalar_lea.sflag [#allocation4], %s7000
          %s7002 = sand.u32 %s211, 1
          %s7003 = smul.addr %s7002, 256
          %s7004 = scalar_lea.vmem [#allocation7], %s7003
          %7006 = dma.done %s7001, 4096
        $region68: #{tpu_custom_call.1} parent=63 // pred_fallthru
          _
      $region64: #{tpu_custom_call.1} parent=5 // pred_fallthru
        _
    $region6: #{tpu_custom_call.1} parent=1 // loop_footer
      %s26 = sadd.s32 1, %s22
    $region7: #{tpu_custom_call.1} parent=1 // loop_footer_branch
      %21 = sbr.rel target = $region3
    $region8: #{tpu_custom_call.1} parent=1 // loop_exit
      _
    %7007 = vsyncpa [#allocation3], 1
    %s7008 = scalar_lea.sflag [#allocation3], 1
    %7009 = vsyncpa %s7008, 1
    %7010 = vsyncpa [#allocation6], 1
    %s7011 = scalar_lea.sflag [#allocation6], 1
    %7012 = vsyncpa %s7011, 1
    %7013 = vsyncpa [#allocation4], 1
    %s7014 = scalar_lea.sflag [#allocation4], 1
    %7015 = vsyncpa %s7014, 1

</llo_original>
